<compile_context>
chip_gen: v7x
topology: tpu7x:2x2x1
jax: 0.10.0
libtpu: 0.0.40
codegen_flags: <defaults>
</compile_context>

<pallas_src>
import jax
import jax.numpy as jnp
import numpy as np
from jax.experimental import pallas as pl
from jax.experimental.pallas import tpu as pltpu

# Module config (nn.LSTM input_size=2048 is hard-coded in the PyTorch module).
FEATURE_SIZE = 2048       # LSTM input_size
N_RNN_UNITS = 128         # config['n_rnn_units']
LATENT_DIM = 32           # config['latent_space_dim']
N_CLASSES = 5             # config['n_classes']
LN_EPS = 1e-5             # nn.LayerNorm default eps


def _const_spec(block_shape, index_map):
    """BlockSpec for a constant-index operand: single-buffer it if supported."""
    if hasattr(pl, "Buffered"):
        try:
            return pl.BlockSpec(block_shape, index_map,
                                pipeline_mode=pl.Buffered(1))
        except TypeError:
            pass
    return pl.BlockSpec(block_shape, index_map)


def _row_tile(m):
    """Largest MXU/pipeline-friendly row tile that divides m (cap 1024)."""
    for t in (1024, 512, 256, 128, 64, 32, 16, 8):
        if m % t == 0:
            return t
    # TODO(synk): for large M not divisible by 8, pad M instead of one big block.
    return m


def _time_chunk(s):
    """Timesteps per grid step (statically unrolled inside the kernel)."""
    for t in (32, 16, 8):
        if s % t == 0:
            return t
    return s


def _num_tensorcores():
    """2 only on chips with 2 TensorCores per device (v7x); else 1."""
    try:
        kind = jax.devices()[0].device_kind.lower()
    except Exception:
        return 1
    return 2 if "v7" in kind else 1


# ---------------------------------------------------------------------------
# Phase 1: input projection  gates_x = x2d @ W_ih^T + b   (batched over B*S)
# ---------------------------------------------------------------------------
def _gates_kernel(x_ref, w_ref, b_ref, out_ref):
    # bf16 MXU operands, f32 accumulation; bias folded in here so the serial
    # recurrence has no bias add.
    out_ref[...] = (jnp.dot(x_ref[...], w_ref[...],
                            preferred_element_type=jnp.float32)
                    + b_ref[...])


def _input_projection(x2d_bf16, wih_t, b_lstm):
    M, F = x2d_bf16.shape
    G = wih_t.shape[1]                     # 4H
    tm = _row_tile(M)
    return pl.pallas_call(
        _gates_kernel,
        out_shape=jax.ShapeDtypeStruct((M, G), jnp.float32),
        grid_spec=pltpu.PrefetchScalarGridSpec(
            num_scalar_prefetch=0,
            grid=(M // tm,),
            in_specs=[
                pl.BlockSpec((tm, F), lambda m: (m, 0)),    # x rows (bf16)
                _const_spec((F, G), lambda m: (0, 0)),      # W_ih^T (bf16), fetched once
                _const_spec((1, G), lambda m: (0, 0)),      # b_ih + b_hh (f32)
            ],
            out_specs=pl.BlockSpec((tm, G), lambda m: (m, 0)),
        ),
        compiler_params=pltpu.CompilerParams(
            dimension_semantics=("parallel",),
            vmem_limit_bytes=32 * 1024 * 1024),  # ~14 MiB worst case at tm=1024
    )(x2d_bf16, wih_t, b_lstm)


# ---------------------------------------------------------------------------
# Phase 2 + fused head: LSTM recurrence -> proj -> ReLU -> LayerNorm -> clf
# ---------------------------------------------------------------------------
def _lstm_head_kernel(gx_ref, whh_ref, wp_ref, bp_ref, gamma_ref, beta_ref,
                      wc_ref, bc_ref, out_ref, h_scr, c_scr):
    H = whh_ref.shape[0]

    @pl.when(pl.program_id(1) == 0)          # reset at the start of each batch tile
    def _():
        h_scr[...] = jnp.zeros_like(h_scr)
        c_scr[...] = jnp.zeros_like(c_scr)

    h_bf = h_scr[...]                         # bf16 carried state (MXU operand)
    c = c_scr[...]                            # f32 cell state
    whh = whh_ref[...]                        # hoisted constant loads
    wp = wp_ref[...]
    bp = bp_ref[...]
    gamma = gamma_ref[...]
    beta = beta_ref[...]
    wc = wc_ref[...]
    bc = bc_ref[...]

    sc = gx_ref.shape[1]
    for i in range(sc):                       # static unroll of the time chunk
        gates = gx_ref[:, i, :] + jnp.dot(h_bf, whh,
                                          preferred_element_type=jnp.float32)
        # Gate columns were permuted offline to (i, f, o, g): one wide sigmoid
        # over 3H lanes + one tanh over H lanes per step.
        sig = jax.nn.sigmoid(gates[:, :3 * H])
        g_g = jnp.tanh(gates[:, 3 * H:])
        c = sig[:, H:2 * H] * c + sig[:, :H] * g_g
        h = sig[:, 2 * H:3 * H] * jnp.tanh(c)
        h_bf = h.astype(jnp.bfloat16)         # formed where h is produced

        # Fused head (off the h/c serial chain; scheduler overlaps with next step).
        # rnn_dropout(p=0.5) is identity at inference time.
        # TODO(synk): training-mode stochastic dropout mask not implemented.
        z = jnp.dot(h, wp, preferred_element_type=jnp.float32) + bp
        z = jnp.maximum(z, 0.0)
        mean = jnp.mean(z, axis=-1, keepdims=True)
        var = jnp.mean(jnp.square(z - mean), axis=-1, keepdims=True)
        z = (z - mean) * jax.lax.rsqrt(var + LN_EPS)
        z = z * gamma + beta
        out_ref[:, i, :] = (jnp.dot(z, wc, preferred_element_type=jnp.float32)
                            + bc).astype(out_ref.dtype)

    h_scr[...] = h_bf
    c_scr[...] = c


def _lstm_head(gates, params):
    B, S, G = gates.shape
    H = G // 4
    L = params["wp_t"].shape[1]
    C = params["wc_t"].shape[1]

    sc = _time_chunk(S)
    n_chunks = S // sc

    # Batch-parallel leading axis only where it helps (2 TCs per chip, v7x);
    # on 1-TC chips keep a single batch tile so the serial loop runs once.
    nb = _num_tensorcores()
    if nb > 1 and B % nb != 0:
        nb = 1
    bt = B // nb

    return pl.pallas_call(
        _lstm_head_kernel,
        out_shape=jax.ShapeDtypeStruct((B, S, C), jnp.float32),
        grid_spec=pltpu.PrefetchScalarGridSpec(
            num_scalar_prefetch=0,
            grid=(nb, n_chunks),
            in_specs=[
                pl.BlockSpec((bt, sc, G), lambda b, t: (b, t, 0)),  # gates chunk
                _const_spec((H, G), lambda b, t: (0, 0)),           # W_hh^T (bf16)
                _const_spec((H, L), lambda b, t: (0, 0)),           # W_proj^T
                _const_spec((1, L), lambda b, t: (0, 0)),           # b_proj
                _const_spec((1, L), lambda b, t: (0, 0)),           # LN gamma
                _const_spec((1, L), lambda b, t: (0, 0)),           # LN beta
                _const_spec((L, C), lambda b, t: (0, 0)),           # W_clf^T
                _const_spec((1, C), lambda b, t: (0, 0)),           # b_clf
            ],
            out_specs=pl.BlockSpec((bt, sc, C), lambda b, t: (b, t, 0)),
            scratch_shapes=[pltpu.VMEM((bt, H), jnp.bfloat16),      # h state
                            pltpu.VMEM((bt, H), jnp.float32)],      # c state
        ),
        compiler_params=pltpu.CompilerParams(
            dimension_semantics=("parallel", "arbitrary")),  # batch || , time serial
    )(gates, params["whh_t"], params["wp_t"], params["bp"],
      params["gamma"], params["beta"], params["wc_t"], params["bc"])


# ---------------------------------------------------------------------------
# Public forward
# ---------------------------------------------------------------------------
def classifier_forward(x, params):
    B, S, F = x.shape
    H = N_RNN_UNITS
    # Cast x to bf16 once (halves HBM reads of the mem-bound input projection).
    x_bf = x.astype(jnp.bfloat16)
    # All reshapes below are free leading-dim collapses (no HBM transposes).
    gates2d = _input_projection(x_bf.reshape(B * S, F),
                                params["wih_t"], params["b_lstm"])
    return _lstm_head(gates2d.reshape(B, S, 4 * H), params)


def init_params(key):
    H, F, L, C = N_RNN_UNITS, FEATURE_SIZE, LATENT_DIM, N_CLASSES
    ks = jax.random.split(key, 8)
    s = 0.05
    w_ih = jax.random.normal(ks[0], (4 * H, F), jnp.float32) * s   # PyTorch layout
    w_hh = jax.random.normal(ks[1], (4 * H, H), jnp.float32) * s
    b_ih = jax.random.normal(ks[2], (4 * H,), jnp.float32) * s
    b_hh = jax.random.normal(ks[3], (4 * H,), jnp.float32) * s
    w_proj = jax.random.normal(ks[4], (L, H), jnp.float32) * s
    b_proj = jax.random.normal(ks[5], (L,), jnp.float32) * s
    w_clf = jax.random.normal(ks[6], (C, L), jnp.float32) * s
    b_clf = jax.random.normal(ks[7], (C,), jnp.float32) * s

    b_lstm = b_ih + b_hh
    # Permute PyTorch gate order (i, f, g, o) -> kernel order (i, f, o, g).
    # Pure relabeling of the gate blocks (same math as PyTorch).
    perm = np.concatenate([np.arange(0, H), np.arange(H, 2 * H),
                           np.arange(3 * H, 4 * H), np.arange(2 * H, 3 * H)])

    params = {
        "wih_t": w_ih[perm].T.astype(jnp.bfloat16),   # (F, 4H) bf16, (i,f,o,g)
        "whh_t": w_hh[perm].T.astype(jnp.bfloat16),   # (H, 4H) bf16, (i,f,o,g)
        "b_lstm": b_lstm[perm].reshape(1, 4 * H),     # f32
        "wp_t": w_proj.T,                             # (H, L) f32
        "bp": b_proj.reshape(1, L),
        "gamma": jnp.ones((1, L), jnp.float32),       # LayerNorm defaults
        "beta": jnp.zeros((1, L), jnp.float32),
        "wc_t": w_clf.T,                              # (L, C) f32
        "bc": b_clf.reshape(1, C),
    }
    # Reference keeps the original PyTorch gate layout (also bf16-quantized
    # weights so the comparison isolates kernel correctness, not quantization).
    ref_params = {
        "wih_t": w_ih.T.astype(jnp.bfloat16),
        "whh_t": w_hh.T.astype(jnp.bfloat16),
        "b": b_lstm.reshape(1, 4 * H),
        "wp_t": params["wp_t"], "bp": params["bp"],
        "gamma": params["gamma"], "beta": params["beta"],
        "wc_t": params["wc_t"], "bc": params["bc"],
    }
    return params, ref_params


def reference_forward(x, ref_params):
    """Pure-JAX reference matching the PyTorch forward (eval mode)."""
    B, S, _ = x.shape
    H = N_RNN_UNITS
    wih_t = ref_params["wih_t"].astype(jnp.float32)   # PyTorch gate order (i,f,g,o)
    whh_t = ref_params["whh_t"].astype(jnp.float32)
    b = ref_params["b"]

    def step(carry, x_t):
        h, c = carry
        gates = x_t @ wih_t + h @ whh_t + b
        i = jax.nn.sigmoid(gates[:, :H])
        f = jax.nn.sigmoid(gates[:, H:2 * H])
        g = jnp.tanh(gates[:, 2 * H:3 * H])
        o = jax.nn.sigmoid(gates[:, 3 * H:])
        c = f * c + i * g
        h = o * jnp.tanh(c)
        return (h, c), h

    h0 = jnp.zeros((B, H), jnp.float32)
    _, hs = jax.lax.scan(step, (h0, h0), jnp.transpose(x, (1, 0, 2)))
    hs = jnp.transpose(hs, (1, 0, 2)).reshape(B * S, H)
    z = jnp.maximum(hs @ ref_params["wp_t"] + ref_params["bp"], 0.0)
    mean = z.mean(-1, keepdims=True)
    var = ((z - mean) ** 2).mean(-1, keepdims=True)
    z = (z - mean) / jnp.sqrt(var + LN_EPS) * ref_params["gamma"] + ref_params["beta"]
    out = z @ ref_params["wc_t"] + ref_params["bc"]
    return out.reshape(B, S, -1)


if __name__ == "__main__":
    key = jax.random.PRNGKey(0)
    k_x, k_p = jax.random.split(key)

    batch, seq_len = 2, 8
    x = jax.random.normal(k_x, (batch, seq_len, FEATURE_SIZE), jnp.float32)
    params, ref_params = init_params(k_p)

    fwd = jax.jit(classifier_forward)
    out = jax.block_until_ready(fwd(x, params))
    ref = jax.block_until_ready(reference_forward(x, ref_params))

    assert out.shape == (batch, seq_len, N_CLASSES), out.shape
    np.testing.assert_allclose(np.asarray(out), np.asarray(ref),
                               atol=5e-2, rtol=5e-2)

    print("KERNEL_OK")
</pallas_src>

<mosaic_0001>
module attributes {stable_mosaic.version = 11 : i64} {
  func.func @_gates_kernel(%arg0: i32, %arg1: memref<16x2048xbf16, #tpu.memory_space<vmem>>, %arg2: memref<2048x512xbf16, #tpu.memory_space<vmem>>, %arg3: memref<1x512xf32, #tpu.memory_space<vmem>>, %arg4: memref<16x512xf32, #tpu.memory_space<vmem>>) attributes {dimension_semantics = [#tpu.dimension_semantics<parallel>], iteration_bounds = array<i64: 1>, scalar_prefetch = 0 : i64, scratch_operands = 0 : i64, tpu.core_type = #tpu.core_type<tc>, window_params = [{transform_indices = @transform_0, window_bounds = array<i64: 16, 2048>}, {pipeline_mode = #tpu.pipeline_mode<synchronous>, transform_indices = @transform_1, window_bounds = array<i64: 2048, 512>}, {pipeline_mode = #tpu.pipeline_mode<synchronous>, transform_indices = @transform_2, window_bounds = array<i64: 1, 512>}, {transform_indices = @transform_3, window_bounds = array<i64: 16, 512>}]} {
    %c0 = arith.constant 0 : index
    %c0_0 = arith.constant 0 : index
    %0 = vector.load %arg1[%c0, %c0_0] : memref<16x2048xbf16, #tpu.memory_space<vmem>>, vector<16x2048xbf16>
    %c0_1 = arith.constant 0 : index
    %c0_2 = arith.constant 0 : index
    %1 = vector.load %arg2[%c0_1, %c0_2] : memref<2048x512xbf16, #tpu.memory_space<vmem>>, vector<2048x512xbf16>
    %cst = arith.constant dense<0.000000e+00> : vector<16x512xf32>
    %2 = tpu.matmul %0, %1, %cst {dimension_numbers = #tpu.dot_dimension_numbers<[1], [0], [0], [1], [0, 0, 1, 1], [], []>} : vector<16x2048xbf16>, vector<2048x512xbf16>, vector<16x512xf32> -> vector<16x512xf32>
    %c0_3 = arith.constant 0 : index
    %c0_4 = arith.constant 0 : index
    %3 = vector.load %arg3[%c0_3, %c0_4] : memref<1x512xf32, #tpu.memory_space<vmem>>, vector<1x512xf32>
    %4 = vector.broadcast %3 : vector<1x512xf32> to vector<16x512xf32>
    %5 = arith.addf %2, %4 : vector<16x512xf32>
    %c0_5 = arith.constant 0 : index
    %c0_6 = arith.constant 0 : index
    %6 = vector.load %arg4[%c0_5, %c0_6] : memref<16x512xf32, #tpu.memory_space<vmem>>, vector<16x512xf32>
    tpu.vector_store %arg4[%c0_5, %c0_6], %5 {strides = array<i32>} : memref<16x512xf32, #tpu.memory_space<vmem>>, vector<16x512xf32>,
    return
  }
  func.func @transform_0(%arg0: i32) -> (i32, i32) {
    %c0_i32 = arith.constant 0 : i32
    %c0_i32_0 = arith.constant 0 : i32
    return %arg0, %c0_i32 : i32, i32
  }
  func.func @transform_1(%arg0: i32) -> (i32, i32) {
    %c0_i32 = arith.constant 0 : i32
    %c0_i32_0 = arith.constant 0 : i32
    %c0_i32_1 = arith.constant 0 : i32
    return %c0_i32, %c0_i32_0 : i32, i32
  }
  func.func @transform_2(%arg0: i32) -> (i32, i32) {
    %c0_i32 = arith.constant 0 : i32
    %c0_i32_0 = arith.constant 0 : i32
    %c0_i32_1 = arith.constant 0 : i32
    return %c0_i32, %c0_i32_0 : i32, i32
  }
  func.func @transform_3(%arg0: i32) -> (i32, i32) {
    %c0_i32 = arith.constant 0 : i32
    %c0_i32_0 = arith.constant 0 : i32
    return %arg0, %c0_i32 : i32, i32
  }
}

module attributes {stable_mosaic.version = 11 : i64} {
  func.func @_lstm_head_kernel(%arg0: i32, %arg1: i32, %arg2: memref<2x8x512xf32, #tpu.memory_space<vmem>>, %arg3: memref<128x512xbf16, #tpu.memory_space<vmem>>, %arg4: memref<128x32xf32, #tpu.memory_space<vmem>>, %arg5: memref<1x32xf32, #tpu.memory_space<vmem>>, %arg6: memref<1x32xf32, #tpu.memory_space<vmem>>, %arg7: memref<1x32xf32, #tpu.memory_space<vmem>>, %arg8: memref<32x5xf32, #tpu.memory_space<vmem>>, %arg9: memref<1x5xf32, #tpu.memory_space<vmem>>, %arg10: memref<2x8x5xf32, #tpu.memory_space<vmem>>, %arg11: memref<2x128xbf16, #tpu.memory_space<vmem>>, %arg12: memref<2x128xf32, #tpu.memory_space<vmem>>) attributes {dimension_semantics = [#tpu.dimension_semantics<parallel>, #tpu.dimension_semantics<arbitrary>], iteration_bounds = array<i64: 1, 1>, scalar_prefetch = 0 : i64, scratch_operands = 2 : i64, tpu.core_type = #tpu.core_type<tc>, window_params = [{transform_indices = @transform_0, window_bounds = array<i64: 2, 8, 512>}, {pipeline_mode = #tpu.pipeline_mode<synchronous>, transform_indices = @transform_1, window_bounds = array<i64: 128, 512>}, {pipeline_mode = #tpu.pipeline_mode<synchronous>, transform_indices = @transform_2, window_bounds = array<i64: 128, 32>}, {pipeline_mode = #tpu.pipeline_mode<synchronous>, transform_indices = @transform_3, window_bounds = array<i64: 1, 32>}, {pipeline_mode = #tpu.pipeline_mode<synchronous>, transform_indices = @transform_4, window_bounds = array<i64: 1, 32>}, {pipeline_mode = #tpu.pipeline_mode<synchronous>, transform_indices = @transform_5, window_bounds = array<i64: 1, 32>}, {pipeline_mode = #tpu.pipeline_mode<synchronous>, transform_indices = @transform_6, window_bounds = array<i64: 32, 5>}, {pipeline_mode = #tpu.pipeline_mode<synchronous>, transform_indices = @transform_7, window_bounds = array<i64: 1, 5>}, {transform_indices = @transform_8, window_bounds = array<i64: 2, 8, 5>}]} {
    %c0_i32 = arith.constant 0 : i32
    %0 = arith.cmpi eq, %arg1, %c0_i32 : i32
    %1 = arith.extui %0 : i1 to i32
    %c0_i32_0 = arith.constant 0 : i32
    %2 = arith.cmpi ne, %1, %c0_i32_0 : i32
    scf.if %2 {
      %cst_142 = arith.constant 0.000000e+00 : bf16
      %446 = vector.broadcast %cst_142 : bf16 to vector<2x128xbf16>
      %c0_143 = arith.constant 0 : index
      %c0_144 = arith.constant 0 : index
      %447 = vector.load %arg11[%c0_143, %c0_144] : memref<2x128xbf16, #tpu.memory_space<vmem>>, vector<2x128xbf16>
      tpu.vector_store %arg11[%c0_143, %c0_144], %446 {strides = array<i32>} : memref<2x128xbf16, #tpu.memory_space<vmem>>, vector<2x128xbf16>,
      %cst_145 = arith.constant 0.000000e+00 : f32
      %448 = vector.broadcast %cst_145 : f32 to vector<2x128xf32>
      %c0_146 = arith.constant 0 : index
      %c0_147 = arith.constant 0 : index
      %449 = vector.load %arg12[%c0_146, %c0_147] : memref<2x128xf32, #tpu.memory_space<vmem>>, vector<2x128xf32>
      tpu.vector_store %arg12[%c0_146, %c0_147], %448 {strides = array<i32>} : memref<2x128xf32, #tpu.memory_space<vmem>>, vector<2x128xf32>,
    } else {
    }
    %c0 = arith.constant 0 : index
    %c0_1 = arith.constant 0 : index
    %3 = vector.load %arg11[%c0, %c0_1] : memref<2x128xbf16, #tpu.memory_space<vmem>>, vector<2x128xbf16>
    %c0_2 = arith.constant 0 : index
    %c0_3 = arith.constant 0 : index
    %4 = vector.load %arg12[%c0_2, %c0_3] : memref<2x128xf32, #tpu.memory_space<vmem>>, vector<2x128xf32>
    %c0_4 = arith.constant 0 : index
    %c0_5 = arith.constant 0 : index
    %5 = vector.load %arg3[%c0_4, %c0_5] : memref<128x512xbf16, #tpu.memory_space<vmem>>, vector<128x512xbf16>
    %c0_6 = arith.constant 0 : index
    %c0_7 = arith.constant 0 : index
    %6 = vector.load %arg4[%c0_6, %c0_7] : memref<128x32xf32, #tpu.memory_space<vmem>>, vector<128x32xf32>
    %c0_8 = arith.constant 0 : index
    %c0_9 = arith.constant 0 : index
    %7 = vector.load %arg5[%c0_8, %c0_9] : memref<1x32xf32, #tpu.memory_space<vmem>>, vector<1x32xf32>
    %c0_10 = arith.constant 0 : index
    %c0_11 = arith.constant 0 : index
    %8 = vector.load %arg6[%c0_10, %c0_11] : memref<1x32xf32, #tpu.memory_space<vmem>>, vector<1x32xf32>
    %c0_12 = arith.constant 0 : index
    %c0_13 = arith.constant 0 : index
    %9 = vector.load %arg7[%c0_12, %c0_13] : memref<1x32xf32, #tpu.memory_space<vmem>>, vector<1x32xf32>
    %c0_14 = arith.constant 0 : index
    %c0_15 = arith.constant 0 : index
    %10 = vector.load %arg8[%c0_14, %c0_15] : memref<32x5xf32, #tpu.memory_space<vmem>>, vector<32x5xf32>
    %c0_16 = arith.constant 0 : index
    %c0_17 = arith.constant 0 : index
    %11 = vector.load %arg9[%c0_16, %c0_17] : memref<1x5xf32, #tpu.memory_space<vmem>>, vector<1x5xf32>
    %c0_18 = arith.constant 0 : index
    %c0_19 = arith.constant 0 : index
    %c0_20 = arith.constant 0 : index
    %12 = vector.load %arg2[%c0_18, %c0_19, %c0_20] : memref<2x8x512xf32, #tpu.memory_space<vmem>>, vector<2x1x512xf32>
    %13 = vector.shape_cast %12 : vector<2x1x512xf32> to vector<2x512xf32>
    %cst = arith.constant dense<0.000000e+00> : vector<2x512xf32>
    %14 = tpu.matmul %3, %5, %cst {dimension_numbers = #tpu.dot_dimension_numbers<[1], [0], [0], [1], [0, 0, 1, 1], [], []>} : vector<2x128xbf16>, vector<128x512xbf16>, vector<2x512xf32> -> vector<2x512xf32>
    %15 = arith.addf %13, %14 : vector<2x512xf32>
    %16 = vector.extract_strided_slice %15 {offsets = [0, 0], sizes = [2, 384], strides = [1, 1]} : vector<2x512xf32> to vector<2x384xf32>
    %17 = arith.negf %16 : vector<2x384xf32>
    %18 = math.exp %17 : vector<2x384xf32>
    %cst_21 = arith.constant 1.000000e+00 : f32
    %19 = vector.broadcast %cst_21 : f32 to vector<2x384xf32>
    %20 = arith.addf %19, %18 : vector<2x384xf32>
    %21 = arith.divf %19, %20 : vector<2x384xf32>
    %22 = vector.extract_strided_slice %15 {offsets = [0, 384], sizes = [2, 128], strides = [1, 1]} : vector<2x512xf32> to vector<2x128xf32>
    %23 = math.tanh %22 : vector<2x128xf32>
    %24 = vector.extract_strided_slice %21 {offsets = [0, 128], sizes = [2, 128], strides = [1, 1]} : vector<2x384xf32> to vector<2x128xf32>
    %25 = arith.mulf %24, %4 : vector<2x128xf32>
    %26 = vector.extract_strided_slice %21 {offsets = [0, 0], sizes = [2, 128], strides = [1, 1]} : vector<2x384xf32> to vector<2x128xf32>
    %27 = arith.mulf %26, %23 : vector<2x128xf32>
    %28 = arith.addf %25, %27 : vector<2x128xf32>
    %29 = vector.extract_strided_slice %21 {offsets = [0, 256], sizes = [2, 128], strides = [1, 1]} : vector<2x384xf32> to vector<2x128xf32>
    %30 = math.tanh %28 : vector<2x128xf32>
    %31 = arith.mulf %29, %30 : vector<2x128xf32>
    %32 = arith.truncf %31 : vector<2x128xf32> to vector<2x128xbf16>
    %cst_22 = arith.constant dense<0.000000e+00> : vector<2x32xf32>
    %33 = tpu.matmul %31, %6, %cst_22 {dimension_numbers = #tpu.dot_dimension_numbers<[1], [0], [0], [1], [0, 0, 1, 1], [], []>} : vector<2x128xf32>, vector<128x32xf32>, vector<2x32xf32> -> vector<2x32xf32>
    %34 = vector.broadcast %7 : vector<1x32xf32> to vector<2x32xf32>
    %35 = arith.addf %33, %34 : vector<2x32xf32>
    %cst_23 = arith.constant 0.000000e+00 : f32
    %36 = vector.broadcast %cst_23 : f32 to vector<2x32xf32>
    %37 = arith.maximumf %35, %36 : vector<2x32xf32>
    %cst_24 = arith.constant dense<0.000000e+00> : vector<2xf32>
    %38 = vector.multi_reduction <add>, %37, %cst_24 [1] : vector<2x32xf32> to vector<2xf32>
    %39 = vector.shape_cast %38 : vector<2xf32> to vector<2x1xf32>
    %cst_25 = arith.constant 3.200000e+01 : f32
    %40 = vector.broadcast %cst_25 : f32 to vector<2x1xf32>
    %41 = arith.divf %39, %40 : vector<2x1xf32>
    %42 = vector.broadcast %41 : vector<2x1xf32> to vector<2x32xf32>
    %43 = arith.subf %37, %42 : vector<2x32xf32>
    %44 = arith.mulf %43, %43 : vector<2x32xf32>
    %cst_26 = arith.constant dense<0.000000e+00> : vector<2xf32>
    %45 = vector.multi_reduction <add>, %44, %cst_26 [1] : vector<2x32xf32> to vector<2xf32>
    %46 = vector.shape_cast %45 : vector<2xf32> to vector<2x1xf32>
    %cst_27 = arith.constant 3.200000e+01 : f32
    %47 = vector.broadcast %cst_27 : f32 to vector<2x1xf32>
    %48 = arith.divf %46, %47 : vector<2x1xf32>
    %49 = vector.broadcast %41 : vector<2x1xf32> to vector<2x32xf32>
    %50 = arith.subf %37, %49 : vector<2x32xf32>
    %cst_28 = arith.constant 9.99999974E-6 : f32
    %51 = vector.broadcast %cst_28 : f32 to vector<2x1xf32>
    %52 = arith.addf %48, %51 : vector<2x1xf32>
    %53 = math.rsqrt %52 : vector<2x1xf32>
    %54 = vector.broadcast %53 : vector<2x1xf32> to vector<2x32xf32>
    %55 = arith.mulf %50, %54 : vector<2x32xf32>
    %56 = vector.broadcast %8 : vector<1x32xf32> to vector<2x32xf32>
    %57 = arith.mulf %55, %56 : vector<2x32xf32>
    %58 = vector.broadcast %9 : vector<1x32xf32> to vector<2x32xf32>
    %59 = arith.addf %57, %58 : vector<2x32xf32>
    %cst_29 = arith.constant dense<0.000000e+00> : vector<2x5xf32>
    %60 = tpu.matmul %59, %10, %cst_29 {dimension_numbers = #tpu.dot_dimension_numbers<[1], [0], [0], [1], [0, 0, 1, 1], [], []>} : vector<2x32xf32>, vector<32x5xf32>, vector<2x5xf32> -> vector<2x5xf32>
    %61 = vector.broadcast %11 : vector<1x5xf32> to vector<2x5xf32>
    %62 = arith.addf %60, %61 : vector<2x5xf32>
    %c0_30 = arith.constant 0 : index
    %c0_31 = arith.constant 0 : index
    %c0_32 = arith.constant 0 : index
    %63 = vector.load %arg10[%c0_30, %c0_31, %c0_32] : memref<2x8x5xf32, #tpu.memory_space<vmem>>, vector<2x1x5xf32>
    %64 = vector.shape_cast %63 : vector<2x1x5xf32> to vector<2x5xf32>
    %65 = vector.shape_cast %62 : vector<2x5xf32> to vector<2x1x5xf32>
    tpu.vector_store %arg10[%c0_30, %c0_31, %c0_32], %65 {strides = array<i32>} : memref<2x8x5xf32, #tpu.memory_space<vmem>>, vector<2x1x5xf32>,
    %c0_33 = arith.constant 0 : index
    %c1 = arith.constant 1 : index
    %c0_34 = arith.constant 0 : index
    %66 = vector.load %arg2[%c0_33, %c1, %c0_34] : memref<2x8x512xf32, #tpu.memory_space<vmem>>, vector<2x1x512xf32>
    %67 = vector.shape_cast %66 : vector<2x1x512xf32> to vector<2x512xf32>
    %cst_35 = arith.constant dense<0.000000e+00> : vector<2x512xf32>
    %68 = tpu.matmul %32, %5, %cst_35 {dimension_numbers = #tpu.dot_dimension_numbers<[1], [0], [0], [1], [0, 0, 1, 1], [], []>} : vector<2x128xbf16>, vector<128x512xbf16>, vector<2x512xf32> -> vector<2x512xf32>
    %69 = arith.addf %67, %68 : vector<2x512xf32>
    %70 = vector.extract_strided_slice %69 {offsets = [0, 0], sizes = [2, 384], strides = [1, 1]} : vector<2x512xf32> to vector<2x384xf32>
    %71 = arith.negf %70 : vector<2x384xf32>
    %72 = math.exp %71 : vector<2x384xf32>
    %cst_36 = arith.constant 1.000000e+00 : f32
    %73 = vector.broadcast %cst_36 : f32 to vector<2x384xf32>
    %74 = arith.addf %73, %72 : vector<2x384xf32>
    %75 = arith.divf %73, %74 : vector<2x384xf32>
    %76 = vector.extract_strided_slice %69 {offsets = [0, 384], sizes = [2, 128], strides = [1, 1]} : vector<2x512xf32> to vector<2x128xf32>
    %77 = math.tanh %76 : vector<2x128xf32>
    %78 = vector.extract_strided_slice %75 {offsets = [0, 128], sizes = [2, 128], strides = [1, 1]} : vector<2x384xf32> to vector<2x128xf32>
    %79 = arith.mulf %78, %28 : vector<2x128xf32>
    %80 = vector.extract_strided_slice %75 {offsets = [0, 0], sizes = [2, 128], strides = [1, 1]} : vector<2x384xf32> to vector<2x128xf32>
    %81 = arith.mulf %80, %77 : vector<2x128xf32>
    %82 = arith.addf %79, %81 : vector<2x128xf32>
    %83 = vector.extract_strided_slice %75 {offsets = [0, 256], sizes = [2, 128], strides = [1, 1]} : vector<2x384xf32> to vector<2x128xf32>
    %84 = math.tanh %82 : vector<2x128xf32>
    %85 = arith.mulf %83, %84 : vector<2x128xf32>
    %86 = arith.truncf %85 : vector<2x128xf32> to vector<2x128xbf16>
    %cst_37 = arith.constant dense<0.000000e+00> : vector<2x32xf32>
    %87 = tpu.matmul %85, %6, %cst_37 {dimension_numbers = #tpu.dot_dimension_numbers<[1], [0], [0], [1], [0, 0, 1, 1], [], []>} : vector<2x128xf32>, vector<128x32xf32>, vector<2x32xf32> -> vector<2x32xf32>
    %88 = vector.broadcast %7 : vector<1x32xf32> to vector<2x32xf32>
    %89 = arith.addf %87, %88 : vector<2x32xf32>
    %cst_38 = arith.constant 0.000000e+00 : f32
    %90 = vector.broadcast %cst_38 : f32 to vector<2x32xf32>
    %91 = arith.maximumf %89, %90 : vector<2x32xf32>
    %cst_39 = arith.constant dense<0.000000e+00> : vector<2xf32>
    %92 = vector.multi_reduction <add>, %91, %cst_39 [1] : vector<2x32xf32> to vector<2xf32>
    %93 = vector.shape_cast %92 : vector<2xf32> to vector<2x1xf32>
    %cst_40 = arith.constant 3.200000e+01 : f32
    %94 = vector.broadcast %cst_40 : f32 to vector<2x1xf32>
    %95 = arith.divf %93, %94 : vector<2x1xf32>
    %96 = vector.broadcast %95 : vector<2x1xf32> to vector<2x32xf32>
    %97 = arith.subf %91, %96 : vector<2x32xf32>
    %98 = arith.mulf %97, %97 : vector<2x32xf32>
    %cst_41 = arith.constant dense<0.000000e+00> : vector<2xf32>
    %99 = vector.multi_reduction <add>, %98, %cst_41 [1] : vector<2x32xf32> to vector<2xf32>
    %100 = vector.shape_cast %99 : vector<2xf32> to vector<2x1xf32>
    %cst_42 = arith.constant 3.200000e+01 : f32
    %101 = vector.broadcast %cst_42 : f32 to vector<2x1xf32>
    %102 = arith.divf %100, %101 : vector<2x1xf32>
    %103 = vector.broadcast %95 : vector<2x1xf32> to vector<2x32xf32>
    %104 = arith.subf %91, %103 : vector<2x32xf32>
    %cst_43 = arith.constant 9.99999974E-6 : f32
    %105 = vector.broadcast %cst_43 : f32 to vector<2x1xf32>
    %106 = arith.addf %102, %105 : vector<2x1xf32>
    %107 = math.rsqrt %106 : vector<2x1xf32>
    %108 = vector.broadcast %107 : vector<2x1xf32> to vector<2x32xf32>
    %109 = arith.mulf %104, %108 : vector<2x32xf32>
    %110 = vector.broadcast %8 : vector<1x32xf32> to vector<2x32xf32>
    %111 = arith.mulf %109, %110 : vector<2x32xf32>
    %112 = vector.broadcast %9 : vector<1x32xf32> to vector<2x32xf32>
    %113 = arith.addf %111, %112 : vector<2x32xf32>
    %cst_44 = arith.constant dense<0.000000e+00> : vector<2x5xf32>
    %114 = tpu.matmul %113, %10, %cst_44 {dimension_numbers = #tpu.dot_dimension_numbers<[1], [0], [0], [1], [0, 0, 1, 1], [], []>} : vector<2x32xf32>, vector<32x5xf32>, vector<2x5xf32> -> vector<2x5xf32>
    %115 = vector.broadcast %11 : vector<1x5xf32> to vector<2x5xf32>
    %116 = arith.addf %114, %115 : vector<2x5xf32>
    %c0_45 = arith.constant 0 : index
    %c1_46 = arith.constant 1 : index
    %c0_47 = arith.constant 0 : index
    %117 = vector.load %arg10[%c0_45, %c1_46, %c0_47] : memref<2x8x5xf32, #tpu.memory_space<vmem>>, vector<2x1x5xf32>
    %118 = vector.shape_cast %117 : vector<2x1x5xf32> to vector<2x5xf32>
    %119 = vector.shape_cast %116 : vector<2x5xf32> to vector<2x1x5xf32>
    tpu.vector_store %arg10[%c0_45, %c1_46, %c0_47], %119 {strides = array<i32>} : memref<2x8x5xf32, #tpu.memory_space<vmem>>, vector<2x1x5xf32>,
    %c0_48 = arith.constant 0 : index
    %c2 = arith.constant 2 : index
    %c0_49 = arith.constant 0 : index
    %120 = vector.load %arg2[%c0_48, %c2, %c0_49] : memref<2x8x512xf32, #tpu.memory_space<vmem>>, vector<2x1x512xf32>
    %121 = vector.shape_cast %120 : vector<2x1x512xf32> to vector<2x512xf32>
    %cst_50 = arith.constant dense<0.000000e+00> : vector<2x512xf32>
    %122 = tpu.matmul %86, %5, %cst_50 {dimension_numbers = #tpu.dot_dimension_numbers<[1], [0], [0], [1], [0, 0, 1, 1], [], []>} : vector<2x128xbf16>, vector<128x512xbf16>, vector<2x512xf32> -> vector<2x512xf32>
    %123 = arith.addf %121, %122 : vector<2x512xf32>
    %124 = vector.extract_strided_slice %123 {offsets = [0, 0], sizes = [2, 384], strides = [1, 1]} : vector<2x512xf32> to vector<2x384xf32>
    %125 = arith.negf %124 : vector<2x384xf32>
    %126 = math.exp %125 : vector<2x384xf32>
    %cst_51 = arith.constant 1.000000e+00 : f32
    %127 = vector.broadcast %cst_51 : f32 to vector<2x384xf32>
    %128 = arith.addf %127, %126 : vector<2x384xf32>
    %129 = arith.divf %127, %128 : vector<2x384xf32>
    %130 = vector.extract_strided_slice %123 {offsets = [0, 384], sizes = [2, 128], strides = [1, 1]} : vector<2x512xf32> to vector<2x128xf32>
    %131 = math.tanh %130 : vector<2x128xf32>
    %132 = vector.extract_strided_slice %129 {offsets = [0, 128], sizes = [2, 128], strides = [1, 1]} : vector<2x384xf32> to vector<2x128xf32>
    %133 = arith.mulf %132, %82 : vector<2x128xf32>
    %134 = vector.extract_strided_slice %129 {offsets = [0, 0], sizes = [2, 128], strides = [1, 1]} : vector<2x384xf32> to vector<2x128xf32>
    %135 = arith.mulf %134, %131 : vector<2x128xf32>
    %136 = arith.addf %133, %135 : vector<2x128xf32>
    %137 = vector.extract_strided_slice %129 {offsets = [0, 256], sizes = [2, 128], strides = [1, 1]} : vector<2x384xf32> to vector<2x128xf32>
    %138 = math.tanh %136 : vector<2x128xf32>
    %139 = arith.mulf %137, %138 : vector<2x128xf32>
    %140 = arith.truncf %139 : vector<2x128xf32> to vector<2x128xbf16>
    %cst_52 = arith.constant dense<0.000000e+00> : vector<2x32xf32>
    %141 = tpu.matmul %139, %6, %cst_52 {dimension_numbers = #tpu.dot_dimension_numbers<[1], [0], [0], [1], [0, 0, 1, 1], [], []>} : vector<2x128xf32>, vector<128x32xf32>, vector<2x32xf32> -> vector<2x32xf32>
    %142 = vector.broadcast %7 : vector<1x32xf32> to vector<2x32xf32>
    %143 = arith.addf %141, %142 : vector<2x32xf32>
    %cst_53 = arith.constant 0.000000e+00 : f32
    %144 = vector.broadcast %cst_53 : f32 to vector<2x32xf32>
    %145 = arith.maximumf %143, %144 : vector<2x32xf32>
    %cst_54 = arith.constant dense<0.000000e+00> : vector<2xf32>
    %146 = vector.multi_reduction <add>, %145, %cst_54 [1] : vector<2x32xf32> to vector<2xf32>
    %147 = vector.shape_cast %146 : vector<2xf32> to vector<2x1xf32>
    %cst_55 = arith.constant 3.200000e+01 : f32
    %148 = vector.broadcast %cst_55 : f32 to vector<2x1xf32>
    %149 = arith.divf %147, %148 : vector<2x1xf32>
    %150 = vector.broadcast %149 : vector<2x1xf32> to vector<2x32xf32>
    %151 = arith.subf %145, %150 : vector<2x32xf32>
    %152 = arith.mulf %151, %151 : vector<2x32xf32>
    %cst_56 = arith.constant dense<0.000000e+00> : vector<2xf32>
    %153 = vector.multi_reduction <add>, %152, %cst_56 [1] : vector<2x32xf32> to vector<2xf32>
    %154 = vector.shape_cast %153 : vector<2xf32> to vector<2x1xf32>
    %cst_57 = arith.constant 3.200000e+01 : f32
    %155 = vector.broadcast %cst_57 : f32 to vector<2x1xf32>
    %156 = arith.divf %154, %155 : vector<2x1xf32>
    %157 = vector.broadcast %149 : vector<2x1xf32> to vector<2x32xf32>
    %158 = arith.subf %145, %157 : vector<2x32xf32>
    %cst_58 = arith.constant 9.99999974E-6 : f32
    %159 = vector.broadcast %cst_58 : f32 to vector<2x1xf32>
    %160 = arith.addf %156, %159 : vector<2x1xf32>
    %161 = math.rsqrt %160 : vector<2x1xf32>
    %162 = vector.broadcast %161 : vector<2x1xf32> to vector<2x32xf32>
    %163 = arith.mulf %158, %162 : vector<2x32xf32>
    %164 = vector.broadcast %8 : vector<1x32xf32> to vector<2x32xf32>
    %165 = arith.mulf %163, %164 : vector<2x32xf32>
    %166 = vector.broadcast %9 : vector<1x32xf32> to vector<2x32xf32>
    %167 = arith.addf %165, %166 : vector<2x32xf32>
    %cst_59 = arith.constant dense<0.000000e+00> : vector<2x5xf32>
    %168 = tpu.matmul %167, %10, %cst_59 {dimension_numbers = #tpu.dot_dimension_numbers<[1], [0], [0], [1], [0, 0, 1, 1], [], []>} : vector<2x32xf32>, vector<32x5xf32>, vector<2x5xf32> -> vector<2x5xf32>
    %169 = vector.broadcast %11 : vector<1x5xf32> to vector<2x5xf32>
    %170 = arith.addf %168, %169 : vector<2x5xf32>
    %c0_60 = arith.constant 0 : index
    %c2_61 = arith.constant 2 : index
    %c0_62 = arith.constant 0 : index
    %171 = vector.load %arg10[%c0_60, %c2_61, %c0_62] : memref<2x8x5xf32, #tpu.memory_space<vmem>>, vector<2x1x5xf32>
    %172 = vector.shape_cast %171 : vector<2x1x5xf32> to vector<2x5xf32>
    %173 = vector.shape_cast %170 : vector<2x5xf32> to vector<2x1x5xf32>
    tpu.vector_store %arg10[%c0_60, %c2_61, %c0_62], %173 {strides = array<i32>} : memref<2x8x5xf32, #tpu.memory_space<vmem>>, vector<2x1x5xf32>,
    %c0_63 = arith.constant 0 : index
    %c3 = arith.constant 3 : index
    %c0_64 = arith.constant 0 : index
    %174 = vector.load %arg2[%c0_63, %c3, %c0_64] : memref<2x8x512xf32, #tpu.memory_space<vmem>>, vector<2x1x512xf32>
    %175 = vector.shape_cast %174 : vector<2x1x512xf32> to vector<2x512xf32>
    %cst_65 = arith.constant dense<0.000000e+00> : vector<2x512xf32>
    %176 = tpu.matmul %140, %5, %cst_65 {dimension_numbers = #tpu.dot_dimension_numbers<[1], [0], [0], [1], [0, 0, 1, 1], [], []>} : vector<2x128xbf16>, vector<128x512xbf16>, vector<2x512xf32> -> vector<2x512xf32>
    %177 = arith.addf %175, %176 : vector<2x512xf32>
    %178 = vector.extract_strided_slice %177 {offsets = [0, 0], sizes = [2, 384], strides = [1, 1]} : vector<2x512xf32> to vector<2x384xf32>
    %179 = arith.negf %178 : vector<2x384xf32>
    %180 = math.exp %179 : vector<2x384xf32>
    %cst_66 = arith.constant 1.000000e+00 : f32
    %181 = vector.broadcast %cst_66 : f32 to vector<2x384xf32>
    %182 = arith.addf %181, %180 : vector<2x384xf32>
    %183 = arith.divf %181, %182 : vector<2x384xf32>
    %184 = vector.extract_strided_slice %177 {offsets = [0, 384], sizes = [2, 128], strides = [1, 1]} : vector<2x512xf32> to vector<2x128xf32>
    %185 = math.tanh %184 : vector<2x128xf32>
    %186 = vector.extract_strided_slice %183 {offsets = [0, 128], sizes = [2, 128], strides = [1, 1]} : vector<2x384xf32> to vector<2x128xf32>
    %187 = arith.mulf %186, %136 : vector<2x128xf32>
    %188 = vector.extract_strided_slice %183 {offsets = [0, 0], sizes = [2, 128], strides = [1, 1]} : vector<2x384xf32> to vector<2x128xf32>
    %189 = arith.mulf %188, %185 : vector<2x128xf32>
    %190 = arith.addf %187, %189 : vector<2x128xf32>
    %191 = vector.extract_strided_slice %183 {offsets = [0, 256], sizes = [2, 128], strides = [1, 1]} : vector<2x384xf32> to vector<2x128xf32>
    %192 = math.tanh %190 : vector<2x128xf32>
    %193 = arith.mulf %191, %192 : vector<2x128xf32>
    %194 = arith.truncf %193 : vector<2x128xf32> to vector<2x128xbf16>
    %cst_67 = arith.constant dense<0.000000e+00> : vector<2x32xf32>
    %195 = tpu.matmul %193, %6, %cst_67 {dimension_numbers = #tpu.dot_dimension_numbers<[1], [0], [0], [1], [0, 0, 1, 1], [], []>} : vector<2x128xf32>, vector<128x32xf32>, vector<2x32xf32> -> vector<2x32xf32>
    %196 = vector.broadcast %7 : vector<1x32xf32> to vector<2x32xf32>
    %197 = arith.addf %195, %196 : vector<2x32xf32>
    %cst_68 = arith.constant 0.000000e+00 : f32
    %198 = vector.broadcast %cst_68 : f32 to vector<2x32xf32>
    %199 = arith.maximumf %197, %198 : vector<2x32xf32>
    %cst_69 = arith.constant dense<0.000000e+00> : vector<2xf32>
    %200 = vector.multi_reduction <add>, %199, %cst_69 [1] : vector<2x32xf32> to vector<2xf32>
    %201 = vector.shape_cast %200 : vector<2xf32> to vector<2x1xf32>
    %cst_70 = arith.constant 3.200000e+01 : f32
    %202 = vector.broadcast %cst_70 : f32 to vector<2x1xf32>
    %203 = arith.divf %201, %202 : vector<2x1xf32>
    %204 = vector.broadcast %203 : vector<2x1xf32> to vector<2x32xf32>
    %205 = arith.subf %199, %204 : vector<2x32xf32>
    %206 = arith.mulf %205, %205 : vector<2x32xf32>
    %cst_71 = arith.constant dense<0.000000e+00> : vector<2xf32>
    %207 = vector.multi_reduction <add>, %206, %cst_71 [1] : vector<2x32xf32> to vector<2xf32>
    %208 = vector.shape_cast %207 : vector<2xf32> to vector<2x1xf32>
    %cst_72 = arith.constant 3.200000e+01 : f32
    %209 = vector.broadcast %cst_72 : f32 to vector<2x1xf32>
    %210 = arith.divf %208, %209 : vector<2x1xf32>
    %211 = vector.broadcast %203 : vector<2x1xf32> to vector<2x32xf32>
    %212 = arith.subf %199, %211 : vector<2x32xf32>
    %cst_73 = arith.constant 9.99999974E-6 : f32
    %213 = vector.broadcast %cst_73 : f32 to vector<2x1xf32>
    %214 = arith.addf %210, %213 : vector<2x1xf32>
    %215 = math.rsqrt %214 : vector<2x1xf32>
    %216 = vector.broadcast %215 : vector<2x1xf32> to vector<2x32xf32>
    %217 = arith.mulf %212, %216 : vector<2x32xf32>
    %218 = vector.broadcast %8 : vector<1x32xf32> to vector<2x32xf32>
    %219 = arith.mulf %217, %218 : vector<2x32xf32>
    %220 = vector.broadcast %9 : vector<1x32xf32> to vector<2x32xf32>
    %221 = arith.addf %219, %220 : vector<2x32xf32>
    %cst_74 = arith.constant dense<0.000000e+00> : vector<2x5xf32>
    %222 = tpu.matmul %221, %10, %cst_74 {dimension_numbers = #tpu.dot_dimension_numbers<[1], [0], [0], [1], [0, 0, 1, 1], [], []>} : vector<2x32xf32>, vector<32x5xf32>, vector<2x5xf32> -> vector<2x5xf32>
    %223 = vector.broadcast %11 : vector<1x5xf32> to vector<2x5xf32>
    %224 = arith.addf %222, %223 : vector<2x5xf32>
    %c0_75 = arith.constant 0 : index
    %c3_76 = arith.constant 3 : index
    %c0_77 = arith.constant 0 : index
    %225 = vector.load %arg10[%c0_75, %c3_76, %c0_77] : memref<2x8x5xf32, #tpu.memory_space<vmem>>, vector<2x1x5xf32>
    %226 = vector.shape_cast %225 : vector<2x1x5xf32> to vector<2x5xf32>
    %227 = vector.shape_cast %224 : vector<2x5xf32> to vector<2x1x5xf32>
    tpu.vector_store %arg10[%c0_75, %c3_76, %c0_77], %227 {strides = array<i32>} : memref<2x8x5xf32, #tpu.memory_space<vmem>>, vector<2x1x5xf32>,
    %c0_78 = arith.constant 0 : index
    %c4 = arith.constant 4 : index
    %c0_79 = arith.constant 0 : index
    %228 = vector.load %arg2[%c0_78, %c4, %c0_79] : memref<2x8x512xf32, #tpu.memory_space<vmem>>, vector<2x1x512xf32>
    %229 = vector.shape_cast %228 : vector<2x1x512xf32> to vector<2x512xf32>
    %cst_80 = arith.constant dense<0.000000e+00> : vector<2x512xf32>
    %230 = tpu.matmul %194, %5, %cst_80 {dimension_numbers = #tpu.dot_dimension_numbers<[1], [0], [0], [1], [0, 0, 1, 1], [], []>} : vector<2x128xbf16>, vector<128x512xbf16>, vector<2x512xf32> -> vector<2x512xf32>
    %231 = arith.addf %229, %230 : vector<2x512xf32>
    %232 = vector.extract_strided_slice %231 {offsets = [0, 0], sizes = [2, 384], strides = [1, 1]} : vector<2x512xf32> to vector<2x384xf32>
    %233 = arith.negf %232 : vector<2x384xf32>
    %234 = math.exp %233 : vector<2x384xf32>
    %cst_81 = arith.constant 1.000000e+00 : f32
    %235 = vector.broadcast %cst_81 : f32 to vector<2x384xf32>
    %236 = arith.addf %235, %234 : vector<2x384xf32>
    %237 = arith.divf %235, %236 : vector<2x384xf32>
    %238 = vector.extract_strided_slice %231 {offsets = [0, 384], sizes = [2, 128], strides = [1, 1]} : vector<2x512xf32> to vector<2x128xf32>
    %239 = math.tanh %238 : vector<2x128xf32>
    %240 = vector.extract_strided_slice %237 {offsets = [0, 128], sizes = [2, 128], strides = [1, 1]} : vector<2x384xf32> to vector<2x128xf32>
    %241 = arith.mulf %240, %190 : vector<2x128xf32>
    %242 = vector.extract_strided_slice %237 {offsets = [0, 0], sizes = [2, 128], strides = [1, 1]} : vector<2x384xf32> to vector<2x128xf32>
    %243 = arith.mulf %242, %239 : vector<2x128xf32>
    %244 = arith.addf %241, %243 : vector<2x128xf32>
    %245 = vector.extract_strided_slice %237 {offsets = [0, 256], sizes = [2, 128], strides = [1, 1]} : vector<2x384xf32> to vector<2x128xf32>
    %246 = math.tanh %244 : vector<2x128xf32>
    %247 = arith.mulf %245, %246 : vector<2x128xf32>
    %248 = arith.truncf %247 : vector<2x128xf32> to vector<2x128xbf16>
    %cst_82 = arith.constant dense<0.000000e+00> : vector<2x32xf32>
    %249 = tpu.matmul %247, %6, %cst_82 {dimension_numbers = #tpu.dot_dimension_numbers<[1], [0], [0], [1], [0, 0, 1, 1], [], []>} : vector<2x128xf32>, vector<128x32xf32>, vector<2x32xf32> -> vector<2x32xf32>
    %250 = vector.broadcast %7 : vector<1x32xf32> to vector<2x32xf32>
    %251 = arith.addf %249, %250 : vector<2x32xf32>
    %cst_83 = arith.constant 0.000000e+00 : f32
    %252 = vector.broadcast %cst_83 : f32 to vector<2x32xf32>
    %253 = arith.maximumf %251, %252 : vector<2x32xf32>
    %cst_84 = arith.constant dense<0.000000e+00> : vector<2xf32>
    %254 = vector.multi_reduction <add>, %253, %cst_84 [1] : vector<2x32xf32> to vector<2xf32>
    %255 = vector.shape_cast %254 : vector<2xf32> to vector<2x1xf32>
    %cst_85 = arith.constant 3.200000e+01 : f32
    %256 = vector.broadcast %cst_85 : f32 to vector<2x1xf32>
    %257 = arith.divf %255, %256 : vector<2x1xf32>
    %258 = vector.broadcast %257 : vector<2x1xf32> to vector<2x32xf32>
    %259 = arith.subf %253, %258 : vector<2x32xf32>
    %260 = arith.mulf %259, %259 : vector<2x32xf32>
    %cst_86 = arith.constant dense<0.000000e+00> : vector<2xf32>
    %261 = vector.multi_reduction <add>, %260, %cst_86 [1] : vector<2x32xf32> to vector<2xf32>
    %262 = vector.shape_cast %261 : vector<2xf32> to vector<2x1xf32>
    %cst_87 = arith.constant 3.200000e+01 : f32
    %263 = vector.broadcast %cst_87 : f32 to vector<2x1xf32>
    %264 = arith.divf %262, %263 : vector<2x1xf32>
    %265 = vector.broadcast %257 : vector<2x1xf32> to vector<2x32xf32>
    %266 = arith.subf %253, %265 : vector<2x32xf32>
    %cst_88 = arith.constant 9.99999974E-6 : f32
    %267 = vector.broadcast %cst_88 : f32 to vector<2x1xf32>
    %268 = arith.addf %264, %267 : vector<2x1xf32>
    %269 = math.rsqrt %268 : vector<2x1xf32>
    %270 = vector.broadcast %269 : vector<2x1xf32> to vector<2x32xf32>
    %271 = arith.mulf %266, %270 : vector<2x32xf32>
    %272 = vector.broadcast %8 : vector<1x32xf32> to vector<2x32xf32>
    %273 = arith.mulf %271, %272 : vector<2x32xf32>
    %274 = vector.broadcast %9 : vector<1x32xf32> to vector<2x32xf32>
    %275 = arith.addf %273, %274 : vector<2x32xf32>
    %cst_89 = arith.constant dense<0.000000e+00> : vector<2x5xf32>
    %276 = tpu.matmul %275, %10, %cst_89 {dimension_numbers = #tpu.dot_dimension_numbers<[1], [0], [0], [1], [0, 0, 1, 1], [], []>} : vector<2x32xf32>, vector<32x5xf32>, vector<2x5xf32> -> vector<2x5xf32>
    %277 = vector.broadcast %11 : vector<1x5xf32> to vector<2x5xf32>
    %278 = arith.addf %276, %277 : vector<2x5xf32>
    %c0_90 = arith.constant 0 : index
    %c4_91 = arith.constant 4 : index
    %c0_92 = arith.constant 0 : index
    %279 = vector.load %arg10[%c0_90, %c4_91, %c0_92] : memref<2x8x5xf32, #tpu.memory_space<vmem>>, vector<2x1x5xf32>
    %280 = vector.shape_cast %279 : vector<2x1x5xf32> to vector<2x5xf32>
    %281 = vector.shape_cast %278 : vector<2x5xf32> to vector<2x1x5xf32>
    tpu.vector_store %arg10[%c0_90, %c4_91, %c0_92], %281 {strides = array<i32>} : memref<2x8x5xf32, #tpu.memory_space<vmem>>, vector<2x1x5xf32>,
    %c0_93 = arith.constant 0 : index
    %c5 = arith.constant 5 : index
    %c0_94 = arith.constant 0 : index
    %282 = vector.load %arg2[%c0_93, %c5, %c0_94] : memref<2x8x512xf32, #tpu.memory_space<vmem>>, vector<2x1x512xf32>
    %283 = vector.shape_cast %282 : vector<2x1x512xf32> to vector<2x512xf32>
    %cst_95 = arith.constant dense<0.000000e+00> : vector<2x512xf32>
    %284 = tpu.matmul %248, %5, %cst_95 {dimension_numbers = #tpu.dot_dimension_numbers<[1], [0], [0], [1], [0, 0, 1, 1], [], []>} : vector<2x128xbf16>, vector<128x512xbf16>, vector<2x512xf32> -> vector<2x512xf32>
    %285 = arith.addf %283, %284 : vector<2x512xf32>
    %286 = vector.extract_strided_slice %285 {offsets = [0, 0], sizes = [2, 384], strides = [1, 1]} : vector<2x512xf32> to vector<2x384xf32>
    %287 = arith.negf %286 : vector<2x384xf32>
    %288 = math.exp %287 : vector<2x384xf32>
    %cst_96 = arith.constant 1.000000e+00 : f32
    %289 = vector.broadcast %cst_96 : f32 to vector<2x384xf32>
    %290 = arith.addf %289, %288 : vector<2x384xf32>
    %291 = arith.divf %289, %290 : vector<2x384xf32>
    %292 = vector.extract_strided_slice %285 {offsets = [0, 384], sizes = [2, 128], strides = [1, 1]} : vector<2x512xf32> to vector<2x128xf32>
    %293 = math.tanh %292 : vector<2x128xf32>
    %294 = vector.extract_strided_slice %291 {offsets = [0, 128], sizes = [2, 128], strides = [1, 1]} : vector<2x384xf32> to vector<2x128xf32>
    %295 = arith.mulf %294, %244 : vector<2x128xf32>
    %296 = vector.extract_strided_slice %291 {offsets = [0, 0], sizes = [2, 128], strides = [1, 1]} : vector<2x384xf32> to vector<2x128xf32>
    %297 = arith.mulf %296, %293 : vector<2x128xf32>
    %298 = arith.addf %295, %297 : vector<2x128xf32>
    %299 = vector.extract_strided_slice %291 {offsets = [0, 256], sizes = [2, 128], strides = [1, 1]} : vector<2x384xf32> to vector<2x128xf32>
    %300 = math.tanh %298 : vector<2x128xf32>
    %301 = arith.mulf %299, %300 : vector<2x128xf32>
    %302 = arith.truncf %301 : vector<2x128xf32> to vector<2x128xbf16>
    %cst_97 = arith.constant dense<0.000000e+00> : vector<2x32xf32>
    %303 = tpu.matmul %301, %6, %cst_97 {dimension_numbers = #tpu.dot_dimension_numbers<[1], [0], [0], [1], [0, 0, 1, 1], [], []>} : vector<2x128xf32>, vector<128x32xf32>, vector<2x32xf32> -> vector<2x32xf32>
    %304 = vector.broadcast %7 : vector<1x32xf32> to vector<2x32xf32>
    %305 = arith.addf %303, %304 : vector<2x32xf32>
    %cst_98 = arith.constant 0.000000e+00 : f32
    %306 = vector.broadcast %cst_98 : f32 to vector<2x32xf32>
    %307 = arith.maximumf %305, %306 : vector<2x32xf32>
    %cst_99 = arith.constant dense<0.000000e+00> : vector<2xf32>
    %308 = vector.multi_reduction <add>, %307, %cst_99 [1] : vector<2x32xf32> to vector<2xf32>
    %309 = vector.shape_cast %308 : vector<2xf32> to vector<2x1xf32>
    %cst_100 = arith.constant 3.200000e+01 : f32
    %310 = vector.broadcast %cst_100 : f32 to vector<2x1xf32>
    %311 = arith.divf %309, %310 : vector<2x1xf32>
    %312 = vector.broadcast %311 : vector<2x1xf32> to vector<2x32xf32>
    %313 = arith.subf %307, %312 : vector<2x32xf32>
    %314 = arith.mulf %313, %313 : vector<2x32xf32>
    %cst_101 = arith.constant dense<0.000000e+00> : vector<2xf32>
    %315 = vector.multi_reduction <add>, %314, %cst_101 [1] : vector<2x32xf32> to vector<2xf32>
    %316 = vector.shape_cast %315 : vector<2xf32> to vector<2x1xf32>
    %cst_102 = arith.constant 3.200000e+01 : f32
    %317 = vector.broadcast %cst_102 : f32 to vector<2x1xf32>
    %318 = arith.divf %316, %317 : vector<2x1xf32>
    %319 = vector.broadcast %311 : vector<2x1xf32> to vector<2x32xf32>
    %320 = arith.subf %307, %319 : vector<2x32xf32>
    %cst_103 = arith.constant 9.99999974E-6 : f32
    %321 = vector.broadcast %cst_103 : f32 to vector<2x1xf32>
    %322 = arith.addf %318, %321 : vector<2x1xf32>
    %323 = math.rsqrt %322 : vector<2x1xf32>
    %324 = vector.broadcast %323 : vector<2x1xf32> to vector<2x32xf32>
    %325 = arith.mulf %320, %324 : vector<2x32xf32>
    %326 = vector.broadcast %8 : vector<1x32xf32> to vector<2x32xf32>
    %327 = arith.mulf %325, %326 : vector<2x32xf32>
    %328 = vector.broadcast %9 : vector<1x32xf32> to vector<2x32xf32>
    %329 = arith.addf %327, %328 : vector<2x32xf32>
    %cst_104 = arith.constant dense<0.000000e+00> : vector<2x5xf32>
    %330 = tpu.matmul %329, %10, %cst_104 {dimension_numbers = #tpu.dot_dimension_numbers<[1], [0], [0], [1], [0, 0, 1, 1], [], []>} : vector<2x32xf32>, vector<32x5xf32>, vector<2x5xf32> -> vector<2x5xf32>
    %331 = vector.broadcast %11 : vector<1x5xf32> to vector<2x5xf32>
    %332 = arith.addf %330, %331 : vector<2x5xf32>
    %c0_105 = arith.constant 0 : index
    %c5_106 = arith.constant 5 : index
    %c0_107 = arith.constant 0 : index
    %333 = vector.load %arg10[%c0_105, %c5_106, %c0_107] : memref<2x8x5xf32, #tpu.memory_space<vmem>>, vector<2x1x5xf32>
    %334 = vector.shape_cast %333 : vector<2x1x5xf32> to vector<2x5xf32>
    %335 = vector.shape_cast %332 : vector<2x5xf32> to vector<2x1x5xf32>
    tpu.vector_store %arg10[%c0_105, %c5_106, %c0_107], %335 {strides = array<i32>} : memref<2x8x5xf32, #tpu.memory_space<vmem>>, vector<2x1x5xf32>,
    %c0_108 = arith.constant 0 : index
    %c6 = arith.constant 6 : index
    %c0_109 = arith.constant 0 : index
    %336 = vector.load %arg2[%c0_108, %c6, %c0_109] : memref<2x8x512xf32, #tpu.memory_space<vmem>>, vector<2x1x512xf32>
    %337 = vector.shape_cast %336 : vector<2x1x512xf32> to vector<2x512xf32>
    %cst_110 = arith.constant dense<0.000000e+00> : vector<2x512xf32>
    %338 = tpu.matmul %302, %5, %cst_110 {dimension_numbers = #tpu.dot_dimension_numbers<[1], [0], [0], [1], [0, 0, 1, 1], [], []>} : vector<2x128xbf16>, vector<128x512xbf16>, vector<2x512xf32> -> vector<2x512xf32>
    %339 = arith.addf %337, %338 : vector<2x512xf32>
    %340 = vector.extract_strided_slice %339 {offsets = [0, 0], sizes = [2, 384], strides = [1, 1]} : vector<2x512xf32> to vector<2x384xf32>
    %341 = arith.negf %340 : vector<2x384xf32>
    %342 = math.exp %341 : vector<2x384xf32>
    %cst_111 = arith.constant 1.000000e+00 : f32
    %343 = vector.broadcast %cst_111 : f32 to vector<2x384xf32>
    %344 = arith.addf %343, %342 : vector<2x384xf32>
    %345 = arith.divf %343, %344 : vector<2x384xf32>
    %346 = vector.extract_strided_slice %339 {offsets = [0, 384], sizes = [2, 128], strides = [1, 1]} : vector<2x512xf32> to vector<2x128xf32>
    %347 = math.tanh %346 : vector<2x128xf32>
    %348 = vector.extract_strided_slice %345 {offsets = [0, 128], sizes = [2, 128], strides = [1, 1]} : vector<2x384xf32> to vector<2x128xf32>
    %349 = arith.mulf %348, %298 : vector<2x128xf32>
    %350 = vector.extract_strided_slice %345 {offsets = [0, 0], sizes = [2, 128], strides = [1, 1]} : vector<2x384xf32> to vector<2x128xf32>
    %351 = arith.mulf %350, %347 : vector<2x128xf32>
    %352 = arith.addf %349, %351 : vector<2x128xf32>
    %353 = vector.extract_strided_slice %345 {offsets = [0, 256], sizes = [2, 128], strides = [1, 1]} : vector<2x384xf32> to vector<2x128xf32>
    %354 = math.tanh %352 : vector<2x128xf32>
    %355 = arith.mulf %353, %354 : vector<2x128xf32>
    %356 = arith.truncf %355 : vector<2x128xf32> to vector<2x128xbf16>
    %cst_112 = arith.constant dense<0.000000e+00> : vector<2x32xf32>
    %357 = tpu.matmul %355, %6, %cst_112 {dimension_numbers = #tpu.dot_dimension_numbers<[1], [0], [0], [1], [0, 0, 1, 1], [], []>} : vector<2x128xf32>, vector<128x32xf32>, vector<2x32xf32> -> vector<2x32xf32>
    %358 = vector.broadcast %7 : vector<1x32xf32> to vector<2x32xf32>
    %359 = arith.addf %357, %358 : vector<2x32xf32>
    %cst_113 = arith.constant 0.000000e+00 : f32
    %360 = vector.broadcast %cst_113 : f32 to vector<2x32xf32>
    %361 = arith.maximumf %359, %360 : vector<2x32xf32>
    %cst_114 = arith.constant dense<0.000000e+00> : vector<2xf32>
    %362 = vector.multi_reduction <add>, %361, %cst_114 [1] : vector<2x32xf32> to vector<2xf32>
    %363 = vector.shape_cast %362 : vector<2xf32> to vector<2x1xf32>
    %cst_115 = arith.constant 3.200000e+01 : f32
    %364 = vector.broadcast %cst_115 : f32 to vector<2x1xf32>
    %365 = arith.divf %363, %364 : vector<2x1xf32>
    %366 = vector.broadcast %365 : vector<2x1xf32> to vector<2x32xf32>
    %367 = arith.subf %361, %366 : vector<2x32xf32>
    %368 = arith.mulf %367, %367 : vector<2x32xf32>
    %cst_116 = arith.constant dense<0.000000e+00> : vector<2xf32>
    %369 = vector.multi_reduction <add>, %368, %cst_116 [1] : vector<2x32xf32> to vector<2xf32>
    %370 = vector.shape_cast %369 : vector<2xf32> to vector<2x1xf32>
    %cst_117 = arith.constant 3.200000e+01 : f32
    %371 = vector.broadcast %cst_117 : f32 to vector<2x1xf32>
    %372 = arith.divf %370, %371 : vector<2x1xf32>
    %373 = vector.broadcast %365 : vector<2x1xf32> to vector<2x32xf32>
    %374 = arith.subf %361, %373 : vector<2x32xf32>
    %cst_118 = arith.constant 9.99999974E-6 : f32
    %375 = vector.broadcast %cst_118 : f32 to vector<2x1xf32>
    %376 = arith.addf %372, %375 : vector<2x1xf32>
    %377 = math.rsqrt %376 : vector<2x1xf32>
    %378 = vector.broadcast %377 : vector<2x1xf32> to vector<2x32xf32>
    %379 = arith.mulf %374, %378 : vector<2x32xf32>
    %380 = vector.broadcast %8 : vector<1x32xf32> to vector<2x32xf32>
    %381 = arith.mulf %379, %380 : vector<2x32xf32>
    %382 = vector.broadcast %9 : vector<1x32xf32> to vector<2x32xf32>
    %383 = arith.addf %381, %382 : vector<2x32xf32>
    %cst_119 = arith.constant dense<0.000000e+00> : vector<2x5xf32>
    %384 = tpu.matmul %383, %10, %cst_119 {dimension_numbers = #tpu.dot_dimension_numbers<[1], [0], [0], [1], [0, 0, 1, 1], [], []>} : vector<2x32xf32>, vector<32x5xf32>, vector<2x5xf32> -> vector<2x5xf32>
    %385 = vector.broadcast %11 : vector<1x5xf32> to vector<2x5xf32>
    %386 = arith.addf %384, %385 : vector<2x5xf32>
    %c0_120 = arith.constant 0 : index
    %c6_121 = arith.constant 6 : index
    %c0_122 = arith.constant 0 : index
    %387 = vector.load %arg10[%c0_120, %c6_121, %c0_122] : memref<2x8x5xf32, #tpu.memory_space<vmem>>, vector<2x1x5xf32>
    %388 = vector.shape_cast %387 : vector<2x1x5xf32> to vector<2x5xf32>
    %389 = vector.shape_cast %386 : vector<2x5xf32> to vector<2x1x5xf32>
    tpu.vector_store %arg10[%c0_120, %c6_121, %c0_122], %389 {strides = array<i32>} : memref<2x8x5xf32, #tpu.memory_space<vmem>>, vector<2x1x5xf32>,
    %c0_123 = arith.constant 0 : index
    %c7 = arith.constant 7 : index
    %c0_124 = arith.constant 0 : index
    %390 = vector.load %arg2[%c0_123, %c7, %c0_124] : memref<2x8x512xf32, #tpu.memory_space<vmem>>, vector<2x1x512xf32>
    %391 = vector.shape_cast %390 : vector<2x1x512xf32> to vector<2x512xf32>
    %cst_125 = arith.constant dense<0.000000e+00> : vector<2x512xf32>
    %392 = tpu.matmul %356, %5, %cst_125 {dimension_numbers = #tpu.dot_dimension_numbers<[1], [0], [0], [1], [0, 0, 1, 1], [], []>} : vector<2x128xbf16>, vector<128x512xbf16>, vector<2x512xf32> -> vector<2x512xf32>
    %393 = arith.addf %391, %392 : vector<2x512xf32>
    %394 = vector.extract_strided_slice %393 {offsets = [0, 0], sizes = [2, 384], strides = [1, 1]} : vector<2x512xf32> to vector<2x384xf32>
    %395 = arith.negf %394 : vector<2x384xf32>
    %396 = math.exp %395 : vector<2x384xf32>
    %cst_126 = arith.constant 1.000000e+00 : f32
    %397 = vector.broadcast %cst_126 : f32 to vector<2x384xf32>
    %398 = arith.addf %397, %396 : vector<2x384xf32>
    %399 = arith.divf %397, %398 : vector<2x384xf32>
    %400 = vector.extract_strided_slice %393 {offsets = [0, 384], sizes = [2, 128], strides = [1, 1]} : vector<2x512xf32> to vector<2x128xf32>
    %401 = math.tanh %400 : vector<2x128xf32>
    %402 = vector.extract_strided_slice %399 {offsets = [0, 128], sizes = [2, 128], strides = [1, 1]} : vector<2x384xf32> to vector<2x128xf32>
    %403 = arith.mulf %402, %352 : vector<2x128xf32>
    %404 = vector.extract_strided_slice %399 {offsets = [0, 0], sizes = [2, 128], strides = [1, 1]} : vector<2x384xf32> to vector<2x128xf32>
    %405 = arith.mulf %404, %401 : vector<2x128xf32>
    %406 = arith.addf %403, %405 : vector<2x128xf32>
    %407 = vector.extract_strided_slice %399 {offsets = [0, 256], sizes = [2, 128], strides = [1, 1]} : vector<2x384xf32> to vector<2x128xf32>
    %408 = math.tanh %406 : vector<2x128xf32>
    %409 = arith.mulf %407, %408 : vector<2x128xf32>
    %410 = arith.truncf %409 : vector<2x128xf32> to vector<2x128xbf16>
    %cst_127 = arith.constant dense<0.000000e+00> : vector<2x32xf32>
    %411 = tpu.matmul %409, %6, %cst_127 {dimension_numbers = #tpu.dot_dimension_numbers<[1], [0], [0], [1], [0, 0, 1, 1], [], []>} : vector<2x128xf32>, vector<128x32xf32>, vector<2x32xf32> -> vector<2x32xf32>
    %412 = vector.broadcast %7 : vector<1x32xf32> to vector<2x32xf32>
    %413 = arith.addf %411, %412 : vector<2x32xf32>
    %cst_128 = arith.constant 0.000000e+00 : f32
    %414 = vector.broadcast %cst_128 : f32 to vector<2x32xf32>
    %415 = arith.maximumf %413, %414 : vector<2x32xf32>
    %cst_129 = arith.constant dense<0.000000e+00> : vector<2xf32>
    %416 = vector.multi_reduction <add>, %415, %cst_129 [1] : vector<2x32xf32> to vector<2xf32>
    %417 = vector.shape_cast %416 : vector<2xf32> to vector<2x1xf32>
    %cst_130 = arith.constant 3.200000e+01 : f32
    %418 = vector.broadcast %cst_130 : f32 to vector<2x1xf32>
    %419 = arith.divf %417, %418 : vector<2x1xf32>
    %420 = vector.broadcast %419 : vector<2x1xf32> to vector<2x32xf32>
    %421 = arith.subf %415, %420 : vector<2x32xf32>
    %422 = arith.mulf %421, %421 : vector<2x32xf32>
    %cst_131 = arith.constant dense<0.000000e+00> : vector<2xf32>
    %423 = vector.multi_reduction <add>, %422, %cst_131 [1] : vector<2x32xf32> to vector<2xf32>
    %424 = vector.shape_cast %423 : vector<2xf32> to vector<2x1xf32>
    %cst_132 = arith.constant 3.200000e+01 : f32
    %425 = vector.broadcast %cst_132 : f32 to vector<2x1xf32>
    %426 = arith.divf %424, %425 : vector<2x1xf32>
    %427 = vector.broadcast %419 : vector<2x1xf32> to vector<2x32xf32>
    %428 = arith.subf %415, %427 : vector<2x32xf32>
    %cst_133 = arith.constant 9.99999974E-6 : f32
    %429 = vector.broadcast %cst_133 : f32 to vector<2x1xf32>
    %430 = arith.addf %426, %429 : vector<2x1xf32>
    %431 = math.rsqrt %430 : vector<2x1xf32>
    %432 = vector.broadcast %431 : vector<2x1xf32> to vector<2x32xf32>
    %433 = arith.mulf %428, %432 : vector<2x32xf32>
    %434 = vector.broadcast %8 : vector<1x32xf32> to vector<2x32xf32>
    %435 = arith.mulf %433, %434 : vector<2x32xf32>
    %436 = vector.broadcast %9 : vector<1x32xf32> to vector<2x32xf32>
    %437 = arith.addf %435, %436 : vector<2x32xf32>
    %cst_134 = arith.constant dense<0.000000e+00> : vector<2x5xf32>
    %438 = tpu.matmul %437, %10, %cst_134 {dimension_numbers = #tpu.dot_dimension_numbers<[1], [0], [0], [1], [0, 0, 1, 1], [], []>} : vector<2x32xf32>, vector<32x5xf32>, vector<2x5xf32> -> vector<2x5xf32>
    %439 = vector.broadcast %11 : vector<1x5xf32> to vector<2x5xf32>
    %440 = arith.addf %438, %439 : vector<2x5xf32>
    %c0_135 = arith.constant 0 : index
    %c7_136 = arith.constant 7 : index
    %c0_137 = arith.constant 0 : index
    %441 = vector.load %arg10[%c0_135, %c7_136, %c0_137] : memref<2x8x5xf32, #tpu.memory_space<vmem>>, vector<2x1x5xf32>
    %442 = vector.shape_cast %441 : vector<2x1x5xf32> to vector<2x5xf32>
    %443 = vector.shape_cast %440 : vector<2x5xf32> to vector<2x1x5xf32>
    tpu.vector_store %arg10[%c0_135, %c7_136, %c0_137], %443 {strides = array<i32>} : memref<2x8x5xf32, #tpu.memory_space<vmem>>, vector<2x1x5xf32>,
    %c0_138 = arith.constant 0 : index
    %c0_139 = arith.constant 0 : index
    %444 = vector.load %arg11[%c0_138, %c0_139] : memref<2x128xbf16, #tpu.memory_space<vmem>>, vector<2x128xbf16>
    tpu.vector_store %arg11[%c0_138, %c0_139], %410 {strides = array<i32>} : memref<2x128xbf16, #tpu.memory_space<vmem>>, vector<2x128xbf16>,
    %c0_140 = arith.constant 0 : index
    %c0_141 = arith.constant 0 : index
    %445 = vector.load %arg12[%c0_140, %c0_141] : memref<2x128xf32, #tpu.memory_space<vmem>>, vector<2x128xf32>
    tpu.vector_store %arg12[%c0_140, %c0_141], %406 {strides = array<i32>} : memref<2x128xf32, #tpu.memory_space<vmem>>, vector<2x128xf32>,
    return
  }
  func.func @transform_0(%arg0: i32, %arg1: i32) -> (i32, i32, i32) {
    %c0_i32 = arith.constant 0 : i32
    %c0_i32_0 = arith.constant 0 : i32
    return %arg0, %arg1, %c0_i32 : i32, i32, i32
  }
  func.func @transform_1(%arg0: i32, %arg1: i32) -> (i32, i32) {
    %c0_i32 = arith.constant 0 : i32
    %c0_i32_0 = arith.constant 0 : i32
    %c0_i32_1 = arith.constant 0 : i32
    return %c0_i32, %c0_i32_0 : i32, i32
  }
  func.func @transform_2(%arg0: i32, %arg1: i32) -> (i32, i32) {
    %c0_i32 = arith.constant 0 : i32
    %c0_i32_0 = arith.constant 0 : i32
    %c0_i32_1 = arith.constant 0 : i32
    return %c0_i32, %c0_i32_0 : i32, i32
  }
  func.func @transform_3(%arg0: i32, %arg1: i32) -> (i32, i32) {
    %c0_i32 = arith.constant 0 : i32
    %c0_i32_0 = arith.constant 0 : i32
    %c0_i32_1 = arith.constant 0 : i32
    return %c0_i32, %c0_i32_0 : i32, i32
  }
  func.func @transform_4(%arg0: i32, %arg1: i32) -> (i32, i32) {
    %c0_i32 = arith.constant 0 : i32
    %c0_i32_0 = arith.constant 0 : i32
    %c0_i32_1 = arith.constant 0 : i32
    return %c0_i32, %c0_i32_0 : i32, i32
  }
  func.func @transform_5(%arg0: i32, %arg1: i32) -> (i32, i32) {
    %c0_i32 = arith.constant 0 : i32
    %c0_i32_0 = arith.constant 0 : i32
    %c0_i32_1 = arith.constant 0 : i32
    return %c0_i32, %c0_i32_0 : i32, i32
  }
  func.func @transform_6(%arg0: i32, %arg1: i32) -> (i32, i32) {
    %c0_i32 = arith.constant 0 : i32
    %c0_i32_0 = arith.constant 0 : i32
    %c0_i32_1 = arith.constant 0 : i32
    return %c0_i32, %c0_i32_0 : i32, i32
  }
  func.func @transform_7(%arg0: i32, %arg1: i32) -> (i32, i32) {
    %c0_i32 = arith.constant 0 : i32
    %c0_i32_0 = arith.constant 0 : i32
    %c0_i32_1 = arith.constant 0 : i32
    return %c0_i32, %c0_i32_0 : i32, i32
  }
  func.func @transform_8(%arg0: i32, %arg1: i32) -> (i32, i32, i32) {
    %c0_i32 = arith.constant 0 : i32
    %c0_i32_0 = arith.constant 0 : i32
    return %arg0, %arg1, %c0_i32 : i32, i32, i32
  }
}

</mosaic_0001>

<llo_original>
// kernel: classifier_forward.2
$region0: #{classifier_forward.2}
  #allocation0 [shape = 'u32[]', space=smem, size = 0x4, offset = 0x4, fixed_abs, tag = 'smem constant byte address 0x4 - core index']
  #allocation1 [shape = 'u32[144,128]{1,0:T(1,128)}', space=vmem, size = 0x12000, scoped, tag = 'internal scratch']
  %s0 = inlined_call_operand.vmem [shape: bf16[16,2048], index: 0, kind: input, shape index: {}]
  %s1 = inlined_call_operand.hbm [shape: bf16[2048,512], index: 1, kind: input, shape index: {}]
  %s2 = inlined_call_operand.hbm [shape: f32[1,512], index: 2, kind: input, shape index: {}]
  %s3 = inlined_call_operand.vmem [shape: f32[16,512], index: 3, kind: output, shape index: {}]
  %s4 = sld [smem:[#allocation0]]
  $region30: #{classifier_forward.2} parent=0
    _
  %s6 = ssub.s32 1, %s4
  %s7 = scalar_select 0, %s6, %s4
  $region1: #{classifier_forward.2} parent=0
    #allocation2 [shape = 'u8[2097152]{0}', space=vmem, size = 0x200000, scoped, tag = 'input window, operand 1, single buffered']
    #allocation3 [shape = 's32[1]{0}', space=sflag, size = 0x4, scoped, tag = 'scoped memory for classifier_forward.2']
    #allocation4 [shape = 'u8[2048]{0}', space=vmem, size = 0x800, scoped, tag = 'input window, operand 2, single buffered']
    #allocation5 [shape = 's32[1]{0}', space=sflag, size = 0x4, scoped, tag = 'scoped memory for classifier_forward.2']
    %8 = vsyncpa [#allocation3], 0
    %9 = vsyncpa [#allocation5], 0
    // Predicated region
    $region2: #{classifier_forward.2} parent=1 // pred_check
      _
    $region3: #{classifier_forward.2} parent=1 // pred_check_branch
      %11 = sbr.rel (0) target = $region5
    $region4: #{classifier_forward.2} parent=1 // pred_region
      _
    $region5: #{classifier_forward.2} parent=1 // pred_fallthru
      _
    // Predicated region
    $region6: #{classifier_forward.2} parent=1 // pred_check
      _
    $region7: #{classifier_forward.2} parent=1 // pred_check_branch
      %13 = sbr.rel (0) target = $region9
    $region8: #{classifier_forward.2} parent=1 // pred_region
      %s15 = ssub.s32 65536, 65536
      %16 = vsyncadd [#allocation3], %s15
      %s17 = sshll.u32 [#allocation2], 4
      %s18 = int_to_ptr.vmem [resolvable:$true] %s17
      %23 = dma.hbm_to_vmem [thread:$0]  %s1, 65536, %s18, [#allocation3], 256, 256, 16
    $region9: #{classifier_forward.2} parent=1 // pred_fallthru
      _
    // Predicated region
    $region10: #{classifier_forward.2} parent=1 // pred_check
      _
    $region11: #{classifier_forward.2} parent=1 // pred_check_branch
      %25 = sbr.rel (0) target = $region13
    $region12: #{classifier_forward.2} parent=1 // pred_region
      %s27 = ssub.s32 64, 64
      %28 = vsyncadd [#allocation5], %s27
      %s30 = sshll.u32 [#allocation4], 4
      %s31 = int_to_ptr.vmem [resolvable:$true] %s30
      %33 = dma.hbm_to_vmem [thread:$0]  %s2, 64, %s31, [#allocation5]
    $region13: #{classifier_forward.2} parent=1 // pred_fallthru
      _
    // Predicated region
    $region14: #{classifier_forward.2} parent=1 // pred_check
      _
    $region15: #{classifier_forward.2} parent=1 // pred_check_branch
      %35 = sbr.rel (0) target = $region17
    $region16: #{classifier_forward.2} parent=1 // pred_region
      %36 = dma.done [#allocation3], 65536
    $region17: #{classifier_forward.2} parent=1 // pred_fallthru
      _
    // Predicated region
    $region18: #{classifier_forward.2} parent=1 // pred_check
      _
    $region19: #{classifier_forward.2} parent=1 // pred_check_branch
      %38 = sbr.rel (0) target = $region21
    $region20: #{classifier_forward.2} parent=1 // pred_region
      %39 = dma.done [#allocation5], 64
    $region21: #{classifier_forward.2} parent=1 // pred_fallthru
      _
    %v40 = vld [vmem:[%s0] sm:$0xff]
    %v41 = vld [vmem:[%s0 + $0x8] sm:$0xff]
    %v42 = vld [vmem:[%s0 + $0x10] sm:$0xff]
    %v43 = vld [vmem:[%s0 + $0x18] sm:$0xff]
    %v44 = vld [vmem:[%s0 + $0x20] sm:$0xff]
    %v45 = vld [vmem:[%s0 + $0x28] sm:$0xff]
    %v46 = vld [vmem:[%s0 + $0x30] sm:$0xff]
    %v47 = vld [vmem:[%s0 + $0x38] sm:$0xff]
    %v48 = vld [vmem:[%s0 + $0x40] sm:$0xff]
    %v49 = vld [vmem:[%s0 + $0x48] sm:$0xff]
    %v50 = vld [vmem:[%s0 + $0x50] sm:$0xff]
    %v51 = vld [vmem:[%s0 + $0x58] sm:$0xff]
    %v52 = vld [vmem:[%s0 + $0x60] sm:$0xff]
    %v53 = vld [vmem:[%s0 + $0x68] sm:$0xff]
    %v54 = vld [vmem:[%s0 + $0x70] sm:$0xff]
    %v55 = vld [vmem:[%s0 + $0x78] sm:$0xff]
    %v56 = vld [vmem:[#allocation2] sm:$0xff]
    %v57 = vld [vmem:[#allocation2 + $0x8] sm:$0xff]
    %v58 = vld [vmem:[#allocation2 + $0x10] sm:$0xff]
    %v59 = vld [vmem:[#allocation2 + $0x18] sm:$0xff]
    %v60 = vld [vmem:[#allocation2 + $0x20] sm:$0xff]
    %v61 = vld [vmem:[#allocation2 + $0x28] sm:$0xff]
    %v62 = vld [vmem:[#allocation2 + $0x30] sm:$0xff]
    %v63 = vld [vmem:[#allocation2 + $0x38] sm:$0xff]
    %v64 = vld [vmem:[#allocation2 + $0x40] sm:$0xff]
    %v65 = vld [vmem:[#allocation2 + $0x48] sm:$0xff]
    %v66 = vld [vmem:[#allocation2 + $0x50] sm:$0xff]
    %v67 = vld [vmem:[#allocation2 + $0x58] sm:$0xff]
    %v68 = vld [vmem:[#allocation2 + $0x60] sm:$0xff]
    %v69 = vld [vmem:[#allocation2 + $0x68] sm:$0xff]
    %v70 = vld [vmem:[#allocation2 + $0x70] sm:$0xff]
    %v71 = vld [vmem:[#allocation2 + $0x78] sm:$0xff]
    %v72 = vld [vmem:[#allocation2 + $0x80] sm:$0xff]
    %v73 = vld [vmem:[#allocation2 + $0x88] sm:$0xff]
    %v74 = vld [vmem:[#allocation2 + $0x90] sm:$0xff]
    %v75 = vld [vmem:[#allocation2 + $0x98] sm:$0xff]
    %v76 = vld [vmem:[#allocation2 + $0xa0] sm:$0xff]
    %v77 = vld [vmem:[#allocation2 + $0xa8] sm:$0xff]
    %v78 = vld [vmem:[#allocation2 + $0xb0] sm:$0xff]
    %v79 = vld [vmem:[#allocation2 + $0xb8] sm:$0xff]
    %v80 = vld [vmem:[#allocation2 + $0xc0] sm:$0xff]
    %v81 = vld [vmem:[#allocation2 + $0xc8] sm:$0xff]
    %v82 = vld [vmem:[#allocation2 + $0xd0] sm:$0xff]
    %v83 = vld [vmem:[#allocation2 + $0xd8] sm:$0xff]
    %v84 = vld [vmem:[#allocation2 + $0xe0] sm:$0xff]
    %v85 = vld [vmem:[#allocation2 + $0xe8] sm:$0xff]
    %v86 = vld [vmem:[#allocation2 + $0xf0] sm:$0xff]
    %v87 = vld [vmem:[#allocation2 + $0xf8] sm:$0xff]
    %v88 = vld [vmem:[#allocation2 + $0x100] sm:$0xff]
    %v89 = vld [vmem:[#allocation2 + $0x108] sm:$0xff]
    %v90 = vld [vmem:[#allocation2 + $0x110] sm:$0xff]
    %v91 = vld [vmem:[#allocation2 + $0x118] sm:$0xff]
    %v92 = vld [vmem:[#allocation2 + $0x120] sm:$0xff]
    %v93 = vld [vmem:[#allocation2 + $0x128] sm:$0xff]
    %v94 = vld [vmem:[#allocation2 + $0x130] sm:$0xff]
    %v95 = vld [vmem:[#allocation2 + $0x138] sm:$0xff]
    %v96 = vld [vmem:[#allocation2 + $0x140] sm:$0xff]
    %v97 = vld [vmem:[#allocation2 + $0x148] sm:$0xff]
    %v98 = vld [vmem:[#allocation2 + $0x150] sm:$0xff]
    %v99 = vld [vmem:[#allocation2 + $0x158] sm:$0xff]
    %v100 = vld [vmem:[#allocation2 + $0x160] sm:$0xff]
    %v101 = vld [vmem:[#allocation2 + $0x168] sm:$0xff]
    %v102 = vld [vmem:[#allocation2 + $0x170] sm:$0xff]
    %v103 = vld [vmem:[#allocation2 + $0x178] sm:$0xff]
    %v104 = vld [vmem:[#allocation2 + $0x180] sm:$0xff]
    %v105 = vld [vmem:[#allocation2 + $0x188] sm:$0xff]
    %v106 = vld [vmem:[#allocation2 + $0x190] sm:$0xff]
    %v107 = vld [vmem:[#allocation2 + $0x198] sm:$0xff]
    %v108 = vld [vmem:[#allocation2 + $0x1a0] sm:$0xff]
    %v109 = vld [vmem:[#allocation2 + $0x1a8] sm:$0xff]
    %v110 = vld [vmem:[#allocation2 + $0x1b0] sm:$0xff]
    %v111 = vld [vmem:[#allocation2 + $0x1b8] sm:$0xff]
    %v112 = vld [vmem:[#allocation2 + $0x1c0] sm:$0xff]
    %v113 = vld [vmem:[#allocation2 + $0x1c8] sm:$0xff]
    %v114 = vld [vmem:[#allocation2 + $0x1d0] sm:$0xff]
    %v115 = vld [vmem:[#allocation2 + $0x1d8] sm:$0xff]
    %v116 = vld [vmem:[#allocation2 + $0x1e0] sm:$0xff]
    %v117 = vld [vmem:[#allocation2 + $0x1e8] sm:$0xff]
    %v118 = vld [vmem:[#allocation2 + $0x1f0] sm:$0xff]
    %v119 = vld [vmem:[#allocation2 + $0x1f8] sm:$0xff]
    %v120 = vld [vmem:[#allocation2 + $0x200] sm:$0xff]
    %v121 = vld [vmem:[#allocation2 + $0x208] sm:$0xff]
    %v122 = vld [vmem:[#allocation2 + $0x210] sm:$0xff]
    %v123 = vld [vmem:[#allocation2 + $0x218] sm:$0xff]
    %v124 = vld [vmem:[#allocation2 + $0x220] sm:$0xff]
    %v125 = vld [vmem:[#allocation2 + $0x228] sm:$0xff]
    %v126 = vld [vmem:[#allocation2 + $0x230] sm:$0xff]
    %v127 = vld [vmem:[#allocation2 + $0x238] sm:$0xff]
    %v128 = vld [vmem:[#allocation2 + $0x240] sm:$0xff]
    %v129 = vld [vmem:[#allocation2 + $0x248] sm:$0xff]
    %v130 = vld [vmem:[#allocation2 + $0x250] sm:$0xff]
    %v131 = vld [vmem:[#allocation2 + $0x258] sm:$0xff]
    %v132 = vld [vmem:[#allocation2 + $0x260] sm:$0xff]
    %v133 = vld [vmem:[#allocation2 + $0x268] sm:$0xff]
    %v134 = vld [vmem:[#allocation2 + $0x270] sm:$0xff]
    %v135 = vld [vmem:[#allocation2 + $0x278] sm:$0xff]
    %v136 = vld [vmem:[#allocation2 + $0x280] sm:$0xff]
    %v137 = vld [vmem:[#allocation2 + $0x288] sm:$0xff]
    %v138 = vld [vmem:[#allocation2 + $0x290] sm:$0xff]
    %v139 = vld [vmem:[#allocation2 + $0x298] sm:$0xff]
    %v140 = vld [vmem:[#allocation2 + $0x2a0] sm:$0xff]
    %v141 = vld [vmem:[#allocation2 + $0x2a8] sm:$0xff]
    %v142 = vld [vmem:[#allocation2 + $0x2b0] sm:$0xff]
    %v143 = vld [vmem:[#allocation2 + $0x2b8] sm:$0xff]
    %v144 = vld [vmem:[#allocation2 + $0x2c0] sm:$0xff]
    %v145 = vld [vmem:[#allocation2 + $0x2c8] sm:$0xff]
    %v146 = vld [vmem:[#allocation2 + $0x2d0] sm:$0xff]
    %v147 = vld [vmem:[#allocation2 + $0x2d8] sm:$0xff]
    %v148 = vld [vmem:[#allocation2 + $0x2e0] sm:$0xff]
    %v149 = vld [vmem:[#allocation2 + $0x2e8] sm:$0xff]
    %v150 = vld [vmem:[#allocation2 + $0x2f0] sm:$0xff]
    %v151 = vld [vmem:[#allocation2 + $0x2f8] sm:$0xff]
    %v152 = vld [vmem:[#allocation2 + $0x300] sm:$0xff]
    %v153 = vld [vmem:[#allocation2 + $0x308] sm:$0xff]
    %v154 = vld [vmem:[#allocation2 + $0x310] sm:$0xff]
    %v155 = vld [vmem:[#allocation2 + $0x318] sm:$0xff]
    %v156 = vld [vmem:[#allocation2 + $0x320] sm:$0xff]
    %v157 = vld [vmem:[#allocation2 + $0x328] sm:$0xff]
    %v158 = vld [vmem:[#allocation2 + $0x330] sm:$0xff]
    %v159 = vld [vmem:[#allocation2 + $0x338] sm:$0xff]
    %v160 = vld [vmem:[#allocation2 + $0x340] sm:$0xff]
    %v161 = vld [vmem:[#allocation2 + $0x348] sm:$0xff]
    %v162 = vld [vmem:[#allocation2 + $0x350] sm:$0xff]
    %v163 = vld [vmem:[#allocation2 + $0x358] sm:$0xff]
    %v164 = vld [vmem:[#allocation2 + $0x360] sm:$0xff]
    %v165 = vld [vmem:[#allocation2 + $0x368] sm:$0xff]
    %v166 = vld [vmem:[#allocation2 + $0x370] sm:$0xff]
    %v167 = vld [vmem:[#allocation2 + $0x378] sm:$0xff]
    %v168 = vld [vmem:[#allocation2 + $0x380] sm:$0xff]
    %v169 = vld [vmem:[#allocation2 + $0x388] sm:$0xff]
    %v170 = vld [vmem:[#allocation2 + $0x390] sm:$0xff]
    %v171 = vld [vmem:[#allocation2 + $0x398] sm:$0xff]
    %v172 = vld [vmem:[#allocation2 + $0x3a0] sm:$0xff]
    %v173 = vld [vmem:[#allocation2 + $0x3a8] sm:$0xff]
    %v174 = vld [vmem:[#allocation2 + $0x3b0] sm:$0xff]
    %v175 = vld [vmem:[#allocation2 + $0x3b8] sm:$0xff]
    %v176 = vld [vmem:[#allocation2 + $0x3c0] sm:$0xff]
    %v177 = vld [vmem:[#allocation2 + $0x3c8] sm:$0xff]
    %v178 = vld [vmem:[#allocation2 + $0x3d0] sm:$0xff]
    %v179 = vld [vmem:[#allocation2 + $0x3d8] sm:$0xff]
    %v180 = vld [vmem:[#allocation2 + $0x3e0] sm:$0xff]
    %v181 = vld [vmem:[#allocation2 + $0x3e8] sm:$0xff]
    %v182 = vld [vmem:[#allocation2 + $0x3f0] sm:$0xff]
    %v183 = vld [vmem:[#allocation2 + $0x3f8] sm:$0xff]
    %v184 = vld [vmem:[#allocation2 + $0x400] sm:$0xff]
    %v185 = vld [vmem:[#allocation2 + $0x408] sm:$0xff]
    %v186 = vld [vmem:[#allocation2 + $0x410] sm:$0xff]
    %v187 = vld [vmem:[#allocation2 + $0x418] sm:$0xff]
    %v188 = vld [vmem:[#allocation2 + $0x420] sm:$0xff]
    %v189 = vld [vmem:[#allocation2 + $0x428] sm:$0xff]
    %v190 = vld [vmem:[#allocation2 + $0x430] sm:$0xff]
    %v191 = vld [vmem:[#allocation2 + $0x438] sm:$0xff]
    %v192 = vld [vmem:[#allocation2 + $0x440] sm:$0xff]
    %v193 = vld [vmem:[#allocation2 + $0x448] sm:$0xff]
    %v194 = vld [vmem:[#allocation2 + $0x450] sm:$0xff]
    %v195 = vld [vmem:[#allocation2 + $0x458] sm:$0xff]
    %v196 = vld [vmem:[#allocation2 + $0x460] sm:$0xff]
    %v197 = vld [vmem:[#allocation2 + $0x468] sm:$0xff]
    %v198 = vld [vmem:[#allocation2 + $0x470] sm:$0xff]
    %v199 = vld [vmem:[#allocation2 + $0x478] sm:$0xff]
    %v200 = vld [vmem:[#allocation2 + $0x480] sm:$0xff]
    %v201 = vld [vmem:[#allocation2 + $0x488] sm:$0xff]
    %v202 = vld [vmem:[#allocation2 + $0x490] sm:$0xff]
    %v203 = vld [vmem:[#allocation2 + $0x498] sm:$0xff]
    %v204 = vld [vmem:[#allocation2 + $0x4a0] sm:$0xff]
    %v205 = vld [vmem:[#allocation2 + $0x4a8] sm:$0xff]
    %v206 = vld [vmem:[#allocation2 + $0x4b0] sm:$0xff]
    %v207 = vld [vmem:[#allocation2 + $0x4b8] sm:$0xff]
    %v208 = vld [vmem:[#allocation2 + $0x4c0] sm:$0xff]
    %v209 = vld [vmem:[#allocation2 + $0x4c8] sm:$0xff]
    %v210 = vld [vmem:[#allocation2 + $0x4d0] sm:$0xff]
    %v211 = vld [vmem:[#allocation2 + $0x4d8] sm:$0xff]
    %v212 = vld [vmem:[#allocation2 + $0x4e0] sm:$0xff]
    %v213 = vld [vmem:[#allocation2 + $0x4e8] sm:$0xff]
    %v214 = vld [vmem:[#allocation2 + $0x4f0] sm:$0xff]
    %v215 = vld [vmem:[#allocation2 + $0x4f8] sm:$0xff]
    %v216 = vld [vmem:[#allocation2 + $0x500] sm:$0xff]
    %v217 = vld [vmem:[#allocation2 + $0x508] sm:$0xff]
    %v218 = vld [vmem:[#allocation2 + $0x510] sm:$0xff]
    %v219 = vld [vmem:[#allocation2 + $0x518] sm:$0xff]
    %v220 = vld [vmem:[#allocation2 + $0x520] sm:$0xff]
    %v221 = vld [vmem:[#allocation2 + $0x528] sm:$0xff]
    %v222 = vld [vmem:[#allocation2 + $0x530] sm:$0xff]
    %v223 = vld [vmem:[#allocation2 + $0x538] sm:$0xff]
    %v224 = vld [vmem:[#allocation2 + $0x540] sm:$0xff]
    %v225 = vld [vmem:[#allocation2 + $0x548] sm:$0xff]
    %v226 = vld [vmem:[#allocation2 + $0x550] sm:$0xff]
    %v227 = vld [vmem:[#allocation2 + $0x558] sm:$0xff]
    %v228 = vld [vmem:[#allocation2 + $0x560] sm:$0xff]
    %v229 = vld [vmem:[#allocation2 + $0x568] sm:$0xff]
    %v230 = vld [vmem:[#allocation2 + $0x570] sm:$0xff]
    %v231 = vld [vmem:[#allocation2 + $0x578] sm:$0xff]
    %v232 = vld [vmem:[#allocation2 + $0x580] sm:$0xff]
    %v233 = vld [vmem:[#allocation2 + $0x588] sm:$0xff]
    %v234 = vld [vmem:[#allocation2 + $0x590] sm:$0xff]
    %v235 = vld [vmem:[#allocation2 + $0x598] sm:$0xff]
    %v236 = vld [vmem:[#allocation2 + $0x5a0] sm:$0xff]
    %v237 = vld [vmem:[#allocation2 + $0x5a8] sm:$0xff]
    %v238 = vld [vmem:[#allocation2 + $0x5b0] sm:$0xff]
    %v239 = vld [vmem:[#allocation2 + $0x5b8] sm:$0xff]
    %v240 = vld [vmem:[#allocation2 + $0x5c0] sm:$0xff]
    %v241 = vld [vmem:[#allocation2 + $0x5c8] sm:$0xff]
    %v242 = vld [vmem:[#allocation2 + $0x5d0] sm:$0xff]
    %v243 = vld [vmem:[#allocation2 + $0x5d8] sm:$0xff]
    %v244 = vld [vmem:[#allocation2 + $0x5e0] sm:$0xff]
    %v245 = vld [vmem:[#allocation2 + $0x5e8] sm:$0xff]
    %v246 = vld [vmem:[#allocation2 + $0x5f0] sm:$0xff]
    %v247 = vld [vmem:[#allocation2 + $0x5f8] sm:$0xff]
    %v248 = vld [vmem:[#allocation2 + $0x600] sm:$0xff]
    %v249 = vld [vmem:[#allocation2 + $0x608] sm:$0xff]
    %v250 = vld [vmem:[#allocation2 + $0x610] sm:$0xff]
    %v251 = vld [vmem:[#allocation2 + $0x618] sm:$0xff]
    %v252 = vld [vmem:[#allocation2 + $0x620] sm:$0xff]
    %v253 = vld [vmem:[#allocation2 + $0x628] sm:$0xff]
    %v254 = vld [vmem:[#allocation2 + $0x630] sm:$0xff]
    %v255 = vld [vmem:[#allocation2 + $0x638] sm:$0xff]
    %v256 = vld [vmem:[#allocation2 + $0x640] sm:$0xff]
    %v257 = vld [vmem:[#allocation2 + $0x648] sm:$0xff]
    %v258 = vld [vmem:[#allocation2 + $0x650] sm:$0xff]
    %v259 = vld [vmem:[#allocation2 + $0x658] sm:$0xff]
    %v260 = vld [vmem:[#allocation2 + $0x660] sm:$0xff]
    %v261 = vld [vmem:[#allocation2 + $0x668] sm:$0xff]
    %v262 = vld [vmem:[#allocation2 + $0x670] sm:$0xff]
    %v263 = vld [vmem:[#allocation2 + $0x678] sm:$0xff]
    %v264 = vld [vmem:[#allocation2 + $0x680] sm:$0xff]
    %v265 = vld [vmem:[#allocation2 + $0x688] sm:$0xff]
    %v266 = vld [vmem:[#allocation2 + $0x690] sm:$0xff]
    %v267 = vld [vmem:[#allocation2 + $0x698] sm:$0xff]
    %v268 = vld [vmem:[#allocation2 + $0x6a0] sm:$0xff]
    %v269 = vld [vmem:[#allocation2 + $0x6a8] sm:$0xff]
    %v270 = vld [vmem:[#allocation2 + $0x6b0] sm:$0xff]
    %v271 = vld [vmem:[#allocation2 + $0x6b8] sm:$0xff]
    %v272 = vld [vmem:[#allocation2 + $0x6c0] sm:$0xff]
    %v273 = vld [vmem:[#allocation2 + $0x6c8] sm:$0xff]
    %v274 = vld [vmem:[#allocation2 + $0x6d0] sm:$0xff]
    %v275 = vld [vmem:[#allocation2 + $0x6d8] sm:$0xff]
    %v276 = vld [vmem:[#allocation2 + $0x6e0] sm:$0xff]
    %v277 = vld [vmem:[#allocation2 + $0x6e8] sm:$0xff]
    %v278 = vld [vmem:[#allocation2 + $0x6f0] sm:$0xff]
    %v279 = vld [vmem:[#allocation2 + $0x6f8] sm:$0xff]
    %v280 = vld [vmem:[#allocation2 + $0x700] sm:$0xff]
    %v281 = vld [vmem:[#allocation2 + $0x708] sm:$0xff]
    %v282 = vld [vmem:[#allocation2 + $0x710] sm:$0xff]
    %v283 = vld [vmem:[#allocation2 + $0x718] sm:$0xff]
    %v284 = vld [vmem:[#allocation2 + $0x720] sm:$0xff]
    %v285 = vld [vmem:[#allocation2 + $0x728] sm:$0xff]
    %v286 = vld [vmem:[#allocation2 + $0x730] sm:$0xff]
    %v287 = vld [vmem:[#allocation2 + $0x738] sm:$0xff]
    %v288 = vld [vmem:[#allocation2 + $0x740] sm:$0xff]
    %v289 = vld [vmem:[#allocation2 + $0x748] sm:$0xff]
    %v290 = vld [vmem:[#allocation2 + $0x750] sm:$0xff]
    %v291 = vld [vmem:[#allocation2 + $0x758] sm:$0xff]
    %v292 = vld [vmem:[#allocation2 + $0x760] sm:$0xff]
    %v293 = vld [vmem:[#allocation2 + $0x768] sm:$0xff]
    %v294 = vld [vmem:[#allocation2 + $0x770] sm:$0xff]
    %v295 = vld [vmem:[#allocation2 + $0x778] sm:$0xff]
    %v296 = vld [vmem:[#allocation2 + $0x780] sm:$0xff]
    %v297 = vld [vmem:[#allocation2 + $0x788] sm:$0xff]
    %v298 = vld [vmem:[#allocation2 + $0x790] sm:$0xff]
    %v299 = vld [vmem:[#allocation2 + $0x798] sm:$0xff]
    %v300 = vld [vmem:[#allocation2 + $0x7a0] sm:$0xff]
    %v301 = vld [vmem:[#allocation2 + $0x7a8] sm:$0xff]
    %v302 = vld [vmem:[#allocation2 + $0x7b0] sm:$0xff]
    %v303 = vld [vmem:[#allocation2 + $0x7b8] sm:$0xff]
    %v304 = vld [vmem:[#allocation2 + $0x7c0] sm:$0xff]
    %v305 = vld [vmem:[#allocation2 + $0x7c8] sm:$0xff]
    %v306 = vld [vmem:[#allocation2 + $0x7d0] sm:$0xff]
    %v307 = vld [vmem:[#allocation2 + $0x7d8] sm:$0xff]
    %v308 = vld [vmem:[#allocation2 + $0x7e0] sm:$0xff]
    %v309 = vld [vmem:[#allocation2 + $0x7e8] sm:$0xff]
    %v310 = vld [vmem:[#allocation2 + $0x7f0] sm:$0xff]
    %v311 = vld [vmem:[#allocation2 + $0x7f8] sm:$0xff]
    %v312 = vld [vmem:[#allocation2 + $0x800] sm:$0xff]
    %v313 = vld [vmem:[#allocation2 + $0x808] sm:$0xff]
    %v314 = vld [vmem:[#allocation2 + $0x810] sm:$0xff]
    %v315 = vld [vmem:[#allocation2 + $0x818] sm:$0xff]
    %v316 = vld [vmem:[#allocation2 + $0x820] sm:$0xff]
    %v317 = vld [vmem:[#allocation2 + $0x828] sm:$0xff]
    %v318 = vld [vmem:[#allocation2 + $0x830] sm:$0xff]
    %v319 = vld [vmem:[#allocation2 + $0x838] sm:$0xff]
    %v320 = vld [vmem:[#allocation2 + $0x840] sm:$0xff]
    %v321 = vld [vmem:[#allocation2 + $0x848] sm:$0xff]
    %v322 = vld [vmem:[#allocation2 + $0x850] sm:$0xff]
    %v323 = vld [vmem:[#allocation2 + $0x858] sm:$0xff]
    %v324 = vld [vmem:[#allocation2 + $0x860] sm:$0xff]
    %v325 = vld [vmem:[#allocation2 + $0x868] sm:$0xff]
    %v326 = vld [vmem:[#allocation2 + $0x870] sm:$0xff]
    %v327 = vld [vmem:[#allocation2 + $0x878] sm:$0xff]
    %v328 = vld [vmem:[#allocation2 + $0x880] sm:$0xff]
    %v329 = vld [vmem:[#allocation2 + $0x888] sm:$0xff]
    %v330 = vld [vmem:[#allocation2 + $0x890] sm:$0xff]
    %v331 = vld [vmem:[#allocation2 + $0x898] sm:$0xff]
    %v332 = vld [vmem:[#allocation2 + $0x8a0] sm:$0xff]
    %v333 = vld [vmem:[#allocation2 + $0x8a8] sm:$0xff]
    %v334 = vld [vmem:[#allocation2 + $0x8b0] sm:$0xff]
    %v335 = vld [vmem:[#allocation2 + $0x8b8] sm:$0xff]
    %v336 = vld [vmem:[#allocation2 + $0x8c0] sm:$0xff]
    %v337 = vld [vmem:[#allocation2 + $0x8c8] sm:$0xff]
    %v338 = vld [vmem:[#allocation2 + $0x8d0] sm:$0xff]
    %v339 = vld [vmem:[#allocation2 + $0x8d8] sm:$0xff]
    %v340 = vld [vmem:[#allocation2 + $0x8e0] sm:$0xff]
    %v341 = vld [vmem:[#allocation2 + $0x8e8] sm:$0xff]
    %v342 = vld [vmem:[#allocation2 + $0x8f0] sm:$0xff]
    %v343 = vld [vmem:[#allocation2 + $0x8f8] sm:$0xff]
    %v344 = vld [vmem:[#allocation2 + $0x900] sm:$0xff]
    %v345 = vld [vmem:[#allocation2 + $0x908] sm:$0xff]
    %v346 = vld [vmem:[#allocation2 + $0x910] sm:$0xff]
    %v347 = vld [vmem:[#allocation2 + $0x918] sm:$0xff]
    %v348 = vld [vmem:[#allocation2 + $0x920] sm:$0xff]
    %v349 = vld [vmem:[#allocation2 + $0x928] sm:$0xff]
    %v350 = vld [vmem:[#allocation2 + $0x930] sm:$0xff]
    %v351 = vld [vmem:[#allocation2 + $0x938] sm:$0xff]
    %v352 = vld [vmem:[#allocation2 + $0x940] sm:$0xff]
    %v353 = vld [vmem:[#allocation2 + $0x948] sm:$0xff]
    %v354 = vld [vmem:[#allocation2 + $0x950] sm:$0xff]
    %v355 = vld [vmem:[#allocation2 + $0x958] sm:$0xff]
    %v356 = vld [vmem:[#allocation2 + $0x960] sm:$0xff]
    %v357 = vld [vmem:[#allocation2 + $0x968] sm:$0xff]
    %v358 = vld [vmem:[#allocation2 + $0x970] sm:$0xff]
    %v359 = vld [vmem:[#allocation2 + $0x978] sm:$0xff]
    %v360 = vld [vmem:[#allocation2 + $0x980] sm:$0xff]
    %v361 = vld [vmem:[#allocation2 + $0x988] sm:$0xff]
    %v362 = vld [vmem:[#allocation2 + $0x990] sm:$0xff]
    %v363 = vld [vmem:[#allocation2 + $0x998] sm:$0xff]
    %v364 = vld [vmem:[#allocation2 + $0x9a0] sm:$0xff]
    %v365 = vld [vmem:[#allocation2 + $0x9a8] sm:$0xff]
    %v366 = vld [vmem:[#allocation2 + $0x9b0] sm:$0xff]
    %v367 = vld [vmem:[#allocation2 + $0x9b8] sm:$0xff]
    %v368 = vld [vmem:[#allocation2 + $0x9c0] sm:$0xff]
    %v369 = vld [vmem:[#allocation2 + $0x9c8] sm:$0xff]
    %v370 = vld [vmem:[#allocation2 + $0x9d0] sm:$0xff]
    %v371 = vld [vmem:[#allocation2 + $0x9d8] sm:$0xff]
    %v372 = vld [vmem:[#allocation2 + $0x9e0] sm:$0xff]
    %v373 = vld [vmem:[#allocation2 + $0x9e8] sm:$0xff]
    %v374 = vld [vmem:[#allocation2 + $0x9f0] sm:$0xff]
    %v375 = vld [vmem:[#allocation2 + $0x9f8] sm:$0xff]
    %v376 = vld [vmem:[#allocation2 + $0xa00] sm:$0xff]
    %v377 = vld [vmem:[#allocation2 + $0xa08] sm:$0xff]
    %v378 = vld [vmem:[#allocation2 + $0xa10] sm:$0xff]
    %v379 = vld [vmem:[#allocation2 + $0xa18] sm:$0xff]
    %v380 = vld [vmem:[#allocation2 + $0xa20] sm:$0xff]
    %v381 = vld [vmem:[#allocation2 + $0xa28] sm:$0xff]
    %v382 = vld [vmem:[#allocation2 + $0xa30] sm:$0xff]
    %v383 = vld [vmem:[#allocation2 + $0xa38] sm:$0xff]
    %v384 = vld [vmem:[#allocation2 + $0xa40] sm:$0xff]
    %v385 = vld [vmem:[#allocation2 + $0xa48] sm:$0xff]
    %v386 = vld [vmem:[#allocation2 + $0xa50] sm:$0xff]
    %v387 = vld [vmem:[#allocation2 + $0xa58] sm:$0xff]
    %v388 = vld [vmem:[#allocation2 + $0xa60] sm:$0xff]
    %v389 = vld [vmem:[#allocation2 + $0xa68] sm:$0xff]
    %v390 = vld [vmem:[#allocation2 + $0xa70] sm:$0xff]
    %v391 = vld [vmem:[#allocation2 + $0xa78] sm:$0xff]
    %v392 = vld [vmem:[#allocation2 + $0xa80] sm:$0xff]
    %v393 = vld [vmem:[#allocation2 + $0xa88] sm:$0xff]
    %v394 = vld [vmem:[#allocation2 + $0xa90] sm:$0xff]
    %v395 = vld [vmem:[#allocation2 + $0xa98] sm:$0xff]
    %v396 = vld [vmem:[#allocation2 + $0xaa0] sm:$0xff]
    %v397 = vld [vmem:[#allocation2 + $0xaa8] sm:$0xff]
    %v398 = vld [vmem:[#allocation2 + $0xab0] sm:$0xff]
    %v399 = vld [vmem:[#allocation2 + $0xab8] sm:$0xff]
    %v400 = vld [vmem:[#allocation2 + $0xac0] sm:$0xff]
    %v401 = vld [vmem:[#allocation2 + $0xac8] sm:$0xff]
    %v402 = vld [vmem:[#allocation2 + $0xad0] sm:$0xff]
    %v403 = vld [vmem:[#allocation2 + $0xad8] sm:$0xff]
    %v404 = vld [vmem:[#allocation2 + $0xae0] sm:$0xff]
    %v405 = vld [vmem:[#allocation2 + $0xae8] sm:$0xff]
    %v406 = vld [vmem:[#allocation2 + $0xaf0] sm:$0xff]
    %v407 = vld [vmem:[#allocation2 + $0xaf8] sm:$0xff]
    %v408 = vld [vmem:[#allocation2 + $0xb00] sm:$0xff]
    %v409 = vld [vmem:[#allocation2 + $0xb08] sm:$0xff]
    %v410 = vld [vmem:[#allocation2 + $0xb10] sm:$0xff]
    %v411 = vld [vmem:[#allocation2 + $0xb18] sm:$0xff]
    %v412 = vld [vmem:[#allocation2 + $0xb20] sm:$0xff]
    %v413 = vld [vmem:[#allocation2 + $0xb28] sm:$0xff]
    %v414 = vld [vmem:[#allocation2 + $0xb30] sm:$0xff]
    %v415 = vld [vmem:[#allocation2 + $0xb38] sm:$0xff]
    %v416 = vld [vmem:[#allocation2 + $0xb40] sm:$0xff]
    %v417 = vld [vmem:[#allocation2 + $0xb48] sm:$0xff]
    %v418 = vld [vmem:[#allocation2 + $0xb50] sm:$0xff]
    %v419 = vld [vmem:[#allocation2 + $0xb58] sm:$0xff]
    %v420 = vld [vmem:[#allocation2 + $0xb60] sm:$0xff]
    %v421 = vld [vmem:[#allocation2 + $0xb68] sm:$0xff]
    %v422 = vld [vmem:[#allocation2 + $0xb70] sm:$0xff]
    %v423 = vld [vmem:[#allocation2 + $0xb78] sm:$0xff]
    %v424 = vld [vmem:[#allocation2 + $0xb80] sm:$0xff]
    %v425 = vld [vmem:[#allocation2 + $0xb88] sm:$0xff]
    %v426 = vld [vmem:[#allocation2 + $0xb90] sm:$0xff]
    %v427 = vld [vmem:[#allocation2 + $0xb98] sm:$0xff]
    %v428 = vld [vmem:[#allocation2 + $0xba0] sm:$0xff]
    %v429 = vld [vmem:[#allocation2 + $0xba8] sm:$0xff]
    %v430 = vld [vmem:[#allocation2 + $0xbb0] sm:$0xff]
    %v431 = vld [vmem:[#allocation2 + $0xbb8] sm:$0xff]
    %v432 = vld [vmem:[#allocation2 + $0xbc0] sm:$0xff]
    %v433 = vld [vmem:[#allocation2 + $0xbc8] sm:$0xff]
    %v434 = vld [vmem:[#allocation2 + $0xbd0] sm:$0xff]
    %v435 = vld [vmem:[#allocation2 + $0xbd8] sm:$0xff]
    %v436 = vld [vmem:[#allocation2 + $0xbe0] sm:$0xff]
    %v437 = vld [vmem:[#allocation2 + $0xbe8] sm:$0xff]
    %v438 = vld [vmem:[#allocation2 + $0xbf0] sm:$0xff]
    %v439 = vld [vmem:[#allocation2 + $0xbf8] sm:$0xff]
    %v440 = vld [vmem:[#allocation2 + $0xc00] sm:$0xff]
    %v441 = vld [vmem:[#allocation2 + $0xc08] sm:$0xff]
    %v442 = vld [vmem:[#allocation2 + $0xc10] sm:$0xff]
    %v443 = vld [vmem:[#allocation2 + $0xc18] sm:$0xff]
    %v444 = vld [vmem:[#allocation2 + $0xc20] sm:$0xff]
    %v445 = vld [vmem:[#allocation2 + $0xc28] sm:$0xff]
    %v446 = vld [vmem:[#allocation2 + $0xc30] sm:$0xff]
    %v447 = vld [vmem:[#allocation2 + $0xc38] sm:$0xff]
    %v448 = vld [vmem:[#allocation2 + $0xc40] sm:$0xff]
    %v449 = vld [vmem:[#allocation2 + $0xc48] sm:$0xff]
    %v450 = vld [vmem:[#allocation2 + $0xc50] sm:$0xff]
    %v451 = vld [vmem:[#allocation2 + $0xc58] sm:$0xff]
    %v452 = vld [vmem:[#allocation2 + $0xc60] sm:$0xff]
    %v453 = vld [vmem:[#allocation2 + $0xc68] sm:$0xff]
    %v454 = vld [vmem:[#allocation2 + $0xc70] sm:$0xff]
    %v455 = vld [vmem:[#allocation2 + $0xc78] sm:$0xff]
    %v456 = vld [vmem:[#allocation2 + $0xc80] sm:$0xff]
    %v457 = vld [vmem:[#allocation2 + $0xc88] sm:$0xff]
    %v458 = vld [vmem:[#allocation2 + $0xc90] sm:$0xff]
    %v459 = vld [vmem:[#allocation2 + $0xc98] sm:$0xff]
    %v460 = vld [vmem:[#allocation2 + $0xca0] sm:$0xff]
    %v461 = vld [vmem:[#allocation2 + $0xca8] sm:$0xff]
    %v462 = vld [vmem:[#allocation2 + $0xcb0] sm:$0xff]
    %v463 = vld [vmem:[#allocation2 + $0xcb8] sm:$0xff]
    %v464 = vld [vmem:[#allocation2 + $0xcc0] sm:$0xff]
    %v465 = vld [vmem:[#allocation2 + $0xcc8] sm:$0xff]
    %v466 = vld [vmem:[#allocation2 + $0xcd0] sm:$0xff]
    %v467 = vld [vmem:[#allocation2 + $0xcd8] sm:$0xff]
    %v468 = vld [vmem:[#allocation2 + $0xce0] sm:$0xff]
    %v469 = vld [vmem:[#allocation2 + $0xce8] sm:$0xff]
    %v470 = vld [vmem:[#allocation2 + $0xcf0] sm:$0xff]
    %v471 = vld [vmem:[#allocation2 + $0xcf8] sm:$0xff]
    %v472 = vld [vmem:[#allocation2 + $0xd00] sm:$0xff]
    %v473 = vld [vmem:[#allocation2 + $0xd08] sm:$0xff]
    %v474 = vld [vmem:[#allocation2 + $0xd10] sm:$0xff]
    %v475 = vld [vmem:[#allocation2 + $0xd18] sm:$0xff]
    %v476 = vld [vmem:[#allocation2 + $0xd20] sm:$0xff]
    %v477 = vld [vmem:[#allocation2 + $0xd28] sm:$0xff]
    %v478 = vld [vmem:[#allocation2 + $0xd30] sm:$0xff]
    %v479 = vld [vmem:[#allocation2 + $0xd38] sm:$0xff]
    %v480 = vld [vmem:[#allocation2 + $0xd40] sm:$0xff]
    %v481 = vld [vmem:[#allocation2 + $0xd48] sm:$0xff]
    %v482 = vld [vmem:[#allocation2 + $0xd50] sm:$0xff]
    %v483 = vld [vmem:[#allocation2 + $0xd58] sm:$0xff]
    %v484 = vld [vmem:[#allocation2 + $0xd60] sm:$0xff]
    %v485 = vld [vmem:[#allocation2 + $0xd68] sm:$0xff]
    %v486 = vld [vmem:[#allocation2 + $0xd70] sm:$0xff]
    %v487 = vld [vmem:[#allocation2 + $0xd78] sm:$0xff]
    %v488 = vld [vmem:[#allocation2 + $0xd80] sm:$0xff]
    %v489 = vld [vmem:[#allocation2 + $0xd88] sm:$0xff]
    %v490 = vld [vmem:[#allocation2 + $0xd90] sm:$0xff]
    %v491 = vld [vmem:[#allocation2 + $0xd98] sm:$0xff]
    %v492 = vld [vmem:[#allocation2 + $0xda0] sm:$0xff]
    %v493 = vld [vmem:[#allocation2 + $0xda8] sm:$0xff]
    %v494 = vld [vmem:[#allocation2 + $0xdb0] sm:$0xff]
    %v495 = vld [vmem:[#allocation2 + $0xdb8] sm:$0xff]
    %v496 = vld [vmem:[#allocation2 + $0xdc0] sm:$0xff]
    %v497 = vld [vmem:[#allocation2 + $0xdc8] sm:$0xff]
    %v498 = vld [vmem:[#allocation2 + $0xdd0] sm:$0xff]
    %v499 = vld [vmem:[#allocation2 + $0xdd8] sm:$0xff]
    %v500 = vld [vmem:[#allocation2 + $0xde0] sm:$0xff]
    %v501 = vld [vmem:[#allocation2 + $0xde8] sm:$0xff]
    %v502 = vld [vmem:[#allocation2 + $0xdf0] sm:$0xff]
    %v503 = vld [vmem:[#allocation2 + $0xdf8] sm:$0xff]
    %v504 = vld [vmem:[#allocation2 + $0xe00] sm:$0xff]
    %v505 = vld [vmem:[#allocation2 + $0xe08] sm:$0xff]
    %v506 = vld [vmem:[#allocation2 + $0xe10] sm:$0xff]
    %v507 = vld [vmem:[#allocation2 + $0xe18] sm:$0xff]
    %v508 = vld [vmem:[#allocation2 + $0xe20] sm:$0xff]
    %v509 = vld [vmem:[#allocation2 + $0xe28] sm:$0xff]
    %v510 = vld [vmem:[#allocation2 + $0xe30] sm:$0xff]
    %v511 = vld [vmem:[#allocation2 + $0xe38] sm:$0xff]
    %v512 = vld [vmem:[#allocation2 + $0xe40] sm:$0xff]
    %v513 = vld [vmem:[#allocation2 + $0xe48] sm:$0xff]
    %v514 = vld [vmem:[#allocation2 + $0xe50] sm:$0xff]
    %v515 = vld [vmem:[#allocation2 + $0xe58] sm:$0xff]
    %v516 = vld [vmem:[#allocation2 + $0xe60] sm:$0xff]
    %v517 = vld [vmem:[#allocation2 + $0xe68] sm:$0xff]
    %v518 = vld [vmem:[#allocation2 + $0xe70] sm:$0xff]
    %v519 = vld [vmem:[#allocation2 + $0xe78] sm:$0xff]
    %v520 = vld [vmem:[#allocation2 + $0xe80] sm:$0xff]
    %v521 = vld [vmem:[#allocation2 + $0xe88] sm:$0xff]
    %v522 = vld [vmem:[#allocation2 + $0xe90] sm:$0xff]
    %v523 = vld [vmem:[#allocation2 + $0xe98] sm:$0xff]
    %v524 = vld [vmem:[#allocation2 + $0xea0] sm:$0xff]
    %v525 = vld [vmem:[#allocation2 + $0xea8] sm:$0xff]
    %v526 = vld [vmem:[#allocation2 + $0xeb0] sm:$0xff]
    %v527 = vld [vmem:[#allocation2 + $0xeb8] sm:$0xff]
    %v528 = vld [vmem:[#allocation2 + $0xec0] sm:$0xff]
    %v529 = vld [vmem:[#allocation2 + $0xec8] sm:$0xff]
    %v530 = vld [vmem:[#allocation2 + $0xed0] sm:$0xff]
    %v531 = vld [vmem:[#allocation2 + $0xed8] sm:$0xff]
    %v532 = vld [vmem:[#allocation2 + $0xee0] sm:$0xff]
    %v533 = vld [vmem:[#allocation2 + $0xee8] sm:$0xff]
    %v534 = vld [vmem:[#allocation2 + $0xef0] sm:$0xff]
    %v535 = vld [vmem:[#allocation2 + $0xef8] sm:$0xff]
    %v536 = vld [vmem:[#allocation2 + $0xf00] sm:$0xff]
    %v537 = vld [vmem:[#allocation2 + $0xf08] sm:$0xff]
    %v538 = vld [vmem:[#allocation2 + $0xf10] sm:$0xff]
    %v539 = vld [vmem:[#allocation2 + $0xf18] sm:$0xff]
    %v540 = vld [vmem:[#allocation2 + $0xf20] sm:$0xff]
    %v541 = vld [vmem:[#allocation2 + $0xf28] sm:$0xff]
    %v542 = vld [vmem:[#allocation2 + $0xf30] sm:$0xff]
    %v543 = vld [vmem:[#allocation2 + $0xf38] sm:$0xff]
    %v544 = vld [vmem:[#allocation2 + $0xf40] sm:$0xff]
    %v545 = vld [vmem:[#allocation2 + $0xf48] sm:$0xff]
    %v546 = vld [vmem:[#allocation2 + $0xf50] sm:$0xff]
    %v547 = vld [vmem:[#allocation2 + $0xf58] sm:$0xff]
    %v548 = vld [vmem:[#allocation2 + $0xf60] sm:$0xff]
    %v549 = vld [vmem:[#allocation2 + $0xf68] sm:$0xff]
    %v550 = vld [vmem:[#allocation2 + $0xf70] sm:$0xff]
    %v551 = vld [vmem:[#allocation2 + $0xf78] sm:$0xff]
    %v552 = vld [vmem:[#allocation2 + $0xf80] sm:$0xff]
    %v553 = vld [vmem:[#allocation2 + $0xf88] sm:$0xff]
    %v554 = vld [vmem:[#allocation2 + $0xf90] sm:$0xff]
    %v555 = vld [vmem:[#allocation2 + $0xf98] sm:$0xff]
    %v556 = vld [vmem:[#allocation2 + $0xfa0] sm:$0xff]
    %v557 = vld [vmem:[#allocation2 + $0xfa8] sm:$0xff]
    %v558 = vld [vmem:[#allocation2 + $0xfb0] sm:$0xff]
    %v559 = vld [vmem:[#allocation2 + $0xfb8] sm:$0xff]
    %v560 = vld [vmem:[#allocation2 + $0xfc0] sm:$0xff]
    %v561 = vld [vmem:[#allocation2 + $0xfc8] sm:$0xff]
    %v562 = vld [vmem:[#allocation2 + $0xfd0] sm:$0xff]
    %v563 = vld [vmem:[#allocation2 + $0xfd8] sm:$0xff]
    %v564 = vld [vmem:[#allocation2 + $0xfe0] sm:$0xff]
    %v565 = vld [vmem:[#allocation2 + $0xfe8] sm:$0xff]
    %v566 = vld [vmem:[#allocation2 + $0xff0] sm:$0xff]
    %v567 = vld [vmem:[#allocation2 + $0xff8] sm:$0xff]
    %v568 = vld [vmem:[#allocation4] sm:$0xf]
    %v570 = vlaneseq
    %v571 = vshrl.u32 %v570, 7
    %v572 = vsub.s32 0, %v571
    %v573 = vrot.slane %v568, %v572
    %v574 = vlaneseq
    %v575 = vshrl.u32 %v574, 7
    %v576 = vsub.s32 1, %v575
    %v577 = vrot.slane %v568, %v576
    %v578 = vlaneseq
    %v579 = vshrl.u32 %v578, 7
    %v580 = vsub.s32 2, %v579
    %v581 = vrot.slane %v568, %v580
    %v582 = vlaneseq
    %v583 = vshrl.u32 %v582, 7
    %v584 = vsub.s32 3, %v583
    %v585 = vrot.slane %v568, %v584
    %v606 = vunpack.c.l.b16 %v40
    %v607 = vunpack.c.h.b16 %v40
    %v608 = vunpack.c.l.b16 %v41
    %v609 = vunpack.c.h.b16 %v41
    %v610 = vunpack.c.l.b16 %v42
    %v611 = vunpack.c.h.b16 %v42
    %v612 = vunpack.c.l.b16 %v43
    %v613 = vunpack.c.h.b16 %v43
    %v614 = vunpack.c.l.b16 %v44
    %v615 = vunpack.c.h.b16 %v44
    %v616 = vunpack.c.l.b16 %v45
    %v617 = vunpack.c.h.b16 %v45
    %v618 = vunpack.c.l.b16 %v46
    %v619 = vunpack.c.h.b16 %v46
    %v620 = vunpack.c.l.b16 %v47
    %v621 = vunpack.c.h.b16 %v47
    %v622 = vunpack.c.l.b16 %v48
    %v623 = vunpack.c.h.b16 %v48
    %v624 = vunpack.c.l.b16 %v49
    %v625 = vunpack.c.h.b16 %v49
    %v626 = vunpack.c.l.b16 %v50
    %v627 = vunpack.c.h.b16 %v50
    %v628 = vunpack.c.l.b16 %v51
    %v629 = vunpack.c.h.b16 %v51
    %v630 = vunpack.c.l.b16 %v52
    %v631 = vunpack.c.h.b16 %v52
    %v632 = vunpack.c.l.b16 %v53
    %v633 = vunpack.c.h.b16 %v53
    %v634 = vunpack.c.l.b16 %v54
    %v635 = vunpack.c.h.b16 %v54
    %v636 = vunpack.c.l.b16 %v55
    %v637 = vunpack.c.h.b16 %v55
    %v638 = vpack.c.b16 %v622, %v606
    %v639 = vpack.c.b16 %v623, %v607
    %v640 = vpack.c.b16 %v624, %v608
    %v641 = vpack.c.b16 %v625, %v609
    %v642 = vpack.c.b16 %v626, %v610
    %v643 = vpack.c.b16 %v627, %v611
    %v644 = vpack.c.b16 %v628, %v612
    %v645 = vpack.c.b16 %v629, %v613
    %v646 = vpack.c.b16 %v630, %v614
    %v647 = vpack.c.b16 %v631, %v615
    %v648 = vpack.c.b16 %v632, %v616
    %v649 = vpack.c.b16 %v633, %v617
    %v650 = vpack.c.b16 %v634, %v618
    %v651 = vpack.c.b16 %v635, %v619
    %v652 = vpack.c.b16 %v636, %v620
    %v653 = vpack.c.b16 %v637, %v621
    %v1182 = vunpack.c.l.b16 %v56
    %v1183 = vunpack.c.h.b16 %v56
    %v1184 = vunpack.c.l.b16 %v57
    %v1185 = vunpack.c.h.b16 %v57
    %v1186 = vunpack.c.l.b16 %v58
    %v1187 = vunpack.c.h.b16 %v58
    %v1188 = vunpack.c.l.b16 %v59
    %v1189 = vunpack.c.h.b16 %v59
    %v1190 = vunpack.c.l.b16 %v60
    %v1191 = vunpack.c.h.b16 %v60
    %v1192 = vunpack.c.l.b16 %v61
    %v1193 = vunpack.c.h.b16 %v61
    %v1194 = vunpack.c.l.b16 %v62
    %v1195 = vunpack.c.h.b16 %v62
    %v1196 = vunpack.c.l.b16 %v63
    %v1197 = vunpack.c.h.b16 %v63
    %v1198 = vunpack.c.l.b16 %v64
    %v1199 = vunpack.c.h.b16 %v64
    %v1200 = vunpack.c.l.b16 %v65
    %v1201 = vunpack.c.h.b16 %v65
    %v1202 = vunpack.c.l.b16 %v66
    %v1203 = vunpack.c.h.b16 %v66
    %v1204 = vunpack.c.l.b16 %v67
    %v1205 = vunpack.c.h.b16 %v67
    %v1206 = vunpack.c.l.b16 %v68
    %v1207 = vunpack.c.h.b16 %v68
    %v1208 = vunpack.c.l.b16 %v69
    %v1209 = vunpack.c.h.b16 %v69
    %v1210 = vunpack.c.l.b16 %v70
    %v1211 = vunpack.c.h.b16 %v70
    %v1212 = vunpack.c.l.b16 %v71
    %v1213 = vunpack.c.h.b16 %v71
    %v1214 = vunpack.c.l.b16 %v72
    %v1215 = vunpack.c.h.b16 %v72
    %v1216 = vunpack.c.l.b16 %v73
    %v1217 = vunpack.c.h.b16 %v73
    %v1218 = vunpack.c.l.b16 %v74
    %v1219 = vunpack.c.h.b16 %v74
    %v1220 = vunpack.c.l.b16 %v75
    %v1221 = vunpack.c.h.b16 %v75
    %v1222 = vunpack.c.l.b16 %v76
    %v1223 = vunpack.c.h.b16 %v76
    %v1224 = vunpack.c.l.b16 %v77
    %v1225 = vunpack.c.h.b16 %v77
    %v1226 = vunpack.c.l.b16 %v78
    %v1227 = vunpack.c.h.b16 %v78
    %v1228 = vunpack.c.l.b16 %v79
    %v1229 = vunpack.c.h.b16 %v79
    %v1230 = vunpack.c.l.b16 %v80
    %v1231 = vunpack.c.h.b16 %v80
    %v1232 = vunpack.c.l.b16 %v81
    %v1233 = vunpack.c.h.b16 %v81
    %v1234 = vunpack.c.l.b16 %v82
    %v1235 = vunpack.c.h.b16 %v82
    %v1236 = vunpack.c.l.b16 %v83
    %v1237 = vunpack.c.h.b16 %v83
    %v1238 = vunpack.c.l.b16 %v84
    %v1239 = vunpack.c.h.b16 %v84
    %v1240 = vunpack.c.l.b16 %v85
    %v1241 = vunpack.c.h.b16 %v85
    %v1242 = vunpack.c.l.b16 %v86
    %v1243 = vunpack.c.h.b16 %v86
    %v1244 = vunpack.c.l.b16 %v87
    %v1245 = vunpack.c.h.b16 %v87
    %v1246 = vunpack.c.l.b16 %v88
    %v1247 = vunpack.c.h.b16 %v88
    %v1248 = vunpack.c.l.b16 %v89
    %v1249 = vunpack.c.h.b16 %v89
    %v1250 = vunpack.c.l.b16 %v90
    %v1251 = vunpack.c.h.b16 %v90
    %v1252 = vunpack.c.l.b16 %v91
    %v1253 = vunpack.c.h.b16 %v91
    %v1254 = vunpack.c.l.b16 %v92
    %v1255 = vunpack.c.h.b16 %v92
    %v1256 = vunpack.c.l.b16 %v93
    %v1257 = vunpack.c.h.b16 %v93
    %v1258 = vunpack.c.l.b16 %v94
    %v1259 = vunpack.c.h.b16 %v94
    %v1260 = vunpack.c.l.b16 %v95
    %v1261 = vunpack.c.h.b16 %v95
    %v1262 = vunpack.c.l.b16 %v96
    %v1263 = vunpack.c.h.b16 %v96
    %v1264 = vunpack.c.l.b16 %v97
    %v1265 = vunpack.c.h.b16 %v97
    %v1266 = vunpack.c.l.b16 %v98
    %v1267 = vunpack.c.h.b16 %v98
    %v1268 = vunpack.c.l.b16 %v99
    %v1269 = vunpack.c.h.b16 %v99
    %v1270 = vunpack.c.l.b16 %v100
    %v1271 = vunpack.c.h.b16 %v100
    %v1272 = vunpack.c.l.b16 %v101
    %v1273 = vunpack.c.h.b16 %v101
    %v1274 = vunpack.c.l.b16 %v102
    %v1275 = vunpack.c.h.b16 %v102
    %v1276 = vunpack.c.l.b16 %v103
    %v1277 = vunpack.c.h.b16 %v103
    %v1278 = vunpack.c.l.b16 %v104
    %v1279 = vunpack.c.h.b16 %v104
    %v1280 = vunpack.c.l.b16 %v105
    %v1281 = vunpack.c.h.b16 %v105
    %v1282 = vunpack.c.l.b16 %v106
    %v1283 = vunpack.c.h.b16 %v106
    %v1284 = vunpack.c.l.b16 %v107
    %v1285 = vunpack.c.h.b16 %v107
    %v1286 = vunpack.c.l.b16 %v108
    %v1287 = vunpack.c.h.b16 %v108
    %v1288 = vunpack.c.l.b16 %v109
    %v1289 = vunpack.c.h.b16 %v109
    %v1290 = vunpack.c.l.b16 %v110
    %v1291 = vunpack.c.h.b16 %v110
    %v1292 = vunpack.c.l.b16 %v111
    %v1293 = vunpack.c.h.b16 %v111
    %v1294 = vunpack.c.l.b16 %v112
    %v1295 = vunpack.c.h.b16 %v112
    %v1296 = vunpack.c.l.b16 %v113
    %v1297 = vunpack.c.h.b16 %v113
    %v1298 = vunpack.c.l.b16 %v114
    %v1299 = vunpack.c.h.b16 %v114
    %v1300 = vunpack.c.l.b16 %v115
    %v1301 = vunpack.c.h.b16 %v115
    %v1302 = vunpack.c.l.b16 %v116
    %v1303 = vunpack.c.h.b16 %v116
    %v1304 = vunpack.c.l.b16 %v117
    %v1305 = vunpack.c.h.b16 %v117
    %v1306 = vunpack.c.l.b16 %v118
    %v1307 = vunpack.c.h.b16 %v118
    %v1308 = vunpack.c.l.b16 %v119
    %v1309 = vunpack.c.h.b16 %v119
    %v1310 = vunpack.c.l.b16 %v120
    %v1311 = vunpack.c.h.b16 %v120
    %v1312 = vunpack.c.l.b16 %v121
    %v1313 = vunpack.c.h.b16 %v121
    %v1314 = vunpack.c.l.b16 %v122
    %v1315 = vunpack.c.h.b16 %v122
    %v1316 = vunpack.c.l.b16 %v123
    %v1317 = vunpack.c.h.b16 %v123
    %v1318 = vunpack.c.l.b16 %v124
    %v1319 = vunpack.c.h.b16 %v124
    %v1320 = vunpack.c.l.b16 %v125
    %v1321 = vunpack.c.h.b16 %v125
    %v1322 = vunpack.c.l.b16 %v126
    %v1323 = vunpack.c.h.b16 %v126
    %v1324 = vunpack.c.l.b16 %v127
    %v1325 = vunpack.c.h.b16 %v127
    %v1326 = vunpack.c.l.b16 %v128
    %v1327 = vunpack.c.h.b16 %v128
    %v1328 = vunpack.c.l.b16 %v129
    %v1329 = vunpack.c.h.b16 %v129
    %v1330 = vunpack.c.l.b16 %v130
    %v1331 = vunpack.c.h.b16 %v130
    %v1332 = vunpack.c.l.b16 %v131
    %v1333 = vunpack.c.h.b16 %v131
    %v1334 = vunpack.c.l.b16 %v132
    %v1335 = vunpack.c.h.b16 %v132
    %v1336 = vunpack.c.l.b16 %v133
    %v1337 = vunpack.c.h.b16 %v133
    %v1338 = vunpack.c.l.b16 %v134
    %v1339 = vunpack.c.h.b16 %v134
    %v1340 = vunpack.c.l.b16 %v135
    %v1341 = vunpack.c.h.b16 %v135
    %v1342 = vunpack.c.l.b16 %v136
    %v1343 = vunpack.c.h.b16 %v136
    %v1344 = vunpack.c.l.b16 %v137
    %v1345 = vunpack.c.h.b16 %v137
    %v1346 = vunpack.c.l.b16 %v138
    %v1347 = vunpack.c.h.b16 %v138
    %v1348 = vunpack.c.l.b16 %v139
    %v1349 = vunpack.c.h.b16 %v139
    %v1350 = vunpack.c.l.b16 %v140
    %v1351 = vunpack.c.h.b16 %v140
    %v1352 = vunpack.c.l.b16 %v141
    %v1353 = vunpack.c.h.b16 %v141
    %v1354 = vunpack.c.l.b16 %v142
    %v1355 = vunpack.c.h.b16 %v142
    %v1356 = vunpack.c.l.b16 %v143
    %v1357 = vunpack.c.h.b16 %v143
    %v1358 = vunpack.c.l.b16 %v144
    %v1359 = vunpack.c.h.b16 %v144
    %v1360 = vunpack.c.l.b16 %v145
    %v1361 = vunpack.c.h.b16 %v145
    %v1362 = vunpack.c.l.b16 %v146
    %v1363 = vunpack.c.h.b16 %v146
    %v1364 = vunpack.c.l.b16 %v147
    %v1365 = vunpack.c.h.b16 %v147
    %v1366 = vunpack.c.l.b16 %v148
    %v1367 = vunpack.c.h.b16 %v148
    %v1368 = vunpack.c.l.b16 %v149
    %v1369 = vunpack.c.h.b16 %v149
    %v1370 = vunpack.c.l.b16 %v150
    %v1371 = vunpack.c.h.b16 %v150
    %v1372 = vunpack.c.l.b16 %v151
    %v1373 = vunpack.c.h.b16 %v151
    %v1374 = vunpack.c.l.b16 %v152
    %v1375 = vunpack.c.h.b16 %v152
    %v1376 = vunpack.c.l.b16 %v153
    %v1377 = vunpack.c.h.b16 %v153
    %v1378 = vunpack.c.l.b16 %v154
    %v1379 = vunpack.c.h.b16 %v154
    %v1380 = vunpack.c.l.b16 %v155
    %v1381 = vunpack.c.h.b16 %v155
    %v1382 = vunpack.c.l.b16 %v156
    %v1383 = vunpack.c.h.b16 %v156
    %v1384 = vunpack.c.l.b16 %v157
    %v1385 = vunpack.c.h.b16 %v157
    %v1386 = vunpack.c.l.b16 %v158
    %v1387 = vunpack.c.h.b16 %v158
    %v1388 = vunpack.c.l.b16 %v159
    %v1389 = vunpack.c.h.b16 %v159
    %v1390 = vunpack.c.l.b16 %v160
    %v1391 = vunpack.c.h.b16 %v160
    %v1392 = vunpack.c.l.b16 %v161
    %v1393 = vunpack.c.h.b16 %v161
    %v1394 = vunpack.c.l.b16 %v162
    %v1395 = vunpack.c.h.b16 %v162
    %v1396 = vunpack.c.l.b16 %v163
    %v1397 = vunpack.c.h.b16 %v163
    %v1398 = vunpack.c.l.b16 %v164
    %v1399 = vunpack.c.h.b16 %v164
    %v1400 = vunpack.c.l.b16 %v165
    %v1401 = vunpack.c.h.b16 %v165
    %v1402 = vunpack.c.l.b16 %v166
    %v1403 = vunpack.c.h.b16 %v166
    %v1404 = vunpack.c.l.b16 %v167
    %v1405 = vunpack.c.h.b16 %v167
    %v1406 = vunpack.c.l.b16 %v168
    %v1407 = vunpack.c.h.b16 %v168
    %v1408 = vunpack.c.l.b16 %v169
    %v1409 = vunpack.c.h.b16 %v169
    %v1410 = vunpack.c.l.b16 %v170
    %v1411 = vunpack.c.h.b16 %v170
    %v1412 = vunpack.c.l.b16 %v171
    %v1413 = vunpack.c.h.b16 %v171
    %v1414 = vunpack.c.l.b16 %v172
    %v1415 = vunpack.c.h.b16 %v172
    %v1416 = vunpack.c.l.b16 %v173
    %v1417 = vunpack.c.h.b16 %v173
    %v1418 = vunpack.c.l.b16 %v174
    %v1419 = vunpack.c.h.b16 %v174
    %v1420 = vunpack.c.l.b16 %v175
    %v1421 = vunpack.c.h.b16 %v175
    %v1422 = vunpack.c.l.b16 %v176
    %v1423 = vunpack.c.h.b16 %v176
    %v1424 = vunpack.c.l.b16 %v177
    %v1425 = vunpack.c.h.b16 %v177
    %v1426 = vunpack.c.l.b16 %v178
    %v1427 = vunpack.c.h.b16 %v178
    %v1428 = vunpack.c.l.b16 %v179
    %v1429 = vunpack.c.h.b16 %v179
    %v1430 = vunpack.c.l.b16 %v180
    %v1431 = vunpack.c.h.b16 %v180
    %v1432 = vunpack.c.l.b16 %v181
    %v1433 = vunpack.c.h.b16 %v181
    %v1434 = vunpack.c.l.b16 %v182
    %v1435 = vunpack.c.h.b16 %v182
    %v1436 = vunpack.c.l.b16 %v183
    %v1437 = vunpack.c.h.b16 %v183
    %v1438 = vunpack.c.l.b16 %v184
    %v1439 = vunpack.c.h.b16 %v184
    %v1440 = vunpack.c.l.b16 %v185
    %v1441 = vunpack.c.h.b16 %v185
    %v1442 = vunpack.c.l.b16 %v186
    %v1443 = vunpack.c.h.b16 %v186
    %v1444 = vunpack.c.l.b16 %v187
    %v1445 = vunpack.c.h.b16 %v187
    %v1446 = vunpack.c.l.b16 %v188
    %v1447 = vunpack.c.h.b16 %v188
    %v1448 = vunpack.c.l.b16 %v189
    %v1449 = vunpack.c.h.b16 %v189
    %v1450 = vunpack.c.l.b16 %v190
    %v1451 = vunpack.c.h.b16 %v190
    %v1452 = vunpack.c.l.b16 %v191
    %v1453 = vunpack.c.h.b16 %v191
    %v1454 = vunpack.c.l.b16 %v192
    %v1455 = vunpack.c.h.b16 %v192
    %v1456 = vunpack.c.l.b16 %v193
    %v1457 = vunpack.c.h.b16 %v193
    %v1458 = vunpack.c.l.b16 %v194
    %v1459 = vunpack.c.h.b16 %v194
    %v1460 = vunpack.c.l.b16 %v195
    %v1461 = vunpack.c.h.b16 %v195
    %v1462 = vunpack.c.l.b16 %v196
    %v1463 = vunpack.c.h.b16 %v196
    %v1464 = vunpack.c.l.b16 %v197
    %v1465 = vunpack.c.h.b16 %v197
    %v1466 = vunpack.c.l.b16 %v198
    %v1467 = vunpack.c.h.b16 %v198
    %v1468 = vunpack.c.l.b16 %v199
    %v1469 = vunpack.c.h.b16 %v199
    %v1470 = vunpack.c.l.b16 %v200
    %v1471 = vunpack.c.h.b16 %v200
    %v1472 = vunpack.c.l.b16 %v201
    %v1473 = vunpack.c.h.b16 %v201
    %v1474 = vunpack.c.l.b16 %v202
    %v1475 = vunpack.c.h.b16 %v202
    %v1476 = vunpack.c.l.b16 %v203
    %v1477 = vunpack.c.h.b16 %v203
    %v1478 = vunpack.c.l.b16 %v204
    %v1479 = vunpack.c.h.b16 %v204
    %v1480 = vunpack.c.l.b16 %v205
    %v1481 = vunpack.c.h.b16 %v205
    %v1482 = vunpack.c.l.b16 %v206
    %v1483 = vunpack.c.h.b16 %v206
    %v1484 = vunpack.c.l.b16 %v207
    %v1485 = vunpack.c.h.b16 %v207
    %v1486 = vunpack.c.l.b16 %v208
    %v1487 = vunpack.c.h.b16 %v208
    %v1488 = vunpack.c.l.b16 %v209
    %v1489 = vunpack.c.h.b16 %v209
    %v1490 = vunpack.c.l.b16 %v210
    %v1491 = vunpack.c.h.b16 %v210
    %v1492 = vunpack.c.l.b16 %v211
    %v1493 = vunpack.c.h.b16 %v211
    %v1494 = vunpack.c.l.b16 %v212
    %v1495 = vunpack.c.h.b16 %v212
    %v1496 = vunpack.c.l.b16 %v213
    %v1497 = vunpack.c.h.b16 %v213
    %v1498 = vunpack.c.l.b16 %v214
    %v1499 = vunpack.c.h.b16 %v214
    %v1500 = vunpack.c.l.b16 %v215
    %v1501 = vunpack.c.h.b16 %v215
    %v1502 = vunpack.c.l.b16 %v216
    %v1503 = vunpack.c.h.b16 %v216
    %v1504 = vunpack.c.l.b16 %v217
    %v1505 = vunpack.c.h.b16 %v217
    %v1506 = vunpack.c.l.b16 %v218
    %v1507 = vunpack.c.h.b16 %v218
    %v1508 = vunpack.c.l.b16 %v219
    %v1509 = vunpack.c.h.b16 %v219
    %v1510 = vunpack.c.l.b16 %v220
    %v1511 = vunpack.c.h.b16 %v220
    %v1512 = vunpack.c.l.b16 %v221
    %v1513 = vunpack.c.h.b16 %v221
    %v1514 = vunpack.c.l.b16 %v222
    %v1515 = vunpack.c.h.b16 %v222
    %v1516 = vunpack.c.l.b16 %v223
    %v1517 = vunpack.c.h.b16 %v223
    %v1518 = vunpack.c.l.b16 %v224
    %v1519 = vunpack.c.h.b16 %v224
    %v1520 = vunpack.c.l.b16 %v225
    %v1521 = vunpack.c.h.b16 %v225
    %v1522 = vunpack.c.l.b16 %v226
    %v1523 = vunpack.c.h.b16 %v226
    %v1524 = vunpack.c.l.b16 %v227
    %v1525 = vunpack.c.h.b16 %v227
    %v1526 = vunpack.c.l.b16 %v228
    %v1527 = vunpack.c.h.b16 %v228
    %v1528 = vunpack.c.l.b16 %v229
    %v1529 = vunpack.c.h.b16 %v229
    %v1530 = vunpack.c.l.b16 %v230
    %v1531 = vunpack.c.h.b16 %v230
    %v1532 = vunpack.c.l.b16 %v231
    %v1533 = vunpack.c.h.b16 %v231
    %v1534 = vunpack.c.l.b16 %v232
    %v1535 = vunpack.c.h.b16 %v232
    %v1536 = vunpack.c.l.b16 %v233
    %v1537 = vunpack.c.h.b16 %v233
    %v1538 = vunpack.c.l.b16 %v234
    %v1539 = vunpack.c.h.b16 %v234
    %v1540 = vunpack.c.l.b16 %v235
    %v1541 = vunpack.c.h.b16 %v235
    %v1542 = vunpack.c.l.b16 %v236
    %v1543 = vunpack.c.h.b16 %v236
    %v1544 = vunpack.c.l.b16 %v237
    %v1545 = vunpack.c.h.b16 %v237
    %v1546 = vunpack.c.l.b16 %v238
    %v1547 = vunpack.c.h.b16 %v238
    %v1548 = vunpack.c.l.b16 %v239
    %v1549 = vunpack.c.h.b16 %v239
    %v1550 = vunpack.c.l.b16 %v240
    %v1551 = vunpack.c.h.b16 %v240
    %v1552 = vunpack.c.l.b16 %v241
    %v1553 = vunpack.c.h.b16 %v241
    %v1554 = vunpack.c.l.b16 %v242
    %v1555 = vunpack.c.h.b16 %v242
    %v1556 = vunpack.c.l.b16 %v243
    %v1557 = vunpack.c.h.b16 %v243
    %v1558 = vunpack.c.l.b16 %v244
    %v1559 = vunpack.c.h.b16 %v244
    %v1560 = vunpack.c.l.b16 %v245
    %v1561 = vunpack.c.h.b16 %v245
    %v1562 = vunpack.c.l.b16 %v246
    %v1563 = vunpack.c.h.b16 %v246
    %v1564 = vunpack.c.l.b16 %v247
    %v1565 = vunpack.c.h.b16 %v247
    %v1566 = vunpack.c.l.b16 %v248
    %v1567 = vunpack.c.h.b16 %v248
    %v1568 = vunpack.c.l.b16 %v249
    %v1569 = vunpack.c.h.b16 %v249
    %v1570 = vunpack.c.l.b16 %v250
    %v1571 = vunpack.c.h.b16 %v250
    %v1572 = vunpack.c.l.b16 %v251
    %v1573 = vunpack.c.h.b16 %v251
    %v1574 = vunpack.c.l.b16 %v252
    %v1575 = vunpack.c.h.b16 %v252
    %v1576 = vunpack.c.l.b16 %v253
    %v1577 = vunpack.c.h.b16 %v253
    %v1578 = vunpack.c.l.b16 %v254
    %v1579 = vunpack.c.h.b16 %v254
    %v1580 = vunpack.c.l.b16 %v255
    %v1581 = vunpack.c.h.b16 %v255
    %v1582 = vunpack.c.l.b16 %v256
    %v1583 = vunpack.c.h.b16 %v256
    %v1584 = vunpack.c.l.b16 %v257
    %v1585 = vunpack.c.h.b16 %v257
    %v1586 = vunpack.c.l.b16 %v258
    %v1587 = vunpack.c.h.b16 %v258
    %v1588 = vunpack.c.l.b16 %v259
    %v1589 = vunpack.c.h.b16 %v259
    %v1590 = vunpack.c.l.b16 %v260
    %v1591 = vunpack.c.h.b16 %v260
    %v1592 = vunpack.c.l.b16 %v261
    %v1593 = vunpack.c.h.b16 %v261
    %v1594 = vunpack.c.l.b16 %v262
    %v1595 = vunpack.c.h.b16 %v262
    %v1596 = vunpack.c.l.b16 %v263
    %v1597 = vunpack.c.h.b16 %v263
    %v1598 = vunpack.c.l.b16 %v264
    %v1599 = vunpack.c.h.b16 %v264
    %v1600 = vunpack.c.l.b16 %v265
    %v1601 = vunpack.c.h.b16 %v265
    %v1602 = vunpack.c.l.b16 %v266
    %v1603 = vunpack.c.h.b16 %v266
    %v1604 = vunpack.c.l.b16 %v267
    %v1605 = vunpack.c.h.b16 %v267
    %v1606 = vunpack.c.l.b16 %v268
    %v1607 = vunpack.c.h.b16 %v268
    %v1608 = vunpack.c.l.b16 %v269
    %v1609 = vunpack.c.h.b16 %v269
    %v1610 = vunpack.c.l.b16 %v270
    %v1611 = vunpack.c.h.b16 %v270
    %v1612 = vunpack.c.l.b16 %v271
    %v1613 = vunpack.c.h.b16 %v271
    %v1614 = vunpack.c.l.b16 %v272
    %v1615 = vunpack.c.h.b16 %v272
    %v1616 = vunpack.c.l.b16 %v273
    %v1617 = vunpack.c.h.b16 %v273
    %v1618 = vunpack.c.l.b16 %v274
    %v1619 = vunpack.c.h.b16 %v274
    %v1620 = vunpack.c.l.b16 %v275
    %v1621 = vunpack.c.h.b16 %v275
    %v1622 = vunpack.c.l.b16 %v276
    %v1623 = vunpack.c.h.b16 %v276
    %v1624 = vunpack.c.l.b16 %v277
    %v1625 = vunpack.c.h.b16 %v277
    %v1626 = vunpack.c.l.b16 %v278
    %v1627 = vunpack.c.h.b16 %v278
    %v1628 = vunpack.c.l.b16 %v279
    %v1629 = vunpack.c.h.b16 %v279
    %v1630 = vunpack.c.l.b16 %v280
    %v1631 = vunpack.c.h.b16 %v280
    %v1632 = vunpack.c.l.b16 %v281
    %v1633 = vunpack.c.h.b16 %v281
    %v1634 = vunpack.c.l.b16 %v282
    %v1635 = vunpack.c.h.b16 %v282
    %v1636 = vunpack.c.l.b16 %v283
    %v1637 = vunpack.c.h.b16 %v283
    %v1638 = vunpack.c.l.b16 %v284
    %v1639 = vunpack.c.h.b16 %v284
    %v1640 = vunpack.c.l.b16 %v285
    %v1641 = vunpack.c.h.b16 %v285
    %v1642 = vunpack.c.l.b16 %v286
    %v1643 = vunpack.c.h.b16 %v286
    %v1644 = vunpack.c.l.b16 %v287
    %v1645 = vunpack.c.h.b16 %v287
    %v1646 = vunpack.c.l.b16 %v288
    %v1647 = vunpack.c.h.b16 %v288
    %v1648 = vunpack.c.l.b16 %v289
    %v1649 = vunpack.c.h.b16 %v289
    %v1650 = vunpack.c.l.b16 %v290
    %v1651 = vunpack.c.h.b16 %v290
    %v1652 = vunpack.c.l.b16 %v291
    %v1653 = vunpack.c.h.b16 %v291
    %v1654 = vunpack.c.l.b16 %v292
    %v1655 = vunpack.c.h.b16 %v292
    %v1656 = vunpack.c.l.b16 %v293
    %v1657 = vunpack.c.h.b16 %v293
    %v1658 = vunpack.c.l.b16 %v294
    %v1659 = vunpack.c.h.b16 %v294
    %v1660 = vunpack.c.l.b16 %v295
    %v1661 = vunpack.c.h.b16 %v295
    %v1662 = vunpack.c.l.b16 %v296
    %v1663 = vunpack.c.h.b16 %v296
    %v1664 = vunpack.c.l.b16 %v297
    %v1665 = vunpack.c.h.b16 %v297
    %v1666 = vunpack.c.l.b16 %v298
    %v1667 = vunpack.c.h.b16 %v298
    %v1668 = vunpack.c.l.b16 %v299
    %v1669 = vunpack.c.h.b16 %v299
    %v1670 = vunpack.c.l.b16 %v300
    %v1671 = vunpack.c.h.b16 %v300
    %v1672 = vunpack.c.l.b16 %v301
    %v1673 = vunpack.c.h.b16 %v301
    %v1674 = vunpack.c.l.b16 %v302
    %v1675 = vunpack.c.h.b16 %v302
    %v1676 = vunpack.c.l.b16 %v303
    %v1677 = vunpack.c.h.b16 %v303
    %v1678 = vunpack.c.l.b16 %v304
    %v1679 = vunpack.c.h.b16 %v304
    %v1680 = vunpack.c.l.b16 %v305
    %v1681 = vunpack.c.h.b16 %v305
    %v1682 = vunpack.c.l.b16 %v306
    %v1683 = vunpack.c.h.b16 %v306
    %v1684 = vunpack.c.l.b16 %v307
    %v1685 = vunpack.c.h.b16 %v307
    %v1686 = vunpack.c.l.b16 %v308
    %v1687 = vunpack.c.h.b16 %v308
    %v1688 = vunpack.c.l.b16 %v309
    %v1689 = vunpack.c.h.b16 %v309
    %v1690 = vunpack.c.l.b16 %v310
    %v1691 = vunpack.c.h.b16 %v310
    %v1692 = vunpack.c.l.b16 %v311
    %v1693 = vunpack.c.h.b16 %v311
    %v1694 = vunpack.c.l.b16 %v312
    %v1695 = vunpack.c.h.b16 %v312
    %v1696 = vunpack.c.l.b16 %v313
    %v1697 = vunpack.c.h.b16 %v313
    %v1698 = vunpack.c.l.b16 %v314
    %v1699 = vunpack.c.h.b16 %v314
    %v1700 = vunpack.c.l.b16 %v315
    %v1701 = vunpack.c.h.b16 %v315
    %v1702 = vunpack.c.l.b16 %v316
    %v1703 = vunpack.c.h.b16 %v316
    %v1704 = vunpack.c.l.b16 %v317
    %v1705 = vunpack.c.h.b16 %v317
    %v1706 = vunpack.c.l.b16 %v318
    %v1707 = vunpack.c.h.b16 %v318
    %v1708 = vunpack.c.l.b16 %v319
    %v1709 = vunpack.c.h.b16 %v319
    %v1710 = vunpack.c.l.b16 %v320
    %v1711 = vunpack.c.h.b16 %v320
    %v1712 = vunpack.c.l.b16 %v321
    %v1713 = vunpack.c.h.b16 %v321
    %v1714 = vunpack.c.l.b16 %v322
    %v1715 = vunpack.c.h.b16 %v322
    %v1716 = vunpack.c.l.b16 %v323
    %v1717 = vunpack.c.h.b16 %v323
    %v1718 = vunpack.c.l.b16 %v324
    %v1719 = vunpack.c.h.b16 %v324
    %v1720 = vunpack.c.l.b16 %v325
    %v1721 = vunpack.c.h.b16 %v325
    %v1722 = vunpack.c.l.b16 %v326
    %v1723 = vunpack.c.h.b16 %v326
    %v1724 = vunpack.c.l.b16 %v327
    %v1725 = vunpack.c.h.b16 %v327
    %v1726 = vunpack.c.l.b16 %v328
    %v1727 = vunpack.c.h.b16 %v328
    %v1728 = vunpack.c.l.b16 %v329
    %v1729 = vunpack.c.h.b16 %v329
    %v1730 = vunpack.c.l.b16 %v330
    %v1731 = vunpack.c.h.b16 %v330
    %v1732 = vunpack.c.l.b16 %v331
    %v1733 = vunpack.c.h.b16 %v331
    %v1734 = vunpack.c.l.b16 %v332
    %v1735 = vunpack.c.h.b16 %v332
    %v1736 = vunpack.c.l.b16 %v333
    %v1737 = vunpack.c.h.b16 %v333
    %v1738 = vunpack.c.l.b16 %v334
    %v1739 = vunpack.c.h.b16 %v334
    %v1740 = vunpack.c.l.b16 %v335
    %v1741 = vunpack.c.h.b16 %v335
    %v1742 = vunpack.c.l.b16 %v336
    %v1743 = vunpack.c.h.b16 %v336
    %v1744 = vunpack.c.l.b16 %v337
    %v1745 = vunpack.c.h.b16 %v337
    %v1746 = vunpack.c.l.b16 %v338
    %v1747 = vunpack.c.h.b16 %v338
    %v1748 = vunpack.c.l.b16 %v339
    %v1749 = vunpack.c.h.b16 %v339
    %v1750 = vunpack.c.l.b16 %v340
    %v1751 = vunpack.c.h.b16 %v340
    %v1752 = vunpack.c.l.b16 %v341
    %v1753 = vunpack.c.h.b16 %v341
    %v1754 = vunpack.c.l.b16 %v342
    %v1755 = vunpack.c.h.b16 %v342
    %v1756 = vunpack.c.l.b16 %v343
    %v1757 = vunpack.c.h.b16 %v343
    %v1758 = vunpack.c.l.b16 %v344
    %v1759 = vunpack.c.h.b16 %v344
    %v1760 = vunpack.c.l.b16 %v345
    %v1761 = vunpack.c.h.b16 %v345
    %v1762 = vunpack.c.l.b16 %v346
    %v1763 = vunpack.c.h.b16 %v346
    %v1764 = vunpack.c.l.b16 %v347
    %v1765 = vunpack.c.h.b16 %v347
    %v1766 = vunpack.c.l.b16 %v348
    %v1767 = vunpack.c.h.b16 %v348
    %v1768 = vunpack.c.l.b16 %v349
    %v1769 = vunpack.c.h.b16 %v349
    %v1770 = vunpack.c.l.b16 %v350
    %v1771 = vunpack.c.h.b16 %v350
    %v1772 = vunpack.c.l.b16 %v351
    %v1773 = vunpack.c.h.b16 %v351
    %v1774 = vunpack.c.l.b16 %v352
    %v1775 = vunpack.c.h.b16 %v352
    %v1776 = vunpack.c.l.b16 %v353
    %v1777 = vunpack.c.h.b16 %v353
    %v1778 = vunpack.c.l.b16 %v354
    %v1779 = vunpack.c.h.b16 %v354
    %v1780 = vunpack.c.l.b16 %v355
    %v1781 = vunpack.c.h.b16 %v355
    %v1782 = vunpack.c.l.b16 %v356
    %v1783 = vunpack.c.h.b16 %v356
    %v1784 = vunpack.c.l.b16 %v357
    %v1785 = vunpack.c.h.b16 %v357
    %v1786 = vunpack.c.l.b16 %v358
    %v1787 = vunpack.c.h.b16 %v358
    %v1788 = vunpack.c.l.b16 %v359
    %v1789 = vunpack.c.h.b16 %v359
    %v1790 = vunpack.c.l.b16 %v360
    %v1791 = vunpack.c.h.b16 %v360
    %v1792 = vunpack.c.l.b16 %v361
    %v1793 = vunpack.c.h.b16 %v361
    %v1794 = vunpack.c.l.b16 %v362
    %v1795 = vunpack.c.h.b16 %v362
    %v1796 = vunpack.c.l.b16 %v363
    %v1797 = vunpack.c.h.b16 %v363
    %v1798 = vunpack.c.l.b16 %v364
    %v1799 = vunpack.c.h.b16 %v364
    %v1800 = vunpack.c.l.b16 %v365
    %v1801 = vunpack.c.h.b16 %v365
    %v1802 = vunpack.c.l.b16 %v366
    %v1803 = vunpack.c.h.b16 %v366
    %v1804 = vunpack.c.l.b16 %v367
    %v1805 = vunpack.c.h.b16 %v367
    %v1806 = vunpack.c.l.b16 %v368
    %v1807 = vunpack.c.h.b16 %v368
    %v1808 = vunpack.c.l.b16 %v369
    %v1809 = vunpack.c.h.b16 %v369
    %v1810 = vunpack.c.l.b16 %v370
    %v1811 = vunpack.c.h.b16 %v370
    %v1812 = vunpack.c.l.b16 %v371
    %v1813 = vunpack.c.h.b16 %v371
    %v1814 = vunpack.c.l.b16 %v372
    %v1815 = vunpack.c.h.b16 %v372
    %v1816 = vunpack.c.l.b16 %v373
    %v1817 = vunpack.c.h.b16 %v373
    %v1818 = vunpack.c.l.b16 %v374
    %v1819 = vunpack.c.h.b16 %v374
    %v1820 = vunpack.c.l.b16 %v375
    %v1821 = vunpack.c.h.b16 %v375
    %v1822 = vunpack.c.l.b16 %v376
    %v1823 = vunpack.c.h.b16 %v376
    %v1824 = vunpack.c.l.b16 %v377
    %v1825 = vunpack.c.h.b16 %v377
    %v1826 = vunpack.c.l.b16 %v378
    %v1827 = vunpack.c.h.b16 %v378
    %v1828 = vunpack.c.l.b16 %v379
    %v1829 = vunpack.c.h.b16 %v379
    %v1830 = vunpack.c.l.b16 %v380
    %v1831 = vunpack.c.h.b16 %v380
    %v1832 = vunpack.c.l.b16 %v381
    %v1833 = vunpack.c.h.b16 %v381
    %v1834 = vunpack.c.l.b16 %v382
    %v1835 = vunpack.c.h.b16 %v382
    %v1836 = vunpack.c.l.b16 %v383
    %v1837 = vunpack.c.h.b16 %v383
    %v1838 = vunpack.c.l.b16 %v384
    %v1839 = vunpack.c.h.b16 %v384
    %v1840 = vunpack.c.l.b16 %v385
    %v1841 = vunpack.c.h.b16 %v385
    %v1842 = vunpack.c.l.b16 %v386
    %v1843 = vunpack.c.h.b16 %v386
    %v1844 = vunpack.c.l.b16 %v387
    %v1845 = vunpack.c.h.b16 %v387
    %v1846 = vunpack.c.l.b16 %v388
    %v1847 = vunpack.c.h.b16 %v388
    %v1848 = vunpack.c.l.b16 %v389
    %v1849 = vunpack.c.h.b16 %v389
    %v1850 = vunpack.c.l.b16 %v390
    %v1851 = vunpack.c.h.b16 %v390
    %v1852 = vunpack.c.l.b16 %v391
    %v1853 = vunpack.c.h.b16 %v391
    %v1854 = vunpack.c.l.b16 %v392
    %v1855 = vunpack.c.h.b16 %v392
    %v1856 = vunpack.c.l.b16 %v393
    %v1857 = vunpack.c.h.b16 %v393
    %v1858 = vunpack.c.l.b16 %v394
    %v1859 = vunpack.c.h.b16 %v394
    %v1860 = vunpack.c.l.b16 %v395
    %v1861 = vunpack.c.h.b16 %v395
    %v1862 = vunpack.c.l.b16 %v396
    %v1863 = vunpack.c.h.b16 %v396
    %v1864 = vunpack.c.l.b16 %v397
    %v1865 = vunpack.c.h.b16 %v397
    %v1866 = vunpack.c.l.b16 %v398
    %v1867 = vunpack.c.h.b16 %v398
    %v1868 = vunpack.c.l.b16 %v399
    %v1869 = vunpack.c.h.b16 %v399
    %v1870 = vunpack.c.l.b16 %v400
    %v1871 = vunpack.c.h.b16 %v400
    %v1872 = vunpack.c.l.b16 %v401
    %v1873 = vunpack.c.h.b16 %v401
    %v1874 = vunpack.c.l.b16 %v402
    %v1875 = vunpack.c.h.b16 %v402
    %v1876 = vunpack.c.l.b16 %v403
    %v1877 = vunpack.c.h.b16 %v403
    %v1878 = vunpack.c.l.b16 %v404
    %v1879 = vunpack.c.h.b16 %v404
    %v1880 = vunpack.c.l.b16 %v405
    %v1881 = vunpack.c.h.b16 %v405
    %v1882 = vunpack.c.l.b16 %v406
    %v1883 = vunpack.c.h.b16 %v406
    %v1884 = vunpack.c.l.b16 %v407
    %v1885 = vunpack.c.h.b16 %v407
    %v1886 = vunpack.c.l.b16 %v408
    %v1887 = vunpack.c.h.b16 %v408
    %v1888 = vunpack.c.l.b16 %v409
    %v1889 = vunpack.c.h.b16 %v409
    %v1890 = vunpack.c.l.b16 %v410
    %v1891 = vunpack.c.h.b16 %v410
    %v1892 = vunpack.c.l.b16 %v411
    %v1893 = vunpack.c.h.b16 %v411
    %v1894 = vunpack.c.l.b16 %v412
    %v1895 = vunpack.c.h.b16 %v412
    %v1896 = vunpack.c.l.b16 %v413
    %v1897 = vunpack.c.h.b16 %v413
    %v1898 = vunpack.c.l.b16 %v414
    %v1899 = vunpack.c.h.b16 %v414
    %v1900 = vunpack.c.l.b16 %v415
    %v1901 = vunpack.c.h.b16 %v415
    %v1902 = vunpack.c.l.b16 %v416
    %v1903 = vunpack.c.h.b16 %v416
    %v1904 = vunpack.c.l.b16 %v417
    %v1905 = vunpack.c.h.b16 %v417
    %v1906 = vunpack.c.l.b16 %v418
    %v1907 = vunpack.c.h.b16 %v418
    %v1908 = vunpack.c.l.b16 %v419
    %v1909 = vunpack.c.h.b16 %v419
    %v1910 = vunpack.c.l.b16 %v420
    %v1911 = vunpack.c.h.b16 %v420
    %v1912 = vunpack.c.l.b16 %v421
    %v1913 = vunpack.c.h.b16 %v421
    %v1914 = vunpack.c.l.b16 %v422
    %v1915 = vunpack.c.h.b16 %v422
    %v1916 = vunpack.c.l.b16 %v423
    %v1917 = vunpack.c.h.b16 %v423
    %v1918 = vunpack.c.l.b16 %v424
    %v1919 = vunpack.c.h.b16 %v424
    %v1920 = vunpack.c.l.b16 %v425
    %v1921 = vunpack.c.h.b16 %v425
    %v1922 = vunpack.c.l.b16 %v426
    %v1923 = vunpack.c.h.b16 %v426
    %v1924 = vunpack.c.l.b16 %v427
    %v1925 = vunpack.c.h.b16 %v427
    %v1926 = vunpack.c.l.b16 %v428
    %v1927 = vunpack.c.h.b16 %v428
    %v1928 = vunpack.c.l.b16 %v429
    %v1929 = vunpack.c.h.b16 %v429
    %v1930 = vunpack.c.l.b16 %v430
    %v1931 = vunpack.c.h.b16 %v430
    %v1932 = vunpack.c.l.b16 %v431
    %v1933 = vunpack.c.h.b16 %v431
    %v1934 = vunpack.c.l.b16 %v432
    %v1935 = vunpack.c.h.b16 %v432
    %v1936 = vunpack.c.l.b16 %v433
    %v1937 = vunpack.c.h.b16 %v433
    %v1938 = vunpack.c.l.b16 %v434
    %v1939 = vunpack.c.h.b16 %v434
    %v1940 = vunpack.c.l.b16 %v435
    %v1941 = vunpack.c.h.b16 %v435
    %v1942 = vunpack.c.l.b16 %v436
    %v1943 = vunpack.c.h.b16 %v436
    %v1944 = vunpack.c.l.b16 %v437
    %v1945 = vunpack.c.h.b16 %v437
    %v1946 = vunpack.c.l.b16 %v438
    %v1947 = vunpack.c.h.b16 %v438
    %v1948 = vunpack.c.l.b16 %v439
    %v1949 = vunpack.c.h.b16 %v439
    %v1950 = vunpack.c.l.b16 %v440
    %v1951 = vunpack.c.h.b16 %v440
    %v1952 = vunpack.c.l.b16 %v441
    %v1953 = vunpack.c.h.b16 %v441
    %v1954 = vunpack.c.l.b16 %v442
    %v1955 = vunpack.c.h.b16 %v442
    %v1956 = vunpack.c.l.b16 %v443
    %v1957 = vunpack.c.h.b16 %v443
    %v1958 = vunpack.c.l.b16 %v444
    %v1959 = vunpack.c.h.b16 %v444
    %v1960 = vunpack.c.l.b16 %v445
    %v1961 = vunpack.c.h.b16 %v445
    %v1962 = vunpack.c.l.b16 %v446
    %v1963 = vunpack.c.h.b16 %v446
    %v1964 = vunpack.c.l.b16 %v447
    %v1965 = vunpack.c.h.b16 %v447
    %v1966 = vunpack.c.l.b16 %v448
    %v1967 = vunpack.c.h.b16 %v448
    %v1968 = vunpack.c.l.b16 %v449
    %v1969 = vunpack.c.h.b16 %v449
    %v1970 = vunpack.c.l.b16 %v450
    %v1971 = vunpack.c.h.b16 %v450
    %v1972 = vunpack.c.l.b16 %v451
    %v1973 = vunpack.c.h.b16 %v451
    %v1974 = vunpack.c.l.b16 %v452
    %v1975 = vunpack.c.h.b16 %v452
    %v1976 = vunpack.c.l.b16 %v453
    %v1977 = vunpack.c.h.b16 %v453
    %v1978 = vunpack.c.l.b16 %v454
    %v1979 = vunpack.c.h.b16 %v454
    %v1980 = vunpack.c.l.b16 %v455
    %v1981 = vunpack.c.h.b16 %v455
    %v1982 = vunpack.c.l.b16 %v456
    %v1983 = vunpack.c.h.b16 %v456
    %v1984 = vunpack.c.l.b16 %v457
    %v1985 = vunpack.c.h.b16 %v457
    %v1986 = vunpack.c.l.b16 %v458
    %v1987 = vunpack.c.h.b16 %v458
    %v1988 = vunpack.c.l.b16 %v459
    %v1989 = vunpack.c.h.b16 %v459
    %v1990 = vunpack.c.l.b16 %v460
    %v1991 = vunpack.c.h.b16 %v460
    %v1992 = vunpack.c.l.b16 %v461
    %v1993 = vunpack.c.h.b16 %v461
    %v1994 = vunpack.c.l.b16 %v462
    %v1995 = vunpack.c.h.b16 %v462
    %v1996 = vunpack.c.l.b16 %v463
    %v1997 = vunpack.c.h.b16 %v463
    %v1998 = vunpack.c.l.b16 %v464
    %v1999 = vunpack.c.h.b16 %v464
    %v2000 = vunpack.c.l.b16 %v465
    %v2001 = vunpack.c.h.b16 %v465
    %v2002 = vunpack.c.l.b16 %v466
    %v2003 = vunpack.c.h.b16 %v466
    %v2004 = vunpack.c.l.b16 %v467
    %v2005 = vunpack.c.h.b16 %v467
    %v2006 = vunpack.c.l.b16 %v468
    %v2007 = vunpack.c.h.b16 %v468
    %v2008 = vunpack.c.l.b16 %v469
    %v2009 = vunpack.c.h.b16 %v469
    %v2010 = vunpack.c.l.b16 %v470
    %v2011 = vunpack.c.h.b16 %v470
    %v2012 = vunpack.c.l.b16 %v471
    %v2013 = vunpack.c.h.b16 %v471
    %v2014 = vunpack.c.l.b16 %v472
    %v2015 = vunpack.c.h.b16 %v472
    %v2016 = vunpack.c.l.b16 %v473
    %v2017 = vunpack.c.h.b16 %v473
    %v2018 = vunpack.c.l.b16 %v474
    %v2019 = vunpack.c.h.b16 %v474
    %v2020 = vunpack.c.l.b16 %v475
    %v2021 = vunpack.c.h.b16 %v475
    %v2022 = vunpack.c.l.b16 %v476
    %v2023 = vunpack.c.h.b16 %v476
    %v2024 = vunpack.c.l.b16 %v477
    %v2025 = vunpack.c.h.b16 %v477
    %v2026 = vunpack.c.l.b16 %v478
    %v2027 = vunpack.c.h.b16 %v478
    %v2028 = vunpack.c.l.b16 %v479
    %v2029 = vunpack.c.h.b16 %v479
    %v2030 = vunpack.c.l.b16 %v480
    %v2031 = vunpack.c.h.b16 %v480
    %v2032 = vunpack.c.l.b16 %v481
    %v2033 = vunpack.c.h.b16 %v481
    %v2034 = vunpack.c.l.b16 %v482
    %v2035 = vunpack.c.h.b16 %v482
    %v2036 = vunpack.c.l.b16 %v483
    %v2037 = vunpack.c.h.b16 %v483
    %v2038 = vunpack.c.l.b16 %v484
    %v2039 = vunpack.c.h.b16 %v484
    %v2040 = vunpack.c.l.b16 %v485
    %v2041 = vunpack.c.h.b16 %v485
    %v2042 = vunpack.c.l.b16 %v486
    %v2043 = vunpack.c.h.b16 %v486
    %v2044 = vunpack.c.l.b16 %v487
    %v2045 = vunpack.c.h.b16 %v487
    %v2046 = vunpack.c.l.b16 %v488
    %v2047 = vunpack.c.h.b16 %v488
    %v2048 = vunpack.c.l.b16 %v489
    %v2049 = vunpack.c.h.b16 %v489
    %v2050 = vunpack.c.l.b16 %v490
    %v2051 = vunpack.c.h.b16 %v490
    %v2052 = vunpack.c.l.b16 %v491
    %v2053 = vunpack.c.h.b16 %v491
    %v2054 = vunpack.c.l.b16 %v492
    %v2055 = vunpack.c.h.b16 %v492
    %v2056 = vunpack.c.l.b16 %v493
    %v2057 = vunpack.c.h.b16 %v493
    %v2058 = vunpack.c.l.b16 %v494
    %v2059 = vunpack.c.h.b16 %v494
    %v2060 = vunpack.c.l.b16 %v495
    %v2061 = vunpack.c.h.b16 %v495
    %v2062 = vunpack.c.l.b16 %v496
    %v2063 = vunpack.c.h.b16 %v496
    %v2064 = vunpack.c.l.b16 %v497
    %v2065 = vunpack.c.h.b16 %v497
    %v2066 = vunpack.c.l.b16 %v498
    %v2067 = vunpack.c.h.b16 %v498
    %v2068 = vunpack.c.l.b16 %v499
    %v2069 = vunpack.c.h.b16 %v499
    %v2070 = vunpack.c.l.b16 %v500
    %v2071 = vunpack.c.h.b16 %v500
    %v2072 = vunpack.c.l.b16 %v501
    %v2073 = vunpack.c.h.b16 %v501
    %v2074 = vunpack.c.l.b16 %v502
    %v2075 = vunpack.c.h.b16 %v502
    %v2076 = vunpack.c.l.b16 %v503
    %v2077 = vunpack.c.h.b16 %v503
    %v2078 = vunpack.c.l.b16 %v504
    %v2079 = vunpack.c.h.b16 %v504
    %v2080 = vunpack.c.l.b16 %v505
    %v2081 = vunpack.c.h.b16 %v505
    %v2082 = vunpack.c.l.b16 %v506
    %v2083 = vunpack.c.h.b16 %v506
    %v2084 = vunpack.c.l.b16 %v507
    %v2085 = vunpack.c.h.b16 %v507
    %v2086 = vunpack.c.l.b16 %v508
    %v2087 = vunpack.c.h.b16 %v508
    %v2088 = vunpack.c.l.b16 %v509
    %v2089 = vunpack.c.h.b16 %v509
    %v2090 = vunpack.c.l.b16 %v510
    %v2091 = vunpack.c.h.b16 %v510
    %v2092 = vunpack.c.l.b16 %v511
    %v2093 = vunpack.c.h.b16 %v511
    %v2094 = vunpack.c.l.b16 %v512
    %v2095 = vunpack.c.h.b16 %v512
    %v2096 = vunpack.c.l.b16 %v513
    %v2097 = vunpack.c.h.b16 %v513
    %v2098 = vunpack.c.l.b16 %v514
    %v2099 = vunpack.c.h.b16 %v514
    %v2100 = vunpack.c.l.b16 %v515
    %v2101 = vunpack.c.h.b16 %v515
    %v2102 = vunpack.c.l.b16 %v516
    %v2103 = vunpack.c.h.b16 %v516
    %v2104 = vunpack.c.l.b16 %v517
    %v2105 = vunpack.c.h.b16 %v517
    %v2106 = vunpack.c.l.b16 %v518
    %v2107 = vunpack.c.h.b16 %v518
    %v2108 = vunpack.c.l.b16 %v519
    %v2109 = vunpack.c.h.b16 %v519
    %v2110 = vunpack.c.l.b16 %v520
    %v2111 = vunpack.c.h.b16 %v520
    %v2112 = vunpack.c.l.b16 %v521
    %v2113 = vunpack.c.h.b16 %v521
    %v2114 = vunpack.c.l.b16 %v522
    %v2115 = vunpack.c.h.b16 %v522
    %v2116 = vunpack.c.l.b16 %v523
    %v2117 = vunpack.c.h.b16 %v523
    %v2118 = vunpack.c.l.b16 %v524
    %v2119 = vunpack.c.h.b16 %v524
    %v2120 = vunpack.c.l.b16 %v525
    %v2121 = vunpack.c.h.b16 %v525
    %v2122 = vunpack.c.l.b16 %v526
    %v2123 = vunpack.c.h.b16 %v526
    %v2124 = vunpack.c.l.b16 %v527
    %v2125 = vunpack.c.h.b16 %v527
    %v2126 = vunpack.c.l.b16 %v528
    %v2127 = vunpack.c.h.b16 %v528
    %v2128 = vunpack.c.l.b16 %v529
    %v2129 = vunpack.c.h.b16 %v529
    %v2130 = vunpack.c.l.b16 %v530
    %v2131 = vunpack.c.h.b16 %v530
    %v2132 = vunpack.c.l.b16 %v531
    %v2133 = vunpack.c.h.b16 %v531
    %v2134 = vunpack.c.l.b16 %v532
    %v2135 = vunpack.c.h.b16 %v532
    %v2136 = vunpack.c.l.b16 %v533
    %v2137 = vunpack.c.h.b16 %v533
    %v2138 = vunpack.c.l.b16 %v534
    %v2139 = vunpack.c.h.b16 %v534
    %v2140 = vunpack.c.l.b16 %v535
    %v2141 = vunpack.c.h.b16 %v535
    %v2142 = vunpack.c.l.b16 %v536
    %v2143 = vunpack.c.h.b16 %v536
    %v2144 = vunpack.c.l.b16 %v537
    %v2145 = vunpack.c.h.b16 %v537
    %v2146 = vunpack.c.l.b16 %v538
    %v2147 = vunpack.c.h.b16 %v538
    %v2148 = vunpack.c.l.b16 %v539
    %v2149 = vunpack.c.h.b16 %v539
    %v2150 = vunpack.c.l.b16 %v540
    %v2151 = vunpack.c.h.b16 %v540
    %v2152 = vunpack.c.l.b16 %v541
    %v2153 = vunpack.c.h.b16 %v541
    %v2154 = vunpack.c.l.b16 %v542
    %v2155 = vunpack.c.h.b16 %v542
    %v2156 = vunpack.c.l.b16 %v543
    %v2157 = vunpack.c.h.b16 %v543
    %v2158 = vunpack.c.l.b16 %v544
    %v2159 = vunpack.c.h.b16 %v544
    %v2160 = vunpack.c.l.b16 %v545
    %v2161 = vunpack.c.h.b16 %v545
    %v2162 = vunpack.c.l.b16 %v546
    %v2163 = vunpack.c.h.b16 %v546
    %v2164 = vunpack.c.l.b16 %v547
    %v2165 = vunpack.c.h.b16 %v547
    %v2166 = vunpack.c.l.b16 %v548
    %v2167 = vunpack.c.h.b16 %v548
    %v2168 = vunpack.c.l.b16 %v549
    %v2169 = vunpack.c.h.b16 %v549
    %v2170 = vunpack.c.l.b16 %v550
    %v2171 = vunpack.c.h.b16 %v550
    %v2172 = vunpack.c.l.b16 %v551
    %v2173 = vunpack.c.h.b16 %v551
    %v2174 = vunpack.c.l.b16 %v552
    %v2175 = vunpack.c.h.b16 %v552
    %v2176 = vunpack.c.l.b16 %v553
    %v2177 = vunpack.c.h.b16 %v553
    %v2178 = vunpack.c.l.b16 %v554
    %v2179 = vunpack.c.h.b16 %v554
    %v2180 = vunpack.c.l.b16 %v555
    %v2181 = vunpack.c.h.b16 %v555
    %v2182 = vunpack.c.l.b16 %v556
    %v2183 = vunpack.c.h.b16 %v556
    %v2184 = vunpack.c.l.b16 %v557
    %v2185 = vunpack.c.h.b16 %v557
    %v2186 = vunpack.c.l.b16 %v558
    %v2187 = vunpack.c.h.b16 %v558
    %v2188 = vunpack.c.l.b16 %v559
    %v2189 = vunpack.c.h.b16 %v559
    %v2190 = vunpack.c.l.b16 %v560
    %v2191 = vunpack.c.h.b16 %v560
    %v2192 = vunpack.c.l.b16 %v561
    %v2193 = vunpack.c.h.b16 %v561
    %v2194 = vunpack.c.l.b16 %v562
    %v2195 = vunpack.c.h.b16 %v562
    %v2196 = vunpack.c.l.b16 %v563
    %v2197 = vunpack.c.h.b16 %v563
    %v2198 = vunpack.c.l.b16 %v564
    %v2199 = vunpack.c.h.b16 %v564
    %v2200 = vunpack.c.l.b16 %v565
    %v2201 = vunpack.c.h.b16 %v565
    %v2202 = vunpack.c.l.b16 %v566
    %v2203 = vunpack.c.h.b16 %v566
    %v2204 = vunpack.c.l.b16 %v567
    %v2205 = vunpack.c.h.b16 %v567
    %v2206 = vpack.c.b16 %v1186, %v1182
    %v2207 = vpack.c.b16 %v1187, %v1183
    %v2208 = vpack.c.b16 %v1188, %v1184
    %v2209 = vpack.c.b16 %v1189, %v1185
    %v2210 = vpack.c.b16 %v1194, %v1190
    %v2211 = vpack.c.b16 %v1195, %v1191
    %v2212 = vpack.c.b16 %v1196, %v1192
    %v2213 = vpack.c.b16 %v1197, %v1193
    %v2214 = vpack.c.b16 %v1202, %v1198
    %v2215 = vpack.c.b16 %v1203, %v1199
    %v2216 = vpack.c.b16 %v1204, %v1200
    %v2217 = vpack.c.b16 %v1205, %v1201
    %v2218 = vpack.c.b16 %v1210, %v1206
    %v2219 = vpack.c.b16 %v1211, %v1207
    %v2220 = vpack.c.b16 %v1212, %v1208
    %v2221 = vpack.c.b16 %v1213, %v1209
    %v2222 = vpack.c.b16 %v1218, %v1214
    %v2223 = vpack.c.b16 %v1219, %v1215
    %v2224 = vpack.c.b16 %v1220, %v1216
    %v2225 = vpack.c.b16 %v1221, %v1217
    %v2226 = vpack.c.b16 %v1226, %v1222
    %v2227 = vpack.c.b16 %v1227, %v1223
    %v2228 = vpack.c.b16 %v1228, %v1224
    %v2229 = vpack.c.b16 %v1229, %v1225
    %v2230 = vpack.c.b16 %v1234, %v1230
    %v2231 = vpack.c.b16 %v1235, %v1231
    %v2232 = vpack.c.b16 %v1236, %v1232
    %v2233 = vpack.c.b16 %v1237, %v1233
    %v2234 = vpack.c.b16 %v1242, %v1238
    %v2235 = vpack.c.b16 %v1243, %v1239
    %v2236 = vpack.c.b16 %v1244, %v1240
    %v2237 = vpack.c.b16 %v1245, %v1241
    %v2238 = vpack.c.b16 %v1250, %v1246
    %v2239 = vpack.c.b16 %v1251, %v1247
    %v2240 = vpack.c.b16 %v1252, %v1248
    %v2241 = vpack.c.b16 %v1253, %v1249
    %v2242 = vpack.c.b16 %v1258, %v1254
    %v2243 = vpack.c.b16 %v1259, %v1255
    %v2244 = vpack.c.b16 %v1260, %v1256
    %v2245 = vpack.c.b16 %v1261, %v1257
    %v2246 = vpack.c.b16 %v1266, %v1262
    %v2247 = vpack.c.b16 %v1267, %v1263
    %v2248 = vpack.c.b16 %v1268, %v1264
    %v2249 = vpack.c.b16 %v1269, %v1265
    %v2250 = vpack.c.b16 %v1274, %v1270
    %v2251 = vpack.c.b16 %v1275, %v1271
    %v2252 = vpack.c.b16 %v1276, %v1272
    %v2253 = vpack.c.b16 %v1277, %v1273
    %v2254 = vpack.c.b16 %v1282, %v1278
    %v2255 = vpack.c.b16 %v1283, %v1279
    %v2256 = vpack.c.b16 %v1284, %v1280
    %v2257 = vpack.c.b16 %v1285, %v1281
    %v2258 = vpack.c.b16 %v1290, %v1286
    %v2259 = vpack.c.b16 %v1291, %v1287
    %v2260 = vpack.c.b16 %v1292, %v1288
    %v2261 = vpack.c.b16 %v1293, %v1289
    %v2262 = vpack.c.b16 %v1298, %v1294
    %v2263 = vpack.c.b16 %v1299, %v1295
    %v2264 = vpack.c.b16 %v1300, %v1296
    %v2265 = vpack.c.b16 %v1301, %v1297
    %v2266 = vpack.c.b16 %v1306, %v1302
    %v2267 = vpack.c.b16 %v1307, %v1303
    %v2268 = vpack.c.b16 %v1308, %v1304
    %v2269 = vpack.c.b16 %v1309, %v1305
    %v2270 = vpack.c.b16 %v1314, %v1310
    %v2271 = vpack.c.b16 %v1315, %v1311
    %v2272 = vpack.c.b16 %v1316, %v1312
    %v2273 = vpack.c.b16 %v1317, %v1313
    %v2274 = vpack.c.b16 %v1322, %v1318
    %v2275 = vpack.c.b16 %v1323, %v1319
    %v2276 = vpack.c.b16 %v1324, %v1320
    %v2277 = vpack.c.b16 %v1325, %v1321
    %v2278 = vpack.c.b16 %v1330, %v1326
    %v2279 = vpack.c.b16 %v1331, %v1327
    %v2280 = vpack.c.b16 %v1332, %v1328
    %v2281 = vpack.c.b16 %v1333, %v1329
    %v2282 = vpack.c.b16 %v1338, %v1334
    %v2283 = vpack.c.b16 %v1339, %v1335
    %v2284 = vpack.c.b16 %v1340, %v1336
    %v2285 = vpack.c.b16 %v1341, %v1337
    %v2286 = vpack.c.b16 %v1346, %v1342
    %v2287 = vpack.c.b16 %v1347, %v1343
    %v2288 = vpack.c.b16 %v1348, %v1344
    %v2289 = vpack.c.b16 %v1349, %v1345
    %v2290 = vpack.c.b16 %v1354, %v1350
    %v2291 = vpack.c.b16 %v1355, %v1351
    %v2292 = vpack.c.b16 %v1356, %v1352
    %v2293 = vpack.c.b16 %v1357, %v1353
    %v2294 = vpack.c.b16 %v1362, %v1358
    %v2295 = vpack.c.b16 %v1363, %v1359
    %v2296 = vpack.c.b16 %v1364, %v1360
    %v2297 = vpack.c.b16 %v1365, %v1361
    %v2298 = vpack.c.b16 %v1370, %v1366
    %v2299 = vpack.c.b16 %v1371, %v1367
    %v2300 = vpack.c.b16 %v1372, %v1368
    %v2301 = vpack.c.b16 %v1373, %v1369
    %v2302 = vpack.c.b16 %v1378, %v1374
    %v2303 = vpack.c.b16 %v1379, %v1375
    %v2304 = vpack.c.b16 %v1380, %v1376
    %v2305 = vpack.c.b16 %v1381, %v1377
    %v2306 = vpack.c.b16 %v1386, %v1382
    %v2307 = vpack.c.b16 %v1387, %v1383
    %v2308 = vpack.c.b16 %v1388, %v1384
    %v2309 = vpack.c.b16 %v1389, %v1385
    %v2310 = vpack.c.b16 %v1394, %v1390
    %v2311 = vpack.c.b16 %v1395, %v1391
    %v2312 = vpack.c.b16 %v1396, %v1392
    %v2313 = vpack.c.b16 %v1397, %v1393
    %v2314 = vpack.c.b16 %v1402, %v1398
    %v2315 = vpack.c.b16 %v1403, %v1399
    %v2316 = vpack.c.b16 %v1404, %v1400
    %v2317 = vpack.c.b16 %v1405, %v1401
    %v2318 = vpack.c.b16 %v1410, %v1406
    %v2319 = vpack.c.b16 %v1411, %v1407
    %v2320 = vpack.c.b16 %v1412, %v1408
    %v2321 = vpack.c.b16 %v1413, %v1409
    %v2322 = vpack.c.b16 %v1418, %v1414
    %v2323 = vpack.c.b16 %v1419, %v1415
    %v2324 = vpack.c.b16 %v1420, %v1416
    %v2325 = vpack.c.b16 %v1421, %v1417
    %v2326 = vpack.c.b16 %v1426, %v1422
    %v2327 = vpack.c.b16 %v1427, %v1423
    %v2328 = vpack.c.b16 %v1428, %v1424
    %v2329 = vpack.c.b16 %v1429, %v1425
    %v2330 = vpack.c.b16 %v1434, %v1430
    %v2331 = vpack.c.b16 %v1435, %v1431
    %v2332 = vpack.c.b16 %v1436, %v1432
    %v2333 = vpack.c.b16 %v1437, %v1433
    %v2334 = vpack.c.b16 %v1442, %v1438
    %v2335 = vpack.c.b16 %v1443, %v1439
    %v2336 = vpack.c.b16 %v1444, %v1440
    %v2337 = vpack.c.b16 %v1445, %v1441
    %v2338 = vpack.c.b16 %v1450, %v1446
    %v2339 = vpack.c.b16 %v1451, %v1447
    %v2340 = vpack.c.b16 %v1452, %v1448
    %v2341 = vpack.c.b16 %v1453, %v1449
    %v2342 = vpack.c.b16 %v1458, %v1454
    %v2343 = vpack.c.b16 %v1459, %v1455
    %v2344 = vpack.c.b16 %v1460, %v1456
    %v2345 = vpack.c.b16 %v1461, %v1457
    %v2346 = vpack.c.b16 %v1466, %v1462
    %v2347 = vpack.c.b16 %v1467, %v1463
    %v2348 = vpack.c.b16 %v1468, %v1464
    %v2349 = vpack.c.b16 %v1469, %v1465
    %v2350 = vpack.c.b16 %v1474, %v1470
    %v2351 = vpack.c.b16 %v1475, %v1471
    %v2352 = vpack.c.b16 %v1476, %v1472
    %v2353 = vpack.c.b16 %v1477, %v1473
    %v2354 = vpack.c.b16 %v1482, %v1478
    %v2355 = vpack.c.b16 %v1483, %v1479
    %v2356 = vpack.c.b16 %v1484, %v1480
    %v2357 = vpack.c.b16 %v1485, %v1481
    %v2358 = vpack.c.b16 %v1490, %v1486
    %v2359 = vpack.c.b16 %v1491, %v1487
    %v2360 = vpack.c.b16 %v1492, %v1488
    %v2361 = vpack.c.b16 %v1493, %v1489
    %v2362 = vpack.c.b16 %v1498, %v1494
    %v2363 = vpack.c.b16 %v1499, %v1495
    %v2364 = vpack.c.b16 %v1500, %v1496
    %v2365 = vpack.c.b16 %v1501, %v1497
    %v2366 = vpack.c.b16 %v1506, %v1502
    %v2367 = vpack.c.b16 %v1507, %v1503
    %v2368 = vpack.c.b16 %v1508, %v1504
    %v2369 = vpack.c.b16 %v1509, %v1505
    %v2370 = vpack.c.b16 %v1514, %v1510
    %v2371 = vpack.c.b16 %v1515, %v1511
    %v2372 = vpack.c.b16 %v1516, %v1512
    %v2373 = vpack.c.b16 %v1517, %v1513
    %v2374 = vpack.c.b16 %v1522, %v1518
    %v2375 = vpack.c.b16 %v1523, %v1519
    %v2376 = vpack.c.b16 %v1524, %v1520
    %v2377 = vpack.c.b16 %v1525, %v1521
    %v2378 = vpack.c.b16 %v1530, %v1526
    %v2379 = vpack.c.b16 %v1531, %v1527
    %v2380 = vpack.c.b16 %v1532, %v1528
    %v2381 = vpack.c.b16 %v1533, %v1529
    %v2382 = vpack.c.b16 %v1538, %v1534
    %v2383 = vpack.c.b16 %v1539, %v1535
    %v2384 = vpack.c.b16 %v1540, %v1536
    %v2385 = vpack.c.b16 %v1541, %v1537
    %v2386 = vpack.c.b16 %v1546, %v1542
    %v2387 = vpack.c.b16 %v1547, %v1543
    %v2388 = vpack.c.b16 %v1548, %v1544
    %v2389 = vpack.c.b16 %v1549, %v1545
    %v2390 = vpack.c.b16 %v1554, %v1550
    %v2391 = vpack.c.b16 %v1555, %v1551
    %v2392 = vpack.c.b16 %v1556, %v1552
    %v2393 = vpack.c.b16 %v1557, %v1553
    %v2394 = vpack.c.b16 %v1562, %v1558
    %v2395 = vpack.c.b16 %v1563, %v1559
    %v2396 = vpack.c.b16 %v1564, %v1560
    %v2397 = vpack.c.b16 %v1565, %v1561
    %v2398 = vpack.c.b16 %v1570, %v1566
    %v2399 = vpack.c.b16 %v1571, %v1567
    %v2400 = vpack.c.b16 %v1572, %v1568
    %v2401 = vpack.c.b16 %v1573, %v1569
    %v2402 = vpack.c.b16 %v1578, %v1574
    %v2403 = vpack.c.b16 %v1579, %v1575
    %v2404 = vpack.c.b16 %v1580, %v1576
    %v2405 = vpack.c.b16 %v1581, %v1577
    %v2406 = vpack.c.b16 %v1586, %v1582
    %v2407 = vpack.c.b16 %v1587, %v1583
    %v2408 = vpack.c.b16 %v1588, %v1584
    %v2409 = vpack.c.b16 %v1589, %v1585
    %v2410 = vpack.c.b16 %v1594, %v1590
    %v2411 = vpack.c.b16 %v1595, %v1591
    %v2412 = vpack.c.b16 %v1596, %v1592
    %v2413 = vpack.c.b16 %v1597, %v1593
    %v2414 = vpack.c.b16 %v1602, %v1598
    %v2415 = vpack.c.b16 %v1603, %v1599
    %v2416 = vpack.c.b16 %v1604, %v1600
    %v2417 = vpack.c.b16 %v1605, %v1601
    %v2418 = vpack.c.b16 %v1610, %v1606
    %v2419 = vpack.c.b16 %v1611, %v1607
    %v2420 = vpack.c.b16 %v1612, %v1608
    %v2421 = vpack.c.b16 %v1613, %v1609
    %v2422 = vpack.c.b16 %v1618, %v1614
    %v2423 = vpack.c.b16 %v1619, %v1615
    %v2424 = vpack.c.b16 %v1620, %v1616
    %v2425 = vpack.c.b16 %v1621, %v1617
    %v2426 = vpack.c.b16 %v1626, %v1622
    %v2427 = vpack.c.b16 %v1627, %v1623
    %v2428 = vpack.c.b16 %v1628, %v1624
    %v2429 = vpack.c.b16 %v1629, %v1625
    %v2430 = vpack.c.b16 %v1634, %v1630
    %v2431 = vpack.c.b16 %v1635, %v1631
    %v2432 = vpack.c.b16 %v1636, %v1632
    %v2433 = vpack.c.b16 %v1637, %v1633
    %v2434 = vpack.c.b16 %v1642, %v1638
    %v2435 = vpack.c.b16 %v1643, %v1639
    %v2436 = vpack.c.b16 %v1644, %v1640
    %v2437 = vpack.c.b16 %v1645, %v1641
    %v2438 = vpack.c.b16 %v1650, %v1646
    %v2439 = vpack.c.b16 %v1651, %v1647
    %v2440 = vpack.c.b16 %v1652, %v1648
    %v2441 = vpack.c.b16 %v1653, %v1649
    %v2442 = vpack.c.b16 %v1658, %v1654
    %v2443 = vpack.c.b16 %v1659, %v1655
    %v2444 = vpack.c.b16 %v1660, %v1656
    %v2445 = vpack.c.b16 %v1661, %v1657
    %v2446 = vpack.c.b16 %v1666, %v1662
    %v2447 = vpack.c.b16 %v1667, %v1663
    %v2448 = vpack.c.b16 %v1668, %v1664
    %v2449 = vpack.c.b16 %v1669, %v1665
    %v2450 = vpack.c.b16 %v1674, %v1670
    %v2451 = vpack.c.b16 %v1675, %v1671
    %v2452 = vpack.c.b16 %v1676, %v1672
    %v2453 = vpack.c.b16 %v1677, %v1673
    %v2454 = vpack.c.b16 %v1682, %v1678
    %v2455 = vpack.c.b16 %v1683, %v1679
    %v2456 = vpack.c.b16 %v1684, %v1680
    %v2457 = vpack.c.b16 %v1685, %v1681
    %v2458 = vpack.c.b16 %v1690, %v1686
    %v2459 = vpack.c.b16 %v1691, %v1687
    %v2460 = vpack.c.b16 %v1692, %v1688
    %v2461 = vpack.c.b16 %v1693, %v1689
    %v2462 = vpack.c.b16 %v1698, %v1694
    %v2463 = vpack.c.b16 %v1699, %v1695
    %v2464 = vpack.c.b16 %v1700, %v1696
    %v2465 = vpack.c.b16 %v1701, %v1697
    %v2466 = vpack.c.b16 %v1706, %v1702
    %v2467 = vpack.c.b16 %v1707, %v1703
    %v2468 = vpack.c.b16 %v1708, %v1704
    %v2469 = vpack.c.b16 %v1709, %v1705
    %v2470 = vpack.c.b16 %v1714, %v1710
    %v2471 = vpack.c.b16 %v1715, %v1711
    %v2472 = vpack.c.b16 %v1716, %v1712
    %v2473 = vpack.c.b16 %v1717, %v1713
    %v2474 = vpack.c.b16 %v1722, %v1718
    %v2475 = vpack.c.b16 %v1723, %v1719
    %v2476 = vpack.c.b16 %v1724, %v1720
    %v2477 = vpack.c.b16 %v1725, %v1721
    %v2478 = vpack.c.b16 %v1730, %v1726
    %v2479 = vpack.c.b16 %v1731, %v1727
    %v2480 = vpack.c.b16 %v1732, %v1728
    %v2481 = vpack.c.b16 %v1733, %v1729
    %v2482 = vpack.c.b16 %v1738, %v1734
    %v2483 = vpack.c.b16 %v1739, %v1735
    %v2484 = vpack.c.b16 %v1740, %v1736
    %v2485 = vpack.c.b16 %v1741, %v1737
    %v2486 = vpack.c.b16 %v1746, %v1742
    %v2487 = vpack.c.b16 %v1747, %v1743
    %v2488 = vpack.c.b16 %v1748, %v1744
    %v2489 = vpack.c.b16 %v1749, %v1745
    %v2490 = vpack.c.b16 %v1754, %v1750
    %v2491 = vpack.c.b16 %v1755, %v1751
    %v2492 = vpack.c.b16 %v1756, %v1752
    %v2493 = vpack.c.b16 %v1757, %v1753
    %v2494 = vpack.c.b16 %v1762, %v1758
    %v2495 = vpack.c.b16 %v1763, %v1759
    %v2496 = vpack.c.b16 %v1764, %v1760
    %v2497 = vpack.c.b16 %v1765, %v1761
    %v2498 = vpack.c.b16 %v1770, %v1766
    %v2499 = vpack.c.b16 %v1771, %v1767
    %v2500 = vpack.c.b16 %v1772, %v1768
    %v2501 = vpack.c.b16 %v1773, %v1769
    %v2502 = vpack.c.b16 %v1778, %v1774
    %v2503 = vpack.c.b16 %v1779, %v1775
    %v2504 = vpack.c.b16 %v1780, %v1776
    %v2505 = vpack.c.b16 %v1781, %v1777
    %v2506 = vpack.c.b16 %v1786, %v1782
    %v2507 = vpack.c.b16 %v1787, %v1783
    %v2508 = vpack.c.b16 %v1788, %v1784
    %v2509 = vpack.c.b16 %v1789, %v1785
    %v2510 = vpack.c.b16 %v1794, %v1790
    %v2511 = vpack.c.b16 %v1795, %v1791
    %v2512 = vpack.c.b16 %v1796, %v1792
    %v2513 = vpack.c.b16 %v1797, %v1793
    %v2514 = vpack.c.b16 %v1802, %v1798
    %v2515 = vpack.c.b16 %v1803, %v1799
    %v2516 = vpack.c.b16 %v1804, %v1800
    %v2517 = vpack.c.b16 %v1805, %v1801
    %v2518 = vpack.c.b16 %v1810, %v1806
    %v2519 = vpack.c.b16 %v1811, %v1807
    %v2520 = vpack.c.b16 %v1812, %v1808
    %v2521 = vpack.c.b16 %v1813, %v1809
    %v2522 = vpack.c.b16 %v1818, %v1814
    %v2523 = vpack.c.b16 %v1819, %v1815
    %v2524 = vpack.c.b16 %v1820, %v1816
    %v2525 = vpack.c.b16 %v1821, %v1817
    %v2526 = vpack.c.b16 %v1826, %v1822
    %v2527 = vpack.c.b16 %v1827, %v1823
    %v2528 = vpack.c.b16 %v1828, %v1824
    %v2529 = vpack.c.b16 %v1829, %v1825
    %v2530 = vpack.c.b16 %v1834, %v1830
    %v2531 = vpack.c.b16 %v1835, %v1831
    %v2532 = vpack.c.b16 %v1836, %v1832
    %v2533 = vpack.c.b16 %v1837, %v1833
    %v2534 = vpack.c.b16 %v1842, %v1838
    %v2535 = vpack.c.b16 %v1843, %v1839
    %v2536 = vpack.c.b16 %v1844, %v1840
    %v2537 = vpack.c.b16 %v1845, %v1841
    %v2538 = vpack.c.b16 %v1850, %v1846
    %v2539 = vpack.c.b16 %v1851, %v1847
    %v2540 = vpack.c.b16 %v1852, %v1848
    %v2541 = vpack.c.b16 %v1853, %v1849
    %v2542 = vpack.c.b16 %v1858, %v1854
    %v2543 = vpack.c.b16 %v1859, %v1855
    %v2544 = vpack.c.b16 %v1860, %v1856
    %v2545 = vpack.c.b16 %v1861, %v1857
    %v2546 = vpack.c.b16 %v1866, %v1862
    %v2547 = vpack.c.b16 %v1867, %v1863
    %v2548 = vpack.c.b16 %v1868, %v1864
    %v2549 = vpack.c.b16 %v1869, %v1865
    %v2550 = vpack.c.b16 %v1874, %v1870
    %v2551 = vpack.c.b16 %v1875, %v1871
    %v2552 = vpack.c.b16 %v1876, %v1872
    %v2553 = vpack.c.b16 %v1877, %v1873
    %v2554 = vpack.c.b16 %v1882, %v1878
    %v2555 = vpack.c.b16 %v1883, %v1879
    %v2556 = vpack.c.b16 %v1884, %v1880
    %v2557 = vpack.c.b16 %v1885, %v1881
    %v2558 = vpack.c.b16 %v1890, %v1886
    %v2559 = vpack.c.b16 %v1891, %v1887
    %v2560 = vpack.c.b16 %v1892, %v1888
    %v2561 = vpack.c.b16 %v1893, %v1889
    %v2562 = vpack.c.b16 %v1898, %v1894
    %v2563 = vpack.c.b16 %v1899, %v1895
    %v2564 = vpack.c.b16 %v1900, %v1896
    %v2565 = vpack.c.b16 %v1901, %v1897
    %v2566 = vpack.c.b16 %v1906, %v1902
    %v2567 = vpack.c.b16 %v1907, %v1903
    %v2568 = vpack.c.b16 %v1908, %v1904
    %v2569 = vpack.c.b16 %v1909, %v1905
    %v2570 = vpack.c.b16 %v1914, %v1910
    %v2571 = vpack.c.b16 %v1915, %v1911
    %v2572 = vpack.c.b16 %v1916, %v1912
    %v2573 = vpack.c.b16 %v1917, %v1913
    %v2574 = vpack.c.b16 %v1922, %v1918
    %v2575 = vpack.c.b16 %v1923, %v1919
    %v2576 = vpack.c.b16 %v1924, %v1920
    %v2577 = vpack.c.b16 %v1925, %v1921
    %v2578 = vpack.c.b16 %v1930, %v1926
    %v2579 = vpack.c.b16 %v1931, %v1927
    %v2580 = vpack.c.b16 %v1932, %v1928
    %v2581 = vpack.c.b16 %v1933, %v1929
    %v2582 = vpack.c.b16 %v1938, %v1934
    %v2583 = vpack.c.b16 %v1939, %v1935
    %v2584 = vpack.c.b16 %v1940, %v1936
    %v2585 = vpack.c.b16 %v1941, %v1937
    %v2586 = vpack.c.b16 %v1946, %v1942
    %v2587 = vpack.c.b16 %v1947, %v1943
    %v2588 = vpack.c.b16 %v1948, %v1944
    %v2589 = vpack.c.b16 %v1949, %v1945
    %v2590 = vpack.c.b16 %v1954, %v1950
    %v2591 = vpack.c.b16 %v1955, %v1951
    %v2592 = vpack.c.b16 %v1956, %v1952
    %v2593 = vpack.c.b16 %v1957, %v1953
    %v2594 = vpack.c.b16 %v1962, %v1958
    %v2595 = vpack.c.b16 %v1963, %v1959
    %v2596 = vpack.c.b16 %v1964, %v1960
    %v2597 = vpack.c.b16 %v1965, %v1961
    %v2598 = vpack.c.b16 %v1970, %v1966
    %v2599 = vpack.c.b16 %v1971, %v1967
    %v2600 = vpack.c.b16 %v1972, %v1968
    %v2601 = vpack.c.b16 %v1973, %v1969
    %v2602 = vpack.c.b16 %v1978, %v1974
    %v2603 = vpack.c.b16 %v1979, %v1975
    %v2604 = vpack.c.b16 %v1980, %v1976
    %v2605 = vpack.c.b16 %v1981, %v1977
    %v2606 = vpack.c.b16 %v1986, %v1982
    %v2607 = vpack.c.b16 %v1987, %v1983
    %v2608 = vpack.c.b16 %v1988, %v1984
    %v2609 = vpack.c.b16 %v1989, %v1985
    %v2610 = vpack.c.b16 %v1994, %v1990
    %v2611 = vpack.c.b16 %v1995, %v1991
    %v2612 = vpack.c.b16 %v1996, %v1992
    %v2613 = vpack.c.b16 %v1997, %v1993
    %v2614 = vpack.c.b16 %v2002, %v1998
    %v2615 = vpack.c.b16 %v2003, %v1999
    %v2616 = vpack.c.b16 %v2004, %v2000
    %v2617 = vpack.c.b16 %v2005, %v2001
    %v2618 = vpack.c.b16 %v2010, %v2006
    %v2619 = vpack.c.b16 %v2011, %v2007
    %v2620 = vpack.c.b16 %v2012, %v2008
    %v2621 = vpack.c.b16 %v2013, %v2009
    %v2622 = vpack.c.b16 %v2018, %v2014
    %v2623 = vpack.c.b16 %v2019, %v2015
    %v2624 = vpack.c.b16 %v2020, %v2016
    %v2625 = vpack.c.b16 %v2021, %v2017
    %v2626 = vpack.c.b16 %v2026, %v2022
    %v2627 = vpack.c.b16 %v2027, %v2023
    %v2628 = vpack.c.b16 %v2028, %v2024
    %v2629 = vpack.c.b16 %v2029, %v2025
    %v2630 = vpack.c.b16 %v2034, %v2030
    %v2631 = vpack.c.b16 %v2035, %v2031
    %v2632 = vpack.c.b16 %v2036, %v2032
    %v2633 = vpack.c.b16 %v2037, %v2033
    %v2634 = vpack.c.b16 %v2042, %v2038
    %v2635 = vpack.c.b16 %v2043, %v2039
    %v2636 = vpack.c.b16 %v2044, %v2040
    %v2637 = vpack.c.b16 %v2045, %v2041
    %v2638 = vpack.c.b16 %v2050, %v2046
    %v2639 = vpack.c.b16 %v2051, %v2047
    %v2640 = vpack.c.b16 %v2052, %v2048
    %v2641 = vpack.c.b16 %v2053, %v2049
    %v2642 = vpack.c.b16 %v2058, %v2054
    %v2643 = vpack.c.b16 %v2059, %v2055
    %v2644 = vpack.c.b16 %v2060, %v2056
    %v2645 = vpack.c.b16 %v2061, %v2057
    %v2646 = vpack.c.b16 %v2066, %v2062
    %v2647 = vpack.c.b16 %v2067, %v2063
    %v2648 = vpack.c.b16 %v2068, %v2064
    %v2649 = vpack.c.b16 %v2069, %v2065
    %v2650 = vpack.c.b16 %v2074, %v2070
    %v2651 = vpack.c.b16 %v2075, %v2071
    %v2652 = vpack.c.b16 %v2076, %v2072
    %v2653 = vpack.c.b16 %v2077, %v2073
    %v2654 = vpack.c.b16 %v2082, %v2078
    %v2655 = vpack.c.b16 %v2083, %v2079
    %v2656 = vpack.c.b16 %v2084, %v2080
    %v2657 = vpack.c.b16 %v2085, %v2081
    %v2658 = vpack.c.b16 %v2090, %v2086
    %v2659 = vpack.c.b16 %v2091, %v2087
    %v2660 = vpack.c.b16 %v2092, %v2088
    %v2661 = vpack.c.b16 %v2093, %v2089
    %v2662 = vpack.c.b16 %v2098, %v2094
    %v2663 = vpack.c.b16 %v2099, %v2095
    %v2664 = vpack.c.b16 %v2100, %v2096
    %v2665 = vpack.c.b16 %v2101, %v2097
    %v2666 = vpack.c.b16 %v2106, %v2102
    %v2667 = vpack.c.b16 %v2107, %v2103
    %v2668 = vpack.c.b16 %v2108, %v2104
    %v2669 = vpack.c.b16 %v2109, %v2105
    %v2670 = vpack.c.b16 %v2114, %v2110
    %v2671 = vpack.c.b16 %v2115, %v2111
    %v2672 = vpack.c.b16 %v2116, %v2112
    %v2673 = vpack.c.b16 %v2117, %v2113
    %v2674 = vpack.c.b16 %v2122, %v2118
    %v2675 = vpack.c.b16 %v2123, %v2119
    %v2676 = vpack.c.b16 %v2124, %v2120
    %v2677 = vpack.c.b16 %v2125, %v2121
    %v2678 = vpack.c.b16 %v2130, %v2126
    %v2679 = vpack.c.b16 %v2131, %v2127
    %v2680 = vpack.c.b16 %v2132, %v2128
    %v2681 = vpack.c.b16 %v2133, %v2129
    %v2682 = vpack.c.b16 %v2138, %v2134
    %v2683 = vpack.c.b16 %v2139, %v2135
    %v2684 = vpack.c.b16 %v2140, %v2136
    %v2685 = vpack.c.b16 %v2141, %v2137
    %v2686 = vpack.c.b16 %v2146, %v2142
    %v2687 = vpack.c.b16 %v2147, %v2143
    %v2688 = vpack.c.b16 %v2148, %v2144
    %v2689 = vpack.c.b16 %v2149, %v2145
    %v2690 = vpack.c.b16 %v2154, %v2150
    %v2691 = vpack.c.b16 %v2155, %v2151
    %v2692 = vpack.c.b16 %v2156, %v2152
    %v2693 = vpack.c.b16 %v2157, %v2153
    %v2694 = vpack.c.b16 %v2162, %v2158
    %v2695 = vpack.c.b16 %v2163, %v2159
    %v2696 = vpack.c.b16 %v2164, %v2160
    %v2697 = vpack.c.b16 %v2165, %v2161
    %v2698 = vpack.c.b16 %v2170, %v2166
    %v2699 = vpack.c.b16 %v2171, %v2167
    %v2700 = vpack.c.b16 %v2172, %v2168
    %v2701 = vpack.c.b16 %v2173, %v2169
    %v2702 = vpack.c.b16 %v2178, %v2174
    %v2703 = vpack.c.b16 %v2179, %v2175
    %v2704 = vpack.c.b16 %v2180, %v2176
    %v2705 = vpack.c.b16 %v2181, %v2177
    %v2706 = vpack.c.b16 %v2186, %v2182
    %v2707 = vpack.c.b16 %v2187, %v2183
    %v2708 = vpack.c.b16 %v2188, %v2184
    %v2709 = vpack.c.b16 %v2189, %v2185
    %v2710 = vpack.c.b16 %v2194, %v2190
    %v2711 = vpack.c.b16 %v2195, %v2191
    %v2712 = vpack.c.b16 %v2196, %v2192
    %v2713 = vpack.c.b16 %v2197, %v2193
    %v2714 = vpack.c.b16 %v2202, %v2198
    %v2715 = vpack.c.b16 %v2203, %v2199
    %v2716 = vpack.c.b16 %v2204, %v2200
    %v2717 = vpack.c.b16 %v2205, %v2201
    %3230 = vmatprep.subr.bf16.mxu0 %v2207
    %3231 = vmatpush1.bf16.msra.mxu0 %v2206
    %3232 = vmatprep.subr.bf16.mxu0 %v2211
    %3233 = vmatpush1.bf16.msra.mxu0 %v2210
    %3234 = vmatprep.subr.bf16.mxu0 %v2215
    %3235 = vmatpush1.bf16.msra.mxu0 %v2214
    %3236 = vmatprep.subr.bf16.mxu0 %v2219
    %3237 = vmatpush1.bf16.msra.mxu0 %v2218
    %3238 = vmatprep.subr.bf16.mxu0 %v2223
    %3239 = vmatpush1.bf16.msra.mxu0 %v2222
    %3240 = vmatprep.subr.bf16.mxu0 %v2227
    %3241 = vmatpush1.bf16.msra.mxu0 %v2226
    %3242 = vmatprep.subr.bf16.mxu0 %v2231
    %3243 = vmatpush1.bf16.msra.mxu0 %v2230
    %3244 = vmatprep.subr.bf16.mxu0 %v2235
    %3245 = vmatpush1.bf16.msra.mxu0 %v2234
    %3246 = vmatprep.subr.bf16.mxu0 %v2239
    %3247 = vmatpush1.bf16.msra.mxu0 %v2238
    %3248 = vmatprep.subr.bf16.mxu0 %v2243
    %3249 = vmatpush1.bf16.msra.mxu0 %v2242
    %3250 = vmatprep.subr.bf16.mxu0 %v2247
    %3251 = vmatpush1.bf16.msra.mxu0 %v2246
    %3252 = vmatprep.subr.bf16.mxu0 %v2251
    %3253 = vmatpush1.bf16.msra.mxu0 %v2250
    %3254 = vmatprep.subr.bf16.mxu0 %v2255
    %3255 = vmatpush1.bf16.msra.mxu0 %v2254
    %3256 = vmatprep.subr.bf16.mxu0 %v2259
    %3257 = vmatpush1.bf16.msra.mxu0 %v2258
    %3258 = vmatprep.subr.bf16.mxu0 %v2263
    %3259 = vmatpush1.bf16.msra.mxu0 %v2262
    %3260 = vmatprep.subr.bf16.mxu0 %v2267
    %3261 = vmatpush1.bf16.msra.mxu0 %v2266
    %3262 = vmatprep.mubr.bf16.mxu0 %v639
    %3263 = vmatmul.mubr.bf16.gmra.mrb[0].mxu0 %v638
    %v3264 = vpop.f32.mrb[0].mxu0
    %v3265 = vadd.f32 %v573, %v3264
    %v3266 = vpop.f32.mrb[0].mxu0
    %v3267 = vadd.f32 %v577, %v3266
    %v3268 = vpop.f32.mrb[0].mxu0
    %v3269 = vadd.f32 %v573, %v3268
    %v3270 = vpop.f32.mrb[0].mxu0
    %v3271 = vadd.f32 %v577, %v3270
    %3272 = vdwg.mxu0
    %3273 = vmatprep.subr.bf16.mxu0 %v2271
    %3274 = vmatpush1.bf16.msra.mxu0 %v2270
    %3275 = vmatprep.subr.bf16.mxu0 %v2275
    %3276 = vmatpush1.bf16.msra.mxu0 %v2274
    %3277 = vmatprep.subr.bf16.mxu0 %v2279
    %3278 = vmatpush1.bf16.msra.mxu0 %v2278
    %3279 = vmatprep.subr.bf16.mxu0 %v2283
    %3280 = vmatpush1.bf16.msra.mxu0 %v2282
    %3281 = vmatprep.subr.bf16.mxu0 %v2287
    %3282 = vmatpush1.bf16.msra.mxu0 %v2286
    %3283 = vmatprep.subr.bf16.mxu0 %v2291
    %3284 = vmatpush1.bf16.msra.mxu0 %v2290
    %3285 = vmatprep.subr.bf16.mxu0 %v2295
    %3286 = vmatpush1.bf16.msra.mxu0 %v2294
    %3287 = vmatprep.subr.bf16.mxu0 %v2299
    %3288 = vmatpush1.bf16.msra.mxu0 %v2298
    %3289 = vmatprep.subr.bf16.mxu0 %v2303
    %3290 = vmatpush1.bf16.msra.mxu0 %v2302
    %3291 = vmatprep.subr.bf16.mxu0 %v2307
    %3292 = vmatpush1.bf16.msra.mxu0 %v2306
    %3293 = vmatprep.subr.bf16.mxu0 %v2311
    %3294 = vmatpush1.bf16.msra.mxu0 %v2310
    %3295 = vmatprep.subr.bf16.mxu0 %v2315
    %3296 = vmatpush1.bf16.msra.mxu0 %v2314
    %3297 = vmatprep.subr.bf16.mxu0 %v2319
    %3298 = vmatpush1.bf16.msra.mxu0 %v2318
    %3299 = vmatprep.subr.bf16.mxu0 %v2323
    %3300 = vmatpush1.bf16.msra.mxu0 %v2322
    %3301 = vmatprep.subr.bf16.mxu0 %v2327
    %3302 = vmatpush1.bf16.msra.mxu0 %v2326
    %3303 = vmatprep.subr.bf16.mxu0 %v2331
    %3304 = vmatpush1.bf16.msra.mxu0 %v2330
    %3305 = vmatprep.mubr.bf16.mxu0 %v641
    %3306 = vmatmul.mubr.bf16.gmra.mrb[0].mxu0 %v640
    %v3307 = vpop.f32.mrb[0].mxu0
    %v3308 = vadd.f32 %v3265, %v3307
    %v3309 = vpop.f32.mrb[0].mxu0
    %v3310 = vadd.f32 %v3267, %v3309
    %v3311 = vpop.f32.mrb[0].mxu0
    %v3312 = vadd.f32 %v3269, %v3311
    %v3313 = vpop.f32.mrb[0].mxu0
    %v3314 = vadd.f32 %v3271, %v3313
    %3315 = vdwg.mxu0
    %3316 = vmatprep.subr.bf16.mxu0 %v2335
    %3317 = vmatpush1.bf16.msra.mxu0 %v2334
    %3318 = vmatprep.subr.bf16.mxu0 %v2339
    %3319 = vmatpush1.bf16.msra.mxu0 %v2338
    %3320 = vmatprep.subr.bf16.mxu0 %v2343
    %3321 = vmatpush1.bf16.msra.mxu0 %v2342
    %3322 = vmatprep.subr.bf16.mxu0 %v2347
    %3323 = vmatpush1.bf16.msra.mxu0 %v2346
    %3324 = vmatprep.subr.bf16.mxu0 %v2351
    %3325 = vmatpush1.bf16.msra.mxu0 %v2350
    %3326 = vmatprep.subr.bf16.mxu0 %v2355
    %3327 = vmatpush1.bf16.msra.mxu0 %v2354
    %3328 = vmatprep.subr.bf16.mxu0 %v2359
    %3329 = vmatpush1.bf16.msra.mxu0 %v2358
    %3330 = vmatprep.subr.bf16.mxu0 %v2363
    %3331 = vmatpush1.bf16.msra.mxu0 %v2362
    %3332 = vmatprep.subr.bf16.mxu0 %v2367
    %3333 = vmatpush1.bf16.msra.mxu0 %v2366
    %3334 = vmatprep.subr.bf16.mxu0 %v2371
    %3335 = vmatpush1.bf16.msra.mxu0 %v2370
    %3336 = vmatprep.subr.bf16.mxu0 %v2375
    %3337 = vmatpush1.bf16.msra.mxu0 %v2374
    %3338 = vmatprep.subr.bf16.mxu0 %v2379
    %3339 = vmatpush1.bf16.msra.mxu0 %v2378
    %3340 = vmatprep.subr.bf16.mxu0 %v2383
    %3341 = vmatpush1.bf16.msra.mxu0 %v2382
    %3342 = vmatprep.subr.bf16.mxu0 %v2387
    %3343 = vmatpush1.bf16.msra.mxu0 %v2386
    %3344 = vmatprep.subr.bf16.mxu0 %v2391
    %3345 = vmatpush1.bf16.msra.mxu0 %v2390
    %3346 = vmatprep.subr.bf16.mxu0 %v2395
    %3347 = vmatpush1.bf16.msra.mxu0 %v2394
    %3348 = vmatprep.mubr.bf16.mxu0 %v643
    %3349 = vmatmul.mubr.bf16.gmra.mrb[0].mxu0 %v642
    %v3350 = vpop.f32.mrb[0].mxu0
    %v3351 = vadd.f32 %v3308, %v3350
    %v3352 = vpop.f32.mrb[0].mxu0
    %v3353 = vadd.f32 %v3310, %v3352
    %v3354 = vpop.f32.mrb[0].mxu0
    %v3355 = vadd.f32 %v3312, %v3354
    %v3356 = vpop.f32.mrb[0].mxu0
    %v3357 = vadd.f32 %v3314, %v3356
    %3358 = vdwg.mxu0
    %3359 = vmatprep.subr.bf16.mxu0 %v2399
    %3360 = vmatpush1.bf16.msra.mxu0 %v2398
    %3361 = vmatprep.subr.bf16.mxu0 %v2403
    %3362 = vmatpush1.bf16.msra.mxu0 %v2402
    %3363 = vmatprep.subr.bf16.mxu0 %v2407
    %3364 = vmatpush1.bf16.msra.mxu0 %v2406
    %3365 = vmatprep.subr.bf16.mxu0 %v2411
    %3366 = vmatpush1.bf16.msra.mxu0 %v2410
    %3367 = vmatprep.subr.bf16.mxu0 %v2415
    %3368 = vmatpush1.bf16.msra.mxu0 %v2414
    %3369 = vmatprep.subr.bf16.mxu0 %v2419
    %3370 = vmatpush1.bf16.msra.mxu0 %v2418
    %3371 = vmatprep.subr.bf16.mxu0 %v2423
    %3372 = vmatpush1.bf16.msra.mxu0 %v2422
    %3373 = vmatprep.subr.bf16.mxu0 %v2427
    %3374 = vmatpush1.bf16.msra.mxu0 %v2426
    %3375 = vmatprep.subr.bf16.mxu0 %v2431
    %3376 = vmatpush1.bf16.msra.mxu0 %v2430
    %3377 = vmatprep.subr.bf16.mxu0 %v2435
    %3378 = vmatpush1.bf16.msra.mxu0 %v2434
    %3379 = vmatprep.subr.bf16.mxu0 %v2439
    %3380 = vmatpush1.bf16.msra.mxu0 %v2438
    %3381 = vmatprep.subr.bf16.mxu0 %v2443
    %3382 = vmatpush1.bf16.msra.mxu0 %v2442
    %3383 = vmatprep.subr.bf16.mxu0 %v2447
    %3384 = vmatpush1.bf16.msra.mxu0 %v2446
    %3385 = vmatprep.subr.bf16.mxu0 %v2451
    %3386 = vmatpush1.bf16.msra.mxu0 %v2450
    %3387 = vmatprep.subr.bf16.mxu0 %v2455
    %3388 = vmatpush1.bf16.msra.mxu0 %v2454
    %3389 = vmatprep.subr.bf16.mxu0 %v2459
    %3390 = vmatpush1.bf16.msra.mxu0 %v2458
    %3391 = vmatprep.mubr.bf16.mxu0 %v645
    %3392 = vmatmul.mubr.bf16.gmra.mrb[0].mxu0 %v644
    %v3393 = vpop.f32.mrb[0].mxu0
    %v3394 = vadd.f32 %v3351, %v3393
    %v3395 = vpop.f32.mrb[0].mxu0
    %v3396 = vadd.f32 %v3353, %v3395
    %v3397 = vpop.f32.mrb[0].mxu0
    %v3398 = vadd.f32 %v3355, %v3397
    %v3399 = vpop.f32.mrb[0].mxu0
    %v3400 = vadd.f32 %v3357, %v3399
    %3401 = vdwg.mxu0
    %3402 = vmatprep.subr.bf16.mxu0 %v2463
    %3403 = vmatpush1.bf16.msra.mxu0 %v2462
    %3404 = vmatprep.subr.bf16.mxu0 %v2467
    %3405 = vmatpush1.bf16.msra.mxu0 %v2466
    %3406 = vmatprep.subr.bf16.mxu0 %v2471
    %3407 = vmatpush1.bf16.msra.mxu0 %v2470
    %3408 = vmatprep.subr.bf16.mxu0 %v2475
    %3409 = vmatpush1.bf16.msra.mxu0 %v2474
    %3410 = vmatprep.subr.bf16.mxu0 %v2479
    %3411 = vmatpush1.bf16.msra.mxu0 %v2478
    %3412 = vmatprep.subr.bf16.mxu0 %v2483
    %3413 = vmatpush1.bf16.msra.mxu0 %v2482
    %3414 = vmatprep.subr.bf16.mxu0 %v2487
    %3415 = vmatpush1.bf16.msra.mxu0 %v2486
    %3416 = vmatprep.subr.bf16.mxu0 %v2491
    %3417 = vmatpush1.bf16.msra.mxu0 %v2490
    %3418 = vmatprep.subr.bf16.mxu0 %v2495
    %3419 = vmatpush1.bf16.msra.mxu0 %v2494
    %3420 = vmatprep.subr.bf16.mxu0 %v2499
    %3421 = vmatpush1.bf16.msra.mxu0 %v2498
    %3422 = vmatprep.subr.bf16.mxu0 %v2503
    %3423 = vmatpush1.bf16.msra.mxu0 %v2502
    %3424 = vmatprep.subr.bf16.mxu0 %v2507
    %3425 = vmatpush1.bf16.msra.mxu0 %v2506
    %3426 = vmatprep.subr.bf16.mxu0 %v2511
    %3427 = vmatpush1.bf16.msra.mxu0 %v2510
    %3428 = vmatprep.subr.bf16.mxu0 %v2515
    %3429 = vmatpush1.bf16.msra.mxu0 %v2514
    %3430 = vmatprep.subr.bf16.mxu0 %v2519
    %3431 = vmatpush1.bf16.msra.mxu0 %v2518
    %3432 = vmatprep.subr.bf16.mxu0 %v2523
    %3433 = vmatpush1.bf16.msra.mxu0 %v2522
    %3434 = vmatprep.mubr.bf16.mxu0 %v647
    %3435 = vmatmul.mubr.bf16.gmra.mrb[0].mxu0 %v646
    %v3436 = vpop.f32.mrb[0].mxu0
    %v3437 = vadd.f32 %v3394, %v3436
    %v3438 = vpop.f32.mrb[0].mxu0
    %v3439 = vadd.f32 %v3396, %v3438
    %v3440 = vpop.f32.mrb[0].mxu0
    %v3441 = vadd.f32 %v3398, %v3440
    %v3442 = vpop.f32.mrb[0].mxu0
    %v3443 = vadd.f32 %v3400, %v3442
    %3444 = vdwg.mxu0
    %3445 = vmatprep.subr.bf16.mxu0 %v2527
    %3446 = vmatpush1.bf16.msra.mxu0 %v2526
    %3447 = vmatprep.subr.bf16.mxu0 %v2531
    %3448 = vmatpush1.bf16.msra.mxu0 %v2530
    %3449 = vmatprep.subr.bf16.mxu0 %v2535
    %3450 = vmatpush1.bf16.msra.mxu0 %v2534
    %3451 = vmatprep.subr.bf16.mxu0 %v2539
    %3452 = vmatpush1.bf16.msra.mxu0 %v2538
    %3453 = vmatprep.subr.bf16.mxu0 %v2543
    %3454 = vmatpush1.bf16.msra.mxu0 %v2542
    %3455 = vmatprep.subr.bf16.mxu0 %v2547
    %3456 = vmatpush1.bf16.msra.mxu0 %v2546
    %3457 = vmatprep.subr.bf16.mxu0 %v2551
    %3458 = vmatpush1.bf16.msra.mxu0 %v2550
    %3459 = vmatprep.subr.bf16.mxu0 %v2555
    %3460 = vmatpush1.bf16.msra.mxu0 %v2554
    %3461 = vmatprep.subr.bf16.mxu0 %v2559
    %3462 = vmatpush1.bf16.msra.mxu0 %v2558
    %3463 = vmatprep.subr.bf16.mxu0 %v2563
    %3464 = vmatpush1.bf16.msra.mxu0 %v2562
    %3465 = vmatprep.subr.bf16.mxu0 %v2567
    %3466 = vmatpush1.bf16.msra.mxu0 %v2566
    %3467 = vmatprep.subr.bf16.mxu0 %v2571
    %3468 = vmatpush1.bf16.msra.mxu0 %v2570
    %3469 = vmatprep.subr.bf16.mxu0 %v2575
    %3470 = vmatpush1.bf16.msra.mxu0 %v2574
    %3471 = vmatprep.subr.bf16.mxu0 %v2579
    %3472 = vmatpush1.bf16.msra.mxu0 %v2578
    %3473 = vmatprep.subr.bf16.mxu0 %v2583
    %3474 = vmatpush1.bf16.msra.mxu0 %v2582
    %3475 = vmatprep.subr.bf16.mxu0 %v2587
    %3476 = vmatpush1.bf16.msra.mxu0 %v2586
    %3477 = vmatprep.mubr.bf16.mxu0 %v649
    %3478 = vmatmul.mubr.bf16.gmra.mrb[0].mxu0 %v648
    %v3479 = vpop.f32.mrb[0].mxu0
    %v3480 = vadd.f32 %v3437, %v3479
    %v3481 = vpop.f32.mrb[0].mxu0
    %v3482 = vadd.f32 %v3439, %v3481
    %v3483 = vpop.f32.mrb[0].mxu0
    %v3484 = vadd.f32 %v3441, %v3483
    %v3485 = vpop.f32.mrb[0].mxu0
    %v3486 = vadd.f32 %v3443, %v3485
    %3487 = vdwg.mxu0
    %3488 = vmatprep.subr.bf16.mxu0 %v2591
    %3489 = vmatpush1.bf16.msra.mxu0 %v2590
    %3490 = vmatprep.subr.bf16.mxu0 %v2595
    %3491 = vmatpush1.bf16.msra.mxu0 %v2594
    %3492 = vmatprep.subr.bf16.mxu0 %v2599
    %3493 = vmatpush1.bf16.msra.mxu0 %v2598
    %3494 = vmatprep.subr.bf16.mxu0 %v2603
    %3495 = vmatpush1.bf16.msra.mxu0 %v2602
    %3496 = vmatprep.subr.bf16.mxu0 %v2607
    %3497 = vmatpush1.bf16.msra.mxu0 %v2606
    %3498 = vmatprep.subr.bf16.mxu0 %v2611
    %3499 = vmatpush1.bf16.msra.mxu0 %v2610
    %3500 = vmatprep.subr.bf16.mxu0 %v2615
    %3501 = vmatpush1.bf16.msra.mxu0 %v2614
    %3502 = vmatprep.subr.bf16.mxu0 %v2619
    %3503 = vmatpush1.bf16.msra.mxu0 %v2618
    %3504 = vmatprep.subr.bf16.mxu0 %v2623
    %3505 = vmatpush1.bf16.msra.mxu0 %v2622
    %3506 = vmatprep.subr.bf16.mxu0 %v2627
    %3507 = vmatpush1.bf16.msra.mxu0 %v2626
    %3508 = vmatprep.subr.bf16.mxu0 %v2631
    %3509 = vmatpush1.bf16.msra.mxu0 %v2630
    %3510 = vmatprep.subr.bf16.mxu0 %v2635
    %3511 = vmatpush1.bf16.msra.mxu0 %v2634
    %3512 = vmatprep.subr.bf16.mxu0 %v2639
    %3513 = vmatpush1.bf16.msra.mxu0 %v2638
    %3514 = vmatprep.subr.bf16.mxu0 %v2643
    %3515 = vmatpush1.bf16.msra.mxu0 %v2642
    %3516 = vmatprep.subr.bf16.mxu0 %v2647
    %3517 = vmatpush1.bf16.msra.mxu0 %v2646
    %3518 = vmatprep.subr.bf16.mxu0 %v2651
    %3519 = vmatpush1.bf16.msra.mxu0 %v2650
    %3520 = vmatprep.mubr.bf16.mxu0 %v651
    %3521 = vmatmul.mubr.bf16.gmra.mrb[0].mxu0 %v650
    %v3522 = vpop.f32.mrb[0].mxu0
    %v3523 = vadd.f32 %v3480, %v3522
    %v3524 = vpop.f32.mrb[0].mxu0
    %v3525 = vadd.f32 %v3482, %v3524
    %v3526 = vpop.f32.mrb[0].mxu0
    %v3527 = vadd.f32 %v3484, %v3526
    %v3528 = vpop.f32.mrb[0].mxu0
    %v3529 = vadd.f32 %v3486, %v3528
    %3530 = vdwg.mxu0
    %3531 = vmatprep.subr.bf16.mxu0 %v2655
    %3532 = vmatpush1.bf16.msra.mxu0 %v2654
    %3533 = vmatprep.subr.bf16.mxu0 %v2659
    %3534 = vmatpush1.bf16.msra.mxu0 %v2658
    %3535 = vmatprep.subr.bf16.mxu0 %v2663
    %3536 = vmatpush1.bf16.msra.mxu0 %v2662
    %3537 = vmatprep.subr.bf16.mxu0 %v2667
    %3538 = vmatpush1.bf16.msra.mxu0 %v2666
    %3539 = vmatprep.subr.bf16.mxu0 %v2671
    %3540 = vmatpush1.bf16.msra.mxu0 %v2670
    %3541 = vmatprep.subr.bf16.mxu0 %v2675
    %3542 = vmatpush1.bf16.msra.mxu0 %v2674
    %3543 = vmatprep.subr.bf16.mxu0 %v2679
    %3544 = vmatpush1.bf16.msra.mxu0 %v2678
    %3545 = vmatprep.subr.bf16.mxu0 %v2683
    %3546 = vmatpush1.bf16.msra.mxu0 %v2682
    %3547 = vmatprep.subr.bf16.mxu0 %v2687
    %3548 = vmatpush1.bf16.msra.mxu0 %v2686
    %3549 = vmatprep.subr.bf16.mxu0 %v2691
    %3550 = vmatpush1.bf16.msra.mxu0 %v2690
    %3551 = vmatprep.subr.bf16.mxu0 %v2695
    %3552 = vmatpush1.bf16.msra.mxu0 %v2694
    %3553 = vmatprep.subr.bf16.mxu0 %v2699
    %3554 = vmatpush1.bf16.msra.mxu0 %v2698
    %3555 = vmatprep.subr.bf16.mxu0 %v2703
    %3556 = vmatpush1.bf16.msra.mxu0 %v2702
    %3557 = vmatprep.subr.bf16.mxu0 %v2707
    %3558 = vmatpush1.bf16.msra.mxu0 %v2706
    %3559 = vmatprep.subr.bf16.mxu0 %v2711
    %3560 = vmatpush1.bf16.msra.mxu0 %v2710
    %3561 = vmatprep.subr.bf16.mxu0 %v2715
    %3562 = vmatpush1.bf16.msra.mxu0 %v2714
    %3563 = vmatprep.mubr.bf16.mxu0 %v653
    %3564 = vmatmul.mubr.bf16.gmra.mrb[0].mxu0 %v652
    %v3565 = vpop.f32.mrb[0].mxu0
    %v3566 = vadd.f32 %v3523, %v3565
    %v3567 = vpop.f32.mrb[0].mxu0
    %v3568 = vadd.f32 %v3525, %v3567
    %v3569 = vpop.f32.mrb[0].mxu0
    %v3570 = vadd.f32 %v3527, %v3569
    %v3571 = vpop.f32.mrb[0].mxu0
    %v3572 = vadd.f32 %v3529, %v3571
    %3573 = vdwg.mxu0
    %3574 = vmatprep.subr.bf16.mxu0 %v2209
    %3575 = vmatpush1.bf16.msra.mxu0 %v2208
    %3576 = vmatprep.subr.bf16.mxu0 %v2213
    %3577 = vmatpush1.bf16.msra.mxu0 %v2212
    %3578 = vmatprep.subr.bf16.mxu0 %v2217
    %3579 = vmatpush1.bf16.msra.mxu0 %v2216
    %3580 = vmatprep.subr.bf16.mxu0 %v2221
    %3581 = vmatpush1.bf16.msra.mxu0 %v2220
    %3582 = vmatprep.subr.bf16.mxu0 %v2225
    %3583 = vmatpush1.bf16.msra.mxu0 %v2224
    %3584 = vmatprep.subr.bf16.mxu0 %v2229
    %3585 = vmatpush1.bf16.msra.mxu0 %v2228
    %3586 = vmatprep.subr.bf16.mxu0 %v2233
    %3587 = vmatpush1.bf16.msra.mxu0 %v2232
    %3588 = vmatprep.subr.bf16.mxu0 %v2237
    %3589 = vmatpush1.bf16.msra.mxu0 %v2236
    %3590 = vmatprep.subr.bf16.mxu0 %v2241
    %3591 = vmatpush1.bf16.msra.mxu0 %v2240
    %3592 = vmatprep.subr.bf16.mxu0 %v2245
    %3593 = vmatpush1.bf16.msra.mxu0 %v2244
    %3594 = vmatprep.subr.bf16.mxu0 %v2249
    %3595 = vmatpush1.bf16.msra.mxu0 %v2248
    %3596 = vmatprep.subr.bf16.mxu0 %v2253
    %3597 = vmatpush1.bf16.msra.mxu0 %v2252
    %3598 = vmatprep.subr.bf16.mxu0 %v2257
    %3599 = vmatpush1.bf16.msra.mxu0 %v2256
    %3600 = vmatprep.subr.bf16.mxu0 %v2261
    %3601 = vmatpush1.bf16.msra.mxu0 %v2260
    %3602 = vmatprep.subr.bf16.mxu0 %v2265
    %3603 = vmatpush1.bf16.msra.mxu0 %v2264
    %3604 = vmatprep.subr.bf16.mxu0 %v2269
    %3605 = vmatpush1.bf16.msra.mxu0 %v2268
    %3606 = vmatprep.mubr.bf16.mxu0 %v639
    %3607 = vmatmul.mubr.bf16.gmra.mrb[0].mxu0 %v638
    %v3608 = vpop.f32.mrb[0].mxu0
    %v3609 = vadd.f32 %v581, %v3608
    %v3610 = vpop.f32.mrb[0].mxu0
    %v3611 = vadd.f32 %v585, %v3610
    %v3612 = vpop.f32.mrb[0].mxu0
    %v3613 = vadd.f32 %v581, %v3612
    %v3614 = vpop.f32.mrb[0].mxu0
    %v3615 = vadd.f32 %v585, %v3614
    %3616 = vdwg.mxu0
    %3617 = vmatprep.subr.bf16.mxu0 %v2273
    %3618 = vmatpush1.bf16.msra.mxu0 %v2272
    %3619 = vmatprep.subr.bf16.mxu0 %v2277
    %3620 = vmatpush1.bf16.msra.mxu0 %v2276
    %3621 = vmatprep.subr.bf16.mxu0 %v2281
    %3622 = vmatpush1.bf16.msra.mxu0 %v2280
    %3623 = vmatprep.subr.bf16.mxu0 %v2285
    %3624 = vmatpush1.bf16.msra.mxu0 %v2284
    %3625 = vmatprep.subr.bf16.mxu0 %v2289
    %3626 = vmatpush1.bf16.msra.mxu0 %v2288
    %3627 = vmatprep.subr.bf16.mxu0 %v2293
    %3628 = vmatpush1.bf16.msra.mxu0 %v2292
    %3629 = vmatprep.subr.bf16.mxu0 %v2297
    %3630 = vmatpush1.bf16.msra.mxu0 %v2296
    %3631 = vmatprep.subr.bf16.mxu0 %v2301
    %3632 = vmatpush1.bf16.msra.mxu0 %v2300
    %3633 = vmatprep.subr.bf16.mxu0 %v2305
    %3634 = vmatpush1.bf16.msra.mxu0 %v2304
    %3635 = vmatprep.subr.bf16.mxu0 %v2309
    %3636 = vmatpush1.bf16.msra.mxu0 %v2308
    %3637 = vmatprep.subr.bf16.mxu0 %v2313
    %3638 = vmatpush1.bf16.msra.mxu0 %v2312
    %3639 = vmatprep.subr.bf16.mxu0 %v2317
    %3640 = vmatpush1.bf16.msra.mxu0 %v2316
    %3641 = vmatprep.subr.bf16.mxu0 %v2321
    %3642 = vmatpush1.bf16.msra.mxu0 %v2320
    %3643 = vmatprep.subr.bf16.mxu0 %v2325
    %3644 = vmatpush1.bf16.msra.mxu0 %v2324
    %3645 = vmatprep.subr.bf16.mxu0 %v2329
    %3646 = vmatpush1.bf16.msra.mxu0 %v2328
    %3647 = vmatprep.subr.bf16.mxu0 %v2333
    %3648 = vmatpush1.bf16.msra.mxu0 %v2332
    %3649 = vmatprep.mubr.bf16.mxu0 %v641
    %3650 = vmatmul.mubr.bf16.gmra.mrb[0].mxu0 %v640
    %v3651 = vpop.f32.mrb[0].mxu0
    %v3652 = vadd.f32 %v3609, %v3651
    %v3653 = vpop.f32.mrb[0].mxu0
    %v3654 = vadd.f32 %v3611, %v3653
    %v3655 = vpop.f32.mrb[0].mxu0
    %v3656 = vadd.f32 %v3613, %v3655
    %v3657 = vpop.f32.mrb[0].mxu0
    %v3658 = vadd.f32 %v3615, %v3657
    %3659 = vdwg.mxu0
    %3660 = vmatprep.subr.bf16.mxu0 %v2337
    %3661 = vmatpush1.bf16.msra.mxu0 %v2336
    %3662 = vmatprep.subr.bf16.mxu0 %v2341
    %3663 = vmatpush1.bf16.msra.mxu0 %v2340
    %3664 = vmatprep.subr.bf16.mxu0 %v2345
    %3665 = vmatpush1.bf16.msra.mxu0 %v2344
    %3666 = vmatprep.subr.bf16.mxu0 %v2349
    %3667 = vmatpush1.bf16.msra.mxu0 %v2348
    %3668 = vmatprep.subr.bf16.mxu0 %v2353
    %3669 = vmatpush1.bf16.msra.mxu0 %v2352
    %3670 = vmatprep.subr.bf16.mxu0 %v2357
    %3671 = vmatpush1.bf16.msra.mxu0 %v2356
    %3672 = vmatprep.subr.bf16.mxu0 %v2361
    %3673 = vmatpush1.bf16.msra.mxu0 %v2360
    %3674 = vmatprep.subr.bf16.mxu0 %v2365
    %3675 = vmatpush1.bf16.msra.mxu0 %v2364
    %3676 = vmatprep.subr.bf16.mxu0 %v2369
    %3677 = vmatpush1.bf16.msra.mxu0 %v2368
    %3678 = vmatprep.subr.bf16.mxu0 %v2373
    %3679 = vmatpush1.bf16.msra.mxu0 %v2372
    %3680 = vmatprep.subr.bf16.mxu0 %v2377
    %3681 = vmatpush1.bf16.msra.mxu0 %v2376
    %3682 = vmatprep.subr.bf16.mxu0 %v2381
    %3683 = vmatpush1.bf16.msra.mxu0 %v2380
    %3684 = vmatprep.subr.bf16.mxu0 %v2385
    %3685 = vmatpush1.bf16.msra.mxu0 %v2384
    %3686 = vmatprep.subr.bf16.mxu0 %v2389
    %3687 = vmatpush1.bf16.msra.mxu0 %v2388
    %3688 = vmatprep.subr.bf16.mxu0 %v2393
    %3689 = vmatpush1.bf16.msra.mxu0 %v2392
    %3690 = vmatprep.subr.bf16.mxu0 %v2397
    %3691 = vmatpush1.bf16.msra.mxu0 %v2396
    %3692 = vmatprep.mubr.bf16.mxu0 %v643
    %3693 = vmatmul.mubr.bf16.gmra.mrb[0].mxu0 %v642
    %v3694 = vpop.f32.mrb[0].mxu0
    %v3695 = vadd.f32 %v3652, %v3694
    %v3696 = vpop.f32.mrb[0].mxu0
    %v3697 = vadd.f32 %v3654, %v3696
    %v3698 = vpop.f32.mrb[0].mxu0
    %v3699 = vadd.f32 %v3656, %v3698
    %v3700 = vpop.f32.mrb[0].mxu0
    %v3701 = vadd.f32 %v3658, %v3700
    %3702 = vdwg.mxu0
    %3703 = vmatprep.subr.bf16.mxu0 %v2401
    %3704 = vmatpush1.bf16.msra.mxu0 %v2400
    %3705 = vmatprep.subr.bf16.mxu0 %v2405
    %3706 = vmatpush1.bf16.msra.mxu0 %v2404
    %3707 = vmatprep.subr.bf16.mxu0 %v2409
    %3708 = vmatpush1.bf16.msra.mxu0 %v2408
    %3709 = vmatprep.subr.bf16.mxu0 %v2413
    %3710 = vmatpush1.bf16.msra.mxu0 %v2412
    %3711 = vmatprep.subr.bf16.mxu0 %v2417
    %3712 = vmatpush1.bf16.msra.mxu0 %v2416
    %3713 = vmatprep.subr.bf16.mxu0 %v2421
    %3714 = vmatpush1.bf16.msra.mxu0 %v2420
    %3715 = vmatprep.subr.bf16.mxu0 %v2425
    %3716 = vmatpush1.bf16.msra.mxu0 %v2424
    %3717 = vmatprep.subr.bf16.mxu0 %v2429
    %3718 = vmatpush1.bf16.msra.mxu0 %v2428
    %3719 = vmatprep.subr.bf16.mxu0 %v2433
    %3720 = vmatpush1.bf16.msra.mxu0 %v2432
    %3721 = vmatprep.subr.bf16.mxu0 %v2437
    %3722 = vmatpush1.bf16.msra.mxu0 %v2436
    %3723 = vmatprep.subr.bf16.mxu0 %v2441
    %3724 = vmatpush1.bf16.msra.mxu0 %v2440
    %3725 = vmatprep.subr.bf16.mxu0 %v2445
    %3726 = vmatpush1.bf16.msra.mxu0 %v2444
    %3727 = vmatprep.subr.bf16.mxu0 %v2449
    %3728 = vmatpush1.bf16.msra.mxu0 %v2448
    %3729 = vmatprep.subr.bf16.mxu0 %v2453
    %3730 = vmatpush1.bf16.msra.mxu0 %v2452
    %3731 = vmatprep.subr.bf16.mxu0 %v2457
    %3732 = vmatpush1.bf16.msra.mxu0 %v2456
    %3733 = vmatprep.subr.bf16.mxu0 %v2461
    %3734 = vmatpush1.bf16.msra.mxu0 %v2460
    %3735 = vmatprep.mubr.bf16.mxu0 %v645
    %3736 = vmatmul.mubr.bf16.gmra.mrb[0].mxu0 %v644
    %v3737 = vpop.f32.mrb[0].mxu0
    %v3738 = vadd.f32 %v3695, %v3737
    %v3739 = vpop.f32.mrb[0].mxu0
    %v3740 = vadd.f32 %v3697, %v3739
    %v3741 = vpop.f32.mrb[0].mxu0
    %v3742 = vadd.f32 %v3699, %v3741
    %v3743 = vpop.f32.mrb[0].mxu0
    %v3744 = vadd.f32 %v3701, %v3743
    %3745 = vdwg.mxu0
    %3746 = vmatprep.subr.bf16.mxu0 %v2465
    %3747 = vmatpush1.bf16.msra.mxu0 %v2464
    %3748 = vmatprep.subr.bf16.mxu0 %v2469
    %3749 = vmatpush1.bf16.msra.mxu0 %v2468
    %3750 = vmatprep.subr.bf16.mxu0 %v2473
    %3751 = vmatpush1.bf16.msra.mxu0 %v2472
    %3752 = vmatprep.subr.bf16.mxu0 %v2477
    %3753 = vmatpush1.bf16.msra.mxu0 %v2476
    %3754 = vmatprep.subr.bf16.mxu0 %v2481
    %3755 = vmatpush1.bf16.msra.mxu0 %v2480
    %3756 = vmatprep.subr.bf16.mxu0 %v2485
    %3757 = vmatpush1.bf16.msra.mxu0 %v2484
    %3758 = vmatprep.subr.bf16.mxu0 %v2489
    %3759 = vmatpush1.bf16.msra.mxu0 %v2488
    %3760 = vmatprep.subr.bf16.mxu0 %v2493
    %3761 = vmatpush1.bf16.msra.mxu0 %v2492
    %3762 = vmatprep.subr.bf16.mxu0 %v2497
    %3763 = vmatpush1.bf16.msra.mxu0 %v2496
    %3764 = vmatprep.subr.bf16.mxu0 %v2501
    %3765 = vmatpush1.bf16.msra.mxu0 %v2500
    %3766 = vmatprep.subr.bf16.mxu0 %v2505
    %3767 = vmatpush1.bf16.msra.mxu0 %v2504
    %3768 = vmatprep.subr.bf16.mxu0 %v2509
    %3769 = vmatpush1.bf16.msra.mxu0 %v2508
    %3770 = vmatprep.subr.bf16.mxu0 %v2513
    %3771 = vmatpush1.bf16.msra.mxu0 %v2512
    %3772 = vmatprep.subr.bf16.mxu0 %v2517
    %3773 = vmatpush1.bf16.msra.mxu0 %v2516
    %3774 = vmatprep.subr.bf16.mxu0 %v2521
    %3775 = vmatpush1.bf16.msra.mxu0 %v2520
    %3776 = vmatprep.subr.bf16.mxu0 %v2525
    %3777 = vmatpush1.bf16.msra.mxu0 %v2524
    %3778 = vmatprep.mubr.bf16.mxu0 %v647
    %3779 = vmatmul.mubr.bf16.gmra.mrb[0].mxu0 %v646
    %v3780 = vpop.f32.mrb[0].mxu0
    %v3781 = vadd.f32 %v3738, %v3780
    %v3782 = vpop.f32.mrb[0].mxu0
    %v3783 = vadd.f32 %v3740, %v3782
    %v3784 = vpop.f32.mrb[0].mxu0
    %v3785 = vadd.f32 %v3742, %v3784
    %v3786 = vpop.f32.mrb[0].mxu0
    %v3787 = vadd.f32 %v3744, %v3786
    %3788 = vdwg.mxu0
    %3789 = vmatprep.subr.bf16.mxu0 %v2529
    %3790 = vmatpush1.bf16.msra.mxu0 %v2528
    %3791 = vmatprep.subr.bf16.mxu0 %v2533
    %3792 = vmatpush1.bf16.msra.mxu0 %v2532
    %3793 = vmatprep.subr.bf16.mxu0 %v2537
    %3794 = vmatpush1.bf16.msra.mxu0 %v2536
    %3795 = vmatprep.subr.bf16.mxu0 %v2541
    %3796 = vmatpush1.bf16.msra.mxu0 %v2540
    %3797 = vmatprep.subr.bf16.mxu0 %v2545
    %3798 = vmatpush1.bf16.msra.mxu0 %v2544
    %3799 = vmatprep.subr.bf16.mxu0 %v2549
    %3800 = vmatpush1.bf16.msra.mxu0 %v2548
    %3801 = vmatprep.subr.bf16.mxu0 %v2553
    %3802 = vmatpush1.bf16.msra.mxu0 %v2552
    %3803 = vmatprep.subr.bf16.mxu0 %v2557
    %3804 = vmatpush1.bf16.msra.mxu0 %v2556
    %3805 = vmatprep.subr.bf16.mxu0 %v2561
    %3806 = vmatpush1.bf16.msra.mxu0 %v2560
    %3807 = vmatprep.subr.bf16.mxu0 %v2565
    %3808 = vmatpush1.bf16.msra.mxu0 %v2564
    %3809 = vmatprep.subr.bf16.mxu0 %v2569
    %3810 = vmatpush1.bf16.msra.mxu0 %v2568
    %3811 = vmatprep.subr.bf16.mxu0 %v2573
    %3812 = vmatpush1.bf16.msra.mxu0 %v2572
    %3813 = vmatprep.subr.bf16.mxu0 %v2577
    %3814 = vmatpush1.bf16.msra.mxu0 %v2576
    %3815 = vmatprep.subr.bf16.mxu0 %v2581
    %3816 = vmatpush1.bf16.msra.mxu0 %v2580
    %3817 = vmatprep.subr.bf16.mxu0 %v2585
    %3818 = vmatpush1.bf16.msra.mxu0 %v2584
    %3819 = vmatprep.subr.bf16.mxu0 %v2589
    %3820 = vmatpush1.bf16.msra.mxu0 %v2588
    %3821 = vmatprep.mubr.bf16.mxu0 %v649
    %3822 = vmatmul.mubr.bf16.gmra.mrb[0].mxu0 %v648
    %v3823 = vpop.f32.mrb[0].mxu0
    %v3824 = vadd.f32 %v3781, %v3823
    %v3825 = vpop.f32.mrb[0].mxu0
    %v3826 = vadd.f32 %v3783, %v3825
    %v3827 = vpop.f32.mrb[0].mxu0
    %v3828 = vadd.f32 %v3785, %v3827
    %v3829 = vpop.f32.mrb[0].mxu0
    %v3830 = vadd.f32 %v3787, %v3829
    %3831 = vdwg.mxu0
    %3832 = vmatprep.subr.bf16.mxu0 %v2593
    %3833 = vmatpush1.bf16.msra.mxu0 %v2592
    %3834 = vmatprep.subr.bf16.mxu0 %v2597
    %3835 = vmatpush1.bf16.msra.mxu0 %v2596
    %3836 = vmatprep.subr.bf16.mxu0 %v2601
    %3837 = vmatpush1.bf16.msra.mxu0 %v2600
    %3838 = vmatprep.subr.bf16.mxu0 %v2605
    %3839 = vmatpush1.bf16.msra.mxu0 %v2604
    %3840 = vmatprep.subr.bf16.mxu0 %v2609
    %3841 = vmatpush1.bf16.msra.mxu0 %v2608
    %3842 = vmatprep.subr.bf16.mxu0 %v2613
    %3843 = vmatpush1.bf16.msra.mxu0 %v2612
    %3844 = vmatprep.subr.bf16.mxu0 %v2617
    %3845 = vmatpush1.bf16.msra.mxu0 %v2616
    %3846 = vmatprep.subr.bf16.mxu0 %v2621
    %3847 = vmatpush1.bf16.msra.mxu0 %v2620
    %3848 = vmatprep.subr.bf16.mxu0 %v2625
    %3849 = vmatpush1.bf16.msra.mxu0 %v2624
    %3850 = vmatprep.subr.bf16.mxu0 %v2629
    %3851 = vmatpush1.bf16.msra.mxu0 %v2628
    %3852 = vmatprep.subr.bf16.mxu0 %v2633
    %3853 = vmatpush1.bf16.msra.mxu0 %v2632
    %3854 = vmatprep.subr.bf16.mxu0 %v2637
    %3855 = vmatpush1.bf16.msra.mxu0 %v2636
    %3856 = vmatprep.subr.bf16.mxu0 %v2641
    %3857 = vmatpush1.bf16.msra.mxu0 %v2640
    %3858 = vmatprep.subr.bf16.mxu0 %v2645
    %3859 = vmatpush1.bf16.msra.mxu0 %v2644
    %3860 = vmatprep.subr.bf16.mxu0 %v2649
    %3861 = vmatpush1.bf16.msra.mxu0 %v2648
    %3862 = vmatprep.subr.bf16.mxu0 %v2653
    %3863 = vmatpush1.bf16.msra.mxu0 %v2652
    %3864 = vmatprep.mubr.bf16.mxu0 %v651
    %3865 = vmatmul.mubr.bf16.gmra.mrb[0].mxu0 %v650
    %v3866 = vpop.f32.mrb[0].mxu0
    %v3867 = vadd.f32 %v3824, %v3866
    %v3868 = vpop.f32.mrb[0].mxu0
    %v3869 = vadd.f32 %v3826, %v3868
    %v3870 = vpop.f32.mrb[0].mxu0
    %v3871 = vadd.f32 %v3828, %v3870
    %v3872 = vpop.f32.mrb[0].mxu0
    %v3873 = vadd.f32 %v3830, %v3872
    %3874 = vdwg.mxu0
    %3875 = vmatprep.subr.bf16.mxu0 %v2657
    %3876 = vmatpush1.bf16.msra.mxu0 %v2656
    %3877 = vmatprep.subr.bf16.mxu0 %v2661
    %3878 = vmatpush1.bf16.msra.mxu0 %v2660
    %3879 = vmatprep.subr.bf16.mxu0 %v2665
    %3880 = vmatpush1.bf16.msra.mxu0 %v2664
    %3881 = vmatprep.subr.bf16.mxu0 %v2669
    %3882 = vmatpush1.bf16.msra.mxu0 %v2668
    %3883 = vmatprep.subr.bf16.mxu0 %v2673
    %3884 = vmatpush1.bf16.msra.mxu0 %v2672
    %3885 = vmatprep.subr.bf16.mxu0 %v2677
    %3886 = vmatpush1.bf16.msra.mxu0 %v2676
    %3887 = vmatprep.subr.bf16.mxu0 %v2681
    %3888 = vmatpush1.bf16.msra.mxu0 %v2680
    %3889 = vmatprep.subr.bf16.mxu0 %v2685
    %3890 = vmatpush1.bf16.msra.mxu0 %v2684
    %3891 = vmatprep.subr.bf16.mxu0 %v2689
    %3892 = vmatpush1.bf16.msra.mxu0 %v2688
    %3893 = vmatprep.subr.bf16.mxu0 %v2693
    %3894 = vmatpush1.bf16.msra.mxu0 %v2692
    %3895 = vmatprep.subr.bf16.mxu0 %v2697
    %3896 = vmatpush1.bf16.msra.mxu0 %v2696
    %3897 = vmatprep.subr.bf16.mxu0 %v2701
    %3898 = vmatpush1.bf16.msra.mxu0 %v2700
    %3899 = vmatprep.subr.bf16.mxu0 %v2705
    %3900 = vmatpush1.bf16.msra.mxu0 %v2704
    %3901 = vmatprep.subr.bf16.mxu0 %v2709
    %3902 = vmatpush1.bf16.msra.mxu0 %v2708
    %3903 = vmatprep.subr.bf16.mxu0 %v2713
    %3904 = vmatpush1.bf16.msra.mxu0 %v2712
    %3905 = vmatprep.subr.bf16.mxu0 %v2717
    %3906 = vmatpush1.bf16.msra.mxu0 %v2716
    %3907 = vmatprep.mubr.bf16.mxu0 %v653
    %3908 = vmatmul.mubr.bf16.gmra.mrb[0].mxu0 %v652
    %v3909 = vpop.f32.mrb[0].mxu0
    %v3910 = vadd.f32 %v3867, %v3909
    %v3911 = vpop.f32.mrb[0].mxu0
    %v3912 = vadd.f32 %v3869, %v3911
    %v3913 = vpop.f32.mrb[0].mxu0
    %v3914 = vadd.f32 %v3871, %v3913
    %v3915 = vpop.f32.mrb[0].mxu0
    %v3916 = vadd.f32 %v3873, %v3915
    %3917 = vdwg.mxu0
    %3918 = vst [vmem:[%s3] sm:$0xff] %v3566
    %3919 = vst [vmem:[%s3 + $0x8] sm:$0xff] %v3568
    %3920 = vst [vmem:[%s3 + $0x10] sm:$0xff] %v3910
    %3921 = vst [vmem:[%s3 + $0x18] sm:$0xff] %v3912
    %3922 = vst [vmem:[%s3 + $0x20] sm:$0xff] %v3570
    %3923 = vst [vmem:[%s3 + $0x28] sm:$0xff] %v3572
    %3924 = vst [vmem:[%s3 + $0x30] sm:$0xff] %v3914
    %3925 = vst [vmem:[%s3 + $0x38] sm:$0xff] %v3916
    // Predicated region
    $region22: #{classifier_forward.2} parent=1 // pred_check
      _
    $region23: #{classifier_forward.2} parent=1 // pred_check_branch
      %3927 = sbr.rel (0) target = $region25
    $region24: #{classifier_forward.2} parent=1 // pred_region
      _
    $region25: #{classifier_forward.2} parent=1 // pred_fallthru
      _
    // Predicated region
    $region26: #{classifier_forward.2} parent=1 // pred_check
      _
    $region27: #{classifier_forward.2} parent=1 // pred_check_branch
      %3929 = sbr.rel (0) target = $region29
    $region28: #{classifier_forward.2} parent=1 // pred_region
      _
    $region29: #{classifier_forward.2} parent=1 // pred_fallthru
      _
    %3930 = vsyncpa [#allocation3], 1
    %3931 = vsyncpa [#allocation5], 1

// kernel: classifier_forward.3
$region0: #{classifier_forward.3}
  #allocation0 [shape = 'u32[]', space=smem, size = 0x4, offset = 0x4, fixed_abs, tag = 'smem constant byte address 0x4 - core index']
  #allocation1 [shape = 'u32[144,128]{1,0:T(1,128)}', space=vmem, size = 0x12000, scoped, tag = 'internal scratch']
  #allocation2 [shape = 'bf16[2,128]{1,0:T(2,128)(2,1)}', space=vmem, size = 0x200, scoped, tag = 'scratch operand']
  #allocation3 [shape = 'f32[2,128]{1,0:T(2,128)}', space=vmem, size = 0x400, scoped, tag = 'scratch operand']
  %s0 = inlined_call_operand.vmem [shape: f32[2,8,512], index: 0, kind: input, shape index: {}]
  %s1 = inlined_call_operand.vmem [shape: bf16[128,512], index: 1, kind: input, shape index: {}]
  %s2 = inlined_call_operand.vmem [shape: f32[128,32], index: 2, kind: input, shape index: {}]
  %s3 = inlined_call_operand.vmem [shape: f32[1,32], index: 3, kind: input, shape index: {}]
  %s4 = inlined_call_operand.vmem [shape: f32[1,32], index: 4, kind: input, shape index: {}]
  %s5 = inlined_call_operand.vmem [shape: f32[1,32], index: 5, kind: input, shape index: {}]
  %s6 = inlined_call_operand.vmem [shape: f32[32,5], index: 6, kind: input, shape index: {}]
  %s7 = inlined_call_operand.vmem [shape: f32[1,5], index: 7, kind: input, shape index: {}]
  %s8 = inlined_call_operand.vmem [shape: f32[2,8,5], index: 8, kind: output, shape index: {}]
  %s9 = sld [smem:[#allocation0]]
  $region46: #{classifier_forward.3} parent=0
    _
  %s11 = ssub.s32 1, %s9
  %s12 = scalar_select 0, %s11, %s9
  // Predicated region
  $region2: #{classifier_forward.3} parent=0 // pred_check
    _
  $region3: #{classifier_forward.3} parent=0 // pred_check_branch
    %14 = sbr.rel (0) target = $region5
  $region4: #{classifier_forward.3} parent=0 // pred_region
    _
  $region5: #{classifier_forward.3} parent=0 // pred_fallthru
    _
  // Predicated region
  $region6: #{classifier_forward.3} parent=0 // pred_check
    _
  $region7: #{classifier_forward.3} parent=0 // pred_check_branch
    %16 = sbr.rel (0) target = $region9
  $region8: #{classifier_forward.3} parent=0 // pred_region
    _
  $region9: #{classifier_forward.3} parent=0 // pred_fallthru
    _
  // Predicated region
  $region10: #{classifier_forward.3} parent=0 // pred_check
    _
  $region11: #{classifier_forward.3} parent=0 // pred_check_branch
    %18 = sbr.rel (0) target = $region13
  $region12: #{classifier_forward.3} parent=0 // pred_region
    _
  $region13: #{classifier_forward.3} parent=0 // pred_fallthru
    _
  // Predicated region
  $region14: #{classifier_forward.3} parent=0 // pred_check
    _
  $region15: #{classifier_forward.3} parent=0 // pred_check_branch
    %20 = sbr.rel (0) target = $region17
  $region16: #{classifier_forward.3} parent=0 // pred_region
    _
  $region17: #{classifier_forward.3} parent=0 // pred_fallthru
    _
  // Predicated region
  $region18: #{classifier_forward.3} parent=0 // pred_check
    _
  $region19: #{classifier_forward.3} parent=0 // pred_check_branch
    %22 = sbr.rel (0) target = $region21
  $region20: #{classifier_forward.3} parent=0 // pred_region
    _
  $region21: #{classifier_forward.3} parent=0 // pred_fallthru
    _
  // Predicated region
  $region22: #{classifier_forward.3} parent=0 // pred_check
    _
  $region23: #{classifier_forward.3} parent=0 // pred_check_branch
    %24 = sbr.rel (0) target = $region25
  $region24: #{classifier_forward.3} parent=0 // pred_region
    _
  $region25: #{classifier_forward.3} parent=0 // pred_fallthru
    _
  // Predicated region
  $region26: #{classifier_forward.3} parent=0 // pred_check
    _
  $region27: #{classifier_forward.3} parent=0 // pred_check_branch
    %26 = sbr.rel (0) target = $region29
  $region28: #{classifier_forward.3} parent=0 // pred_region
    _
  $region29: #{classifier_forward.3} parent=0 // pred_fallthru
    _
  // Predicated region
  $region30: #{classifier_forward.3} parent=0 // pred_check
    _
  $region31: #{classifier_forward.3} parent=0 // pred_check_branch
    %28 = sbr.rel (0) target = $region33
  $region32: #{classifier_forward.3} parent=0 // pred_region
    _
  $region33: #{classifier_forward.3} parent=0 // pred_fallthru
    _
  %p30 = scmp.eq.s32.totalorder 0, 0
  // Predicated region
  $region34: #{classifier_forward.3} parent=0 // pred_check
    %p31 = pneg %p30
  $region35: #{classifier_forward.3} parent=0 // pred_check_branch
    %33 = sbr.rel (%p31) target = $region37
  $region36: #{classifier_forward.3} parent=0 // pred_region
    %34 = vst [vmem:[#allocation2] sm:$0x1] 0
    %35 = vst [vmem:[#allocation3] sm:$0x3] 0.0
  $region37: #{classifier_forward.3} parent=0 // pred_fallthru
    _
  %v36 = vld [vmem:[#allocation2] sm:$0x1]
  %v37 = vld [vmem:[#allocation3] sm:$0x3]
  %v38 = vld [vmem:[%s1] sm:$0xff]
  %v39 = vld [vmem:[%s1 + $0x8] sm:$0xff]
  %v40 = vld [vmem:[%s1 + $0x10] sm:$0xff]
  %v41 = vld [vmem:[%s1 + $0x18] sm:$0xff]
  %v42 = vld [vmem:[%s1 + $0x20] sm:$0xff]
  %v43 = vld [vmem:[%s1 + $0x28] sm:$0xff]
  %v44 = vld [vmem:[%s1 + $0x30] sm:$0xff]
  %v45 = vld [vmem:[%s1 + $0x38] sm:$0xff]
  %v46 = vld [vmem:[%s1 + $0x40] sm:$0xff]
  %v47 = vld [vmem:[%s1 + $0x48] sm:$0xff]
  %v48 = vld [vmem:[%s1 + $0x50] sm:$0xff]
  %v49 = vld [vmem:[%s1 + $0x58] sm:$0xff]
  %v50 = vld [vmem:[%s1 + $0x60] sm:$0xff]
  %v51 = vld [vmem:[%s1 + $0x68] sm:$0xff]
  %v52 = vld [vmem:[%s1 + $0x70] sm:$0xff]
  %v53 = vld [vmem:[%s1 + $0x78] sm:$0xff]
  %v54 = vld [vmem:[%s1 + $0x80] sm:$0xff]
  %v55 = vld [vmem:[%s1 + $0x88] sm:$0xff]
  %v56 = vld [vmem:[%s1 + $0x90] sm:$0xff]
  %v57 = vld [vmem:[%s1 + $0x98] sm:$0xff]
  %v58 = vld [vmem:[%s1 + $0xa0] sm:$0xff]
  %v59 = vld [vmem:[%s1 + $0xa8] sm:$0xff]
  %v60 = vld [vmem:[%s1 + $0xb0] sm:$0xff]
  %v61 = vld [vmem:[%s1 + $0xb8] sm:$0xff]
  %v62 = vld [vmem:[%s1 + $0xc0] sm:$0xff]
  %v63 = vld [vmem:[%s1 + $0xc8] sm:$0xff]
  %v64 = vld [vmem:[%s1 + $0xd0] sm:$0xff]
  %v65 = vld [vmem:[%s1 + $0xd8] sm:$0xff]
  %v66 = vld [vmem:[%s1 + $0xe0] sm:$0xff]
  %v67 = vld [vmem:[%s1 + $0xe8] sm:$0xff]
  %v68 = vld [vmem:[%s1 + $0xf0] sm:$0xff]
  %v69 = vld [vmem:[%s1 + $0xf8] sm:$0xff]
  %v70 = vld [vmem:[%s2] sm:$0xff]
  %v71 = vld [vmem:[%s2 + $0x8] sm:$0xff]
  %v72 = vld [vmem:[%s2 + $0x10] sm:$0xff]
  %v73 = vld [vmem:[%s2 + $0x18] sm:$0xff]
  %v74 = vld [vmem:[%s2 + $0x20] sm:$0xff]
  %v75 = vld [vmem:[%s2 + $0x28] sm:$0xff]
  %v76 = vld [vmem:[%s2 + $0x30] sm:$0xff]
  %v77 = vld [vmem:[%s2 + $0x38] sm:$0xff]
  %v78 = vld [vmem:[%s2 + $0x40] sm:$0xff]
  %v79 = vld [vmem:[%s2 + $0x48] sm:$0xff]
  %v80 = vld [vmem:[%s2 + $0x50] sm:$0xff]
  %v81 = vld [vmem:[%s2 + $0x58] sm:$0xff]
  %v82 = vld [vmem:[%s2 + $0x60] sm:$0xff]
  %v83 = vld [vmem:[%s2 + $0x68] sm:$0xff]
  %v84 = vld [vmem:[%s2 + $0x70] sm:$0xff]
  %v85 = vld [vmem:[%s2 + $0x78] sm:$0xff]
  %v86 = vld [vmem:[%s3] sm:$0x1]
  %v87 = vld [vmem:[%s4] sm:$0x1]
  %v88 = vld [vmem:[%s5] sm:$0x1]
  %v89 = vld [vmem:[%s6] sm:$0xff]
  %v90 = vld [vmem:[%s6 + $0x8] sm:$0xff]
  %v91 = vld [vmem:[%s6 + $0x10] sm:$0xff]
  %v92 = vld [vmem:[%s6 + $0x18] sm:$0xff]
  %v93 = vld [vmem:[%s7] sm:$0x1]
  %v94 = vld [vmem:[%s0] ss:$8 sm:$0xf]
  %s95 = scalar_lea.vmem %s0, 32
  %v96 = vld [vmem:[%s95] ss:$8 sm:$0xf]
  %v129 = vunpack.c.l.b16 %v38
  %v130 = vunpack.c.h.b16 %v38
  %v131 = vunpack.c.l.b16 %v39
  %v132 = vunpack.c.h.b16 %v39
  %v133 = vunpack.c.l.b16 %v40
  %v134 = vunpack.c.h.b16 %v40
  %v135 = vunpack.c.l.b16 %v41
  %v136 = vunpack.c.h.b16 %v41
  %v137 = vunpack.c.l.b16 %v42
  %v138 = vunpack.c.h.b16 %v42
  %v139 = vunpack.c.l.b16 %v43
  %v140 = vunpack.c.h.b16 %v43
  %v141 = vunpack.c.l.b16 %v44
  %v142 = vunpack.c.h.b16 %v44
  %v143 = vunpack.c.l.b16 %v45
  %v144 = vunpack.c.h.b16 %v45
  %v145 = vunpack.c.l.b16 %v46
  %v146 = vunpack.c.h.b16 %v46
  %v147 = vunpack.c.l.b16 %v47
  %v148 = vunpack.c.h.b16 %v47
  %v149 = vunpack.c.l.b16 %v48
  %v150 = vunpack.c.h.b16 %v48
  %v151 = vunpack.c.l.b16 %v49
  %v152 = vunpack.c.h.b16 %v49
  %v153 = vunpack.c.l.b16 %v50
  %v154 = vunpack.c.h.b16 %v50
  %v155 = vunpack.c.l.b16 %v51
  %v156 = vunpack.c.h.b16 %v51
  %v157 = vunpack.c.l.b16 %v52
  %v158 = vunpack.c.h.b16 %v52
  %v159 = vunpack.c.l.b16 %v53
  %v160 = vunpack.c.h.b16 %v53
  %v161 = vunpack.c.l.b16 %v54
  %v162 = vunpack.c.h.b16 %v54
  %v163 = vunpack.c.l.b16 %v55
  %v164 = vunpack.c.h.b16 %v55
  %v165 = vunpack.c.l.b16 %v56
  %v166 = vunpack.c.h.b16 %v56
  %v167 = vunpack.c.l.b16 %v57
  %v168 = vunpack.c.h.b16 %v57
  %v169 = vunpack.c.l.b16 %v58
  %v170 = vunpack.c.h.b16 %v58
  %v171 = vunpack.c.l.b16 %v59
  %v172 = vunpack.c.h.b16 %v59
  %v173 = vunpack.c.l.b16 %v60
  %v174 = vunpack.c.h.b16 %v60
  %v175 = vunpack.c.l.b16 %v61
  %v176 = vunpack.c.h.b16 %v61
  %v177 = vunpack.c.l.b16 %v62
  %v178 = vunpack.c.h.b16 %v62
  %v179 = vunpack.c.l.b16 %v63
  %v180 = vunpack.c.h.b16 %v63
  %v181 = vunpack.c.l.b16 %v64
  %v182 = vunpack.c.h.b16 %v64
  %v183 = vunpack.c.l.b16 %v65
  %v184 = vunpack.c.h.b16 %v65
  %v185 = vunpack.c.l.b16 %v66
  %v186 = vunpack.c.h.b16 %v66
  %v187 = vunpack.c.l.b16 %v67
  %v188 = vunpack.c.h.b16 %v67
  %v189 = vunpack.c.l.b16 %v68
  %v190 = vunpack.c.h.b16 %v68
  %v191 = vunpack.c.l.b16 %v69
  %v192 = vunpack.c.h.b16 %v69
  %v193 = vpack.c.b16 %v133, %v129
  %v194 = vpack.c.b16 %v134, %v130
  %v195 = vpack.c.b16 %v135, %v131
  %v196 = vpack.c.b16 %v136, %v132
  %v197 = vpack.c.b16 %v141, %v137
  %v198 = vpack.c.b16 %v142, %v138
  %v199 = vpack.c.b16 %v143, %v139
  %v200 = vpack.c.b16 %v144, %v140
  %v201 = vpack.c.b16 %v149, %v145
  %v202 = vpack.c.b16 %v150, %v146
  %v203 = vpack.c.b16 %v151, %v147
  %v204 = vpack.c.b16 %v152, %v148
  %v205 = vpack.c.b16 %v157, %v153
  %v206 = vpack.c.b16 %v158, %v154
  %v207 = vpack.c.b16 %v159, %v155
  %v208 = vpack.c.b16 %v160, %v156
  %v209 = vpack.c.b16 %v165, %v161
  %v210 = vpack.c.b16 %v166, %v162
  %v211 = vpack.c.b16 %v167, %v163
  %v212 = vpack.c.b16 %v168, %v164
  %v213 = vpack.c.b16 %v173, %v169
  %v214 = vpack.c.b16 %v174, %v170
  %v215 = vpack.c.b16 %v175, %v171
  %v216 = vpack.c.b16 %v176, %v172
  %v217 = vpack.c.b16 %v181, %v177
  %v218 = vpack.c.b16 %v182, %v178
  %v219 = vpack.c.b16 %v183, %v179
  %v220 = vpack.c.b16 %v184, %v180
  %v221 = vpack.c.b16 %v189, %v185
  %v222 = vpack.c.b16 %v190, %v186
  %v223 = vpack.c.b16 %v191, %v187
  %v224 = vpack.c.b16 %v192, %v188
  %257 = vmatprep.subr.bf16.mxu0 %v194
  %258 = vmatpush1.bf16.msra.mxu0 %v193
  %259 = vmatprep.subr.bf16.mxu0 %v198
  %260 = vmatpush1.bf16.msra.mxu0 %v197
  %261 = vmatprep.subr.bf16.mxu0 %v202
  %262 = vmatpush1.bf16.msra.mxu0 %v201
  %263 = vmatprep.subr.bf16.mxu0 %v206
  %264 = vmatpush1.bf16.msra.mxu0 %v205
  %265 = vmatprep.subr.bf16.mxu0 %v210
  %266 = vmatpush1.bf16.msra.mxu0 %v209
  %267 = vmatprep.subr.bf16.mxu0 %v214
  %268 = vmatpush1.bf16.msra.mxu0 %v213
  %269 = vmatprep.subr.bf16.mxu0 %v218
  %270 = vmatpush1.bf16.msra.mxu0 %v217
  %271 = vmatprep.subr.bf16.mxu0 %v222
  %272 = vmatpush1.bf16.msra.mxu0 %v221
  %273 = vmatprep.subr.bf16.mxu0 0
  %274 = vmatpush1.bf16.msra.mxu0 0
  %275 = vmatprep.subr.bf16.mxu0 0
  %276 = vmatpush1.bf16.msra.mxu0 0
  %277 = vmatprep.subr.bf16.mxu0 0
  %278 = vmatpush1.bf16.msra.mxu0 0
  %279 = vmatprep.subr.bf16.mxu0 0
  %280 = vmatpush1.bf16.msra.mxu0 0
  %281 = vmatprep.subr.bf16.mxu0 0
  %282 = vmatpush1.bf16.msra.mxu0 0
  %283 = vmatprep.subr.bf16.mxu0 0
  %284 = vmatpush1.bf16.msra.mxu0 0
  %285 = vmatprep.subr.bf16.mxu0 0
  %286 = vmatpush1.bf16.msra.mxu0 0
  %287 = vmatprep.subr.bf16.mxu0 0
  %288 = vmatpush1.bf16.msra.mxu0 0
  %289 = vmatprep.mubr.bf16.mxu0 0
  %290 = vmatmul.mubr.bf16.gmra.mrb[0].mxu0 %v36
  %v291 = vpop.f32.mrb[0].mxu0
  %v292 = vadd.f32 0.0, %v291
  %v293 = vpop.f32.mrb[0].mxu0
  %v294 = vadd.f32 0.0, %v293
  %v295 = vpop.f32.mrb[0].mxu0
  %v296 = vpop.f32.mrb[0].mxu0
  %297 = vdwg.mxu0
  %298 = vmatprep.subr.bf16.mxu0 %v196
  %299 = vmatpush1.bf16.msra.mxu0 %v195
  %300 = vmatprep.subr.bf16.mxu0 %v200
  %301 = vmatpush1.bf16.msra.mxu0 %v199
  %302 = vmatprep.subr.bf16.mxu0 %v204
  %303 = vmatpush1.bf16.msra.mxu0 %v203
  %304 = vmatprep.subr.bf16.mxu0 %v208
  %305 = vmatpush1.bf16.msra.mxu0 %v207
  %306 = vmatprep.subr.bf16.mxu0 %v212
  %307 = vmatpush1.bf16.msra.mxu0 %v211
  %308 = vmatprep.subr.bf16.mxu0 %v216
  %309 = vmatpush1.bf16.msra.mxu0 %v215
  %310 = vmatprep.subr.bf16.mxu0 %v220
  %311 = vmatpush1.bf16.msra.mxu0 %v219
  %312 = vmatprep.subr.bf16.mxu0 %v224
  %313 = vmatpush1.bf16.msra.mxu0 %v223
  %314 = vmatprep.subr.bf16.mxu0 0
  %315 = vmatpush1.bf16.msra.mxu0 0
  %316 = vmatprep.subr.bf16.mxu0 0
  %317 = vmatpush1.bf16.msra.mxu0 0
  %318 = vmatprep.subr.bf16.mxu0 0
  %319 = vmatpush1.bf16.msra.mxu0 0
  %320 = vmatprep.subr.bf16.mxu0 0
  %321 = vmatpush1.bf16.msra.mxu0 0
  %322 = vmatprep.subr.bf16.mxu0 0
  %323 = vmatpush1.bf16.msra.mxu0 0
  %324 = vmatprep.subr.bf16.mxu0 0
  %325 = vmatpush1.bf16.msra.mxu0 0
  %326 = vmatprep.subr.bf16.mxu0 0
  %327 = vmatpush1.bf16.msra.mxu0 0
  %328 = vmatprep.subr.bf16.mxu0 0
  %329 = vmatpush1.bf16.msra.mxu0 0
  %330 = vmatprep.mubr.bf16.mxu0 0
  %331 = vmatmul.mubr.bf16.gmra.mrb[0].mxu0 %v36
  %v332 = vpop.f32.mrb[0].mxu0
  %v333 = vadd.f32 0.0, %v332
  %v334 = vpop.f32.mrb[0].mxu0
  %v335 = vadd.f32 0.0, %v334
  %v336 = vpop.f32.mrb[0].mxu0
  %v337 = vpop.f32.mrb[0].mxu0
  %338 = vdwg.mxu0
  %v343 = vcombine.low %v292, %v294
  %v344 = vcombine.low %v333, %v335
  %v346 = vunpack.c.l.s4 1966171168
  %v347 = vunpack.c.0.s8 %v346
  %v348 = vlaneseq
  %v349 = vshrl.u32 %v348, 7
  %v350 = vsub.s32 %v347, %v349
  %v351 = vrot.slane %v343, %v350
  %v353 = vunpack.c.l.s4 1966171168
  %v354 = vunpack.c.0.s8 %v353
  %v355 = vlaneseq
  %v356 = vshrl.u32 %v355, 7
  %v357 = vsub.s32 %v354, %v356
  %v358 = vrot.slane %v344, %v357
  %v359 = vcombine.low %v351, %v358
  %v360 = vcombine.high %v351, %v358
  %v362 = vunpack.c.l.s4 1966171168
  %v363 = vunpack.c.0.s8 %v362
  %v364 = vlaneseq
  %v365 = vshrl.u32 %v364, 7
  %v366 = vsub.s32 %v363, %v365
  %v367 = vrot.slane %v359, %v366
  %v369 = vunpack.c.l.s4 1966171168
  %v370 = vunpack.c.0.s8 %v369
  %v371 = vlaneseq
  %v372 = vshrl.u32 %v371, 7
  %v373 = vsub.s32 %v370, %v372
  %v374 = vrot.slane %v360, %v373
  %v377 = vadd.f32 %v94, %v367
  %v378 = vadd.f32 %v96, %v374
  %v379 = vxor.u32 %v377, 2147483648
  %v380 = vxor.u32 %v378, 2147483648
  %v381 = vmul.f32 %v379, 1.442695
  %v382 = vpow.pop %v381
  %v383 = vmul.f32 %v380, 1.442695
  %v384 = vpow.pop %v383
  %v385 = vadd.f32 %v382, 1.0
  %v386 = vadd.f32 %v384, 1.0
  %v387 = vrcp.pop %v385
  %v388 = vmul.f32 1.0, %v387
  %v389 = vrcp.pop %v386
  %v390 = vmul.f32 1.0, %v389
  %v393 = vrot.slane %v377, 3
  %v394 = vrot.slane %v378, 3
  %v397 = vtanh.pop %v393
  %v398 = vtanh.pop %v394
  %v401 = vrot.slane %v388, 1
  %v402 = vrot.slane %v390, 1
  %v407 = vunpack.c.l.s4 1966171168
  %v408 = vunpack.c.0.s8 %v407
  %v409 = vlaneseq
  %v410 = vshrl.u32 %v409, 7
  %v411 = vsub.s32 %v408, %v410
  %v412 = vrot.slane %v37, %v411
  %v413 = vcombine.high %v412, %v412
  %v415 = vunpack.c.l.s4 1966171168
  %v416 = vunpack.c.0.s8 %v415
  %v417 = vlaneseq
  %v418 = vshrl.u32 %v417, 7
  %v419 = vsub.s32 %v416, %v418
  %v420 = vrot.slane %v412, %v419
  %v422 = vunpack.c.l.s4 1966171168
  %v423 = vunpack.c.0.s8 %v422
  %v424 = vlaneseq
  %v425 = vshrl.u32 %v424, 7
  %v426 = vsub.s32 %v423, %v425
  %v427 = vrot.slane %v413, %v426
  %v430 = vmul.f32 %v401, %v420
  %v431 = vmul.f32 %v402, %v427
  %v432 = vmul.f32 %v388, %v397
  %v433 = vmul.f32 %v390, %v398
  %v434 = vadd.f32 %v430, %v432
  %v435 = vadd.f32 %v431, %v433
  %v436 = vtanh.pop %v434
  %v437 = vtanh.pop %v435
  %v438 = vrot.slane %v388, 2
  %v439 = vrot.slane %v390, 2
  %v442 = vmul.f32 %v438, %v436
  %v443 = vmul.f32 %v439, %v437
  %v444 = vpack.c.bf16 %v442, %v442
  %v445 = vpack.c.bf16 %v443, %v443
  %v447 = vlaneseq
  %v448 = vshrl.u32 %v447, 7
  %v449 = vsub.s32 0, %v448
  %v450 = vrot.slane %v86, %v449
  %v454 = vcombine.low %v442, %v443
  %v456 = vunpack.c.l.s4 1966171168
  %v457 = vunpack.c.0.s8 %v456
  %v458 = vlaneseq
  %v459 = vshrl.u32 %v458, 7
  %v460 = vsub.s32 %v457, %v459
  %v461 = vrot.slane %v454, %v460
  %v463 = vunpack.c.l.s4 1966171168
  %v464 = vunpack.c.0.s8 %v463
  %v465 = vlaneseq
  %v466 = vshrl.u32 %v465, 7
  %v467 = vsub.s32 %v464, %v466
  %v468 = vrot.slane %v461, %v467
  %470 = vmatprep.subr.mxu0 0.0
  %471 = vmatpush1.msra.mxu0 %v70
  %472 = vmatprep.subr.mxu0 0.0
  %473 = vmatpush1.msra.mxu0 %v71
  %474 = vmatprep.subr.mxu0 0.0
  %475 = vmatpush1.msra.mxu0 %v72
  %476 = vmatprep.subr.mxu0 0.0
  %477 = vmatpush1.msra.mxu0 %v73
  %478 = vmatprep.subr.mxu0 0.0
  %479 = vmatpush1.msra.mxu0 %v74
  %480 = vmatprep.subr.mxu0 0.0
  %481 = vmatpush1.msra.mxu0 %v75
  %482 = vmatprep.subr.mxu0 0.0
  %483 = vmatpush1.msra.mxu0 %v76
  %484 = vmatprep.subr.mxu0 0.0
  %485 = vmatpush1.msra.mxu0 %v77
  %486 = vmatprep.subr.mxu0 0.0
  %487 = vmatpush1.msra.mxu0 %v78
  %488 = vmatprep.subr.mxu0 0.0
  %489 = vmatpush1.msra.mxu0 %v79
  %490 = vmatprep.subr.mxu0 0.0
  %491 = vmatpush1.msra.mxu0 %v80
  %492 = vmatprep.subr.mxu0 0.0
  %493 = vmatpush1.msra.mxu0 %v81
  %494 = vmatprep.subr.mxu0 0.0
  %495 = vmatpush1.msra.mxu0 %v82
  %496 = vmatprep.subr.mxu0 0.0
  %497 = vmatpush1.msra.mxu0 %v83
  %498 = vmatprep.subr.mxu0 0.0
  %499 = vmatpush1.msra.mxu0 %v84
  %500 = vmatprep.subr.mxu0 0.0
  %501 = vmatpush1.msra.mxu0 %v85
  %502 = vmatprep.subr.mxu0 0.0
  %503 = vmatpush1.msra.mxu0 0.0
  %504 = vmatprep.subr.mxu0 0.0
  %505 = vmatpush1.msra.mxu0 0.0
  %506 = vmatprep.subr.mxu0 0.0
  %507 = vmatpush1.msra.mxu0 0.0
  %508 = vmatprep.subr.mxu0 0.0
  %509 = vmatpush1.msra.mxu0 0.0
  %510 = vmatprep.subr.mxu0 0.0
  %511 = vmatpush1.msra.mxu0 0.0
  %512 = vmatprep.subr.mxu0 0.0
  %513 = vmatpush1.msra.mxu0 0.0
  %514 = vmatprep.subr.mxu0 0.0
  %515 = vmatpush1.msra.mxu0 0.0
  %516 = vmatprep.subr.mxu0 0.0
  %517 = vmatpush1.msra.mxu0 0.0
  %518 = vmatprep.subr.mxu0 0.0
  %519 = vmatpush1.msra.mxu0 0.0
  %520 = vmatprep.subr.mxu0 0.0
  %521 = vmatpush1.msra.mxu0 0.0
  %522 = vmatprep.subr.mxu0 0.0
  %523 = vmatpush1.msra.mxu0 0.0
  %524 = vmatprep.subr.mxu0 0.0
  %525 = vmatpush1.msra.mxu0 0.0
  %526 = vmatprep.subr.mxu0 0.0
  %527 = vmatpush1.msra.mxu0 0.0
  %528 = vmatprep.subr.mxu0 0.0
  %529 = vmatpush1.msra.mxu0 0.0
  %530 = vmatprep.subr.mxu0 0.0
  %531 = vmatpush1.msra.mxu0 0.0
  %532 = vmatprep.subr.mxu0 0.0
  %533 = vmatpush1.msra.mxu0 0.0
  %534 = vmatprep.mubr.f32.mxu0 0.0
  %535 = vmatmul.mubr.f32.gmra.mrb[0].mxu0 %v468
  %v536 = vpop.f32.mrb[0].mxu0
  %v537 = vadd.f32 %v450, %v536
  %v538 = vpop.f32.mrb[0].mxu0
  %539 = vdwg.mxu0
  %v540 = vmax.f32 %v537, 0.0
  %vm541 = vcmask 254976
  %v542 = vsel %vm541, %v540, 0.0
  %543 = vadd.xlane.f32.xlu0 %v542
  %v544 = vpop.xlane.xlu0 %543
  %v545 = vrcp.pop 32.0
  %v546 = vmul.f32 %v544, %v545
  %v547 = vsub.f32 %v540, %v546
  %v548 = vmul.f32 %v547, %v547
  %v549 = vsel %vm541, %v548, 0.0
  %550 = vadd.xlane.f32.xlu0 %v549
  %v551 = vpop.xlane.xlu0 %550
  %v552 = vmul.f32 %v551, %v545
  %v553 = vadd.f32 %v552, 1e-05
  %v554 = vrsqrt.pop %v553
  %v555 = vmul.f32 %v547, %v554
  %v557 = vlaneseq
  %v558 = vshrl.u32 %v557, 7
  %v559 = vsub.s32 0, %v558
  %v560 = vrot.slane %v87, %v559
  %v562 = vmul.f32 %v555, %v560
  %v564 = vlaneseq
  %v565 = vshrl.u32 %v564, 7
  %v566 = vsub.s32 0, %v565
  %v567 = vrot.slane %v88, %v566
  %v569 = vadd.f32 %v562, %v567
  %v571 = vlaneseq
  %v572 = vshrl.u32 %v571, 7
  %v573 = vsub.s32 0, %v572
  %v574 = vrot.slane %v93, %v573
  %vm576 = vcmask 261120
  %v578 = vsel %vm576, %v569, 0
  %580 = vmatprep.subr.mxu0 0.0
  %581 = vmatpush1.msra.mxu0 %v89
  %582 = vmatprep.subr.mxu0 0.0
  %583 = vmatpush1.msra.mxu0 %v90
  %584 = vmatprep.subr.mxu0 0.0
  %585 = vmatpush1.msra.mxu0 %v91
  %586 = vmatprep.subr.mxu0 0.0
  %587 = vmatpush1.msra.mxu0 %v92
  %588 = vmatprep.subr.mxu0 0.0
  %589 = vmatpush1.msra.mxu0 0.0
  %590 = vmatprep.subr.mxu0 0.0
  %591 = vmatpush1.msra.mxu0 0.0
  %592 = vmatprep.subr.mxu0 0.0
  %593 = vmatpush1.msra.mxu0 0.0
  %594 = vmatprep.subr.mxu0 0.0
  %595 = vmatpush1.msra.mxu0 0.0
  %596 = vmatprep.subr.mxu0 0.0
  %597 = vmatpush1.msra.mxu0 0.0
  %598 = vmatprep.subr.mxu0 0.0
  %599 = vmatpush1.msra.mxu0 0.0
  %600 = vmatprep.subr.mxu0 0.0
  %601 = vmatpush1.msra.mxu0 0.0
  %602 = vmatprep.subr.mxu0 0.0
  %603 = vmatpush1.msra.mxu0 0.0
  %604 = vmatprep.subr.mxu0 0.0
  %605 = vmatpush1.msra.mxu0 0.0
  %606 = vmatprep.subr.mxu0 0.0
  %607 = vmatpush1.msra.mxu0 0.0
  %608 = vmatprep.subr.mxu0 0.0
  %609 = vmatpush1.msra.mxu0 0.0
  %610 = vmatprep.subr.mxu0 0.0
  %611 = vmatpush1.msra.mxu0 0.0
  %612 = vmatprep.subr.mxu0 0.0
  %613 = vmatpush1.msra.mxu0 0.0
  %614 = vmatprep.subr.mxu0 0.0
  %615 = vmatpush1.msra.mxu0 0.0
  %616 = vmatprep.subr.mxu0 0.0
  %617 = vmatpush1.msra.mxu0 0.0
  %618 = vmatprep.subr.mxu0 0.0
  %619 = vmatpush1.msra.mxu0 0.0
  %620 = vmatprep.subr.mxu0 0.0
  %621 = vmatpush1.msra.mxu0 0.0
  %622 = vmatprep.subr.mxu0 0.0
  %623 = vmatpush1.msra.mxu0 0.0
  %624 = vmatprep.subr.mxu0 0.0
  %625 = vmatpush1.msra.mxu0 0.0
  %626 = vmatprep.subr.mxu0 0.0
  %627 = vmatpush1.msra.mxu0 0.0
  %628 = vmatprep.subr.mxu0 0.0
  %629 = vmatpush1.msra.mxu0 0.0
  %630 = vmatprep.subr.mxu0 0.0
  %631 = vmatpush1.msra.mxu0 0.0
  %632 = vmatprep.subr.mxu0 0.0
  %633 = vmatpush1.msra.mxu0 0.0
  %634 = vmatprep.subr.mxu0 0.0
  %635 = vmatpush1.msra.mxu0 0.0
  %636 = vmatprep.subr.mxu0 0.0
  %637 = vmatpush1.msra.mxu0 0.0
  %638 = vmatprep.subr.mxu0 0.0
  %639 = vmatpush1.msra.mxu0 0.0
  %640 = vmatprep.subr.mxu0 0.0
  %641 = vmatpush1.msra.mxu0 0.0
  %642 = vmatprep.subr.mxu0 0.0
  %643 = vmatpush1.msra.mxu0 0.0
  %644 = vmatprep.mubr.f32.mxu0 0.0
  %645 = vmatmul.mubr.f32.gmra.mrb[0].mxu0 %v578
  %v646 = vpop.f32.mrb[0].mxu0
  %v647 = vadd.f32 %v574, %v646
  %v648 = vpop.f32.mrb[0].mxu0
  %649 = vdwg.mxu0
  %v652 = vunpack.c.l.s4 1966171168
  %v653 = vunpack.c.0.s8 %v652
  %v654 = vlaneseq
  %v655 = vshrl.u32 %v654, 7
  %v656 = vsub.s32 %v653, %v655
  %v657 = vrot.slane %v647, %v656
  %v658 = vcombine.high %v657, %v657
  %v660 = vunpack.c.l.s4 1966171168
  %v661 = vunpack.c.0.s8 %v660
  %v662 = vlaneseq
  %v663 = vshrl.u32 %v662, 7
  %v664 = vsub.s32 %v661, %v663
  %v665 = vrot.slane %v657, %v664
  %v667 = vunpack.c.l.s4 1966171168
  %v668 = vunpack.c.0.s8 %v667
  %v669 = vlaneseq
  %v670 = vshrl.u32 %v669, 7
  %v671 = vsub.s32 %v668, %v670
  %v672 = vrot.slane %v658, %v671
  %vm675 = vcmask 32768
  %676 = vst.msk [vmem:[%s8] sm:$0x1] %vm675, %v665
  %677 = vst.msk [vmem:[%s8 + $0x8] sm:$0x1] %vm675, %v672
  %s678 = scalar_lea.vmem %s0, 1
  %v679 = vld [vmem:[%s678] ss:$8 sm:$0xf]
  %s680 = scalar_lea.vmem %s0, 33
  %v681 = vld [vmem:[%s680] ss:$8 sm:$0xf]
  %v684 = vunpack.c.l.b16 %v444
  %v685 = vunpack.c.l.b16 %v445
  %v686 = vrot.slane %v685, 7
  %vm687 = vcmask 1041409
  %v688 = vsel %vm687, %v686, %v684
  %v689 = vpack.c.b16 %v688, %v688
  %691 = vmatprep.subr.bf16.mxu0 %v194
  %692 = vmatpush1.bf16.msra.mxu0 %v193
  %693 = vmatprep.subr.bf16.mxu0 %v198
  %694 = vmatpush1.bf16.msra.mxu0 %v197
  %695 = vmatprep.subr.bf16.mxu0 %v202
  %696 = vmatpush1.bf16.msra.mxu0 %v201
  %697 = vmatprep.subr.bf16.mxu0 %v206
  %698 = vmatpush1.bf16.msra.mxu0 %v205
  %699 = vmatprep.subr.bf16.mxu0 %v210
  %700 = vmatpush1.bf16.msra.mxu0 %v209
  %701 = vmatprep.subr.bf16.mxu0 %v214
  %702 = vmatpush1.bf16.msra.mxu0 %v213
  %703 = vmatprep.subr.bf16.mxu0 %v218
  %704 = vmatpush1.bf16.msra.mxu0 %v217
  %705 = vmatprep.subr.bf16.mxu0 %v222
  %706 = vmatpush1.bf16.msra.mxu0 %v221
  %707 = vmatprep.subr.bf16.mxu0 0
  %708 = vmatpush1.bf16.msra.mxu0 0
  %709 = vmatprep.subr.bf16.mxu0 0
  %710 = vmatpush1.bf16.msra.mxu0 0
  %711 = vmatprep.subr.bf16.mxu0 0
  %712 = vmatpush1.bf16.msra.mxu0 0
  %713 = vmatprep.subr.bf16.mxu0 0
  %714 = vmatpush1.bf16.msra.mxu0 0
  %715 = vmatprep.subr.bf16.mxu0 0
  %716 = vmatpush1.bf16.msra.mxu0 0
  %717 = vmatprep.subr.bf16.mxu0 0
  %718 = vmatpush1.bf16.msra.mxu0 0
  %719 = vmatprep.subr.bf16.mxu0 0
  %720 = vmatpush1.bf16.msra.mxu0 0
  %721 = vmatprep.subr.bf16.mxu0 0
  %722 = vmatpush1.bf16.msra.mxu0 0
  %723 = vmatprep.mubr.bf16.mxu0 0
  %724 = vmatmul.mubr.bf16.gmra.mrb[0].mxu0 %v689
  %v725 = vpop.f32.mrb[0].mxu0
  %v726 = vadd.f32 0.0, %v725
  %v727 = vpop.f32.mrb[0].mxu0
  %v728 = vadd.f32 0.0, %v727
  %v729 = vpop.f32.mrb[0].mxu0
  %v730 = vpop.f32.mrb[0].mxu0
  %731 = vdwg.mxu0
  %732 = vmatprep.subr.bf16.mxu0 %v196
  %733 = vmatpush1.bf16.msra.mxu0 %v195
  %734 = vmatprep.subr.bf16.mxu0 %v200
  %735 = vmatpush1.bf16.msra.mxu0 %v199
  %736 = vmatprep.subr.bf16.mxu0 %v204
  %737 = vmatpush1.bf16.msra.mxu0 %v203
  %738 = vmatprep.subr.bf16.mxu0 %v208
  %739 = vmatpush1.bf16.msra.mxu0 %v207
  %740 = vmatprep.subr.bf16.mxu0 %v212
  %741 = vmatpush1.bf16.msra.mxu0 %v211
  %742 = vmatprep.subr.bf16.mxu0 %v216
  %743 = vmatpush1.bf16.msra.mxu0 %v215
  %744 = vmatprep.subr.bf16.mxu0 %v220
  %745 = vmatpush1.bf16.msra.mxu0 %v219
  %746 = vmatprep.subr.bf16.mxu0 %v224
  %747 = vmatpush1.bf16.msra.mxu0 %v223
  %748 = vmatprep.subr.bf16.mxu0 0
  %749 = vmatpush1.bf16.msra.mxu0 0
  %750 = vmatprep.subr.bf16.mxu0 0
  %751 = vmatpush1.bf16.msra.mxu0 0
  %752 = vmatprep.subr.bf16.mxu0 0
  %753 = vmatpush1.bf16.msra.mxu0 0
  %754 = vmatprep.subr.bf16.mxu0 0
  %755 = vmatpush1.bf16.msra.mxu0 0
  %756 = vmatprep.subr.bf16.mxu0 0
  %757 = vmatpush1.bf16.msra.mxu0 0
  %758 = vmatprep.subr.bf16.mxu0 0
  %759 = vmatpush1.bf16.msra.mxu0 0
  %760 = vmatprep.subr.bf16.mxu0 0
  %761 = vmatpush1.bf16.msra.mxu0 0
  %762 = vmatprep.subr.bf16.mxu0 0
  %763 = vmatpush1.bf16.msra.mxu0 0
  %764 = vmatprep.mubr.bf16.mxu0 0
  %765 = vmatmul.mubr.bf16.gmra.mrb[0].mxu0 %v689
  %v766 = vpop.f32.mrb[0].mxu0
  %v767 = vadd.f32 0.0, %v766
  %v768 = vpop.f32.mrb[0].mxu0
  %v769 = vadd.f32 0.0, %v768
  %v770 = vpop.f32.mrb[0].mxu0
  %v771 = vpop.f32.mrb[0].mxu0
  %772 = vdwg.mxu0
  %v777 = vcombine.low %v726, %v728
  %v778 = vcombine.low %v767, %v769
  %v780 = vunpack.c.l.s4 1966171168
  %v781 = vunpack.c.0.s8 %v780
  %v782 = vlaneseq
  %v783 = vshrl.u32 %v782, 7
  %v784 = vsub.s32 %v781, %v783
  %v785 = vrot.slane %v777, %v784
  %v787 = vunpack.c.l.s4 1966171168
  %v788 = vunpack.c.0.s8 %v787
  %v789 = vlaneseq
  %v790 = vshrl.u32 %v789, 7
  %v791 = vsub.s32 %v788, %v790
  %v792 = vrot.slane %v778, %v791
  %v793 = vcombine.low %v785, %v792
  %v794 = vcombine.high %v785, %v792
  %v796 = vunpack.c.l.s4 1966171168
  %v797 = vunpack.c.0.s8 %v796
  %v798 = vlaneseq
  %v799 = vshrl.u32 %v798, 7
  %v800 = vsub.s32 %v797, %v799
  %v801 = vrot.slane %v793, %v800
  %v803 = vunpack.c.l.s4 1966171168
  %v804 = vunpack.c.0.s8 %v803
  %v805 = vlaneseq
  %v806 = vshrl.u32 %v805, 7
  %v807 = vsub.s32 %v804, %v806
  %v808 = vrot.slane %v794, %v807
  %v811 = vadd.f32 %v679, %v801
  %v812 = vadd.f32 %v681, %v808
  %v813 = vxor.u32 %v811, 2147483648
  %v814 = vxor.u32 %v812, 2147483648
  %v815 = vmul.f32 %v813, 1.442695
  %v816 = vpow.pop %v815
  %v817 = vmul.f32 %v814, 1.442695
  %v818 = vpow.pop %v817
  %v819 = vadd.f32 %v816, 1.0
  %v820 = vadd.f32 %v818, 1.0
  %v821 = vrcp.pop %v819
  %v822 = vmul.f32 1.0, %v821
  %v823 = vrcp.pop %v820
  %v824 = vmul.f32 1.0, %v823
  %v827 = vrot.slane %v811, 3
  %v828 = vrot.slane %v812, 3
  %v831 = vtanh.pop %v827
  %v832 = vtanh.pop %v828
  %v835 = vrot.slane %v822, 1
  %v836 = vrot.slane %v824, 1
  %v839 = vmul.f32 %v835, %v434
  %v840 = vmul.f32 %v836, %v435
  %v841 = vmul.f32 %v822, %v831
  %v842 = vmul.f32 %v824, %v832
  %v843 = vadd.f32 %v839, %v841
  %v844 = vadd.f32 %v840, %v842
  %v845 = vtanh.pop %v843
  %v846 = vtanh.pop %v844
  %v847 = vrot.slane %v822, 2
  %v848 = vrot.slane %v824, 2
  %v851 = vmul.f32 %v847, %v845
  %v852 = vmul.f32 %v848, %v846
  %v853 = vpack.c.bf16 %v851, %v851
  %v854 = vpack.c.bf16 %v852, %v852
  %v857 = vcombine.low %v851, %v852
  %v859 = vunpack.c.l.s4 1966171168
  %v860 = vunpack.c.0.s8 %v859
  %v861 = vlaneseq
  %v862 = vshrl.u32 %v861, 7
  %v863 = vsub.s32 %v860, %v862
  %v864 = vrot.slane %v857, %v863
  %v866 = vunpack.c.l.s4 1966171168
  %v867 = vunpack.c.0.s8 %v866
  %v868 = vlaneseq
  %v869 = vshrl.u32 %v868, 7
  %v870 = vsub.s32 %v867, %v869
  %v871 = vrot.slane %v864, %v870
  %873 = vmatprep.subr.mxu0 0.0
  %874 = vmatpush1.msra.mxu0 %v70
  %875 = vmatprep.subr.mxu0 0.0
  %876 = vmatpush1.msra.mxu0 %v71
  %877 = vmatprep.subr.mxu0 0.0
  %878 = vmatpush1.msra.mxu0 %v72
  %879 = vmatprep.subr.mxu0 0.0
  %880 = vmatpush1.msra.mxu0 %v73
  %881 = vmatprep.subr.mxu0 0.0
  %882 = vmatpush1.msra.mxu0 %v74
  %883 = vmatprep.subr.mxu0 0.0
  %884 = vmatpush1.msra.mxu0 %v75
  %885 = vmatprep.subr.mxu0 0.0
  %886 = vmatpush1.msra.mxu0 %v76
  %887 = vmatprep.subr.mxu0 0.0
  %888 = vmatpush1.msra.mxu0 %v77
  %889 = vmatprep.subr.mxu0 0.0
  %890 = vmatpush1.msra.mxu0 %v78
  %891 = vmatprep.subr.mxu0 0.0
  %892 = vmatpush1.msra.mxu0 %v79
  %893 = vmatprep.subr.mxu0 0.0
  %894 = vmatpush1.msra.mxu0 %v80
  %895 = vmatprep.subr.mxu0 0.0
  %896 = vmatpush1.msra.mxu0 %v81
  %897 = vmatprep.subr.mxu0 0.0
  %898 = vmatpush1.msra.mxu0 %v82
  %899 = vmatprep.subr.mxu0 0.0
  %900 = vmatpush1.msra.mxu0 %v83
  %901 = vmatprep.subr.mxu0 0.0
  %902 = vmatpush1.msra.mxu0 %v84
  %903 = vmatprep.subr.mxu0 0.0
  %904 = vmatpush1.msra.mxu0 %v85
  %905 = vmatprep.subr.mxu0 0.0
  %906 = vmatpush1.msra.mxu0 0.0
  %907 = vmatprep.subr.mxu0 0.0
  %908 = vmatpush1.msra.mxu0 0.0
  %909 = vmatprep.subr.mxu0 0.0
  %910 = vmatpush1.msra.mxu0 0.0
  %911 = vmatprep.subr.mxu0 0.0
  %912 = vmatpush1.msra.mxu0 0.0
  %913 = vmatprep.subr.mxu0 0.0
  %914 = vmatpush1.msra.mxu0 0.0
  %915 = vmatprep.subr.mxu0 0.0
  %916 = vmatpush1.msra.mxu0 0.0
  %917 = vmatprep.subr.mxu0 0.0
  %918 = vmatpush1.msra.mxu0 0.0
  %919 = vmatprep.subr.mxu0 0.0
  %920 = vmatpush1.msra.mxu0 0.0
  %921 = vmatprep.subr.mxu0 0.0
  %922 = vmatpush1.msra.mxu0 0.0
  %923 = vmatprep.subr.mxu0 0.0
  %924 = vmatpush1.msra.mxu0 0.0
  %925 = vmatprep.subr.mxu0 0.0
  %926 = vmatpush1.msra.mxu0 0.0
  %927 = vmatprep.subr.mxu0 0.0
  %928 = vmatpush1.msra.mxu0 0.0
  %929 = vmatprep.subr.mxu0 0.0
  %930 = vmatpush1.msra.mxu0 0.0
  %931 = vmatprep.subr.mxu0 0.0
  %932 = vmatpush1.msra.mxu0 0.0
  %933 = vmatprep.subr.mxu0 0.0
  %934 = vmatpush1.msra.mxu0 0.0
  %935 = vmatprep.subr.mxu0 0.0
  %936 = vmatpush1.msra.mxu0 0.0
  %937 = vmatprep.mubr.f32.mxu0 0.0
  %938 = vmatmul.mubr.f32.gmra.mrb[0].mxu0 %v871
  %v939 = vpop.f32.mrb[0].mxu0
  %v940 = vadd.f32 %v450, %v939
  %v941 = vpop.f32.mrb[0].mxu0
  %942 = vdwg.mxu0
  %v943 = vmax.f32 %v940, 0.0
  %v944 = vsel %vm541, %v943, 0.0
  %945 = vadd.xlane.f32.xlu0 %v944
  %v946 = vpop.xlane.xlu0 %945
  %v947 = vmul.f32 %v946, %v545
  %v948 = vsub.f32 %v943, %v947
  %v949 = vmul.f32 %v948, %v948
  %v950 = vsel %vm541, %v949, 0.0
  %951 = vadd.xlane.f32.xlu0 %v950
  %v952 = vpop.xlane.xlu0 %951
  %v953 = vmul.f32 %v952, %v545
  %v954 = vadd.f32 %v953, 1e-05
  %v955 = vrsqrt.pop %v954
  %v956 = vmul.f32 %v948, %v955
  %v957 = vmul.f32 %v956, %v560
  %v958 = vadd.f32 %v957, %v567
  %v960 = vsel %vm576, %v958, 0
  %962 = vmatprep.subr.mxu0 0.0
  %963 = vmatpush1.msra.mxu0 %v89
  %964 = vmatprep.subr.mxu0 0.0
  %965 = vmatpush1.msra.mxu0 %v90
  %966 = vmatprep.subr.mxu0 0.0
  %967 = vmatpush1.msra.mxu0 %v91
  %968 = vmatprep.subr.mxu0 0.0
  %969 = vmatpush1.msra.mxu0 %v92
  %970 = vmatprep.subr.mxu0 0.0
  %971 = vmatpush1.msra.mxu0 0.0
  %972 = vmatprep.subr.mxu0 0.0
  %973 = vmatpush1.msra.mxu0 0.0
  %974 = vmatprep.subr.mxu0 0.0
  %975 = vmatpush1.msra.mxu0 0.0
  %976 = vmatprep.subr.mxu0 0.0
  %977 = vmatpush1.msra.mxu0 0.0
  %978 = vmatprep.subr.mxu0 0.0
  %979 = vmatpush1.msra.mxu0 0.0
  %980 = vmatprep.subr.mxu0 0.0
  %981 = vmatpush1.msra.mxu0 0.0
  %982 = vmatprep.subr.mxu0 0.0
  %983 = vmatpush1.msra.mxu0 0.0
  %984 = vmatprep.subr.mxu0 0.0
  %985 = vmatpush1.msra.mxu0 0.0
  %986 = vmatprep.subr.mxu0 0.0
  %987 = vmatpush1.msra.mxu0 0.0
  %988 = vmatprep.subr.mxu0 0.0
  %989 = vmatpush1.msra.mxu0 0.0
  %990 = vmatprep.subr.mxu0 0.0
  %991 = vmatpush1.msra.mxu0 0.0
  %992 = vmatprep.subr.mxu0 0.0
  %993 = vmatpush1.msra.mxu0 0.0
  %994 = vmatprep.subr.mxu0 0.0
  %995 = vmatpush1.msra.mxu0 0.0
  %996 = vmatprep.subr.mxu0 0.0
  %997 = vmatpush1.msra.mxu0 0.0
  %998 = vmatprep.subr.mxu0 0.0
  %999 = vmatpush1.msra.mxu0 0.0
  %1000 = vmatprep.subr.mxu0 0.0
  %1001 = vmatpush1.msra.mxu0 0.0
  %1002 = vmatprep.subr.mxu0 0.0
  %1003 = vmatpush1.msra.mxu0 0.0
  %1004 = vmatprep.subr.mxu0 0.0
  %1005 = vmatpush1.msra.mxu0 0.0
  %1006 = vmatprep.subr.mxu0 0.0
  %1007 = vmatpush1.msra.mxu0 0.0
  %1008 = vmatprep.subr.mxu0 0.0
  %1009 = vmatpush1.msra.mxu0 0.0
  %1010 = vmatprep.subr.mxu0 0.0
  %1011 = vmatpush1.msra.mxu0 0.0
  %1012 = vmatprep.subr.mxu0 0.0
  %1013 = vmatpush1.msra.mxu0 0.0
  %1014 = vmatprep.subr.mxu0 0.0
  %1015 = vmatpush1.msra.mxu0 0.0
  %1016 = vmatprep.subr.mxu0 0.0
  %1017 = vmatpush1.msra.mxu0 0.0
  %1018 = vmatprep.subr.mxu0 0.0
  %1019 = vmatpush1.msra.mxu0 0.0
  %1020 = vmatprep.subr.mxu0 0.0
  %1021 = vmatpush1.msra.mxu0 0.0
  %1022 = vmatprep.subr.mxu0 0.0
  %1023 = vmatpush1.msra.mxu0 0.0
  %1024 = vmatprep.subr.mxu0 0.0
  %1025 = vmatpush1.msra.mxu0 0.0
  %1026 = vmatprep.mubr.f32.mxu0 0.0
  %1027 = vmatmul.mubr.f32.gmra.mrb[0].mxu0 %v960
  %v1028 = vpop.f32.mrb[0].mxu0
  %v1029 = vadd.f32 %v574, %v1028
  %v1030 = vpop.f32.mrb[0].mxu0
  %1031 = vdwg.mxu0
  %v1034 = vunpack.c.l.s4 1966171168
  %v1035 = vunpack.c.0.s8 %v1034
  %v1036 = vlaneseq
  %v1037 = vshrl.u32 %v1036, 7
  %v1038 = vsub.s32 %v1035, %v1037
  %v1039 = vrot.slane %v1029, %v1038
  %v1040 = vcombine.high %v1039, %v1039
  %v1042 = vunpack.c.l.s4 1966171168
  %v1043 = vunpack.c.0.s8 %v1042
  %v1044 = vlaneseq
  %v1045 = vshrl.u32 %v1044, 7
  %v1046 = vsub.s32 %v1043, %v1045
  %v1047 = vrot.slane %v1039, %v1046
  %v1049 = vunpack.c.l.s4 1966171168
  %v1050 = vunpack.c.0.s8 %v1049
  %v1051 = vlaneseq
  %v1052 = vshrl.u32 %v1051, 7
  %v1053 = vsub.s32 %v1050, %v1052
  %v1054 = vrot.slane %v1040, %v1053
  %1057 = vst.msk [vmem:[%s8 + $0x1] sm:$0x1] %vm675, %v1047
  %1058 = vst.msk [vmem:[%s8 + $0x9] sm:$0x1] %vm675, %v1054
  %s1059 = scalar_lea.vmem %s0, 2
  %v1060 = vld [vmem:[%s1059] ss:$8 sm:$0xf]
  %s1061 = scalar_lea.vmem %s0, 34
  %v1062 = vld [vmem:[%s1061] ss:$8 sm:$0xf]
  %v1065 = vunpack.c.l.b16 %v853
  %v1066 = vunpack.c.l.b16 %v854
  %v1067 = vrot.slane %v1066, 7
  %v1068 = vsel %vm687, %v1067, %v1065
  %v1069 = vpack.c.b16 %v1068, %v1068
  %1071 = vmatprep.subr.bf16.mxu0 %v194
  %1072 = vmatpush1.bf16.msra.mxu0 %v193
  %1073 = vmatprep.subr.bf16.mxu0 %v198
  %1074 = vmatpush1.bf16.msra.mxu0 %v197
  %1075 = vmatprep.subr.bf16.mxu0 %v202
  %1076 = vmatpush1.bf16.msra.mxu0 %v201
  %1077 = vmatprep.subr.bf16.mxu0 %v206
  %1078 = vmatpush1.bf16.msra.mxu0 %v205
  %1079 = vmatprep.subr.bf16.mxu0 %v210
  %1080 = vmatpush1.bf16.msra.mxu0 %v209
  %1081 = vmatprep.subr.bf16.mxu0 %v214
  %1082 = vmatpush1.bf16.msra.mxu0 %v213
  %1083 = vmatprep.subr.bf16.mxu0 %v218
  %1084 = vmatpush1.bf16.msra.mxu0 %v217
  %1085 = vmatprep.subr.bf16.mxu0 %v222
  %1086 = vmatpush1.bf16.msra.mxu0 %v221
  %1087 = vmatprep.subr.bf16.mxu0 0
  %1088 = vmatpush1.bf16.msra.mxu0 0
  %1089 = vmatprep.subr.bf16.mxu0 0
  %1090 = vmatpush1.bf16.msra.mxu0 0
  %1091 = vmatprep.subr.bf16.mxu0 0
  %1092 = vmatpush1.bf16.msra.mxu0 0
  %1093 = vmatprep.subr.bf16.mxu0 0
  %1094 = vmatpush1.bf16.msra.mxu0 0
  %1095 = vmatprep.subr.bf16.mxu0 0
  %1096 = vmatpush1.bf16.msra.mxu0 0
  %1097 = vmatprep.subr.bf16.mxu0 0
  %1098 = vmatpush1.bf16.msra.mxu0 0
  %1099 = vmatprep.subr.bf16.mxu0 0
  %1100 = vmatpush1.bf16.msra.mxu0 0
  %1101 = vmatprep.subr.bf16.mxu0 0
  %1102 = vmatpush1.bf16.msra.mxu0 0
  %1103 = vmatprep.mubr.bf16.mxu0 0
  %1104 = vmatmul.mubr.bf16.gmra.mrb[0].mxu0 %v1069
  %v1105 = vpop.f32.mrb[0].mxu0
  %v1106 = vadd.f32 0.0, %v1105
  %v1107 = vpop.f32.mrb[0].mxu0
  %v1108 = vadd.f32 0.0, %v1107
  %v1109 = vpop.f32.mrb[0].mxu0
  %v1110 = vpop.f32.mrb[0].mxu0
  %1111 = vdwg.mxu0
  %1112 = vmatprep.subr.bf16.mxu0 %v196
  %1113 = vmatpush1.bf16.msra.mxu0 %v195
  %1114 = vmatprep.subr.bf16.mxu0 %v200
  %1115 = vmatpush1.bf16.msra.mxu0 %v199
  %1116 = vmatprep.subr.bf16.mxu0 %v204
  %1117 = vmatpush1.bf16.msra.mxu0 %v203
  %1118 = vmatprep.subr.bf16.mxu0 %v208
  %1119 = vmatpush1.bf16.msra.mxu0 %v207
  %1120 = vmatprep.subr.bf16.mxu0 %v212
  %1121 = vmatpush1.bf16.msra.mxu0 %v211
  %1122 = vmatprep.subr.bf16.mxu0 %v216
  %1123 = vmatpush1.bf16.msra.mxu0 %v215
  %1124 = vmatprep.subr.bf16.mxu0 %v220
  %1125 = vmatpush1.bf16.msra.mxu0 %v219
  %1126 = vmatprep.subr.bf16.mxu0 %v224
  %1127 = vmatpush1.bf16.msra.mxu0 %v223
  %1128 = vmatprep.subr.bf16.mxu0 0
  %1129 = vmatpush1.bf16.msra.mxu0 0
  %1130 = vmatprep.subr.bf16.mxu0 0
  %1131 = vmatpush1.bf16.msra.mxu0 0
  %1132 = vmatprep.subr.bf16.mxu0 0
  %1133 = vmatpush1.bf16.msra.mxu0 0
  %1134 = vmatprep.subr.bf16.mxu0 0
  %1135 = vmatpush1.bf16.msra.mxu0 0
  %1136 = vmatprep.subr.bf16.mxu0 0
  %1137 = vmatpush1.bf16.msra.mxu0 0
  %1138 = vmatprep.subr.bf16.mxu0 0
  %1139 = vmatpush1.bf16.msra.mxu0 0
  %1140 = vmatprep.subr.bf16.mxu0 0
  %1141 = vmatpush1.bf16.msra.mxu0 0
  %1142 = vmatprep.subr.bf16.mxu0 0
  %1143 = vmatpush1.bf16.msra.mxu0 0
  %1144 = vmatprep.mubr.bf16.mxu0 0
  %1145 = vmatmul.mubr.bf16.gmra.mrb[0].mxu0 %v1069
  %v1146 = vpop.f32.mrb[0].mxu0
  %v1147 = vadd.f32 0.0, %v1146
  %v1148 = vpop.f32.mrb[0].mxu0
  %v1149 = vadd.f32 0.0, %v1148
  %v1150 = vpop.f32.mrb[0].mxu0
  %v1151 = vpop.f32.mrb[0].mxu0
  %1152 = vdwg.mxu0
  %v1157 = vcombine.low %v1106, %v1108
  %v1158 = vcombine.low %v1147, %v1149
  %v1160 = vunpack.c.l.s4 1966171168
  %v1161 = vunpack.c.0.s8 %v1160
  %v1162 = vlaneseq
  %v1163 = vshrl.u32 %v1162, 7
  %v1164 = vsub.s32 %v1161, %v1163
  %v1165 = vrot.slane %v1157, %v1164
  %v1167 = vunpack.c.l.s4 1966171168
  %v1168 = vunpack.c.0.s8 %v1167
  %v1169 = vlaneseq
  %v1170 = vshrl.u32 %v1169, 7
  %v1171 = vsub.s32 %v1168, %v1170
  %v1172 = vrot.slane %v1158, %v1171
  %v1173 = vcombine.low %v1165, %v1172
  %v1174 = vcombine.high %v1165, %v1172
  %v1176 = vunpack.c.l.s4 1966171168
  %v1177 = vunpack.c.0.s8 %v1176
  %v1178 = vlaneseq
  %v1179 = vshrl.u32 %v1178, 7
  %v1180 = vsub.s32 %v1177, %v1179
  %v1181 = vrot.slane %v1173, %v1180
  %v1183 = vunpack.c.l.s4 1966171168
  %v1184 = vunpack.c.0.s8 %v1183
  %v1185 = vlaneseq
  %v1186 = vshrl.u32 %v1185, 7
  %v1187 = vsub.s32 %v1184, %v1186
  %v1188 = vrot.slane %v1174, %v1187
  %v1191 = vadd.f32 %v1060, %v1181
  %v1192 = vadd.f32 %v1062, %v1188
  %v1193 = vxor.u32 %v1191, 2147483648
  %v1194 = vxor.u32 %v1192, 2147483648
  %v1195 = vmul.f32 %v1193, 1.442695
  %v1196 = vpow.pop %v1195
  %v1197 = vmul.f32 %v1194, 1.442695
  %v1198 = vpow.pop %v1197
  %v1199 = vadd.f32 %v1196, 1.0
  %v1200 = vadd.f32 %v1198, 1.0
  %v1201 = vrcp.pop %v1199
  %v1202 = vmul.f32 1.0, %v1201
  %v1203 = vrcp.pop %v1200
  %v1204 = vmul.f32 1.0, %v1203
  %v1207 = vrot.slane %v1191, 3
  %v1208 = vrot.slane %v1192, 3
  %v1211 = vtanh.pop %v1207
  %v1212 = vtanh.pop %v1208
  %v1215 = vrot.slane %v1202, 1
  %v1216 = vrot.slane %v1204, 1
  %v1219 = vmul.f32 %v1215, %v843
  %v1220 = vmul.f32 %v1216, %v844
  %v1221 = vmul.f32 %v1202, %v1211
  %v1222 = vmul.f32 %v1204, %v1212
  %v1223 = vadd.f32 %v1219, %v1221
  %v1224 = vadd.f32 %v1220, %v1222
  %v1225 = vtanh.pop %v1223
  %v1226 = vtanh.pop %v1224
  %v1227 = vrot.slane %v1202, 2
  %v1228 = vrot.slane %v1204, 2
  %v1231 = vmul.f32 %v1227, %v1225
  %v1232 = vmul.f32 %v1228, %v1226
  %v1233 = vpack.c.bf16 %v1231, %v1231
  %v1234 = vpack.c.bf16 %v1232, %v1232
  %v1237 = vcombine.low %v1231, %v1232
  %v1239 = vunpack.c.l.s4 1966171168
  %v1240 = vunpack.c.0.s8 %v1239
  %v1241 = vlaneseq
  %v1242 = vshrl.u32 %v1241, 7
  %v1243 = vsub.s32 %v1240, %v1242
  %v1244 = vrot.slane %v1237, %v1243
  %v1246 = vunpack.c.l.s4 1966171168
  %v1247 = vunpack.c.0.s8 %v1246
  %v1248 = vlaneseq
  %v1249 = vshrl.u32 %v1248, 7
  %v1250 = vsub.s32 %v1247, %v1249
  %v1251 = vrot.slane %v1244, %v1250
  %1253 = vmatprep.subr.mxu0 0.0
  %1254 = vmatpush1.msra.mxu0 %v70
  %1255 = vmatprep.subr.mxu0 0.0
  %1256 = vmatpush1.msra.mxu0 %v71
  %1257 = vmatprep.subr.mxu0 0.0
  %1258 = vmatpush1.msra.mxu0 %v72
  %1259 = vmatprep.subr.mxu0 0.0
  %1260 = vmatpush1.msra.mxu0 %v73
  %1261 = vmatprep.subr.mxu0 0.0
  %1262 = vmatpush1.msra.mxu0 %v74
  %1263 = vmatprep.subr.mxu0 0.0
  %1264 = vmatpush1.msra.mxu0 %v75
  %1265 = vmatprep.subr.mxu0 0.0
  %1266 = vmatpush1.msra.mxu0 %v76
  %1267 = vmatprep.subr.mxu0 0.0
  %1268 = vmatpush1.msra.mxu0 %v77
  %1269 = vmatprep.subr.mxu0 0.0
  %1270 = vmatpush1.msra.mxu0 %v78
  %1271 = vmatprep.subr.mxu0 0.0
  %1272 = vmatpush1.msra.mxu0 %v79
  %1273 = vmatprep.subr.mxu0 0.0
  %1274 = vmatpush1.msra.mxu0 %v80
  %1275 = vmatprep.subr.mxu0 0.0
  %1276 = vmatpush1.msra.mxu0 %v81
  %1277 = vmatprep.subr.mxu0 0.0
  %1278 = vmatpush1.msra.mxu0 %v82
  %1279 = vmatprep.subr.mxu0 0.0
  %1280 = vmatpush1.msra.mxu0 %v83
  %1281 = vmatprep.subr.mxu0 0.0
  %1282 = vmatpush1.msra.mxu0 %v84
  %1283 = vmatprep.subr.mxu0 0.0
  %1284 = vmatpush1.msra.mxu0 %v85
  %1285 = vmatprep.subr.mxu0 0.0
  %1286 = vmatpush1.msra.mxu0 0.0
  %1287 = vmatprep.subr.mxu0 0.0
  %1288 = vmatpush1.msra.mxu0 0.0
  %1289 = vmatprep.subr.mxu0 0.0
  %1290 = vmatpush1.msra.mxu0 0.0
  %1291 = vmatprep.subr.mxu0 0.0
  %1292 = vmatpush1.msra.mxu0 0.0
  %1293 = vmatprep.subr.mxu0 0.0
  %1294 = vmatpush1.msra.mxu0 0.0
  %1295 = vmatprep.subr.mxu0 0.0
  %1296 = vmatpush1.msra.mxu0 0.0
  %1297 = vmatprep.subr.mxu0 0.0
  %1298 = vmatpush1.msra.mxu0 0.0
  %1299 = vmatprep.subr.mxu0 0.0
  %1300 = vmatpush1.msra.mxu0 0.0
  %1301 = vmatprep.subr.mxu0 0.0
  %1302 = vmatpush1.msra.mxu0 0.0
  %1303 = vmatprep.subr.mxu0 0.0
  %1304 = vmatpush1.msra.mxu0 0.0
  %1305 = vmatprep.subr.mxu0 0.0
  %1306 = vmatpush1.msra.mxu0 0.0
  %1307 = vmatprep.subr.mxu0 0.0
  %1308 = vmatpush1.msra.mxu0 0.0
  %1309 = vmatprep.subr.mxu0 0.0
  %1310 = vmatpush1.msra.mxu0 0.0
  %1311 = vmatprep.subr.mxu0 0.0
  %1312 = vmatpush1.msra.mxu0 0.0
  %1313 = vmatprep.subr.mxu0 0.0
  %1314 = vmatpush1.msra.mxu0 0.0
  %1315 = vmatprep.subr.mxu0 0.0
  %1316 = vmatpush1.msra.mxu0 0.0
  %1317 = vmatprep.mubr.f32.mxu0 0.0
  %1318 = vmatmul.mubr.f32.gmra.mrb[0].mxu0 %v1251
  %v1319 = vpop.f32.mrb[0].mxu0
  %v1320 = vadd.f32 %v450, %v1319
  %v1321 = vpop.f32.mrb[0].mxu0
  %1322 = vdwg.mxu0
  %v1323 = vmax.f32 %v1320, 0.0
  %v1324 = vsel %vm541, %v1323, 0.0
  %1325 = vadd.xlane.f32.xlu0 %v1324
  %v1326 = vpop.xlane.xlu0 %1325
  %v1327 = vmul.f32 %v1326, %v545
  %v1328 = vsub.f32 %v1323, %v1327
  %v1329 = vmul.f32 %v1328, %v1328
  %v1330 = vsel %vm541, %v1329, 0.0
  %1331 = vadd.xlane.f32.xlu0 %v1330
  %v1332 = vpop.xlane.xlu0 %1331
  %v1333 = vmul.f32 %v1332, %v545
  %v1334 = vadd.f32 %v1333, 1e-05
  %v1335 = vrsqrt.pop %v1334
  %v1336 = vmul.f32 %v1328, %v1335
  %v1337 = vmul.f32 %v1336, %v560
  %v1338 = vadd.f32 %v1337, %v567
  %v1340 = vsel %vm576, %v1338, 0
  %1342 = vmatprep.subr.mxu0 0.0
  %1343 = vmatpush1.msra.mxu0 %v89
  %1344 = vmatprep.subr.mxu0 0.0
  %1345 = vmatpush1.msra.mxu0 %v90
  %1346 = vmatprep.subr.mxu0 0.0
  %1347 = vmatpush1.msra.mxu0 %v91
  %1348 = vmatprep.subr.mxu0 0.0
  %1349 = vmatpush1.msra.mxu0 %v92
  %1350 = vmatprep.subr.mxu0 0.0
  %1351 = vmatpush1.msra.mxu0 0.0
  %1352 = vmatprep.subr.mxu0 0.0
  %1353 = vmatpush1.msra.mxu0 0.0
  %1354 = vmatprep.subr.mxu0 0.0
  %1355 = vmatpush1.msra.mxu0 0.0
  %1356 = vmatprep.subr.mxu0 0.0
  %1357 = vmatpush1.msra.mxu0 0.0
  %1358 = vmatprep.subr.mxu0 0.0
  %1359 = vmatpush1.msra.mxu0 0.0
  %1360 = vmatprep.subr.mxu0 0.0
  %1361 = vmatpush1.msra.mxu0 0.0
  %1362 = vmatprep.subr.mxu0 0.0
  %1363 = vmatpush1.msra.mxu0 0.0
  %1364 = vmatprep.subr.mxu0 0.0
  %1365 = vmatpush1.msra.mxu0 0.0
  %1366 = vmatprep.subr.mxu0 0.0
  %1367 = vmatpush1.msra.mxu0 0.0
  %1368 = vmatprep.subr.mxu0 0.0
  %1369 = vmatpush1.msra.mxu0 0.0
  %1370 = vmatprep.subr.mxu0 0.0
  %1371 = vmatpush1.msra.mxu0 0.0
  %1372 = vmatprep.subr.mxu0 0.0
  %1373 = vmatpush1.msra.mxu0 0.0
  %1374 = vmatprep.subr.mxu0 0.0
  %1375 = vmatpush1.msra.mxu0 0.0
  %1376 = vmatprep.subr.mxu0 0.0
  %1377 = vmatpush1.msra.mxu0 0.0
  %1378 = vmatprep.subr.mxu0 0.0
  %1379 = vmatpush1.msra.mxu0 0.0
  %1380 = vmatprep.subr.mxu0 0.0
  %1381 = vmatpush1.msra.mxu0 0.0
  %1382 = vmatprep.subr.mxu0 0.0
  %1383 = vmatpush1.msra.mxu0 0.0
  %1384 = vmatprep.subr.mxu0 0.0
  %1385 = vmatpush1.msra.mxu0 0.0
  %1386 = vmatprep.subr.mxu0 0.0
  %1387 = vmatpush1.msra.mxu0 0.0
  %1388 = vmatprep.subr.mxu0 0.0
  %1389 = vmatpush1.msra.mxu0 0.0
  %1390 = vmatprep.subr.mxu0 0.0
  %1391 = vmatpush1.msra.mxu0 0.0
  %1392 = vmatprep.subr.mxu0 0.0
  %1393 = vmatpush1.msra.mxu0 0.0
  %1394 = vmatprep.subr.mxu0 0.0
  %1395 = vmatpush1.msra.mxu0 0.0
  %1396 = vmatprep.subr.mxu0 0.0
  %1397 = vmatpush1.msra.mxu0 0.0
  %1398 = vmatprep.subr.mxu0 0.0
  %1399 = vmatpush1.msra.mxu0 0.0
  %1400 = vmatprep.subr.mxu0 0.0
  %1401 = vmatpush1.msra.mxu0 0.0
  %1402 = vmatprep.subr.mxu0 0.0
  %1403 = vmatpush1.msra.mxu0 0.0
  %1404 = vmatprep.subr.mxu0 0.0
  %1405 = vmatpush1.msra.mxu0 0.0
  %1406 = vmatprep.mubr.f32.mxu0 0.0
  %1407 = vmatmul.mubr.f32.gmra.mrb[0].mxu0 %v1340
  %v1408 = vpop.f32.mrb[0].mxu0
  %v1409 = vadd.f32 %v574, %v1408
  %v1410 = vpop.f32.mrb[0].mxu0
  %1411 = vdwg.mxu0
  %v1414 = vunpack.c.l.s4 1966171168
  %v1415 = vunpack.c.0.s8 %v1414
  %v1416 = vlaneseq
  %v1417 = vshrl.u32 %v1416, 7
  %v1418 = vsub.s32 %v1415, %v1417
  %v1419 = vrot.slane %v1409, %v1418
  %v1420 = vcombine.high %v1419, %v1419
  %v1422 = vunpack.c.l.s4 1966171168
  %v1423 = vunpack.c.0.s8 %v1422
  %v1424 = vlaneseq
  %v1425 = vshrl.u32 %v1424, 7
  %v1426 = vsub.s32 %v1423, %v1425
  %v1427 = vrot.slane %v1419, %v1426
  %v1429 = vunpack.c.l.s4 1966171168
  %v1430 = vunpack.c.0.s8 %v1429
  %v1431 = vlaneseq
  %v1432 = vshrl.u32 %v1431, 7
  %v1433 = vsub.s32 %v1430, %v1432
  %v1434 = vrot.slane %v1420, %v1433
  %1437 = vst.msk [vmem:[%s8 + $0x2] sm:$0x1] %vm675, %v1427
  %1438 = vst.msk [vmem:[%s8 + $0xa] sm:$0x1] %vm675, %v1434
  %s1439 = scalar_lea.vmem %s0, 3
  %v1440 = vld [vmem:[%s1439] ss:$8 sm:$0xf]
  %s1441 = scalar_lea.vmem %s0, 35
  %v1442 = vld [vmem:[%s1441] ss:$8 sm:$0xf]
  %v1445 = vunpack.c.l.b16 %v1233
  %v1446 = vunpack.c.l.b16 %v1234
  %v1447 = vrot.slane %v1446, 7
  %v1448 = vsel %vm687, %v1447, %v1445
  %v1449 = vpack.c.b16 %v1448, %v1448
  %1451 = vmatprep.subr.bf16.mxu0 %v194
  %1452 = vmatpush1.bf16.msra.mxu0 %v193
  %1453 = vmatprep.subr.bf16.mxu0 %v198
  %1454 = vmatpush1.bf16.msra.mxu0 %v197
  %1455 = vmatprep.subr.bf16.mxu0 %v202
  %1456 = vmatpush1.bf16.msra.mxu0 %v201
  %1457 = vmatprep.subr.bf16.mxu0 %v206
  %1458 = vmatpush1.bf16.msra.mxu0 %v205
  %1459 = vmatprep.subr.bf16.mxu0 %v210
  %1460 = vmatpush1.bf16.msra.mxu0 %v209
  %1461 = vmatprep.subr.bf16.mxu0 %v214
  %1462 = vmatpush1.bf16.msra.mxu0 %v213
  %1463 = vmatprep.subr.bf16.mxu0 %v218
  %1464 = vmatpush1.bf16.msra.mxu0 %v217
  %1465 = vmatprep.subr.bf16.mxu0 %v222
  %1466 = vmatpush1.bf16.msra.mxu0 %v221
  %1467 = vmatprep.subr.bf16.mxu0 0
  %1468 = vmatpush1.bf16.msra.mxu0 0
  %1469 = vmatprep.subr.bf16.mxu0 0
  %1470 = vmatpush1.bf16.msra.mxu0 0
  %1471 = vmatprep.subr.bf16.mxu0 0
  %1472 = vmatpush1.bf16.msra.mxu0 0
  %1473 = vmatprep.subr.bf16.mxu0 0
  %1474 = vmatpush1.bf16.msra.mxu0 0
  %1475 = vmatprep.subr.bf16.mxu0 0
  %1476 = vmatpush1.bf16.msra.mxu0 0
  %1477 = vmatprep.subr.bf16.mxu0 0
  %1478 = vmatpush1.bf16.msra.mxu0 0
  %1479 = vmatprep.subr.bf16.mxu0 0
  %1480 = vmatpush1.bf16.msra.mxu0 0
  %1481 = vmatprep.subr.bf16.mxu0 0
  %1482 = vmatpush1.bf16.msra.mxu0 0
  %1483 = vmatprep.mubr.bf16.mxu0 0
  %1484 = vmatmul.mubr.bf16.gmra.mrb[0].mxu0 %v1449
  %v1485 = vpop.f32.mrb[0].mxu0
  %v1486 = vadd.f32 0.0, %v1485
  %v1487 = vpop.f32.mrb[0].mxu0
  %v1488 = vadd.f32 0.0, %v1487
  %v1489 = vpop.f32.mrb[0].mxu0
  %v1490 = vpop.f32.mrb[0].mxu0
  %1491 = vdwg.mxu0
  %1492 = vmatprep.subr.bf16.mxu0 %v196
  %1493 = vmatpush1.bf16.msra.mxu0 %v195
  %1494 = vmatprep.subr.bf16.mxu0 %v200
  %1495 = vmatpush1.bf16.msra.mxu0 %v199
  %1496 = vmatprep.subr.bf16.mxu0 %v204
  %1497 = vmatpush1.bf16.msra.mxu0 %v203
  %1498 = vmatprep.subr.bf16.mxu0 %v208
  %1499 = vmatpush1.bf16.msra.mxu0 %v207
  %1500 = vmatprep.subr.bf16.mxu0 %v212
  %1501 = vmatpush1.bf16.msra.mxu0 %v211
  %1502 = vmatprep.subr.bf16.mxu0 %v216
  %1503 = vmatpush1.bf16.msra.mxu0 %v215
  %1504 = vmatprep.subr.bf16.mxu0 %v220
  %1505 = vmatpush1.bf16.msra.mxu0 %v219
  %1506 = vmatprep.subr.bf16.mxu0 %v224
  %1507 = vmatpush1.bf16.msra.mxu0 %v223
  %1508 = vmatprep.subr.bf16.mxu0 0
  %1509 = vmatpush1.bf16.msra.mxu0 0
  %1510 = vmatprep.subr.bf16.mxu0 0
  %1511 = vmatpush1.bf16.msra.mxu0 0
  %1512 = vmatprep.subr.bf16.mxu0 0
  %1513 = vmatpush1.bf16.msra.mxu0 0
  %1514 = vmatprep.subr.bf16.mxu0 0
  %1515 = vmatpush1.bf16.msra.mxu0 0
  %1516 = vmatprep.subr.bf16.mxu0 0
  %1517 = vmatpush1.bf16.msra.mxu0 0
  %1518 = vmatprep.subr.bf16.mxu0 0
  %1519 = vmatpush1.bf16.msra.mxu0 0
  %1520 = vmatprep.subr.bf16.mxu0 0
  %1521 = vmatpush1.bf16.msra.mxu0 0
  %1522 = vmatprep.subr.bf16.mxu0 0
  %1523 = vmatpush1.bf16.msra.mxu0 0
  %1524 = vmatprep.mubr.bf16.mxu0 0
  %1525 = vmatmul.mubr.bf16.gmra.mrb[0].mxu0 %v1449
  %v1526 = vpop.f32.mrb[0].mxu0
  %v1527 = vadd.f32 0.0, %v1526
  %v1528 = vpop.f32.mrb[0].mxu0
  %v1529 = vadd.f32 0.0, %v1528
  %v1530 = vpop.f32.mrb[0].mxu0
  %v1531 = vpop.f32.mrb[0].mxu0
  %1532 = vdwg.mxu0
  %v1537 = vcombine.low %v1486, %v1488
  %v1538 = vcombine.low %v1527, %v1529
  %v1540 = vunpack.c.l.s4 1966171168
  %v1541 = vunpack.c.0.s8 %v1540
  %v1542 = vlaneseq
  %v1543 = vshrl.u32 %v1542, 7
  %v1544 = vsub.s32 %v1541, %v1543
  %v1545 = vrot.slane %v1537, %v1544
  %v1547 = vunpack.c.l.s4 1966171168
  %v1548 = vunpack.c.0.s8 %v1547
  %v1549 = vlaneseq
  %v1550 = vshrl.u32 %v1549, 7
  %v1551 = vsub.s32 %v1548, %v1550
  %v1552 = vrot.slane %v1538, %v1551
  %v1553 = vcombine.low %v1545, %v1552
  %v1554 = vcombine.high %v1545, %v1552
  %v1556 = vunpack.c.l.s4 1966171168
  %v1557 = vunpack.c.0.s8 %v1556
  %v1558 = vlaneseq
  %v1559 = vshrl.u32 %v1558, 7
  %v1560 = vsub.s32 %v1557, %v1559
  %v1561 = vrot.slane %v1553, %v1560
  %v1563 = vunpack.c.l.s4 1966171168
  %v1564 = vunpack.c.0.s8 %v1563
  %v1565 = vlaneseq
  %v1566 = vshrl.u32 %v1565, 7
  %v1567 = vsub.s32 %v1564, %v1566
  %v1568 = vrot.slane %v1554, %v1567
  %v1571 = vadd.f32 %v1440, %v1561
  %v1572 = vadd.f32 %v1442, %v1568
  %v1573 = vxor.u32 %v1571, 2147483648
  %v1574 = vxor.u32 %v1572, 2147483648
  %v1575 = vmul.f32 %v1573, 1.442695
  %v1576 = vpow.pop %v1575
  %v1577 = vmul.f32 %v1574, 1.442695
  %v1578 = vpow.pop %v1577
  %v1579 = vadd.f32 %v1576, 1.0
  %v1580 = vadd.f32 %v1578, 1.0
  %v1581 = vrcp.pop %v1579
  %v1582 = vmul.f32 1.0, %v1581
  %v1583 = vrcp.pop %v1580
  %v1584 = vmul.f32 1.0, %v1583
  %v1587 = vrot.slane %v1571, 3
  %v1588 = vrot.slane %v1572, 3
  %v1591 = vtanh.pop %v1587
  %v1592 = vtanh.pop %v1588
  %v1595 = vrot.slane %v1582, 1
  %v1596 = vrot.slane %v1584, 1
  %v1599 = vmul.f32 %v1595, %v1223
  %v1600 = vmul.f32 %v1596, %v1224
  %v1601 = vmul.f32 %v1582, %v1591
  %v1602 = vmul.f32 %v1584, %v1592
  %v1603 = vadd.f32 %v1599, %v1601
  %v1604 = vadd.f32 %v1600, %v1602
  %v1605 = vtanh.pop %v1603
  %v1606 = vtanh.pop %v1604
  %v1607 = vrot.slane %v1582, 2
  %v1608 = vrot.slane %v1584, 2
  %v1611 = vmul.f32 %v1607, %v1605
  %v1612 = vmul.f32 %v1608, %v1606
  %v1613 = vpack.c.bf16 %v1611, %v1611
  %v1614 = vpack.c.bf16 %v1612, %v1612
  %v1617 = vcombine.low %v1611, %v1612
  %v1619 = vunpack.c.l.s4 1966171168
  %v1620 = vunpack.c.0.s8 %v1619
  %v1621 = vlaneseq
  %v1622 = vshrl.u32 %v1621, 7
  %v1623 = vsub.s32 %v1620, %v1622
  %v1624 = vrot.slane %v1617, %v1623
  %v1626 = vunpack.c.l.s4 1966171168
  %v1627 = vunpack.c.0.s8 %v1626
  %v1628 = vlaneseq
  %v1629 = vshrl.u32 %v1628, 7
  %v1630 = vsub.s32 %v1627, %v1629
  %v1631 = vrot.slane %v1624, %v1630
  %1633 = vmatprep.subr.mxu0 0.0
  %1634 = vmatpush1.msra.mxu0 %v70
  %1635 = vmatprep.subr.mxu0 0.0
  %1636 = vmatpush1.msra.mxu0 %v71
  %1637 = vmatprep.subr.mxu0 0.0
  %1638 = vmatpush1.msra.mxu0 %v72
  %1639 = vmatprep.subr.mxu0 0.0
  %1640 = vmatpush1.msra.mxu0 %v73
  %1641 = vmatprep.subr.mxu0 0.0
  %1642 = vmatpush1.msra.mxu0 %v74
  %1643 = vmatprep.subr.mxu0 0.0
  %1644 = vmatpush1.msra.mxu0 %v75
  %1645 = vmatprep.subr.mxu0 0.0
  %1646 = vmatpush1.msra.mxu0 %v76
  %1647 = vmatprep.subr.mxu0 0.0
  %1648 = vmatpush1.msra.mxu0 %v77
  %1649 = vmatprep.subr.mxu0 0.0
  %1650 = vmatpush1.msra.mxu0 %v78
  %1651 = vmatprep.subr.mxu0 0.0
  %1652 = vmatpush1.msra.mxu0 %v79
  %1653 = vmatprep.subr.mxu0 0.0
  %1654 = vmatpush1.msra.mxu0 %v80
  %1655 = vmatprep.subr.mxu0 0.0
  %1656 = vmatpush1.msra.mxu0 %v81
  %1657 = vmatprep.subr.mxu0 0.0
  %1658 = vmatpush1.msra.mxu0 %v82
  %1659 = vmatprep.subr.mxu0 0.0
  %1660 = vmatpush1.msra.mxu0 %v83
  %1661 = vmatprep.subr.mxu0 0.0
  %1662 = vmatpush1.msra.mxu0 %v84
  %1663 = vmatprep.subr.mxu0 0.0
  %1664 = vmatpush1.msra.mxu0 %v85
  %1665 = vmatprep.subr.mxu0 0.0
  %1666 = vmatpush1.msra.mxu0 0.0
  %1667 = vmatprep.subr.mxu0 0.0
  %1668 = vmatpush1.msra.mxu0 0.0
  %1669 = vmatprep.subr.mxu0 0.0
  %1670 = vmatpush1.msra.mxu0 0.0
  %1671 = vmatprep.subr.mxu0 0.0
  %1672 = vmatpush1.msra.mxu0 0.0
  %1673 = vmatprep.subr.mxu0 0.0
  %1674 = vmatpush1.msra.mxu0 0.0
  %1675 = vmatprep.subr.mxu0 0.0
  %1676 = vmatpush1.msra.mxu0 0.0
  %1677 = vmatprep.subr.mxu0 0.0
  %1678 = vmatpush1.msra.mxu0 0.0
  %1679 = vmatprep.subr.mxu0 0.0
  %1680 = vmatpush1.msra.mxu0 0.0
  %1681 = vmatprep.subr.mxu0 0.0
  %1682 = vmatpush1.msra.mxu0 0.0
  %1683 = vmatprep.subr.mxu0 0.0
  %1684 = vmatpush1.msra.mxu0 0.0
  %1685 = vmatprep.subr.mxu0 0.0
  %1686 = vmatpush1.msra.mxu0 0.0
  %1687 = vmatprep.subr.mxu0 0.0
  %1688 = vmatpush1.msra.mxu0 0.0
  %1689 = vmatprep.subr.mxu0 0.0
  %1690 = vmatpush1.msra.mxu0 0.0
  %1691 = vmatprep.subr.mxu0 0.0
  %1692 = vmatpush1.msra.mxu0 0.0
  %1693 = vmatprep.subr.mxu0 0.0
  %1694 = vmatpush1.msra.mxu0 0.0
  %1695 = vmatprep.subr.mxu0 0.0
  %1696 = vmatpush1.msra.mxu0 0.0
  %1697 = vmatprep.mubr.f32.mxu0 0.0
  %1698 = vmatmul.mubr.f32.gmra.mrb[0].mxu0 %v1631
  %v1699 = vpop.f32.mrb[0].mxu0
  %v1700 = vadd.f32 %v450, %v1699
  %v1701 = vpop.f32.mrb[0].mxu0
  %1702 = vdwg.mxu0
  %v1703 = vmax.f32 %v1700, 0.0
  %v1704 = vsel %vm541, %v1703, 0.0
  %1705 = vadd.xlane.f32.xlu0 %v1704
  %v1706 = vpop.xlane.xlu0 %1705
  %v1707 = vmul.f32 %v1706, %v545
  %v1708 = vsub.f32 %v1703, %v1707
  %v1709 = vmul.f32 %v1708, %v1708
  %v1710 = vsel %vm541, %v1709, 0.0
  %1711 = vadd.xlane.f32.xlu0 %v1710
  %v1712 = vpop.xlane.xlu0 %1711
  %v1713 = vmul.f32 %v1712, %v545
  %v1714 = vadd.f32 %v1713, 1e-05
  %v1715 = vrsqrt.pop %v1714
  %v1716 = vmul.f32 %v1708, %v1715
  %v1717 = vmul.f32 %v1716, %v560
  %v1718 = vadd.f32 %v1717, %v567
  %v1720 = vsel %vm576, %v1718, 0
  %1722 = vmatprep.subr.mxu0 0.0
  %1723 = vmatpush1.msra.mxu0 %v89
  %1724 = vmatprep.subr.mxu0 0.0
  %1725 = vmatpush1.msra.mxu0 %v90
  %1726 = vmatprep.subr.mxu0 0.0
  %1727 = vmatpush1.msra.mxu0 %v91
  %1728 = vmatprep.subr.mxu0 0.0
  %1729 = vmatpush1.msra.mxu0 %v92
  %1730 = vmatprep.subr.mxu0 0.0
  %1731 = vmatpush1.msra.mxu0 0.0
  %1732 = vmatprep.subr.mxu0 0.0
  %1733 = vmatpush1.msra.mxu0 0.0
  %1734 = vmatprep.subr.mxu0 0.0
  %1735 = vmatpush1.msra.mxu0 0.0
  %1736 = vmatprep.subr.mxu0 0.0
  %1737 = vmatpush1.msra.mxu0 0.0
  %1738 = vmatprep.subr.mxu0 0.0
  %1739 = vmatpush1.msra.mxu0 0.0
  %1740 = vmatprep.subr.mxu0 0.0
  %1741 = vmatpush1.msra.mxu0 0.0
  %1742 = vmatprep.subr.mxu0 0.0
  %1743 = vmatpush1.msra.mxu0 0.0
  %1744 = vmatprep.subr.mxu0 0.0
  %1745 = vmatpush1.msra.mxu0 0.0
  %1746 = vmatprep.subr.mxu0 0.0
  %1747 = vmatpush1.msra.mxu0 0.0
  %1748 = vmatprep.subr.mxu0 0.0
  %1749 = vmatpush1.msra.mxu0 0.0
  %1750 = vmatprep.subr.mxu0 0.0
  %1751 = vmatpush1.msra.mxu0 0.0
  %1752 = vmatprep.subr.mxu0 0.0
  %1753 = vmatpush1.msra.mxu0 0.0
  %1754 = vmatprep.subr.mxu0 0.0
  %1755 = vmatpush1.msra.mxu0 0.0
  %1756 = vmatprep.subr.mxu0 0.0
  %1757 = vmatpush1.msra.mxu0 0.0
  %1758 = vmatprep.subr.mxu0 0.0
  %1759 = vmatpush1.msra.mxu0 0.0
  %1760 = vmatprep.subr.mxu0 0.0
  %1761 = vmatpush1.msra.mxu0 0.0
  %1762 = vmatprep.subr.mxu0 0.0
  %1763 = vmatpush1.msra.mxu0 0.0
  %1764 = vmatprep.subr.mxu0 0.0
  %1765 = vmatpush1.msra.mxu0 0.0
  %1766 = vmatprep.subr.mxu0 0.0
  %1767 = vmatpush1.msra.mxu0 0.0
  %1768 = vmatprep.subr.mxu0 0.0
  %1769 = vmatpush1.msra.mxu0 0.0
  %1770 = vmatprep.subr.mxu0 0.0
  %1771 = vmatpush1.msra.mxu0 0.0
  %1772 = vmatprep.subr.mxu0 0.0
  %1773 = vmatpush1.msra.mxu0 0.0
  %1774 = vmatprep.subr.mxu0 0.0
  %1775 = vmatpush1.msra.mxu0 0.0
  %1776 = vmatprep.subr.mxu0 0.0
  %1777 = vmatpush1.msra.mxu0 0.0
  %1778 = vmatprep.subr.mxu0 0.0
  %1779 = vmatpush1.msra.mxu0 0.0
  %1780 = vmatprep.subr.mxu0 0.0
  %1781 = vmatpush1.msra.mxu0 0.0
  %1782 = vmatprep.subr.mxu0 0.0
  %1783 = vmatpush1.msra.mxu0 0.0
  %1784 = vmatprep.subr.mxu0 0.0
  %1785 = vmatpush1.msra.mxu0 0.0
  %1786 = vmatprep.mubr.f32.mxu0 0.0
  %1787 = vmatmul.mubr.f32.gmra.mrb[0].mxu0 %v1720
  %v1788 = vpop.f32.mrb[0].mxu0
  %v1789 = vadd.f32 %v574, %v1788
  %v1790 = vpop.f32.mrb[0].mxu0
  %1791 = vdwg.mxu0
  %v1794 = vunpack.c.l.s4 1966171168
  %v1795 = vunpack.c.0.s8 %v1794
  %v1796 = vlaneseq
  %v1797 = vshrl.u32 %v1796, 7
  %v1798 = vsub.s32 %v1795, %v1797
  %v1799 = vrot.slane %v1789, %v1798
  %v1800 = vcombine.high %v1799, %v1799
  %v1802 = vunpack.c.l.s4 1966171168
  %v1803 = vunpack.c.0.s8 %v1802
  %v1804 = vlaneseq
  %v1805 = vshrl.u32 %v1804, 7
  %v1806 = vsub.s32 %v1803, %v1805
  %v1807 = vrot.slane %v1799, %v1806
  %v1809 = vunpack.c.l.s4 1966171168
  %v1810 = vunpack.c.0.s8 %v1809
  %v1811 = vlaneseq
  %v1812 = vshrl.u32 %v1811, 7
  %v1813 = vsub.s32 %v1810, %v1812
  %v1814 = vrot.slane %v1800, %v1813
  %1817 = vst.msk [vmem:[%s8 + $0x3] sm:$0x1] %vm675, %v1807
  %1818 = vst.msk [vmem:[%s8 + $0xb] sm:$0x1] %vm675, %v1814
  %s1819 = scalar_lea.vmem %s0, 4
  %v1820 = vld [vmem:[%s1819] ss:$8 sm:$0xf]
  %s1821 = scalar_lea.vmem %s0, 36
  %v1822 = vld [vmem:[%s1821] ss:$8 sm:$0xf]
  %v1825 = vunpack.c.l.b16 %v1613
  %v1826 = vunpack.c.l.b16 %v1614
  %v1827 = vrot.slane %v1826, 7
  %v1828 = vsel %vm687, %v1827, %v1825
  %v1829 = vpack.c.b16 %v1828, %v1828
  %1831 = vmatprep.subr.bf16.mxu0 %v194
  %1832 = vmatpush1.bf16.msra.mxu0 %v193
  %1833 = vmatprep.subr.bf16.mxu0 %v198
  %1834 = vmatpush1.bf16.msra.mxu0 %v197
  %1835 = vmatprep.subr.bf16.mxu0 %v202
  %1836 = vmatpush1.bf16.msra.mxu0 %v201
  %1837 = vmatprep.subr.bf16.mxu0 %v206
  %1838 = vmatpush1.bf16.msra.mxu0 %v205
  %1839 = vmatprep.subr.bf16.mxu0 %v210
  %1840 = vmatpush1.bf16.msra.mxu0 %v209
  %1841 = vmatprep.subr.bf16.mxu0 %v214
  %1842 = vmatpush1.bf16.msra.mxu0 %v213
  %1843 = vmatprep.subr.bf16.mxu0 %v218
  %1844 = vmatpush1.bf16.msra.mxu0 %v217
  %1845 = vmatprep.subr.bf16.mxu0 %v222
  %1846 = vmatpush1.bf16.msra.mxu0 %v221
  %1847 = vmatprep.subr.bf16.mxu0 0
  %1848 = vmatpush1.bf16.msra.mxu0 0
  %1849 = vmatprep.subr.bf16.mxu0 0
  %1850 = vmatpush1.bf16.msra.mxu0 0
  %1851 = vmatprep.subr.bf16.mxu0 0
  %1852 = vmatpush1.bf16.msra.mxu0 0
  %1853 = vmatprep.subr.bf16.mxu0 0
  %1854 = vmatpush1.bf16.msra.mxu0 0
  %1855 = vmatprep.subr.bf16.mxu0 0
  %1856 = vmatpush1.bf16.msra.mxu0 0
  %1857 = vmatprep.subr.bf16.mxu0 0
  %1858 = vmatpush1.bf16.msra.mxu0 0
  %1859 = vmatprep.subr.bf16.mxu0 0
  %1860 = vmatpush1.bf16.msra.mxu0 0
  %1861 = vmatprep.subr.bf16.mxu0 0
  %1862 = vmatpush1.bf16.msra.mxu0 0
  %1863 = vmatprep.mubr.bf16.mxu0 0
  %1864 = vmatmul.mubr.bf16.gmra.mrb[0].mxu0 %v1829
  %v1865 = vpop.f32.mrb[0].mxu0
  %v1866 = vadd.f32 0.0, %v1865
  %v1867 = vpop.f32.mrb[0].mxu0
  %v1868 = vadd.f32 0.0, %v1867
  %v1869 = vpop.f32.mrb[0].mxu0
  %v1870 = vpop.f32.mrb[0].mxu0
  %1871 = vdwg.mxu0
  %1872 = vmatprep.subr.bf16.mxu0 %v196
  %1873 = vmatpush1.bf16.msra.mxu0 %v195
  %1874 = vmatprep.subr.bf16.mxu0 %v200
  %1875 = vmatpush1.bf16.msra.mxu0 %v199
  %1876 = vmatprep.subr.bf16.mxu0 %v204
  %1877 = vmatpush1.bf16.msra.mxu0 %v203
  %1878 = vmatprep.subr.bf16.mxu0 %v208
  %1879 = vmatpush1.bf16.msra.mxu0 %v207
  %1880 = vmatprep.subr.bf16.mxu0 %v212
  %1881 = vmatpush1.bf16.msra.mxu0 %v211
  %1882 = vmatprep.subr.bf16.mxu0 %v216
  %1883 = vmatpush1.bf16.msra.mxu0 %v215
  %1884 = vmatprep.subr.bf16.mxu0 %v220
  %1885 = vmatpush1.bf16.msra.mxu0 %v219
  %1886 = vmatprep.subr.bf16.mxu0 %v224
  %1887 = vmatpush1.bf16.msra.mxu0 %v223
  %1888 = vmatprep.subr.bf16.mxu0 0
  %1889 = vmatpush1.bf16.msra.mxu0 0
  %1890 = vmatprep.subr.bf16.mxu0 0
  %1891 = vmatpush1.bf16.msra.mxu0 0
  %1892 = vmatprep.subr.bf16.mxu0 0
  %1893 = vmatpush1.bf16.msra.mxu0 0
  %1894 = vmatprep.subr.bf16.mxu0 0
  %1895 = vmatpush1.bf16.msra.mxu0 0
  %1896 = vmatprep.subr.bf16.mxu0 0
  %1897 = vmatpush1.bf16.msra.mxu0 0
  %1898 = vmatprep.subr.bf16.mxu0 0
  %1899 = vmatpush1.bf16.msra.mxu0 0
  %1900 = vmatprep.subr.bf16.mxu0 0
  %1901 = vmatpush1.bf16.msra.mxu0 0
  %1902 = vmatprep.subr.bf16.mxu0 0
  %1903 = vmatpush1.bf16.msra.mxu0 0
  %1904 = vmatprep.mubr.bf16.mxu0 0
  %1905 = vmatmul.mubr.bf16.gmra.mrb[0].mxu0 %v1829
  %v1906 = vpop.f32.mrb[0].mxu0
  %v1907 = vadd.f32 0.0, %v1906
  %v1908 = vpop.f32.mrb[0].mxu0
  %v1909 = vadd.f32 0.0, %v1908
  %v1910 = vpop.f32.mrb[0].mxu0
  %v1911 = vpop.f32.mrb[0].mxu0
  %1912 = vdwg.mxu0
  %v1917 = vcombine.low %v1866, %v1868
  %v1918 = vcombine.low %v1907, %v1909
  %v1920 = vunpack.c.l.s4 1966171168
  %v1921 = vunpack.c.0.s8 %v1920
  %v1922 = vlaneseq
  %v1923 = vshrl.u32 %v1922, 7
  %v1924 = vsub.s32 %v1921, %v1923
  %v1925 = vrot.slane %v1917, %v1924
  %v1927 = vunpack.c.l.s4 1966171168
  %v1928 = vunpack.c.0.s8 %v1927
  %v1929 = vlaneseq
  %v1930 = vshrl.u32 %v1929, 7
  %v1931 = vsub.s32 %v1928, %v1930
  %v1932 = vrot.slane %v1918, %v1931
  %v1933 = vcombine.low %v1925, %v1932
  %v1934 = vcombine.high %v1925, %v1932
  %v1936 = vunpack.c.l.s4 1966171168
  %v1937 = vunpack.c.0.s8 %v1936
  %v1938 = vlaneseq
  %v1939 = vshrl.u32 %v1938, 7
  %v1940 = vsub.s32 %v1937, %v1939
  %v1941 = vrot.slane %v1933, %v1940
  %v1943 = vunpack.c.l.s4 1966171168
  %v1944 = vunpack.c.0.s8 %v1943
  %v1945 = vlaneseq
  %v1946 = vshrl.u32 %v1945, 7
  %v1947 = vsub.s32 %v1944, %v1946
  %v1948 = vrot.slane %v1934, %v1947
  %v1951 = vadd.f32 %v1820, %v1941
  %v1952 = vadd.f32 %v1822, %v1948
  %v1953 = vxor.u32 %v1951, 2147483648
  %v1954 = vxor.u32 %v1952, 2147483648
  %v1955 = vmul.f32 %v1953, 1.442695
  %v1956 = vpow.pop %v1955
  %v1957 = vmul.f32 %v1954, 1.442695
  %v1958 = vpow.pop %v1957
  %v1959 = vadd.f32 %v1956, 1.0
  %v1960 = vadd.f32 %v1958, 1.0
  %v1961 = vrcp.pop %v1959
  %v1962 = vmul.f32 1.0, %v1961
  %v1963 = vrcp.pop %v1960
  %v1964 = vmul.f32 1.0, %v1963
  %v1967 = vrot.slane %v1951, 3
  %v1968 = vrot.slane %v1952, 3
  %v1971 = vtanh.pop %v1967
  %v1972 = vtanh.pop %v1968
  %v1975 = vrot.slane %v1962, 1
  %v1976 = vrot.slane %v1964, 1
  %v1979 = vmul.f32 %v1975, %v1603
  %v1980 = vmul.f32 %v1976, %v1604
  %v1981 = vmul.f32 %v1962, %v1971
  %v1982 = vmul.f32 %v1964, %v1972
  %v1983 = vadd.f32 %v1979, %v1981
  %v1984 = vadd.f32 %v1980, %v1982
  %v1985 = vtanh.pop %v1983
  %v1986 = vtanh.pop %v1984
  %v1987 = vrot.slane %v1962, 2
  %v1988 = vrot.slane %v1964, 2
  %v1991 = vmul.f32 %v1987, %v1985
  %v1992 = vmul.f32 %v1988, %v1986
  %v1993 = vpack.c.bf16 %v1991, %v1991
  %v1994 = vpack.c.bf16 %v1992, %v1992
  %v1997 = vcombine.low %v1991, %v1992
  %v1999 = vunpack.c.l.s4 1966171168
  %v2000 = vunpack.c.0.s8 %v1999
  %v2001 = vlaneseq
  %v2002 = vshrl.u32 %v2001, 7
  %v2003 = vsub.s32 %v2000, %v2002
  %v2004 = vrot.slane %v1997, %v2003
  %v2006 = vunpack.c.l.s4 1966171168
  %v2007 = vunpack.c.0.s8 %v2006
  %v2008 = vlaneseq
  %v2009 = vshrl.u32 %v2008, 7
  %v2010 = vsub.s32 %v2007, %v2009
  %v2011 = vrot.slane %v2004, %v2010
  %2013 = vmatprep.subr.mxu0 0.0
  %2014 = vmatpush1.msra.mxu0 %v70
  %2015 = vmatprep.subr.mxu0 0.0
  %2016 = vmatpush1.msra.mxu0 %v71
  %2017 = vmatprep.subr.mxu0 0.0
  %2018 = vmatpush1.msra.mxu0 %v72
  %2019 = vmatprep.subr.mxu0 0.0
  %2020 = vmatpush1.msra.mxu0 %v73
  %2021 = vmatprep.subr.mxu0 0.0
  %2022 = vmatpush1.msra.mxu0 %v74
  %2023 = vmatprep.subr.mxu0 0.0
  %2024 = vmatpush1.msra.mxu0 %v75
  %2025 = vmatprep.subr.mxu0 0.0
  %2026 = vmatpush1.msra.mxu0 %v76
  %2027 = vmatprep.subr.mxu0 0.0
  %2028 = vmatpush1.msra.mxu0 %v77
  %2029 = vmatprep.subr.mxu0 0.0
  %2030 = vmatpush1.msra.mxu0 %v78
  %2031 = vmatprep.subr.mxu0 0.0
  %2032 = vmatpush1.msra.mxu0 %v79
  %2033 = vmatprep.subr.mxu0 0.0
  %2034 = vmatpush1.msra.mxu0 %v80
  %2035 = vmatprep.subr.mxu0 0.0
  %2036 = vmatpush1.msra.mxu0 %v81
  %2037 = vmatprep.subr.mxu0 0.0
  %2038 = vmatpush1.msra.mxu0 %v82
  %2039 = vmatprep.subr.mxu0 0.0
  %2040 = vmatpush1.msra.mxu0 %v83
  %2041 = vmatprep.subr.mxu0 0.0
  %2042 = vmatpush1.msra.mxu0 %v84
  %2043 = vmatprep.subr.mxu0 0.0
  %2044 = vmatpush1.msra.mxu0 %v85
  %2045 = vmatprep.subr.mxu0 0.0
  %2046 = vmatpush1.msra.mxu0 0.0
  %2047 = vmatprep.subr.mxu0 0.0
  %2048 = vmatpush1.msra.mxu0 0.0
  %2049 = vmatprep.subr.mxu0 0.0
  %2050 = vmatpush1.msra.mxu0 0.0
  %2051 = vmatprep.subr.mxu0 0.0
  %2052 = vmatpush1.msra.mxu0 0.0
  %2053 = vmatprep.subr.mxu0 0.0
  %2054 = vmatpush1.msra.mxu0 0.0
  %2055 = vmatprep.subr.mxu0 0.0
  %2056 = vmatpush1.msra.mxu0 0.0
  %2057 = vmatprep.subr.mxu0 0.0
  %2058 = vmatpush1.msra.mxu0 0.0
  %2059 = vmatprep.subr.mxu0 0.0
  %2060 = vmatpush1.msra.mxu0 0.0
  %2061 = vmatprep.subr.mxu0 0.0
  %2062 = vmatpush1.msra.mxu0 0.0
  %2063 = vmatprep.subr.mxu0 0.0
  %2064 = vmatpush1.msra.mxu0 0.0
  %2065 = vmatprep.subr.mxu0 0.0
  %2066 = vmatpush1.msra.mxu0 0.0
  %2067 = vmatprep.subr.mxu0 0.0
  %2068 = vmatpush1.msra.mxu0 0.0
  %2069 = vmatprep.subr.mxu0 0.0
  %2070 = vmatpush1.msra.mxu0 0.0
  %2071 = vmatprep.subr.mxu0 0.0
  %2072 = vmatpush1.msra.mxu0 0.0
  %2073 = vmatprep.subr.mxu0 0.0
  %2074 = vmatpush1.msra.mxu0 0.0
  %2075 = vmatprep.subr.mxu0 0.0
  %2076 = vmatpush1.msra.mxu0 0.0
  %2077 = vmatprep.mubr.f32.mxu0 0.0
  %2078 = vmatmul.mubr.f32.gmra.mrb[0].mxu0 %v2011
  %v2079 = vpop.f32.mrb[0].mxu0
  %v2080 = vadd.f32 %v450, %v2079
  %v2081 = vpop.f32.mrb[0].mxu0
  %2082 = vdwg.mxu0
  %v2083 = vmax.f32 %v2080, 0.0
  %v2084 = vsel %vm541, %v2083, 0.0
  %2085 = vadd.xlane.f32.xlu0 %v2084
  %v2086 = vpop.xlane.xlu0 %2085
  %v2087 = vmul.f32 %v2086, %v545
  %v2088 = vsub.f32 %v2083, %v2087
  %v2089 = vmul.f32 %v2088, %v2088
  %v2090 = vsel %vm541, %v2089, 0.0
  %2091 = vadd.xlane.f32.xlu0 %v2090
  %v2092 = vpop.xlane.xlu0 %2091
  %v2093 = vmul.f32 %v2092, %v545
  %v2094 = vadd.f32 %v2093, 1e-05
  %v2095 = vrsqrt.pop %v2094
  %v2096 = vmul.f32 %v2088, %v2095
  %v2097 = vmul.f32 %v2096, %v560
  %v2098 = vadd.f32 %v2097, %v567
  %v2100 = vsel %vm576, %v2098, 0
  %2102 = vmatprep.subr.mxu0 0.0
  %2103 = vmatpush1.msra.mxu0 %v89
  %2104 = vmatprep.subr.mxu0 0.0
  %2105 = vmatpush1.msra.mxu0 %v90
  %2106 = vmatprep.subr.mxu0 0.0
  %2107 = vmatpush1.msra.mxu0 %v91
  %2108 = vmatprep.subr.mxu0 0.0
  %2109 = vmatpush1.msra.mxu0 %v92
  %2110 = vmatprep.subr.mxu0 0.0
  %2111 = vmatpush1.msra.mxu0 0.0
  %2112 = vmatprep.subr.mxu0 0.0
  %2113 = vmatpush1.msra.mxu0 0.0
  %2114 = vmatprep.subr.mxu0 0.0
  %2115 = vmatpush1.msra.mxu0 0.0
  %2116 = vmatprep.subr.mxu0 0.0
  %2117 = vmatpush1.msra.mxu0 0.0
  %2118 = vmatprep.subr.mxu0 0.0
  %2119 = vmatpush1.msra.mxu0 0.0
  %2120 = vmatprep.subr.mxu0 0.0
  %2121 = vmatpush1.msra.mxu0 0.0
  %2122 = vmatprep.subr.mxu0 0.0
  %2123 = vmatpush1.msra.mxu0 0.0
  %2124 = vmatprep.subr.mxu0 0.0
  %2125 = vmatpush1.msra.mxu0 0.0
  %2126 = vmatprep.subr.mxu0 0.0
  %2127 = vmatpush1.msra.mxu0 0.0
  %2128 = vmatprep.subr.mxu0 0.0
  %2129 = vmatpush1.msra.mxu0 0.0
  %2130 = vmatprep.subr.mxu0 0.0
  %2131 = vmatpush1.msra.mxu0 0.0
  %2132 = vmatprep.subr.mxu0 0.0
  %2133 = vmatpush1.msra.mxu0 0.0
  %2134 = vmatprep.subr.mxu0 0.0
  %2135 = vmatpush1.msra.mxu0 0.0
  %2136 = vmatprep.subr.mxu0 0.0
  %2137 = vmatpush1.msra.mxu0 0.0
  %2138 = vmatprep.subr.mxu0 0.0
  %2139 = vmatpush1.msra.mxu0 0.0
  %2140 = vmatprep.subr.mxu0 0.0
  %2141 = vmatpush1.msra.mxu0 0.0
  %2142 = vmatprep.subr.mxu0 0.0
  %2143 = vmatpush1.msra.mxu0 0.0
  %2144 = vmatprep.subr.mxu0 0.0
  %2145 = vmatpush1.msra.mxu0 0.0
  %2146 = vmatprep.subr.mxu0 0.0
  %2147 = vmatpush1.msra.mxu0 0.0
  %2148 = vmatprep.subr.mxu0 0.0
  %2149 = vmatpush1.msra.mxu0 0.0
  %2150 = vmatprep.subr.mxu0 0.0
  %2151 = vmatpush1.msra.mxu0 0.0
  %2152 = vmatprep.subr.mxu0 0.0
  %2153 = vmatpush1.msra.mxu0 0.0
  %2154 = vmatprep.subr.mxu0 0.0
  %2155 = vmatpush1.msra.mxu0 0.0
  %2156 = vmatprep.subr.mxu0 0.0
  %2157 = vmatpush1.msra.mxu0 0.0
  %2158 = vmatprep.subr.mxu0 0.0
  %2159 = vmatpush1.msra.mxu0 0.0
  %2160 = vmatprep.subr.mxu0 0.0
  %2161 = vmatpush1.msra.mxu0 0.0
  %2162 = vmatprep.subr.mxu0 0.0
  %2163 = vmatpush1.msra.mxu0 0.0
  %2164 = vmatprep.subr.mxu0 0.0
  %2165 = vmatpush1.msra.mxu0 0.0
  %2166 = vmatprep.mubr.f32.mxu0 0.0
  %2167 = vmatmul.mubr.f32.gmra.mrb[0].mxu0 %v2100
  %v2168 = vpop.f32.mrb[0].mxu0
  %v2169 = vadd.f32 %v574, %v2168
  %v2170 = vpop.f32.mrb[0].mxu0
  %2171 = vdwg.mxu0
  %v2174 = vunpack.c.l.s4 1966171168
  %v2175 = vunpack.c.0.s8 %v2174
  %v2176 = vlaneseq
  %v2177 = vshrl.u32 %v2176, 7
  %v2178 = vsub.s32 %v2175, %v2177
  %v2179 = vrot.slane %v2169, %v2178
  %v2180 = vcombine.high %v2179, %v2179
  %v2182 = vunpack.c.l.s4 1966171168
  %v2183 = vunpack.c.0.s8 %v2182
  %v2184 = vlaneseq
  %v2185 = vshrl.u32 %v2184, 7
  %v2186 = vsub.s32 %v2183, %v2185
  %v2187 = vrot.slane %v2179, %v2186
  %v2189 = vunpack.c.l.s4 1966171168
  %v2190 = vunpack.c.0.s8 %v2189
  %v2191 = vlaneseq
  %v2192 = vshrl.u32 %v2191, 7
  %v2193 = vsub.s32 %v2190, %v2192
  %v2194 = vrot.slane %v2180, %v2193
  %2197 = vst.msk [vmem:[%s8 + $0x4] sm:$0x1] %vm675, %v2187
  %2198 = vst.msk [vmem:[%s8 + $0xc] sm:$0x1] %vm675, %v2194
  %s2199 = scalar_lea.vmem %s0, 5
  %v2200 = vld [vmem:[%s2199] ss:$8 sm:$0xf]
  %s2201 = scalar_lea.vmem %s0, 37
  %v2202 = vld [vmem:[%s2201] ss:$8 sm:$0xf]
  %v2205 = vunpack.c.l.b16 %v1993
  %v2206 = vunpack.c.l.b16 %v1994
  %v2207 = vrot.slane %v2206, 7
  %v2208 = vsel %vm687, %v2207, %v2205
  %v2209 = vpack.c.b16 %v2208, %v2208
  %2211 = vmatprep.subr.bf16.mxu0 %v194
  %2212 = vmatpush1.bf16.msra.mxu0 %v193
  %2213 = vmatprep.subr.bf16.mxu0 %v198
  %2214 = vmatpush1.bf16.msra.mxu0 %v197
  %2215 = vmatprep.subr.bf16.mxu0 %v202
  %2216 = vmatpush1.bf16.msra.mxu0 %v201
  %2217 = vmatprep.subr.bf16.mxu0 %v206
  %2218 = vmatpush1.bf16.msra.mxu0 %v205
  %2219 = vmatprep.subr.bf16.mxu0 %v210
  %2220 = vmatpush1.bf16.msra.mxu0 %v209
  %2221 = vmatprep.subr.bf16.mxu0 %v214
  %2222 = vmatpush1.bf16.msra.mxu0 %v213
  %2223 = vmatprep.subr.bf16.mxu0 %v218
  %2224 = vmatpush1.bf16.msra.mxu0 %v217
  %2225 = vmatprep.subr.bf16.mxu0 %v222
  %2226 = vmatpush1.bf16.msra.mxu0 %v221
  %2227 = vmatprep.subr.bf16.mxu0 0
  %2228 = vmatpush1.bf16.msra.mxu0 0
  %2229 = vmatprep.subr.bf16.mxu0 0
  %2230 = vmatpush1.bf16.msra.mxu0 0
  %2231 = vmatprep.subr.bf16.mxu0 0
  %2232 = vmatpush1.bf16.msra.mxu0 0
  %2233 = vmatprep.subr.bf16.mxu0 0
  %2234 = vmatpush1.bf16.msra.mxu0 0
  %2235 = vmatprep.subr.bf16.mxu0 0
  %2236 = vmatpush1.bf16.msra.mxu0 0
  %2237 = vmatprep.subr.bf16.mxu0 0
  %2238 = vmatpush1.bf16.msra.mxu0 0
  %2239 = vmatprep.subr.bf16.mxu0 0
  %2240 = vmatpush1.bf16.msra.mxu0 0
  %2241 = vmatprep.subr.bf16.mxu0 0
  %2242 = vmatpush1.bf16.msra.mxu0 0
  %2243 = vmatprep.mubr.bf16.mxu0 0
  %2244 = vmatmul.mubr.bf16.gmra.mrb[0].mxu0 %v2209
  %v2245 = vpop.f32.mrb[0].mxu0
  %v2246 = vadd.f32 0.0, %v2245
  %v2247 = vpop.f32.mrb[0].mxu0
  %v2248 = vadd.f32 0.0, %v2247
  %v2249 = vpop.f32.mrb[0].mxu0
  %v2250 = vpop.f32.mrb[0].mxu0
  %2251 = vdwg.mxu0
  %2252 = vmatprep.subr.bf16.mxu0 %v196
  %2253 = vmatpush1.bf16.msra.mxu0 %v195
  %2254 = vmatprep.subr.bf16.mxu0 %v200
  %2255 = vmatpush1.bf16.msra.mxu0 %v199
  %2256 = vmatprep.subr.bf16.mxu0 %v204
  %2257 = vmatpush1.bf16.msra.mxu0 %v203
  %2258 = vmatprep.subr.bf16.mxu0 %v208
  %2259 = vmatpush1.bf16.msra.mxu0 %v207
  %2260 = vmatprep.subr.bf16.mxu0 %v212
  %2261 = vmatpush1.bf16.msra.mxu0 %v211
  %2262 = vmatprep.subr.bf16.mxu0 %v216
  %2263 = vmatpush1.bf16.msra.mxu0 %v215
  %2264 = vmatprep.subr.bf16.mxu0 %v220
  %2265 = vmatpush1.bf16.msra.mxu0 %v219
  %2266 = vmatprep.subr.bf16.mxu0 %v224
  %2267 = vmatpush1.bf16.msra.mxu0 %v223
  %2268 = vmatprep.subr.bf16.mxu0 0
  %2269 = vmatpush1.bf16.msra.mxu0 0
  %2270 = vmatprep.subr.bf16.mxu0 0
  %2271 = vmatpush1.bf16.msra.mxu0 0
  %2272 = vmatprep.subr.bf16.mxu0 0
  %2273 = vmatpush1.bf16.msra.mxu0 0
  %2274 = vmatprep.subr.bf16.mxu0 0
  %2275 = vmatpush1.bf16.msra.mxu0 0
  %2276 = vmatprep.subr.bf16.mxu0 0
  %2277 = vmatpush1.bf16.msra.mxu0 0
  %2278 = vmatprep.subr.bf16.mxu0 0
  %2279 = vmatpush1.bf16.msra.mxu0 0
  %2280 = vmatprep.subr.bf16.mxu0 0
  %2281 = vmatpush1.bf16.msra.mxu0 0
  %2282 = vmatprep.subr.bf16.mxu0 0
  %2283 = vmatpush1.bf16.msra.mxu0 0
  %2284 = vmatprep.mubr.bf16.mxu0 0
  %2285 = vmatmul.mubr.bf16.gmra.mrb[0].mxu0 %v2209
  %v2286 = vpop.f32.mrb[0].mxu0
  %v2287 = vadd.f32 0.0, %v2286
  %v2288 = vpop.f32.mrb[0].mxu0
  %v2289 = vadd.f32 0.0, %v2288
  %v2290 = vpop.f32.mrb[0].mxu0
  %v2291 = vpop.f32.mrb[0].mxu0
  %2292 = vdwg.mxu0
  %v2297 = vcombine.low %v2246, %v2248
  %v2298 = vcombine.low %v2287, %v2289
  %v2300 = vunpack.c.l.s4 1966171168
  %v2301 = vunpack.c.0.s8 %v2300
  %v2302 = vlaneseq
  %v2303 = vshrl.u32 %v2302, 7
  %v2304 = vsub.s32 %v2301, %v2303
  %v2305 = vrot.slane %v2297, %v2304
  %v2307 = vunpack.c.l.s4 1966171168
  %v2308 = vunpack.c.0.s8 %v2307
  %v2309 = vlaneseq
  %v2310 = vshrl.u32 %v2309, 7
  %v2311 = vsub.s32 %v2308, %v2310
  %v2312 = vrot.slane %v2298, %v2311
  %v2313 = vcombine.low %v2305, %v2312
  %v2314 = vcombine.high %v2305, %v2312
  %v2316 = vunpack.c.l.s4 1966171168
  %v2317 = vunpack.c.0.s8 %v2316
  %v2318 = vlaneseq
  %v2319 = vshrl.u32 %v2318, 7
  %v2320 = vsub.s32 %v2317, %v2319
  %v2321 = vrot.slane %v2313, %v2320
  %v2323 = vunpack.c.l.s4 1966171168
  %v2324 = vunpack.c.0.s8 %v2323
  %v2325 = vlaneseq
  %v2326 = vshrl.u32 %v2325, 7
  %v2327 = vsub.s32 %v2324, %v2326
  %v2328 = vrot.slane %v2314, %v2327
  %v2331 = vadd.f32 %v2200, %v2321
  %v2332 = vadd.f32 %v2202, %v2328
  %v2333 = vxor.u32 %v2331, 2147483648
  %v2334 = vxor.u32 %v2332, 2147483648
  %v2335 = vmul.f32 %v2333, 1.442695
  %v2336 = vpow.pop %v2335
  %v2337 = vmul.f32 %v2334, 1.442695
  %v2338 = vpow.pop %v2337
  %v2339 = vadd.f32 %v2336, 1.0
  %v2340 = vadd.f32 %v2338, 1.0
  %v2341 = vrcp.pop %v2339
  %v2342 = vmul.f32 1.0, %v2341
  %v2343 = vrcp.pop %v2340
  %v2344 = vmul.f32 1.0, %v2343
  %v2347 = vrot.slane %v2331, 3
  %v2348 = vrot.slane %v2332, 3
  %v2351 = vtanh.pop %v2347
  %v2352 = vtanh.pop %v2348
  %v2355 = vrot.slane %v2342, 1
  %v2356 = vrot.slane %v2344, 1
  %v2359 = vmul.f32 %v2355, %v1983
  %v2360 = vmul.f32 %v2356, %v1984
  %v2361 = vmul.f32 %v2342, %v2351
  %v2362 = vmul.f32 %v2344, %v2352
  %v2363 = vadd.f32 %v2359, %v2361
  %v2364 = vadd.f32 %v2360, %v2362
  %v2365 = vtanh.pop %v2363
  %v2366 = vtanh.pop %v2364
  %v2367 = vrot.slane %v2342, 2
  %v2368 = vrot.slane %v2344, 2
  %v2371 = vmul.f32 %v2367, %v2365
  %v2372 = vmul.f32 %v2368, %v2366
  %v2373 = vpack.c.bf16 %v2371, %v2371
  %v2374 = vpack.c.bf16 %v2372, %v2372
  %v2377 = vcombine.low %v2371, %v2372
  %v2379 = vunpack.c.l.s4 1966171168
  %v2380 = vunpack.c.0.s8 %v2379
  %v2381 = vlaneseq
  %v2382 = vshrl.u32 %v2381, 7
  %v2383 = vsub.s32 %v2380, %v2382
  %v2384 = vrot.slane %v2377, %v2383
  %v2386 = vunpack.c.l.s4 1966171168
  %v2387 = vunpack.c.0.s8 %v2386
  %v2388 = vlaneseq
  %v2389 = vshrl.u32 %v2388, 7
  %v2390 = vsub.s32 %v2387, %v2389
  %v2391 = vrot.slane %v2384, %v2390
  %2393 = vmatprep.subr.mxu0 0.0
  %2394 = vmatpush1.msra.mxu0 %v70
  %2395 = vmatprep.subr.mxu0 0.0
  %2396 = vmatpush1.msra.mxu0 %v71
  %2397 = vmatprep.subr.mxu0 0.0
  %2398 = vmatpush1.msra.mxu0 %v72
  %2399 = vmatprep.subr.mxu0 0.0
  %2400 = vmatpush1.msra.mxu0 %v73
  %2401 = vmatprep.subr.mxu0 0.0
  %2402 = vmatpush1.msra.mxu0 %v74
  %2403 = vmatprep.subr.mxu0 0.0
  %2404 = vmatpush1.msra.mxu0 %v75
  %2405 = vmatprep.subr.mxu0 0.0
  %2406 = vmatpush1.msra.mxu0 %v76
  %2407 = vmatprep.subr.mxu0 0.0
  %2408 = vmatpush1.msra.mxu0 %v77
  %2409 = vmatprep.subr.mxu0 0.0
  %2410 = vmatpush1.msra.mxu0 %v78
  %2411 = vmatprep.subr.mxu0 0.0
  %2412 = vmatpush1.msra.mxu0 %v79
  %2413 = vmatprep.subr.mxu0 0.0
  %2414 = vmatpush1.msra.mxu0 %v80
  %2415 = vmatprep.subr.mxu0 0.0
  %2416 = vmatpush1.msra.mxu0 %v81
  %2417 = vmatprep.subr.mxu0 0.0
  %2418 = vmatpush1.msra.mxu0 %v82
  %2419 = vmatprep.subr.mxu0 0.0
  %2420 = vmatpush1.msra.mxu0 %v83
  %2421 = vmatprep.subr.mxu0 0.0
  %2422 = vmatpush1.msra.mxu0 %v84
  %2423 = vmatprep.subr.mxu0 0.0
  %2424 = vmatpush1.msra.mxu0 %v85
  %2425 = vmatprep.subr.mxu0 0.0
  %2426 = vmatpush1.msra.mxu0 0.0
  %2427 = vmatprep.subr.mxu0 0.0
  %2428 = vmatpush1.msra.mxu0 0.0
  %2429 = vmatprep.subr.mxu0 0.0
  %2430 = vmatpush1.msra.mxu0 0.0
  %2431 = vmatprep.subr.mxu0 0.0
  %2432 = vmatpush1.msra.mxu0 0.0
  %2433 = vmatprep.subr.mxu0 0.0
  %2434 = vmatpush1.msra.mxu0 0.0
  %2435 = vmatprep.subr.mxu0 0.0
  %2436 = vmatpush1.msra.mxu0 0.0
  %2437 = vmatprep.subr.mxu0 0.0
  %2438 = vmatpush1.msra.mxu0 0.0
  %2439 = vmatprep.subr.mxu0 0.0
  %2440 = vmatpush1.msra.mxu0 0.0
  %2441 = vmatprep.subr.mxu0 0.0
  %2442 = vmatpush1.msra.mxu0 0.0
  %2443 = vmatprep.subr.mxu0 0.0
  %2444 = vmatpush1.msra.mxu0 0.0
  %2445 = vmatprep.subr.mxu0 0.0
  %2446 = vmatpush1.msra.mxu0 0.0
  %2447 = vmatprep.subr.mxu0 0.0
  %2448 = vmatpush1.msra.mxu0 0.0
  %2449 = vmatprep.subr.mxu0 0.0
  %2450 = vmatpush1.msra.mxu0 0.0
  %2451 = vmatprep.subr.mxu0 0.0
  %2452 = vmatpush1.msra.mxu0 0.0
  %2453 = vmatprep.subr.mxu0 0.0
  %2454 = vmatpush1.msra.mxu0 0.0
  %2455 = vmatprep.subr.mxu0 0.0
  %2456 = vmatpush1.msra.mxu0 0.0
  %2457 = vmatprep.mubr.f32.mxu0 0.0
  %2458 = vmatmul.mubr.f32.gmra.mrb[0].mxu0 %v2391
  %v2459 = vpop.f32.mrb[0].mxu0
  %v2460 = vadd.f32 %v450, %v2459
  %v2461 = vpop.f32.mrb[0].mxu0
  %2462 = vdwg.mxu0
  %v2463 = vmax.f32 %v2460, 0.0
  %v2464 = vsel %vm541, %v2463, 0.0
  %2465 = vadd.xlane.f32.xlu0 %v2464
  %v2466 = vpop.xlane.xlu0 %2465
  %v2467 = vmul.f32 %v2466, %v545
  %v2468 = vsub.f32 %v2463, %v2467
  %v2469 = vmul.f32 %v2468, %v2468
  %v2470 = vsel %vm541, %v2469, 0.0
  %2471 = vadd.xlane.f32.xlu0 %v2470
  %v2472 = vpop.xlane.xlu0 %2471
  %v2473 = vmul.f32 %v2472, %v545
  %v2474 = vadd.f32 %v2473, 1e-05
  %v2475 = vrsqrt.pop %v2474
  %v2476 = vmul.f32 %v2468, %v2475
  %v2477 = vmul.f32 %v2476, %v560
  %v2478 = vadd.f32 %v2477, %v567
  %v2480 = vsel %vm576, %v2478, 0
  %2482 = vmatprep.subr.mxu0 0.0
  %2483 = vmatpush1.msra.mxu0 %v89
  %2484 = vmatprep.subr.mxu0 0.0
  %2485 = vmatpush1.msra.mxu0 %v90
  %2486 = vmatprep.subr.mxu0 0.0
  %2487 = vmatpush1.msra.mxu0 %v91
  %2488 = vmatprep.subr.mxu0 0.0
  %2489 = vmatpush1.msra.mxu0 %v92
  %2490 = vmatprep.subr.mxu0 0.0
  %2491 = vmatpush1.msra.mxu0 0.0
  %2492 = vmatprep.subr.mxu0 0.0
  %2493 = vmatpush1.msra.mxu0 0.0
  %2494 = vmatprep.subr.mxu0 0.0
  %2495 = vmatpush1.msra.mxu0 0.0
  %2496 = vmatprep.subr.mxu0 0.0
  %2497 = vmatpush1.msra.mxu0 0.0
  %2498 = vmatprep.subr.mxu0 0.0
  %2499 = vmatpush1.msra.mxu0 0.0
  %2500 = vmatprep.subr.mxu0 0.0
  %2501 = vmatpush1.msra.mxu0 0.0
  %2502 = vmatprep.subr.mxu0 0.0
  %2503 = vmatpush1.msra.mxu0 0.0
  %2504 = vmatprep.subr.mxu0 0.0
  %2505 = vmatpush1.msra.mxu0 0.0
  %2506 = vmatprep.subr.mxu0 0.0
  %2507 = vmatpush1.msra.mxu0 0.0
  %2508 = vmatprep.subr.mxu0 0.0
  %2509 = vmatpush1.msra.mxu0 0.0
  %2510 = vmatprep.subr.mxu0 0.0
  %2511 = vmatpush1.msra.mxu0 0.0
  %2512 = vmatprep.subr.mxu0 0.0
  %2513 = vmatpush1.msra.mxu0 0.0
  %2514 = vmatprep.subr.mxu0 0.0
  %2515 = vmatpush1.msra.mxu0 0.0
  %2516 = vmatprep.subr.mxu0 0.0
  %2517 = vmatpush1.msra.mxu0 0.0
  %2518 = vmatprep.subr.mxu0 0.0
  %2519 = vmatpush1.msra.mxu0 0.0
  %2520 = vmatprep.subr.mxu0 0.0
  %2521 = vmatpush1.msra.mxu0 0.0
  %2522 = vmatprep.subr.mxu0 0.0
  %2523 = vmatpush1.msra.mxu0 0.0
  %2524 = vmatprep.subr.mxu0 0.0
  %2525 = vmatpush1.msra.mxu0 0.0
  %2526 = vmatprep.subr.mxu0 0.0
  %2527 = vmatpush1.msra.mxu0 0.0
  %2528 = vmatprep.subr.mxu0 0.0
  %2529 = vmatpush1.msra.mxu0 0.0
  %2530 = vmatprep.subr.mxu0 0.0
  %2531 = vmatpush1.msra.mxu0 0.0
  %2532 = vmatprep.subr.mxu0 0.0
  %2533 = vmatpush1.msra.mxu0 0.0
  %2534 = vmatprep.subr.mxu0 0.0
  %2535 = vmatpush1.msra.mxu0 0.0
  %2536 = vmatprep.subr.mxu0 0.0
  %2537 = vmatpush1.msra.mxu0 0.0
  %2538 = vmatprep.subr.mxu0 0.0
  %2539 = vmatpush1.msra.mxu0 0.0
  %2540 = vmatprep.subr.mxu0 0.0
  %2541 = vmatpush1.msra.mxu0 0.0
  %2542 = vmatprep.subr.mxu0 0.0
  %2543 = vmatpush1.msra.mxu0 0.0
  %2544 = vmatprep.subr.mxu0 0.0
  %2545 = vmatpush1.msra.mxu0 0.0
  %2546 = vmatprep.mubr.f32.mxu0 0.0
  %2547 = vmatmul.mubr.f32.gmra.mrb[0].mxu0 %v2480
  %v2548 = vpop.f32.mrb[0].mxu0
  %v2549 = vadd.f32 %v574, %v2548
  %v2550 = vpop.f32.mrb[0].mxu0
  %2551 = vdwg.mxu0
  %v2554 = vunpack.c.l.s4 1966171168
  %v2555 = vunpack.c.0.s8 %v2554
  %v2556 = vlaneseq
  %v2557 = vshrl.u32 %v2556, 7
  %v2558 = vsub.s32 %v2555, %v2557
  %v2559 = vrot.slane %v2549, %v2558
  %v2560 = vcombine.high %v2559, %v2559
  %v2562 = vunpack.c.l.s4 1966171168
  %v2563 = vunpack.c.0.s8 %v2562
  %v2564 = vlaneseq
  %v2565 = vshrl.u32 %v2564, 7
  %v2566 = vsub.s32 %v2563, %v2565
  %v2567 = vrot.slane %v2559, %v2566
  %v2569 = vunpack.c.l.s4 1966171168
  %v2570 = vunpack.c.0.s8 %v2569
  %v2571 = vlaneseq
  %v2572 = vshrl.u32 %v2571, 7
  %v2573 = vsub.s32 %v2570, %v2572
  %v2574 = vrot.slane %v2560, %v2573
  %2577 = vst.msk [vmem:[%s8 + $0x5] sm:$0x1] %vm675, %v2567
  %2578 = vst.msk [vmem:[%s8 + $0xd] sm:$0x1] %vm675, %v2574
  %s2579 = scalar_lea.vmem %s0, 6
  %v2580 = vld [vmem:[%s2579] ss:$8 sm:$0xf]
  %s2581 = scalar_lea.vmem %s0, 38
  %v2582 = vld [vmem:[%s2581] ss:$8 sm:$0xf]
  %v2585 = vunpack.c.l.b16 %v2373
  %v2586 = vunpack.c.l.b16 %v2374
  %v2587 = vrot.slane %v2586, 7
  %v2588 = vsel %vm687, %v2587, %v2585
  %v2589 = vpack.c.b16 %v2588, %v2588
  %2591 = vmatprep.subr.bf16.mxu0 %v194
  %2592 = vmatpush1.bf16.msra.mxu0 %v193
  %2593 = vmatprep.subr.bf16.mxu0 %v198
  %2594 = vmatpush1.bf16.msra.mxu0 %v197
  %2595 = vmatprep.subr.bf16.mxu0 %v202
  %2596 = vmatpush1.bf16.msra.mxu0 %v201
  %2597 = vmatprep.subr.bf16.mxu0 %v206
  %2598 = vmatpush1.bf16.msra.mxu0 %v205
  %2599 = vmatprep.subr.bf16.mxu0 %v210
  %2600 = vmatpush1.bf16.msra.mxu0 %v209
  %2601 = vmatprep.subr.bf16.mxu0 %v214
  %2602 = vmatpush1.bf16.msra.mxu0 %v213
  %2603 = vmatprep.subr.bf16.mxu0 %v218
  %2604 = vmatpush1.bf16.msra.mxu0 %v217
  %2605 = vmatprep.subr.bf16.mxu0 %v222
  %2606 = vmatpush1.bf16.msra.mxu0 %v221
  %2607 = vmatprep.subr.bf16.mxu0 0
  %2608 = vmatpush1.bf16.msra.mxu0 0
  %2609 = vmatprep.subr.bf16.mxu0 0
  %2610 = vmatpush1.bf16.msra.mxu0 0
  %2611 = vmatprep.subr.bf16.mxu0 0
  %2612 = vmatpush1.bf16.msra.mxu0 0
  %2613 = vmatprep.subr.bf16.mxu0 0
  %2614 = vmatpush1.bf16.msra.mxu0 0
  %2615 = vmatprep.subr.bf16.mxu0 0
  %2616 = vmatpush1.bf16.msra.mxu0 0
  %2617 = vmatprep.subr.bf16.mxu0 0
  %2618 = vmatpush1.bf16.msra.mxu0 0
  %2619 = vmatprep.subr.bf16.mxu0 0
  %2620 = vmatpush1.bf16.msra.mxu0 0
  %2621 = vmatprep.subr.bf16.mxu0 0
  %2622 = vmatpush1.bf16.msra.mxu0 0
  %2623 = vmatprep.mubr.bf16.mxu0 0
  %2624 = vmatmul.mubr.bf16.gmra.mrb[0].mxu0 %v2589
  %v2625 = vpop.f32.mrb[0].mxu0
  %v2626 = vadd.f32 0.0, %v2625
  %v2627 = vpop.f32.mrb[0].mxu0
  %v2628 = vadd.f32 0.0, %v2627
  %v2629 = vpop.f32.mrb[0].mxu0
  %v2630 = vpop.f32.mrb[0].mxu0
  %2631 = vdwg.mxu0
  %2632 = vmatprep.subr.bf16.mxu0 %v196
  %2633 = vmatpush1.bf16.msra.mxu0 %v195
  %2634 = vmatprep.subr.bf16.mxu0 %v200
  %2635 = vmatpush1.bf16.msra.mxu0 %v199
  %2636 = vmatprep.subr.bf16.mxu0 %v204
  %2637 = vmatpush1.bf16.msra.mxu0 %v203
  %2638 = vmatprep.subr.bf16.mxu0 %v208
  %2639 = vmatpush1.bf16.msra.mxu0 %v207
  %2640 = vmatprep.subr.bf16.mxu0 %v212
  %2641 = vmatpush1.bf16.msra.mxu0 %v211
  %2642 = vmatprep.subr.bf16.mxu0 %v216
  %2643 = vmatpush1.bf16.msra.mxu0 %v215
  %2644 = vmatprep.subr.bf16.mxu0 %v220
  %2645 = vmatpush1.bf16.msra.mxu0 %v219
  %2646 = vmatprep.subr.bf16.mxu0 %v224
  %2647 = vmatpush1.bf16.msra.mxu0 %v223
  %2648 = vmatprep.subr.bf16.mxu0 0
  %2649 = vmatpush1.bf16.msra.mxu0 0
  %2650 = vmatprep.subr.bf16.mxu0 0
  %2651 = vmatpush1.bf16.msra.mxu0 0
  %2652 = vmatprep.subr.bf16.mxu0 0
  %2653 = vmatpush1.bf16.msra.mxu0 0
  %2654 = vmatprep.subr.bf16.mxu0 0
  %2655 = vmatpush1.bf16.msra.mxu0 0
  %2656 = vmatprep.subr.bf16.mxu0 0
  %2657 = vmatpush1.bf16.msra.mxu0 0
  %2658 = vmatprep.subr.bf16.mxu0 0
  %2659 = vmatpush1.bf16.msra.mxu0 0
  %2660 = vmatprep.subr.bf16.mxu0 0
  %2661 = vmatpush1.bf16.msra.mxu0 0
  %2662 = vmatprep.subr.bf16.mxu0 0
  %2663 = vmatpush1.bf16.msra.mxu0 0
  %2664 = vmatprep.mubr.bf16.mxu0 0
  %2665 = vmatmul.mubr.bf16.gmra.mrb[0].mxu0 %v2589
  %v2666 = vpop.f32.mrb[0].mxu0
  %v2667 = vadd.f32 0.0, %v2666
  %v2668 = vpop.f32.mrb[0].mxu0
  %v2669 = vadd.f32 0.0, %v2668
  %v2670 = vpop.f32.mrb[0].mxu0
  %v2671 = vpop.f32.mrb[0].mxu0
  %2672 = vdwg.mxu0
  %v2677 = vcombine.low %v2626, %v2628
  %v2678 = vcombine.low %v2667, %v2669
  %v2680 = vunpack.c.l.s4 1966171168
  %v2681 = vunpack.c.0.s8 %v2680
  %v2682 = vlaneseq
  %v2683 = vshrl.u32 %v2682, 7
  %v2684 = vsub.s32 %v2681, %v2683
  %v2685 = vrot.slane %v2677, %v2684
  %v2687 = vunpack.c.l.s4 1966171168
  %v2688 = vunpack.c.0.s8 %v2687
  %v2689 = vlaneseq
  %v2690 = vshrl.u32 %v2689, 7
  %v2691 = vsub.s32 %v2688, %v2690
  %v2692 = vrot.slane %v2678, %v2691
  %v2693 = vcombine.low %v2685, %v2692
  %v2694 = vcombine.high %v2685, %v2692
  %v2696 = vunpack.c.l.s4 1966171168
  %v2697 = vunpack.c.0.s8 %v2696
  %v2698 = vlaneseq
  %v2699 = vshrl.u32 %v2698, 7
  %v2700 = vsub.s32 %v2697, %v2699
  %v2701 = vrot.slane %v2693, %v2700
  %v2703 = vunpack.c.l.s4 1966171168
  %v2704 = vunpack.c.0.s8 %v2703
  %v2705 = vlaneseq
  %v2706 = vshrl.u32 %v2705, 7
  %v2707 = vsub.s32 %v2704, %v2706
  %v2708 = vrot.slane %v2694, %v2707
  %v2711 = vadd.f32 %v2580, %v2701
  %v2712 = vadd.f32 %v2582, %v2708
  %v2713 = vxor.u32 %v2711, 2147483648
  %v2714 = vxor.u32 %v2712, 2147483648
  %v2715 = vmul.f32 %v2713, 1.442695
  %v2716 = vpow.pop %v2715
  %v2717 = vmul.f32 %v2714, 1.442695
  %v2718 = vpow.pop %v2717
  %v2719 = vadd.f32 %v2716, 1.0
  %v2720 = vadd.f32 %v2718, 1.0
  %v2721 = vrcp.pop %v2719
  %v2722 = vmul.f32 1.0, %v2721
  %v2723 = vrcp.pop %v2720
  %v2724 = vmul.f32 1.0, %v2723
  %v2727 = vrot.slane %v2711, 3
  %v2728 = vrot.slane %v2712, 3
  %v2731 = vtanh.pop %v2727
  %v2732 = vtanh.pop %v2728
  %v2735 = vrot.slane %v2722, 1
  %v2736 = vrot.slane %v2724, 1
  %v2739 = vmul.f32 %v2735, %v2363
  %v2740 = vmul.f32 %v2736, %v2364
  %v2741 = vmul.f32 %v2722, %v2731
  %v2742 = vmul.f32 %v2724, %v2732
  %v2743 = vadd.f32 %v2739, %v2741
  %v2744 = vadd.f32 %v2740, %v2742
  %v2745 = vtanh.pop %v2743
  %v2746 = vtanh.pop %v2744
  %v2747 = vrot.slane %v2722, 2
  %v2748 = vrot.slane %v2724, 2
  %v2751 = vmul.f32 %v2747, %v2745
  %v2752 = vmul.f32 %v2748, %v2746
  %v2753 = vpack.c.bf16 %v2751, %v2751
  %v2754 = vpack.c.bf16 %v2752, %v2752
  %v2757 = vcombine.low %v2751, %v2752
  %v2759 = vunpack.c.l.s4 1966171168
  %v2760 = vunpack.c.0.s8 %v2759
  %v2761 = vlaneseq
  %v2762 = vshrl.u32 %v2761, 7
  %v2763 = vsub.s32 %v2760, %v2762
  %v2764 = vrot.slane %v2757, %v2763
  %v2766 = vunpack.c.l.s4 1966171168
  %v2767 = vunpack.c.0.s8 %v2766
  %v2768 = vlaneseq
  %v2769 = vshrl.u32 %v2768, 7
  %v2770 = vsub.s32 %v2767, %v2769
  %v2771 = vrot.slane %v2764, %v2770
  %2773 = vmatprep.subr.mxu0 0.0
  %2774 = vmatpush1.msra.mxu0 %v70
  %2775 = vmatprep.subr.mxu0 0.0
  %2776 = vmatpush1.msra.mxu0 %v71
  %2777 = vmatprep.subr.mxu0 0.0
  %2778 = vmatpush1.msra.mxu0 %v72
  %2779 = vmatprep.subr.mxu0 0.0
  %2780 = vmatpush1.msra.mxu0 %v73
  %2781 = vmatprep.subr.mxu0 0.0
  %2782 = vmatpush1.msra.mxu0 %v74
  %2783 = vmatprep.subr.mxu0 0.0
  %2784 = vmatpush1.msra.mxu0 %v75
  %2785 = vmatprep.subr.mxu0 0.0
  %2786 = vmatpush1.msra.mxu0 %v76
  %2787 = vmatprep.subr.mxu0 0.0
  %2788 = vmatpush1.msra.mxu0 %v77
  %2789 = vmatprep.subr.mxu0 0.0
  %2790 = vmatpush1.msra.mxu0 %v78
  %2791 = vmatprep.subr.mxu0 0.0
  %2792 = vmatpush1.msra.mxu0 %v79
  %2793 = vmatprep.subr.mxu0 0.0
  %2794 = vmatpush1.msra.mxu0 %v80
  %2795 = vmatprep.subr.mxu0 0.0
  %2796 = vmatpush1.msra.mxu0 %v81
  %2797 = vmatprep.subr.mxu0 0.0
  %2798 = vmatpush1.msra.mxu0 %v82
  %2799 = vmatprep.subr.mxu0 0.0
  %2800 = vmatpush1.msra.mxu0 %v83
  %2801 = vmatprep.subr.mxu0 0.0
  %2802 = vmatpush1.msra.mxu0 %v84
  %2803 = vmatprep.subr.mxu0 0.0
  %2804 = vmatpush1.msra.mxu0 %v85
  %2805 = vmatprep.subr.mxu0 0.0
  %2806 = vmatpush1.msra.mxu0 0.0
  %2807 = vmatprep.subr.mxu0 0.0
  %2808 = vmatpush1.msra.mxu0 0.0
  %2809 = vmatprep.subr.mxu0 0.0
  %2810 = vmatpush1.msra.mxu0 0.0
  %2811 = vmatprep.subr.mxu0 0.0
  %2812 = vmatpush1.msra.mxu0 0.0
  %2813 = vmatprep.subr.mxu0 0.0
  %2814 = vmatpush1.msra.mxu0 0.0
  %2815 = vmatprep.subr.mxu0 0.0
  %2816 = vmatpush1.msra.mxu0 0.0
  %2817 = vmatprep.subr.mxu0 0.0
  %2818 = vmatpush1.msra.mxu0 0.0
  %2819 = vmatprep.subr.mxu0 0.0
  %2820 = vmatpush1.msra.mxu0 0.0
  %2821 = vmatprep.subr.mxu0 0.0
  %2822 = vmatpush1.msra.mxu0 0.0
  %2823 = vmatprep.subr.mxu0 0.0
  %2824 = vmatpush1.msra.mxu0 0.0
  %2825 = vmatprep.subr.mxu0 0.0
  %2826 = vmatpush1.msra.mxu0 0.0
  %2827 = vmatprep.subr.mxu0 0.0
  %2828 = vmatpush1.msra.mxu0 0.0
  %2829 = vmatprep.subr.mxu0 0.0
  %2830 = vmatpush1.msra.mxu0 0.0
  %2831 = vmatprep.subr.mxu0 0.0
  %2832 = vmatpush1.msra.mxu0 0.0
  %2833 = vmatprep.subr.mxu0 0.0
  %2834 = vmatpush1.msra.mxu0 0.0
  %2835 = vmatprep.subr.mxu0 0.0
  %2836 = vmatpush1.msra.mxu0 0.0
  %2837 = vmatprep.mubr.f32.mxu0 0.0
  %2838 = vmatmul.mubr.f32.gmra.mrb[0].mxu0 %v2771
  %v2839 = vpop.f32.mrb[0].mxu0
  %v2840 = vadd.f32 %v450, %v2839
  %v2841 = vpop.f32.mrb[0].mxu0
  %2842 = vdwg.mxu0
  %v2843 = vmax.f32 %v2840, 0.0
  %v2844 = vsel %vm541, %v2843, 0.0
  %2845 = vadd.xlane.f32.xlu0 %v2844
  %v2846 = vpop.xlane.xlu0 %2845
  %v2847 = vmul.f32 %v2846, %v545
  %v2848 = vsub.f32 %v2843, %v2847
  %v2849 = vmul.f32 %v2848, %v2848
  %v2850 = vsel %vm541, %v2849, 0.0
  %2851 = vadd.xlane.f32.xlu0 %v2850
  %v2852 = vpop.xlane.xlu0 %2851
  %v2853 = vmul.f32 %v2852, %v545
  %v2854 = vadd.f32 %v2853, 1e-05
  %v2855 = vrsqrt.pop %v2854
  %v2856 = vmul.f32 %v2848, %v2855
  %v2857 = vmul.f32 %v2856, %v560
  %v2858 = vadd.f32 %v2857, %v567
  %v2860 = vsel %vm576, %v2858, 0
  %2862 = vmatprep.subr.mxu0 0.0
  %2863 = vmatpush1.msra.mxu0 %v89
  %2864 = vmatprep.subr.mxu0 0.0
  %2865 = vmatpush1.msra.mxu0 %v90
  %2866 = vmatprep.subr.mxu0 0.0
  %2867 = vmatpush1.msra.mxu0 %v91
  %2868 = vmatprep.subr.mxu0 0.0
  %2869 = vmatpush1.msra.mxu0 %v92
  %2870 = vmatprep.subr.mxu0 0.0
  %2871 = vmatpush1.msra.mxu0 0.0
  %2872 = vmatprep.subr.mxu0 0.0
  %2873 = vmatpush1.msra.mxu0 0.0
  %2874 = vmatprep.subr.mxu0 0.0
  %2875 = vmatpush1.msra.mxu0 0.0
  %2876 = vmatprep.subr.mxu0 0.0
  %2877 = vmatpush1.msra.mxu0 0.0
  %2878 = vmatprep.subr.mxu0 0.0
  %2879 = vmatpush1.msra.mxu0 0.0
  %2880 = vmatprep.subr.mxu0 0.0
  %2881 = vmatpush1.msra.mxu0 0.0
  %2882 = vmatprep.subr.mxu0 0.0
  %2883 = vmatpush1.msra.mxu0 0.0
  %2884 = vmatprep.subr.mxu0 0.0
  %2885 = vmatpush1.msra.mxu0 0.0
  %2886 = vmatprep.subr.mxu0 0.0
  %2887 = vmatpush1.msra.mxu0 0.0
  %2888 = vmatprep.subr.mxu0 0.0
  %2889 = vmatpush1.msra.mxu0 0.0
  %2890 = vmatprep.subr.mxu0 0.0
  %2891 = vmatpush1.msra.mxu0 0.0
  %2892 = vmatprep.subr.mxu0 0.0
  %2893 = vmatpush1.msra.mxu0 0.0
  %2894 = vmatprep.subr.mxu0 0.0
  %2895 = vmatpush1.msra.mxu0 0.0
  %2896 = vmatprep.subr.mxu0 0.0
  %2897 = vmatpush1.msra.mxu0 0.0
  %2898 = vmatprep.subr.mxu0 0.0
  %2899 = vmatpush1.msra.mxu0 0.0
  %2900 = vmatprep.subr.mxu0 0.0
  %2901 = vmatpush1.msra.mxu0 0.0
  %2902 = vmatprep.subr.mxu0 0.0
  %2903 = vmatpush1.msra.mxu0 0.0
  %2904 = vmatprep.subr.mxu0 0.0
  %2905 = vmatpush1.msra.mxu0 0.0
  %2906 = vmatprep.subr.mxu0 0.0
  %2907 = vmatpush1.msra.mxu0 0.0
  %2908 = vmatprep.subr.mxu0 0.0
  %2909 = vmatpush1.msra.mxu0 0.0
  %2910 = vmatprep.subr.mxu0 0.0
  %2911 = vmatpush1.msra.mxu0 0.0
  %2912 = vmatprep.subr.mxu0 0.0
  %2913 = vmatpush1.msra.mxu0 0.0
  %2914 = vmatprep.subr.mxu0 0.0
  %2915 = vmatpush1.msra.mxu0 0.0
  %2916 = vmatprep.subr.mxu0 0.0
  %2917 = vmatpush1.msra.mxu0 0.0
  %2918 = vmatprep.subr.mxu0 0.0
  %2919 = vmatpush1.msra.mxu0 0.0
  %2920 = vmatprep.subr.mxu0 0.0
  %2921 = vmatpush1.msra.mxu0 0.0
  %2922 = vmatprep.subr.mxu0 0.0
  %2923 = vmatpush1.msra.mxu0 0.0
  %2924 = vmatprep.subr.mxu0 0.0
  %2925 = vmatpush1.msra.mxu0 0.0
  %2926 = vmatprep.mubr.f32.mxu0 0.0
  %2927 = vmatmul.mubr.f32.gmra.mrb[0].mxu0 %v2860
  %v2928 = vpop.f32.mrb[0].mxu0
  %v2929 = vadd.f32 %v574, %v2928
  %v2930 = vpop.f32.mrb[0].mxu0
  %2931 = vdwg.mxu0
  %v2934 = vunpack.c.l.s4 1966171168
  %v2935 = vunpack.c.0.s8 %v2934
  %v2936 = vlaneseq
  %v2937 = vshrl.u32 %v2936, 7
  %v2938 = vsub.s32 %v2935, %v2937
  %v2939 = vrot.slane %v2929, %v2938
  %v2940 = vcombine.high %v2939, %v2939
  %v2942 = vunpack.c.l.s4 1966171168
  %v2943 = vunpack.c.0.s8 %v2942
  %v2944 = vlaneseq
  %v2945 = vshrl.u32 %v2944, 7
  %v2946 = vsub.s32 %v2943, %v2945
  %v2947 = vrot.slane %v2939, %v2946
  %v2949 = vunpack.c.l.s4 1966171168
  %v2950 = vunpack.c.0.s8 %v2949
  %v2951 = vlaneseq
  %v2952 = vshrl.u32 %v2951, 7
  %v2953 = vsub.s32 %v2950, %v2952
  %v2954 = vrot.slane %v2940, %v2953
  %2957 = vst.msk [vmem:[%s8 + $0x6] sm:$0x1] %vm675, %v2947
  %2958 = vst.msk [vmem:[%s8 + $0xe] sm:$0x1] %vm675, %v2954
  %s2959 = scalar_lea.vmem %s0, 7
  %v2960 = vld [vmem:[%s2959] ss:$8 sm:$0xf]
  %s2961 = scalar_lea.vmem %s0, 39
  %v2962 = vld [vmem:[%s2961] ss:$8 sm:$0xf]
  %v2965 = vunpack.c.l.b16 %v2753
  %v2966 = vunpack.c.l.b16 %v2754
  %v2967 = vrot.slane %v2966, 7
  %v2968 = vsel %vm687, %v2967, %v2965
  %v2969 = vpack.c.b16 %v2968, %v2968
  %2971 = vmatprep.subr.bf16.mxu0 %v194
  %2972 = vmatpush1.bf16.msra.mxu0 %v193
  %2973 = vmatprep.subr.bf16.mxu0 %v198
  %2974 = vmatpush1.bf16.msra.mxu0 %v197
  %2975 = vmatprep.subr.bf16.mxu0 %v202
  %2976 = vmatpush1.bf16.msra.mxu0 %v201
  %2977 = vmatprep.subr.bf16.mxu0 %v206
  %2978 = vmatpush1.bf16.msra.mxu0 %v205
  %2979 = vmatprep.subr.bf16.mxu0 %v210
  %2980 = vmatpush1.bf16.msra.mxu0 %v209
  %2981 = vmatprep.subr.bf16.mxu0 %v214
  %2982 = vmatpush1.bf16.msra.mxu0 %v213
  %2983 = vmatprep.subr.bf16.mxu0 %v218
  %2984 = vmatpush1.bf16.msra.mxu0 %v217
  %2985 = vmatprep.subr.bf16.mxu0 %v222
  %2986 = vmatpush1.bf16.msra.mxu0 %v221
  %2987 = vmatprep.subr.bf16.mxu0 0
  %2988 = vmatpush1.bf16.msra.mxu0 0
  %2989 = vmatprep.subr.bf16.mxu0 0
  %2990 = vmatpush1.bf16.msra.mxu0 0
  %2991 = vmatprep.subr.bf16.mxu0 0
  %2992 = vmatpush1.bf16.msra.mxu0 0
  %2993 = vmatprep.subr.bf16.mxu0 0
  %2994 = vmatpush1.bf16.msra.mxu0 0
  %2995 = vmatprep.subr.bf16.mxu0 0
  %2996 = vmatpush1.bf16.msra.mxu0 0
  %2997 = vmatprep.subr.bf16.mxu0 0
  %2998 = vmatpush1.bf16.msra.mxu0 0
  %2999 = vmatprep.subr.bf16.mxu0 0
  %3000 = vmatpush1.bf16.msra.mxu0 0
  %3001 = vmatprep.subr.bf16.mxu0 0
  %3002 = vmatpush1.bf16.msra.mxu0 0
  %3003 = vmatprep.mubr.bf16.mxu0 0
  %3004 = vmatmul.mubr.bf16.gmra.mrb[0].mxu0 %v2969
  %v3005 = vpop.f32.mrb[0].mxu0
  %v3006 = vadd.f32 0.0, %v3005
  %v3007 = vpop.f32.mrb[0].mxu0
  %v3008 = vadd.f32 0.0, %v3007
  %v3009 = vpop.f32.mrb[0].mxu0
  %v3010 = vpop.f32.mrb[0].mxu0
  %3011 = vdwg.mxu0
  %3012 = vmatprep.subr.bf16.mxu0 %v196
  %3013 = vmatpush1.bf16.msra.mxu0 %v195
  %3014 = vmatprep.subr.bf16.mxu0 %v200
  %3015 = vmatpush1.bf16.msra.mxu0 %v199
  %3016 = vmatprep.subr.bf16.mxu0 %v204
  %3017 = vmatpush1.bf16.msra.mxu0 %v203
  %3018 = vmatprep.subr.bf16.mxu0 %v208
  %3019 = vmatpush1.bf16.msra.mxu0 %v207
  %3020 = vmatprep.subr.bf16.mxu0 %v212
  %3021 = vmatpush1.bf16.msra.mxu0 %v211
  %3022 = vmatprep.subr.bf16.mxu0 %v216
  %3023 = vmatpush1.bf16.msra.mxu0 %v215
  %3024 = vmatprep.subr.bf16.mxu0 %v220
  %3025 = vmatpush1.bf16.msra.mxu0 %v219
  %3026 = vmatprep.subr.bf16.mxu0 %v224
  %3027 = vmatpush1.bf16.msra.mxu0 %v223
  %3028 = vmatprep.subr.bf16.mxu0 0
  %3029 = vmatpush1.bf16.msra.mxu0 0
  %3030 = vmatprep.subr.bf16.mxu0 0
  %3031 = vmatpush1.bf16.msra.mxu0 0
  %3032 = vmatprep.subr.bf16.mxu0 0
  %3033 = vmatpush1.bf16.msra.mxu0 0
  %3034 = vmatprep.subr.bf16.mxu0 0
  %3035 = vmatpush1.bf16.msra.mxu0 0
  %3036 = vmatprep.subr.bf16.mxu0 0
  %3037 = vmatpush1.bf16.msra.mxu0 0
  %3038 = vmatprep.subr.bf16.mxu0 0
  %3039 = vmatpush1.bf16.msra.mxu0 0
  %3040 = vmatprep.subr.bf16.mxu0 0
  %3041 = vmatpush1.bf16.msra.mxu0 0
  %3042 = vmatprep.subr.bf16.mxu0 0
  %3043 = vmatpush1.bf16.msra.mxu0 0
  %3044 = vmatprep.mubr.bf16.mxu0 0
  %3045 = vmatmul.mubr.bf16.gmra.mrb[0].mxu0 %v2969
  %v3046 = vpop.f32.mrb[0].mxu0
  %v3047 = vadd.f32 0.0, %v3046
  %v3048 = vpop.f32.mrb[0].mxu0
  %v3049 = vadd.f32 0.0, %v3048
  %v3050 = vpop.f32.mrb[0].mxu0
  %v3051 = vpop.f32.mrb[0].mxu0
  %3052 = vdwg.mxu0
  %v3057 = vcombine.low %v3006, %v3008
  %v3058 = vcombine.low %v3047, %v3049
  %v3060 = vunpack.c.l.s4 1966171168
  %v3061 = vunpack.c.0.s8 %v3060
  %v3062 = vlaneseq
  %v3063 = vshrl.u32 %v3062, 7
  %v3064 = vsub.s32 %v3061, %v3063
  %v3065 = vrot.slane %v3057, %v3064
  %v3067 = vunpack.c.l.s4 1966171168
  %v3068 = vunpack.c.0.s8 %v3067
  %v3069 = vlaneseq
  %v3070 = vshrl.u32 %v3069, 7
  %v3071 = vsub.s32 %v3068, %v3070
  %v3072 = vrot.slane %v3058, %v3071
  %v3073 = vcombine.low %v3065, %v3072
  %v3074 = vcombine.high %v3065, %v3072
  %v3076 = vunpack.c.l.s4 1966171168
  %v3077 = vunpack.c.0.s8 %v3076
  %v3078 = vlaneseq
  %v3079 = vshrl.u32 %v3078, 7
  %v3080 = vsub.s32 %v3077, %v3079
  %v3081 = vrot.slane %v3073, %v3080
  %v3083 = vunpack.c.l.s4 1966171168
  %v3084 = vunpack.c.0.s8 %v3083
  %v3085 = vlaneseq
  %v3086 = vshrl.u32 %v3085, 7
  %v3087 = vsub.s32 %v3084, %v3086
  %v3088 = vrot.slane %v3074, %v3087
  %v3091 = vadd.f32 %v2960, %v3081
  %v3092 = vadd.f32 %v2962, %v3088
  %v3093 = vxor.u32 %v3091, 2147483648
  %v3094 = vxor.u32 %v3092, 2147483648
  %v3095 = vmul.f32 %v3093, 1.442695
  %v3096 = vpow.pop %v3095
  %v3097 = vmul.f32 %v3094, 1.442695
  %v3098 = vpow.pop %v3097
  %v3099 = vadd.f32 %v3096, 1.0
  %v3100 = vadd.f32 %v3098, 1.0
  %v3101 = vrcp.pop %v3099
  %v3102 = vmul.f32 1.0, %v3101
  %v3103 = vrcp.pop %v3100
  %v3104 = vmul.f32 1.0, %v3103
  %v3107 = vrot.slane %v3091, 3
  %v3108 = vrot.slane %v3092, 3
  %v3111 = vtanh.pop %v3107
  %v3112 = vtanh.pop %v3108
  %v3115 = vrot.slane %v3102, 1
  %v3116 = vrot.slane %v3104, 1
  %v3119 = vmul.f32 %v3115, %v2743
  %v3120 = vmul.f32 %v3116, %v2744
  %v3121 = vmul.f32 %v3102, %v3111
  %v3122 = vmul.f32 %v3104, %v3112
  %v3123 = vadd.f32 %v3119, %v3121
  %v3124 = vadd.f32 %v3120, %v3122
  %v3125 = vtanh.pop %v3123
  %v3126 = vtanh.pop %v3124
  %v3127 = vrot.slane %v3102, 2
  %v3128 = vrot.slane %v3104, 2
  %v3131 = vmul.f32 %v3127, %v3125
  %v3132 = vmul.f32 %v3128, %v3126
  %v3133 = vpack.c.bf16 %v3131, %v3131
  %v3134 = vpack.c.bf16 %v3132, %v3132
  %v3137 = vcombine.low %v3131, %v3132
  %v3139 = vunpack.c.l.s4 1966171168
  %v3140 = vunpack.c.0.s8 %v3139
  %v3141 = vlaneseq
  %v3142 = vshrl.u32 %v3141, 7
  %v3143 = vsub.s32 %v3140, %v3142
  %v3144 = vrot.slane %v3137, %v3143
  %v3146 = vunpack.c.l.s4 1966171168
  %v3147 = vunpack.c.0.s8 %v3146
  %v3148 = vlaneseq
  %v3149 = vshrl.u32 %v3148, 7
  %v3150 = vsub.s32 %v3147, %v3149
  %v3151 = vrot.slane %v3144, %v3150
  %3153 = vmatprep.subr.mxu0 0.0
  %3154 = vmatpush1.msra.mxu0 %v70
  %3155 = vmatprep.subr.mxu0 0.0
  %3156 = vmatpush1.msra.mxu0 %v71
  %3157 = vmatprep.subr.mxu0 0.0
  %3158 = vmatpush1.msra.mxu0 %v72
  %3159 = vmatprep.subr.mxu0 0.0
  %3160 = vmatpush1.msra.mxu0 %v73
  %3161 = vmatprep.subr.mxu0 0.0
  %3162 = vmatpush1.msra.mxu0 %v74
  %3163 = vmatprep.subr.mxu0 0.0
  %3164 = vmatpush1.msra.mxu0 %v75
  %3165 = vmatprep.subr.mxu0 0.0
  %3166 = vmatpush1.msra.mxu0 %v76
  %3167 = vmatprep.subr.mxu0 0.0
  %3168 = vmatpush1.msra.mxu0 %v77
  %3169 = vmatprep.subr.mxu0 0.0
  %3170 = vmatpush1.msra.mxu0 %v78
  %3171 = vmatprep.subr.mxu0 0.0
  %3172 = vmatpush1.msra.mxu0 %v79
  %3173 = vmatprep.subr.mxu0 0.0
  %3174 = vmatpush1.msra.mxu0 %v80
  %3175 = vmatprep.subr.mxu0 0.0
  %3176 = vmatpush1.msra.mxu0 %v81
  %3177 = vmatprep.subr.mxu0 0.0
  %3178 = vmatpush1.msra.mxu0 %v82
  %3179 = vmatprep.subr.mxu0 0.0
  %3180 = vmatpush1.msra.mxu0 %v83
  %3181 = vmatprep.subr.mxu0 0.0
  %3182 = vmatpush1.msra.mxu0 %v84
  %3183 = vmatprep.subr.mxu0 0.0
  %3184 = vmatpush1.msra.mxu0 %v85
  %3185 = vmatprep.subr.mxu0 0.0
  %3186 = vmatpush1.msra.mxu0 0.0
  %3187 = vmatprep.subr.mxu0 0.0
  %3188 = vmatpush1.msra.mxu0 0.0
  %3189 = vmatprep.subr.mxu0 0.0
  %3190 = vmatpush1.msra.mxu0 0.0
  %3191 = vmatprep.subr.mxu0 0.0
  %3192 = vmatpush1.msra.mxu0 0.0
  %3193 = vmatprep.subr.mxu0 0.0
  %3194 = vmatpush1.msra.mxu0 0.0
  %3195 = vmatprep.subr.mxu0 0.0
  %3196 = vmatpush1.msra.mxu0 0.0
  %3197 = vmatprep.subr.mxu0 0.0
  %3198 = vmatpush1.msra.mxu0 0.0
  %3199 = vmatprep.subr.mxu0 0.0
  %3200 = vmatpush1.msra.mxu0 0.0
  %3201 = vmatprep.subr.mxu0 0.0
  %3202 = vmatpush1.msra.mxu0 0.0
  %3203 = vmatprep.subr.mxu0 0.0
  %3204 = vmatpush1.msra.mxu0 0.0
  %3205 = vmatprep.subr.mxu0 0.0
  %3206 = vmatpush1.msra.mxu0 0.0
  %3207 = vmatprep.subr.mxu0 0.0
  %3208 = vmatpush1.msra.mxu0 0.0
  %3209 = vmatprep.subr.mxu0 0.0
  %3210 = vmatpush1.msra.mxu0 0.0
  %3211 = vmatprep.subr.mxu0 0.0
  %3212 = vmatpush1.msra.mxu0 0.0
  %3213 = vmatprep.subr.mxu0 0.0
  %3214 = vmatpush1.msra.mxu0 0.0
  %3215 = vmatprep.subr.mxu0 0.0
  %3216 = vmatpush1.msra.mxu0 0.0
  %3217 = vmatprep.mubr.f32.mxu0 0.0
  %3218 = vmatmul.mubr.f32.gmra.mrb[0].mxu0 %v3151
  %v3219 = vpop.f32.mrb[0].mxu0
  %v3220 = vadd.f32 %v450, %v3219
  %v3221 = vpop.f32.mrb[0].mxu0
  %3222 = vdwg.mxu0
  %v3223 = vmax.f32 %v3220, 0.0
  %v3224 = vsel %vm541, %v3223, 0.0
  %3225 = vadd.xlane.f32.xlu0 %v3224
  %v3226 = vpop.xlane.xlu0 %3225
  %v3227 = vmul.f32 %v3226, %v545
  %v3228 = vsub.f32 %v3223, %v3227
  %v3229 = vmul.f32 %v3228, %v3228
  %v3230 = vsel %vm541, %v3229, 0.0
  %3231 = vadd.xlane.f32.xlu0 %v3230
  %v3232 = vpop.xlane.xlu0 %3231
  %v3233 = vmul.f32 %v3232, %v545
  %v3234 = vadd.f32 %v3233, 1e-05
  %v3235 = vrsqrt.pop %v3234
  %v3236 = vmul.f32 %v3228, %v3235
  %v3237 = vmul.f32 %v3236, %v560
  %v3238 = vadd.f32 %v3237, %v567
  %v3240 = vsel %vm576, %v3238, 0
  %3242 = vmatprep.subr.mxu0 0.0
  %3243 = vmatpush1.msra.mxu0 %v89
  %3244 = vmatprep.subr.mxu0 0.0
  %3245 = vmatpush1.msra.mxu0 %v90
  %3246 = vmatprep.subr.mxu0 0.0
  %3247 = vmatpush1.msra.mxu0 %v91
  %3248 = vmatprep.subr.mxu0 0.0
  %3249 = vmatpush1.msra.mxu0 %v92
  %3250 = vmatprep.subr.mxu0 0.0
  %3251 = vmatpush1.msra.mxu0 0.0
  %3252 = vmatprep.subr.mxu0 0.0
  %3253 = vmatpush1.msra.mxu0 0.0
  %3254 = vmatprep.subr.mxu0 0.0
  %3255 = vmatpush1.msra.mxu0 0.0
  %3256 = vmatprep.subr.mxu0 0.0
  %3257 = vmatpush1.msra.mxu0 0.0
  %3258 = vmatprep.subr.mxu0 0.0
  %3259 = vmatpush1.msra.mxu0 0.0
  %3260 = vmatprep.subr.mxu0 0.0
  %3261 = vmatpush1.msra.mxu0 0.0
  %3262 = vmatprep.subr.mxu0 0.0
  %3263 = vmatpush1.msra.mxu0 0.0
  %3264 = vmatprep.subr.mxu0 0.0
  %3265 = vmatpush1.msra.mxu0 0.0
  %3266 = vmatprep.subr.mxu0 0.0
  %3267 = vmatpush1.msra.mxu0 0.0
  %3268 = vmatprep.subr.mxu0 0.0
  %3269 = vmatpush1.msra.mxu0 0.0
  %3270 = vmatprep.subr.mxu0 0.0
  %3271 = vmatpush1.msra.mxu0 0.0
  %3272 = vmatprep.subr.mxu0 0.0
  %3273 = vmatpush1.msra.mxu0 0.0
  %3274 = vmatprep.subr.mxu0 0.0
  %3275 = vmatpush1.msra.mxu0 0.0
  %3276 = vmatprep.subr.mxu0 0.0
  %3277 = vmatpush1.msra.mxu0 0.0
  %3278 = vmatprep.subr.mxu0 0.0
  %3279 = vmatpush1.msra.mxu0 0.0
  %3280 = vmatprep.subr.mxu0 0.0
  %3281 = vmatpush1.msra.mxu0 0.0
  %3282 = vmatprep.subr.mxu0 0.0
  %3283 = vmatpush1.msra.mxu0 0.0
  %3284 = vmatprep.subr.mxu0 0.0
  %3285 = vmatpush1.msra.mxu0 0.0
  %3286 = vmatprep.subr.mxu0 0.0
  %3287 = vmatpush1.msra.mxu0 0.0
  %3288 = vmatprep.subr.mxu0 0.0
  %3289 = vmatpush1.msra.mxu0 0.0
  %3290 = vmatprep.subr.mxu0 0.0
  %3291 = vmatpush1.msra.mxu0 0.0
  %3292 = vmatprep.subr.mxu0 0.0
  %3293 = vmatpush1.msra.mxu0 0.0
  %3294 = vmatprep.subr.mxu0 0.0
  %3295 = vmatpush1.msra.mxu0 0.0
  %3296 = vmatprep.subr.mxu0 0.0
  %3297 = vmatpush1.msra.mxu0 0.0
  %3298 = vmatprep.subr.mxu0 0.0
  %3299 = vmatpush1.msra.mxu0 0.0
  %3300 = vmatprep.subr.mxu0 0.0
  %3301 = vmatpush1.msra.mxu0 0.0
  %3302 = vmatprep.subr.mxu0 0.0
  %3303 = vmatpush1.msra.mxu0 0.0
  %3304 = vmatprep.subr.mxu0 0.0
  %3305 = vmatpush1.msra.mxu0 0.0
  %3306 = vmatprep.mubr.f32.mxu0 0.0
  %3307 = vmatmul.mubr.f32.gmra.mrb[0].mxu0 %v3240
  %v3308 = vpop.f32.mrb[0].mxu0
  %v3309 = vadd.f32 %v574, %v3308
  %v3310 = vpop.f32.mrb[0].mxu0
  %3311 = vdwg.mxu0
  %v3314 = vunpack.c.l.s4 1966171168
  %v3315 = vunpack.c.0.s8 %v3314
  %v3316 = vlaneseq
  %v3317 = vshrl.u32 %v3316, 7
  %v3318 = vsub.s32 %v3315, %v3317
  %v3319 = vrot.slane %v3309, %v3318
  %v3320 = vcombine.high %v3319, %v3319
  %v3322 = vunpack.c.l.s4 1966171168
  %v3323 = vunpack.c.0.s8 %v3322
  %v3324 = vlaneseq
  %v3325 = vshrl.u32 %v3324, 7
  %v3326 = vsub.s32 %v3323, %v3325
  %v3327 = vrot.slane %v3319, %v3326
  %v3329 = vunpack.c.l.s4 1966171168
  %v3330 = vunpack.c.0.s8 %v3329
  %v3331 = vlaneseq
  %v3332 = vshrl.u32 %v3331, 7
  %v3333 = vsub.s32 %v3330, %v3332
  %v3334 = vrot.slane %v3320, %v3333
  %3337 = vst.msk [vmem:[%s8 + $0x7] sm:$0x1] %vm675, %v3327
  %3338 = vst.msk [vmem:[%s8 + $0xf] sm:$0x1] %vm675, %v3334
  %v3342 = vunpack.c.l.s4 1966171168
  %v3343 = vunpack.c.0.s8 %v3342
  %v3344 = vlaneseq
  %v3345 = vshrl.u32 %v3344, 7
  %v3346 = vsub.s32 %v3343, %v3345
  %v3347 = vrot.slane %v3133, %v3346
  %v3349 = vunpack.c.l.s4 1966171168
  %v3350 = vunpack.c.0.s8 %v3349
  %v3351 = vlaneseq
  %v3352 = vshrl.u32 %v3351, 7
  %v3353 = vsub.s32 %v3350, %v3352
  %v3354 = vrot.slane %v3347, %v3353
  %v3356 = vunpack.c.l.s4 1966171168
  %v3357 = vunpack.c.0.s8 %v3356
  %v3358 = vlaneseq
  %v3359 = vshrl.u32 %v3358, 7
  %v3360 = vsub.s32 %v3357, %v3359
  %v3361 = vrot.slane %v3134, %v3360
  %v3363 = vunpack.c.l.s4 1966171168
  %v3364 = vunpack.c.0.s8 %v3363
  %v3365 = vlaneseq
  %v3366 = vshrl.u32 %v3365, 7
  %v3367 = vsub.s32 %v3364, %v3366
  %v3368 = vrot.slane %v3361, %v3367
  %v3370 = vunpack.c.l.s4 1935823168
  %v3371 = vunpack.c.0.s8 %v3370
  %v3372 = vlaneseq
  %v3373 = vshrl.u32 %v3372, 7
  %v3374 = vsub.s32 %v3371, %v3373
  %v3375 = vrot.slane %v3354, %v3374
  %v3377 = vunpack.c.l.s4 1935823168
  %v3378 = vunpack.c.0.s8 %v3377
  %v3379 = vlaneseq
  %v3380 = vshrl.u32 %v3379, 7
  %v3381 = vsub.s32 %v3378, %v3380
  %v3382 = vrot.slane %v3375, %v3381
  %v3384 = vunpack.c.l.s4 1935823168
  %v3385 = vunpack.c.0.s8 %v3384
  %v3386 = vlaneseq
  %v3387 = vshrl.u32 %v3386, 7
  %v3388 = vsub.s32 %v3385, %v3387
  %v3389 = vrot.slane %v3368, %v3388
  %v3391 = vunpack.c.l.s4 1935823168
  %v3392 = vunpack.c.0.s8 %v3391
  %v3393 = vlaneseq
  %v3394 = vshrl.u32 %v3393, 7
  %v3395 = vsub.s32 %v3392, %v3394
  %v3396 = vrot.slane %v3389, %v3395
  %v3397 = vunpack.c.l.b16 %v3382
  %v3398 = vunpack.c.l.b16 %v3396
  %v3399 = vrot.slane %v3398, 7
  %v3400 = vsel %vm687, %v3399, %v3397
  %v3401 = vpack.c.b16 %v3400, %v3400
  %v3403 = vunpack.c.l.s4 1966171168
  %v3404 = vunpack.c.0.s8 %v3403
  %v3405 = vlaneseq
  %v3406 = vshrl.u32 %v3405, 7
  %v3407 = vsub.s32 %v3404, %v3406
  %v3408 = vrot.slane %v3401, %v3407
  %v3410 = vunpack.c.l.s4 1966171168
  %v3411 = vunpack.c.0.s8 %v3410
  %v3412 = vlaneseq
  %v3413 = vshrl.u32 %v3412, 7
  %v3414 = vsub.s32 %v3411, %v3413
  %v3415 = vrot.slane %v3408, %v3414
  %3417 = vst [vmem:[#allocation2] sm:$0x1] %v3415
  %v3420 = vcombine.low %v3123, %v3124
  %v3422 = vunpack.c.l.s4 1966171168
  %v3423 = vunpack.c.0.s8 %v3422
  %v3424 = vlaneseq
  %v3425 = vshrl.u32 %v3424, 7
  %v3426 = vsub.s32 %v3423, %v3425
  %v3427 = vrot.slane %v3420, %v3426
  %v3429 = vunpack.c.l.s4 1966171168
  %v3430 = vunpack.c.0.s8 %v3429
  %v3431 = vlaneseq
  %v3432 = vshrl.u32 %v3431, 7
  %v3433 = vsub.s32 %v3430, %v3432
  %v3434 = vrot.slane %v3427, %v3433
  %3436 = vst [vmem:[#allocation3] sm:$0x3] %v3434
  // Predicated region
  $region38: #{classifier_forward.3} parent=0 // pred_check
    _
  $region39: #{classifier_forward.3} parent=0 // pred_check_branch
    %3438 = sbr.rel (0) target = $region41
  $region40: #{classifier_forward.3} parent=0 // pred_region
    _
  $region41: #{classifier_forward.3} parent=0 // pred_fallthru
    _
  // Predicated region
  $region42: #{classifier_forward.3} parent=0 // pred_check
    _
  $region43: #{classifier_forward.3} parent=0 // pred_check_branch
    %3440 = sbr.rel (0) target = $region45
  $region44: #{classifier_forward.3} parent=0 // pred_region
    _
  $region45: #{classifier_forward.3} parent=0 // pred_fallthru
    _

</llo_original>
